<compile_context>
chip_gen: v7x
topology: tpu7x:2x2x1
jax: 0.10.0
libtpu: 0.0.40
codegen_flags: <defaults>
</compile_context>

<pallas_src>
import jax
import jax.numpy as jnp
from jax import lax
from jax.experimental import pallas as pl
from jax.experimental.pallas import tpu as pltpu


# ----------------------------------------------------------------------------
# Fused kernel: Conv1d+ReLU  ->  encoder GRU  ->  greedy GRU decoder
# ----------------------------------------------------------------------------
def baseline_fused_kernel(x_ref, tok_ref,
                          cw_ref, cb_ref,
                          ewih_ref, ewhh_ref, ebih_ref, ebhh_ref,
                          emb_ref,
                          dwe_ref, dwc_ref, dwhh_ref, dbih_ref, dbhh_ref,
                          clw_ref, clb_ref,
                          out_ref,
                          gi_scr):
    f32 = jnp.float32
    bf16 = jnp.bfloat16
    BB, L, C = out_ref.shape          # batch block, decode length, num classes
    T = x_ref.shape[2] - 2            # conv length (== encoder feature size)
    H = cw_ref.shape[0]               # conv out channels == GRU hidden size
    S = H                             # encoder sequence length (conv channels)
    H3 = 3 * H                        # fused gate width [r | z | n]

    # ---- weights: load once, cast to bf16 (loop-invariant, hoisted) ----------
    cw = cw_ref[...].astype(bf16)          # (H, 3*Cin)   im2col conv weight
    cb = cb_ref[...]                       # (H, 1)       f32 bias
    ewih = ewih_ref[...].astype(bf16)      # (F, 3H)
    ewhh = ewhh_ref[...].astype(bf16)      # (H, 3H)
    ebih = ebih_ref[...]                   # (1, 3H)
    ebhh = ebhh_ref[...]                   # (1, 3H)
    dwhh = dwhh_ref[...].astype(bf16)      # (H, 3H)
    dbih = dbih_ref[...]                   # (1, 3H)
    dbhh = dbhh_ref[...]                   # (1, 3H)
    clw = clw_ref[...].astype(bf16)        # (H, C)
    clb = clb_ref[...]                     # (1, C)

    # ---- Conv1d(k=3, pad=1) + ReLU as ONE im2col GEMM over the whole batch ---
    # xwin rows ordered (k, c); columns ordered (b, t).
    xwins = []
    for b in range(BB):                                # static: BB tiny
        xb = x_ref[b].astype(bf16)                     # (Cin, T+2) zero-padded
        xwins.append(jnp.concatenate([xb[:, 0:T], xb[:, 1:T + 1], xb[:, 2:T + 2]],
                                     axis=0))          # (3*Cin, T)
    xwin = jnp.concatenate(xwins, axis=1)              # (3*Cin, BB*T)
    conv = jnp.dot(cw, xwin, preferred_element_type=f32)       # (H, BB*T)
    feats = jnp.maximum(conv + cb, 0.0)                # (S, BB*F) f32

    # ---- Encoder input-side gates: one GEMM per batch item, written to a -----
    # sequence-major (S, BB, 3H) VMEM scratch so the per-step read is contiguous.
    for b in range(BB):
        feats_b = feats[:, b * T:(b + 1) * T].astype(bf16)     # (S, F) lane slice
        gi_b = jnp.dot(feats_b, ewih, preferred_element_type=f32) + ebih  # (S, 3H)
        gi_scr[:, b:b + 1, :] = gi_b[:, None, :]

    # ---- Encoder GRU recurrence: one (H, 3H) GEMM per step -------------------
    h = jnp.zeros((BB, H), f32)
    for t in range(S):                                 # static unroll
        gi = gi_scr[t]                                 # (BB, 3H) contiguous load
        gh = jnp.dot(h.astype(bf16), ewhh, preferred_element_type=f32) + ebhh
        r = jax.nn.sigmoid(gi[:, 0:H] + gh[:, 0:H])
        z = jax.nn.sigmoid(gi[:, H:2 * H] + gh[:, H:2 * H])
        n = jnp.tanh(gi[:, 2 * H:H3] + r * gh[:, 2 * H:H3])
        h = (1.0 - z) * n + z * h                      # (BB, H)

    # context = encoder_outputs[:, -1, :] == final hidden (1-layer GRU);
    # decoder hidden initialized from the same state.
    ctx = h
    hd = h

    # ---- Decoder loop-invariants ----------------------------------------------
    # embedding folded into the decoder input-gate weights: (C, E)@(E, 3H)->(C, 3H)
    emb2g = jnp.dot(emb_ref[...].astype(bf16), dwe_ref[...].astype(bf16),
                    preferred_element_type=f32).astype(bf16)    # (C, 3H)
    # loop-invariant context contribution + input bias
    gic = jnp.dot(ctx.astype(bf16), dwc_ref[...].astype(bf16),
                  preferred_element_type=f32) + dbih            # (BB, 3H)

    # ---- Greedy autoregressive decoder ----------------------------------------
    iota_c = lax.broadcasted_iota(jnp.int32, (1, C), 1)
    tok = tok_ref[...]                                 # (BB, 1) int32
    for t in range(L):                                 # static unroll (L small)
        onehot = (tok == iota_c).astype(bf16)          # (BB, C) one-hot lookup
        gi = jnp.dot(onehot, emb2g, preferred_element_type=f32) + gic   # (BB, 3H)
        gh = jnp.dot(hd.astype(bf16), dwhh, preferred_element_type=f32) + dbhh
        r = jax.nn.sigmoid(gi[:, 0:H] + gh[:, 0:H])
        z = jax.nn.sigmoid(gi[:, H:2 * H] + gh[:, H:2 * H])
        n = jnp.tanh(gi[:, 2 * H:H3] + r * gh[:, 2 * H:H3])
        hd = (1.0 - z) * n + z * hd                    # (BB, H)

        pred = jnp.dot(hd.astype(bf16), clw, preferred_element_type=f32) + clb
        out_ref[:, t:t + 1, :] = pred[:, None, :]      # direct store (tiny output)

        # greedy feedback: first index attaining the row max (torch.argmax)
        maxv = jnp.max(pred, axis=1, keepdims=True)
        tok = jnp.min(jnp.where(pred == maxv, iota_c, C),
                      axis=1, keepdims=True).astype(jnp.int32)


# ----------------------------------------------------------------------------
# Wrapper: one pallas_call; only wrapper-side work is the tiny time-axis pad.
# ----------------------------------------------------------------------------
def baseline_forward(x, prev_tokens, params, *, batch_blocks=1):
    """x: (B, Cin, T) float32 (the tensor handed to Conv1d, PyTorch NCW);
       prev_tokens: (B, L) int; returns (B, L, num_classes) float32.

       batch_blocks=1 (default) keeps the whole batch in a single grid step
       (best on single-TC v5e/v6e).  On v7x pass batch_blocks=2 (requires
       B % 2 == 0) so the "parallel" grid axis shards across both TensorCores."""
    B, Cin, T = x.shape
    L = prev_tokens.shape[1]
    F_enc, H3 = params["enc_wih"].shape
    H = H3 // 3
    C = params["emb"].shape[0]
    assert B % batch_blocks == 0
    # Encoder GRU input size must equal the conv output length (the original
    # module hard-codes 80); the encoder sequence length equals H (conv channels).
    assert F_enc == T, (F_enc, T)
    assert params["enc_whh"].shape == (H, 3 * H)
    BB = B // batch_blocks

    xp = jnp.pad(x, ((0, 0), (0, 0), (1, 1)))          # pad time by 1 each side
    tok0 = prev_tokens[:, 0:1].astype(jnp.int32)       # first decoder tokens

    def rep(shape):                                    # whole-array, replicated
        return pl.BlockSpec(shape, lambda nb: (0,) * len(shape))

    return pl.pallas_call(
        baseline_fused_kernel,
        grid=(batch_blocks,),
        in_specs=[
            pl.BlockSpec((BB, Cin, T + 2), lambda nb: (nb, 0, 0)),   # x (padded)
            pl.BlockSpec((BB, 1), lambda nb: (nb, 0)),               # tok0
            rep(params["conv_w"].shape), rep(params["conv_b"].shape),
            rep(params["enc_wih"].shape), rep(params["enc_whh"].shape),
            rep(params["enc_bih"].shape), rep(params["enc_bhh"].shape),
            rep(params["emb"].shape),
            rep(params["dec_we"].shape), rep(params["dec_wc"].shape),
            rep(params["dec_whh"].shape),
            rep(params["dec_bih"].shape), rep(params["dec_bhh"].shape),
            rep(params["cls_w"].shape), rep(params["cls_b"].shape),
        ],
        out_specs=pl.BlockSpec((BB, L, C), lambda nb: (nb, 0, 0)),
        out_shape=jax.ShapeDtypeStruct((B, L, C), jnp.float32),
        scratch_shapes=[pltpu.VMEM((H, BB, 3 * H), jnp.float32)],  # seq-major gates
        compiler_params=pltpu.CompilerParams(
            dimension_semantics=("parallel",)),
    )(xp, tok0,
      params["conv_w"], params["conv_b"],
      params["enc_wih"], params["enc_whh"], params["enc_bih"], params["enc_bhh"],
      params["emb"],
      params["dec_we"], params["dec_wc"], params["dec_whh"],
      params["dec_bih"], params["dec_bhh"],
      params["cls_w"], params["cls_b"])


# ----------------------------------------------------------------------------
# Deterministic parameter init (shapes follow Baseline.__init__, JAX layouts).
# GRU gate order is PyTorch's [r, z, n]; gates are FUSED along the last axis
# (width 3H).  conv_w is the im2col layout: conv_w[h, k*Cin + c] == torch_w[h,c,k].
# ----------------------------------------------------------------------------
def init_params(key, input_dim, time_len, hidden_dim, embedding_dim, num_classes):
    H, E, C, F = hidden_dim, embedding_dim, num_classes, time_len
    ks = jax.random.split(key, 16)
    r = lambda k, shape: 0.1 * jax.random.normal(k, shape, jnp.float32)
    return {
        # Conv1d(input_dim, H, k=3, pad=1), im2col: (H, 3*Cin)
        "conv_w": r(ks[0], (H, 3 * input_dim)),
        "conv_b": r(ks[1], (H, 1)),
        # encoder GRU(input_size=time_len, hidden=H): fused-gate transposed weights
        "enc_wih": r(ks[2], (F, 3 * H)),       # == torch weight_ih_l0.T
        "enc_whh": r(ks[3], (H, 3 * H)),       # == torch weight_hh_l0.T
        "enc_bih": r(ks[4], (1, 3 * H)),
        "enc_bhh": r(ks[5], (1, 3 * H)),
        # embedding(num_classes, E)
        "emb": r(ks[6], (C, E)),
        # decoder GRU(E + H, H): weight_ih rows split as [embedded | context]
        "dec_we": r(ks[7], (E, 3 * H)),
        "dec_wc": r(ks[8], (H, 3 * H)),
        "dec_whh": r(ks[9], (H, 3 * H)),
        "dec_bih": r(ks[10], (1, 3 * H)),
        "dec_bhh": r(ks[11], (1, 3 * H)),
        # classifier Linear(H, num_classes): cls_w == torch W.T
        "cls_w": r(ks[12], (H, C)),
        "cls_b": r(ks[13], (1, C)),
    }


if __name__ == "__main__":
    # Small shapes consistent with the module (the encoder GRU feature size ==
    # conv output length; the original hard-codes 80, here T=16).
    B, Cin, T = 2, 4, 16
    H, E, C, L = 32, 8, 12, 6

    key = jax.random.PRNGKey(0)
    k_x, k_tok, k_p = jax.random.split(key, 3)
    x = jax.random.normal(k_x, (B, Cin, T), jnp.float32)
    prev_tokens = jax.random.randint(k_tok, (B, L), 0, C, jnp.int32)
    params = init_params(k_p, Cin, T, H, E, C)

    fwd = jax.jit(baseline_forward)
    out = jax.block_until_ready(fwd(x, prev_tokens, params))

    assert out.shape == (B, L, C), out.shape
    assert bool(jnp.all(jnp.isfinite(out)))
    print("KERNEL_OK")
</pallas_src>

<mosaic_0001>
module attributes {stable_mosaic.version = 11 : i64} {
  func.func @baseline_fused_kernel(%arg0: i32, %arg1: memref<2x4x18xf32, #tpu.memory_space<vmem>>, %arg2: memref<2x1xi32, #tpu.memory_space<vmem>>, %arg3: memref<32x12xf32, #tpu.memory_space<vmem>>, %arg4: memref<32x1xf32, #tpu.memory_space<vmem>>, %arg5: memref<16x96xf32, #tpu.memory_space<vmem>>, %arg6: memref<32x96xf32, #tpu.memory_space<vmem>>, %arg7: memref<1x96xf32, #tpu.memory_space<vmem>>, %arg8: memref<1x96xf32, #tpu.memory_space<vmem>>, %arg9: memref<12x8xf32, #tpu.memory_space<vmem>>, %arg10: memref<8x96xf32, #tpu.memory_space<vmem>>, %arg11: memref<32x96xf32, #tpu.memory_space<vmem>>, %arg12: memref<32x96xf32, #tpu.memory_space<vmem>>, %arg13: memref<1x96xf32, #tpu.memory_space<vmem>>, %arg14: memref<1x96xf32, #tpu.memory_space<vmem>>, %arg15: memref<32x12xf32, #tpu.memory_space<vmem>>, %arg16: memref<1x12xf32, #tpu.memory_space<vmem>>, %arg17: memref<2x6x12xf32, #tpu.memory_space<vmem>>, %arg18: memref<32x2x96xf32, #tpu.memory_space<vmem>>) attributes {dimension_semantics = [#tpu.dimension_semantics<parallel>], iteration_bounds = array<i64: 1>, scalar_prefetch = 0 : i64, scratch_operands = 1 : i64, tpu.core_type = #tpu.core_type<tc>, window_params = [{transform_indices = @transform_0, window_bounds = array<i64: 2, 4, 18>}, {transform_indices = @transform_1, window_bounds = array<i64: 2, 1>}, {pipeline_mode = #tpu.pipeline_mode<synchronous>, transform_indices = @transform_2, window_bounds = array<i64: 32, 12>}, {pipeline_mode = #tpu.pipeline_mode<synchronous>, transform_indices = @transform_3, window_bounds = array<i64: 32, 1>}, {pipeline_mode = #tpu.pipeline_mode<synchronous>, transform_indices = @transform_4, window_bounds = array<i64: 16, 96>}, {pipeline_mode = #tpu.pipeline_mode<synchronous>, transform_indices = @transform_5, window_bounds = array<i64: 32, 96>}, {pipeline_mode = #tpu.pipeline_mode<synchronous>, transform_indices = @transform_6, window_bounds = array<i64: 1, 96>}, {pipeline_mode = #tpu.pipeline_mode<synchronous>, transform_indices = @transform_7, window_bounds = array<i64: 1, 96>}, {pipeline_mode = #tpu.pipeline_mode<synchronous>, transform_indices = @transform_8, window_bounds = array<i64: 12, 8>}, {pipeline_mode = #tpu.pipeline_mode<synchronous>, transform_indices = @transform_9, window_bounds = array<i64: 8, 96>}, {pipeline_mode = #tpu.pipeline_mode<synchronous>, transform_indices = @transform_10, window_bounds = array<i64: 32, 96>}, {pipeline_mode = #tpu.pipeline_mode<synchronous>, transform_indices = @transform_11, window_bounds = array<i64: 32, 96>}, {pipeline_mode = #tpu.pipeline_mode<synchronous>, transform_indices = @transform_12, window_bounds = array<i64: 1, 96>}, {pipeline_mode = #tpu.pipeline_mode<synchronous>, transform_indices = @transform_13, window_bounds = array<i64: 1, 96>}, {pipeline_mode = #tpu.pipeline_mode<synchronous>, transform_indices = @transform_14, window_bounds = array<i64: 32, 12>}, {pipeline_mode = #tpu.pipeline_mode<synchronous>, transform_indices = @transform_15, window_bounds = array<i64: 1, 12>}, {transform_indices = @transform_16, window_bounds = array<i64: 2, 6, 12>}]} {
    %c0 = arith.constant 0 : index
    %c0_0 = arith.constant 0 : index
    %0 = vector.load %arg3[%c0, %c0_0] : memref<32x12xf32, #tpu.memory_space<vmem>>, vector<32x12xf32>
    %1 = arith.truncf %0 : vector<32x12xf32> to vector<32x12xbf16>
    %c0_1 = arith.constant 0 : index
    %c0_2 = arith.constant 0 : index
    %2 = vector.load %arg4[%c0_1, %c0_2] : memref<32x1xf32, #tpu.memory_space<vmem>>, vector<32x1xf32>
    %c0_3 = arith.constant 0 : index
    %c0_4 = arith.constant 0 : index
    %3 = vector.load %arg5[%c0_3, %c0_4] : memref<16x96xf32, #tpu.memory_space<vmem>>, vector<16x96xf32>
    %4 = arith.truncf %3 : vector<16x96xf32> to vector<16x96xbf16>
    %c0_5 = arith.constant 0 : index
    %c0_6 = arith.constant 0 : index
    %5 = vector.load %arg6[%c0_5, %c0_6] : memref<32x96xf32, #tpu.memory_space<vmem>>, vector<32x96xf32>
    %6 = arith.truncf %5 : vector<32x96xf32> to vector<32x96xbf16>
    %c0_7 = arith.constant 0 : index
    %c0_8 = arith.constant 0 : index
    %7 = vector.load %arg7[%c0_7, %c0_8] : memref<1x96xf32, #tpu.memory_space<vmem>>, vector<1x96xf32>
    %c0_9 = arith.constant 0 : index
    %c0_10 = arith.constant 0 : index
    %8 = vector.load %arg8[%c0_9, %c0_10] : memref<1x96xf32, #tpu.memory_space<vmem>>, vector<1x96xf32>
    %c0_11 = arith.constant 0 : index
    %c0_12 = arith.constant 0 : index
    %9 = vector.load %arg12[%c0_11, %c0_12] : memref<32x96xf32, #tpu.memory_space<vmem>>, vector<32x96xf32>
    %10 = arith.truncf %9 : vector<32x96xf32> to vector<32x96xbf16>
    %c0_13 = arith.constant 0 : index
    %c0_14 = arith.constant 0 : index
    %11 = vector.load %arg13[%c0_13, %c0_14] : memref<1x96xf32, #tpu.memory_space<vmem>>, vector<1x96xf32>
    %c0_15 = arith.constant 0 : index
    %c0_16 = arith.constant 0 : index
    %12 = vector.load %arg14[%c0_15, %c0_16] : memref<1x96xf32, #tpu.memory_space<vmem>>, vector<1x96xf32>
    %c0_17 = arith.constant 0 : index
    %c0_18 = arith.constant 0 : index
    %13 = vector.load %arg15[%c0_17, %c0_18] : memref<32x12xf32, #tpu.memory_space<vmem>>, vector<32x12xf32>
    %14 = arith.truncf %13 : vector<32x12xf32> to vector<32x12xbf16>
    %c0_19 = arith.constant 0 : index
    %c0_20 = arith.constant 0 : index
    %15 = vector.load %arg16[%c0_19, %c0_20] : memref<1x12xf32, #tpu.memory_space<vmem>>, vector<1x12xf32>
    %c0_21 = arith.constant 0 : index
    %c0_22 = arith.constant 0 : index
    %c0_23 = arith.constant 0 : index
    %16 = vector.load %arg1[%c0_21, %c0_22, %c0_23] : memref<2x4x18xf32, #tpu.memory_space<vmem>>, vector<1x4x18xf32>
    %17 = vector.shape_cast %16 : vector<1x4x18xf32> to vector<4x18xf32>
    %18 = arith.truncf %17 : vector<4x18xf32> to vector<4x18xbf16>
    %19 = vector.extract_strided_slice %18 {offsets = [0, 0], sizes = [4, 16], strides = [1, 1]} : vector<4x18xbf16> to vector<4x16xbf16>
    %20 = vector.extract_strided_slice %18 {offsets = [0, 1], sizes = [4, 16], strides = [1, 1]} : vector<4x18xbf16> to vector<4x16xbf16>
    %21 = vector.extract_strided_slice %18 {offsets = [0, 2], sizes = [4, 16], strides = [1, 1]} : vector<4x18xbf16> to vector<4x16xbf16>
    %22 = tpu.concatenate %19, %20, %21 in 0 : vector<4x16xbf16>, vector<4x16xbf16>, vector<4x16xbf16> -> vector<12x16xbf16>
    %c1 = arith.constant 1 : index
    %c0_24 = arith.constant 0 : index
    %c0_25 = arith.constant 0 : index
    %23 = vector.load %arg1[%c1, %c0_24, %c0_25] : memref<2x4x18xf32, #tpu.memory_space<vmem>>, vector<1x4x18xf32>
    %24 = vector.shape_cast %23 : vector<1x4x18xf32> to vector<4x18xf32>
    %25 = arith.truncf %24 : vector<4x18xf32> to vector<4x18xbf16>
    %26 = vector.extract_strided_slice %25 {offsets = [0, 0], sizes = [4, 16], strides = [1, 1]} : vector<4x18xbf16> to vector<4x16xbf16>
    %27 = vector.extract_strided_slice %25 {offsets = [0, 1], sizes = [4, 16], strides = [1, 1]} : vector<4x18xbf16> to vector<4x16xbf16>
    %28 = vector.extract_strided_slice %25 {offsets = [0, 2], sizes = [4, 16], strides = [1, 1]} : vector<4x18xbf16> to vector<4x16xbf16>
    %29 = tpu.concatenate %26, %27, %28 in 0 : vector<4x16xbf16>, vector<4x16xbf16>, vector<4x16xbf16> -> vector<12x16xbf16>
    %30 = tpu.concatenate %22, %29 in 1 : vector<12x16xbf16>, vector<12x16xbf16> -> vector<12x32xbf16>
    %cst = arith.constant dense<0.000000e+00> : vector<32x32xf32>
    %31 = tpu.matmul %1, %30, %cst {dimension_numbers = #tpu.dot_dimension_numbers<[1], [0], [0], [1], [0, 0, 1, 1], [], []>} : vector<32x12xbf16>, vector<12x32xbf16>, vector<32x32xf32> -> vector<32x32xf32>
    %32 = vector.broadcast %2 : vector<32x1xf32> to vector<32x32xf32>
    %33 = arith.addf %31, %32 : vector<32x32xf32>
    %cst_26 = arith.constant 0.000000e+00 : f32
    %34 = vector.broadcast %cst_26 : f32 to vector<32x32xf32>
    %35 = arith.maximumf %33, %34 : vector<32x32xf32>
    %36 = vector.extract_strided_slice %35 {offsets = [0, 0], sizes = [32, 16], strides = [1, 1]} : vector<32x32xf32> to vector<32x16xf32>
    %37 = arith.truncf %36 : vector<32x16xf32> to vector<32x16xbf16>
    %cst_27 = arith.constant dense<0.000000e+00> : vector<32x96xf32>
    %38 = tpu.matmul %37, %4, %cst_27 {dimension_numbers = #tpu.dot_dimension_numbers<[1], [0], [0], [1], [0, 0, 1, 1], [], []>} : vector<32x16xbf16>, vector<16x96xbf16>, vector<32x96xf32> -> vector<32x96xf32>
    %39 = vector.broadcast %7 : vector<1x96xf32> to vector<32x96xf32>
    %40 = arith.addf %38, %39 : vector<32x96xf32>
    %41 = vector.shape_cast %40 : vector<32x96xf32> to vector<32x1x96xf32>
    %c0_28 = arith.constant 0 : index
    %c0_29 = arith.constant 0 : index
    %c0_30 = arith.constant 0 : index
    %42 = vector.load %arg18[%c0_28, %c0_29, %c0_30] : memref<32x2x96xf32, #tpu.memory_space<vmem>>, vector<32x1x96xf32>
    tpu.vector_store %arg18[%c0_28, %c0_29, %c0_30], %41 {strides = array<i32>} : memref<32x2x96xf32, #tpu.memory_space<vmem>>, vector<32x1x96xf32>,
    %43 = vector.extract_strided_slice %35 {offsets = [0, 16], sizes = [32, 16], strides = [1, 1]} : vector<32x32xf32> to vector<32x16xf32>
    %44 = arith.truncf %43 : vector<32x16xf32> to vector<32x16xbf16>
    %cst_31 = arith.constant dense<0.000000e+00> : vector<32x96xf32>
    %45 = tpu.matmul %44, %4, %cst_31 {dimension_numbers = #tpu.dot_dimension_numbers<[1], [0], [0], [1], [0, 0, 1, 1], [], []>} : vector<32x16xbf16>, vector<16x96xbf16>, vector<32x96xf32> -> vector<32x96xf32>
    %46 = vector.broadcast %7 : vector<1x96xf32> to vector<32x96xf32>
    %47 = arith.addf %45, %46 : vector<32x96xf32>
    %48 = vector.shape_cast %47 : vector<32x96xf32> to vector<32x1x96xf32>
    %c0_32 = arith.constant 0 : index
    %c1_33 = arith.constant 1 : index
    %c0_34 = arith.constant 0 : index
    %49 = vector.load %arg18[%c0_32, %c1_33, %c0_34] : memref<32x2x96xf32, #tpu.memory_space<vmem>>, vector<32x1x96xf32>
    tpu.vector_store %arg18[%c0_32, %c1_33, %c0_34], %48 {strides = array<i32>} : memref<32x2x96xf32, #tpu.memory_space<vmem>>, vector<32x1x96xf32>,
    %cst_35 = arith.constant 0.000000e+00 : f32
    %50 = vector.broadcast %cst_35 : f32 to vector<2x32xf32>
    %c0_36 = arith.constant 0 : index
    %c0_37 = arith.constant 0 : index
    %c0_38 = arith.constant 0 : index
    %51 = vector.load %arg18[%c0_36, %c0_37, %c0_38] : memref<32x2x96xf32, #tpu.memory_space<vmem>>, vector<1x2x96xf32>
    %52 = vector.shape_cast %51 : vector<1x2x96xf32> to vector<2x96xf32>
    %53 = arith.truncf %50 : vector<2x32xf32> to vector<2x32xbf16>
    %cst_39 = arith.constant dense<0.000000e+00> : vector<2x96xf32>
    %54 = tpu.matmul %53, %6, %cst_39 {dimension_numbers = #tpu.dot_dimension_numbers<[1], [0], [0], [1], [0, 0, 1, 1], [], []>} : vector<2x32xbf16>, vector<32x96xbf16>, vector<2x96xf32> -> vector<2x96xf32>
    %55 = vector.broadcast %8 : vector<1x96xf32> to vector<2x96xf32>
    %56 = arith.addf %54, %55 : vector<2x96xf32>
    %57 = vector.extract_strided_slice %52 {offsets = [0, 0], sizes = [2, 32], strides = [1, 1]} : vector<2x96xf32> to vector<2x32xf32>
    %58 = vector.extract_strided_slice %56 {offsets = [0, 0], sizes = [2, 32], strides = [1, 1]} : vector<2x96xf32> to vector<2x32xf32>
    %59 = arith.addf %57, %58 : vector<2x32xf32>
    %60 = arith.negf %59 : vector<2x32xf32>
    %61 = math.exp %60 : vector<2x32xf32>
    %cst_40 = arith.constant 1.000000e+00 : f32
    %62 = vector.broadcast %cst_40 : f32 to vector<2x32xf32>
    %63 = arith.addf %62, %61 : vector<2x32xf32>
    %64 = arith.divf %62, %63 : vector<2x32xf32>
    %65 = vector.extract_strided_slice %52 {offsets = [0, 32], sizes = [2, 32], strides = [1, 1]} : vector<2x96xf32> to vector<2x32xf32>
    %66 = vector.extract_strided_slice %56 {offsets = [0, 32], sizes = [2, 32], strides = [1, 1]} : vector<2x96xf32> to vector<2x32xf32>
    %67 = arith.addf %65, %66 : vector<2x32xf32>
    %68 = arith.negf %67 : vector<2x32xf32>
    %69 = math.exp %68 : vector<2x32xf32>
    %cst_41 = arith.constant 1.000000e+00 : f32
    %70 = vector.broadcast %cst_41 : f32 to vector<2x32xf32>
    %71 = arith.addf %70, %69 : vector<2x32xf32>
    %72 = arith.divf %70, %71 : vector<2x32xf32>
    %73 = vector.extract_strided_slice %52 {offsets = [0, 64], sizes = [2, 32], strides = [1, 1]} : vector<2x96xf32> to vector<2x32xf32>
    %74 = vector.extract_strided_slice %56 {offsets = [0, 64], sizes = [2, 32], strides = [1, 1]} : vector<2x96xf32> to vector<2x32xf32>
    %75 = arith.mulf %64, %74 : vector<2x32xf32>
    %76 = arith.addf %73, %75 : vector<2x32xf32>
    %77 = math.tanh %76 : vector<2x32xf32>
    %cst_42 = arith.constant 1.000000e+00 : f32
    %78 = vector.broadcast %cst_42 : f32 to vector<2x32xf32>
    %79 = arith.subf %78, %72 : vector<2x32xf32>
    %80 = arith.mulf %79, %77 : vector<2x32xf32>
    %81 = arith.mulf %72, %50 : vector<2x32xf32>
    %82 = arith.addf %80, %81 : vector<2x32xf32>
    %c1_43 = arith.constant 1 : index
    %c0_44 = arith.constant 0 : index
    %c0_45 = arith.constant 0 : index
    %83 = vector.load %arg18[%c1_43, %c0_44, %c0_45] : memref<32x2x96xf32, #tpu.memory_space<vmem>>, vector<1x2x96xf32>
    %84 = vector.shape_cast %83 : vector<1x2x96xf32> to vector<2x96xf32>
    %85 = arith.truncf %82 : vector<2x32xf32> to vector<2x32xbf16>
    %cst_46 = arith.constant dense<0.000000e+00> : vector<2x96xf32>
    %86 = tpu.matmul %85, %6, %cst_46 {dimension_numbers = #tpu.dot_dimension_numbers<[1], [0], [0], [1], [0, 0, 1, 1], [], []>} : vector<2x32xbf16>, vector<32x96xbf16>, vector<2x96xf32> -> vector<2x96xf32>
    %87 = vector.broadcast %8 : vector<1x96xf32> to vector<2x96xf32>
    %88 = arith.addf %86, %87 : vector<2x96xf32>
    %89 = vector.extract_strided_slice %84 {offsets = [0, 0], sizes = [2, 32], strides = [1, 1]} : vector<2x96xf32> to vector<2x32xf32>
    %90 = vector.extract_strided_slice %88 {offsets = [0, 0], sizes = [2, 32], strides = [1, 1]} : vector<2x96xf32> to vector<2x32xf32>
    %91 = arith.addf %89, %90 : vector<2x32xf32>
    %92 = arith.negf %91 : vector<2x32xf32>
    %93 = math.exp %92 : vector<2x32xf32>
    %cst_47 = arith.constant 1.000000e+00 : f32
    %94 = vector.broadcast %cst_47 : f32 to vector<2x32xf32>
    %95 = arith.addf %94, %93 : vector<2x32xf32>
    %96 = arith.divf %94, %95 : vector<2x32xf32>
    %97 = vector.extract_strided_slice %84 {offsets = [0, 32], sizes = [2, 32], strides = [1, 1]} : vector<2x96xf32> to vector<2x32xf32>
    %98 = vector.extract_strided_slice %88 {offsets = [0, 32], sizes = [2, 32], strides = [1, 1]} : vector<2x96xf32> to vector<2x32xf32>
    %99 = arith.addf %97, %98 : vector<2x32xf32>
    %100 = arith.negf %99 : vector<2x32xf32>
    %101 = math.exp %100 : vector<2x32xf32>
    %cst_48 = arith.constant 1.000000e+00 : f32
    %102 = vector.broadcast %cst_48 : f32 to vector<2x32xf32>
    %103 = arith.addf %102, %101 : vector<2x32xf32>
    %104 = arith.divf %102, %103 : vector<2x32xf32>
    %105 = vector.extract_strided_slice %84 {offsets = [0, 64], sizes = [2, 32], strides = [1, 1]} : vector<2x96xf32> to vector<2x32xf32>
    %106 = vector.extract_strided_slice %88 {offsets = [0, 64], sizes = [2, 32], strides = [1, 1]} : vector<2x96xf32> to vector<2x32xf32>
    %107 = arith.mulf %96, %106 : vector<2x32xf32>
    %108 = arith.addf %105, %107 : vector<2x32xf32>
    %109 = math.tanh %108 : vector<2x32xf32>
    %cst_49 = arith.constant 1.000000e+00 : f32
    %110 = vector.broadcast %cst_49 : f32 to vector<2x32xf32>
    %111 = arith.subf %110, %104 : vector<2x32xf32>
    %112 = arith.mulf %111, %109 : vector<2x32xf32>
    %113 = arith.mulf %104, %82 : vector<2x32xf32>
    %114 = arith.addf %112, %113 : vector<2x32xf32>
    %c2 = arith.constant 2 : index
    %c0_50 = arith.constant 0 : index
    %c0_51 = arith.constant 0 : index
    %115 = vector.load %arg18[%c2, %c0_50, %c0_51] : memref<32x2x96xf32, #tpu.memory_space<vmem>>, vector<1x2x96xf32>
    %116 = vector.shape_cast %115 : vector<1x2x96xf32> to vector<2x96xf32>
    %117 = arith.truncf %114 : vector<2x32xf32> to vector<2x32xbf16>
    %cst_52 = arith.constant dense<0.000000e+00> : vector<2x96xf32>
    %118 = tpu.matmul %117, %6, %cst_52 {dimension_numbers = #tpu.dot_dimension_numbers<[1], [0], [0], [1], [0, 0, 1, 1], [], []>} : vector<2x32xbf16>, vector<32x96xbf16>, vector<2x96xf32> -> vector<2x96xf32>
    %119 = vector.broadcast %8 : vector<1x96xf32> to vector<2x96xf32>
    %120 = arith.addf %118, %119 : vector<2x96xf32>
    %121 = vector.extract_strided_slice %116 {offsets = [0, 0], sizes = [2, 32], strides = [1, 1]} : vector<2x96xf32> to vector<2x32xf32>
    %122 = vector.extract_strided_slice %120 {offsets = [0, 0], sizes = [2, 32], strides = [1, 1]} : vector<2x96xf32> to vector<2x32xf32>
    %123 = arith.addf %121, %122 : vector<2x32xf32>
    %124 = arith.negf %123 : vector<2x32xf32>
    %125 = math.exp %124 : vector<2x32xf32>
    %cst_53 = arith.constant 1.000000e+00 : f32
    %126 = vector.broadcast %cst_53 : f32 to vector<2x32xf32>
    %127 = arith.addf %126, %125 : vector<2x32xf32>
    %128 = arith.divf %126, %127 : vector<2x32xf32>
    %129 = vector.extract_strided_slice %116 {offsets = [0, 32], sizes = [2, 32], strides = [1, 1]} : vector<2x96xf32> to vector<2x32xf32>
    %130 = vector.extract_strided_slice %120 {offsets = [0, 32], sizes = [2, 32], strides = [1, 1]} : vector<2x96xf32> to vector<2x32xf32>
    %131 = arith.addf %129, %130 : vector<2x32xf32>
    %132 = arith.negf %131 : vector<2x32xf32>
    %133 = math.exp %132 : vector<2x32xf32>
    %cst_54 = arith.constant 1.000000e+00 : f32
    %134 = vector.broadcast %cst_54 : f32 to vector<2x32xf32>
    %135 = arith.addf %134, %133 : vector<2x32xf32>
    %136 = arith.divf %134, %135 : vector<2x32xf32>
    %137 = vector.extract_strided_slice %116 {offsets = [0, 64], sizes = [2, 32], strides = [1, 1]} : vector<2x96xf32> to vector<2x32xf32>
    %138 = vector.extract_strided_slice %120 {offsets = [0, 64], sizes = [2, 32], strides = [1, 1]} : vector<2x96xf32> to vector<2x32xf32>
    %139 = arith.mulf %128, %138 : vector<2x32xf32>
    %140 = arith.addf %137, %139 : vector<2x32xf32>
    %141 = math.tanh %140 : vector<2x32xf32>
    %cst_55 = arith.constant 1.000000e+00 : f32
    %142 = vector.broadcast %cst_55 : f32 to vector<2x32xf32>
    %143 = arith.subf %142, %136 : vector<2x32xf32>
    %144 = arith.mulf %143, %141 : vector<2x32xf32>
    %145 = arith.mulf %136, %114 : vector<2x32xf32>
    %146 = arith.addf %144, %145 : vector<2x32xf32>
    %c3 = arith.constant 3 : index
    %c0_56 = arith.constant 0 : index
    %c0_57 = arith.constant 0 : index
    %147 = vector.load %arg18[%c3, %c0_56, %c0_57] : memref<32x2x96xf32, #tpu.memory_space<vmem>>, vector<1x2x96xf32>
    %148 = vector.shape_cast %147 : vector<1x2x96xf32> to vector<2x96xf32>
    %149 = arith.truncf %146 : vector<2x32xf32> to vector<2x32xbf16>
    %cst_58 = arith.constant dense<0.000000e+00> : vector<2x96xf32>
    %150 = tpu.matmul %149, %6, %cst_58 {dimension_numbers = #tpu.dot_dimension_numbers<[1], [0], [0], [1], [0, 0, 1, 1], [], []>} : vector<2x32xbf16>, vector<32x96xbf16>, vector<2x96xf32> -> vector<2x96xf32>
    %151 = vector.broadcast %8 : vector<1x96xf32> to vector<2x96xf32>
    %152 = arith.addf %150, %151 : vector<2x96xf32>
    %153 = vector.extract_strided_slice %148 {offsets = [0, 0], sizes = [2, 32], strides = [1, 1]} : vector<2x96xf32> to vector<2x32xf32>
    %154 = vector.extract_strided_slice %152 {offsets = [0, 0], sizes = [2, 32], strides = [1, 1]} : vector<2x96xf32> to vector<2x32xf32>
    %155 = arith.addf %153, %154 : vector<2x32xf32>
    %156 = arith.negf %155 : vector<2x32xf32>
    %157 = math.exp %156 : vector<2x32xf32>
    %cst_59 = arith.constant 1.000000e+00 : f32
    %158 = vector.broadcast %cst_59 : f32 to vector<2x32xf32>
    %159 = arith.addf %158, %157 : vector<2x32xf32>
    %160 = arith.divf %158, %159 : vector<2x32xf32>
    %161 = vector.extract_strided_slice %148 {offsets = [0, 32], sizes = [2, 32], strides = [1, 1]} : vector<2x96xf32> to vector<2x32xf32>
    %162 = vector.extract_strided_slice %152 {offsets = [0, 32], sizes = [2, 32], strides = [1, 1]} : vector<2x96xf32> to vector<2x32xf32>
    %163 = arith.addf %161, %162 : vector<2x32xf32>
    %164 = arith.negf %163 : vector<2x32xf32>
    %165 = math.exp %164 : vector<2x32xf32>
    %cst_60 = arith.constant 1.000000e+00 : f32
    %166 = vector.broadcast %cst_60 : f32 to vector<2x32xf32>
    %167 = arith.addf %166, %165 : vector<2x32xf32>
    %168 = arith.divf %166, %167 : vector<2x32xf32>
    %169 = vector.extract_strided_slice %148 {offsets = [0, 64], sizes = [2, 32], strides = [1, 1]} : vector<2x96xf32> to vector<2x32xf32>
    %170 = vector.extract_strided_slice %152 {offsets = [0, 64], sizes = [2, 32], strides = [1, 1]} : vector<2x96xf32> to vector<2x32xf32>
    %171 = arith.mulf %160, %170 : vector<2x32xf32>
    %172 = arith.addf %169, %171 : vector<2x32xf32>
    %173 = math.tanh %172 : vector<2x32xf32>
    %cst_61 = arith.constant 1.000000e+00 : f32
    %174 = vector.broadcast %cst_61 : f32 to vector<2x32xf32>
    %175 = arith.subf %174, %168 : vector<2x32xf32>
    %176 = arith.mulf %175, %173 : vector<2x32xf32>
    %177 = arith.mulf %168, %146 : vector<2x32xf32>
    %178 = arith.addf %176, %177 : vector<2x32xf32>
    %c4 = arith.constant 4 : index
    %c0_62 = arith.constant 0 : index
    %c0_63 = arith.constant 0 : index
    %179 = vector.load %arg18[%c4, %c0_62, %c0_63] : memref<32x2x96xf32, #tpu.memory_space<vmem>>, vector<1x2x96xf32>
    %180 = vector.shape_cast %179 : vector<1x2x96xf32> to vector<2x96xf32>
    %181 = arith.truncf %178 : vector<2x32xf32> to vector<2x32xbf16>
    %cst_64 = arith.constant dense<0.000000e+00> : vector<2x96xf32>
    %182 = tpu.matmul %181, %6, %cst_64 {dimension_numbers = #tpu.dot_dimension_numbers<[1], [0], [0], [1], [0, 0, 1, 1], [], []>} : vector<2x32xbf16>, vector<32x96xbf16>, vector<2x96xf32> -> vector<2x96xf32>
    %183 = vector.broadcast %8 : vector<1x96xf32> to vector<2x96xf32>
    %184 = arith.addf %182, %183 : vector<2x96xf32>
    %185 = vector.extract_strided_slice %180 {offsets = [0, 0], sizes = [2, 32], strides = [1, 1]} : vector<2x96xf32> to vector<2x32xf32>
    %186 = vector.extract_strided_slice %184 {offsets = [0, 0], sizes = [2, 32], strides = [1, 1]} : vector<2x96xf32> to vector<2x32xf32>
    %187 = arith.addf %185, %186 : vector<2x32xf32>
    %188 = arith.negf %187 : vector<2x32xf32>
    %189 = math.exp %188 : vector<2x32xf32>
    %cst_65 = arith.constant 1.000000e+00 : f32
    %190 = vector.broadcast %cst_65 : f32 to vector<2x32xf32>
    %191 = arith.addf %190, %189 : vector<2x32xf32>
    %192 = arith.divf %190, %191 : vector<2x32xf32>
    %193 = vector.extract_strided_slice %180 {offsets = [0, 32], sizes = [2, 32], strides = [1, 1]} : vector<2x96xf32> to vector<2x32xf32>
    %194 = vector.extract_strided_slice %184 {offsets = [0, 32], sizes = [2, 32], strides = [1, 1]} : vector<2x96xf32> to vector<2x32xf32>
    %195 = arith.addf %193, %194 : vector<2x32xf32>
    %196 = arith.negf %195 : vector<2x32xf32>
    %197 = math.exp %196 : vector<2x32xf32>
    %cst_66 = arith.constant 1.000000e+00 : f32
    %198 = vector.broadcast %cst_66 : f32 to vector<2x32xf32>
    %199 = arith.addf %198, %197 : vector<2x32xf32>
    %200 = arith.divf %198, %199 : vector<2x32xf32>
    %201 = vector.extract_strided_slice %180 {offsets = [0, 64], sizes = [2, 32], strides = [1, 1]} : vector<2x96xf32> to vector<2x32xf32>
    %202 = vector.extract_strided_slice %184 {offsets = [0, 64], sizes = [2, 32], strides = [1, 1]} : vector<2x96xf32> to vector<2x32xf32>
    %203 = arith.mulf %192, %202 : vector<2x32xf32>
    %204 = arith.addf %201, %203 : vector<2x32xf32>
    %205 = math.tanh %204 : vector<2x32xf32>
    %cst_67 = arith.constant 1.000000e+00 : f32
    %206 = vector.broadcast %cst_67 : f32 to vector<2x32xf32>
    %207 = arith.subf %206, %200 : vector<2x32xf32>
    %208 = arith.mulf %207, %205 : vector<2x32xf32>
    %209 = arith.mulf %200, %178 : vector<2x32xf32>
    %210 = arith.addf %208, %209 : vector<2x32xf32>
    %c5 = arith.constant 5 : index
    %c0_68 = arith.constant 0 : index
    %c0_69 = arith.constant 0 : index
    %211 = vector.load %arg18[%c5, %c0_68, %c0_69] : memref<32x2x96xf32, #tpu.memory_space<vmem>>, vector<1x2x96xf32>
    %212 = vector.shape_cast %211 : vector<1x2x96xf32> to vector<2x96xf32>
    %213 = arith.truncf %210 : vector<2x32xf32> to vector<2x32xbf16>
    %cst_70 = arith.constant dense<0.000000e+00> : vector<2x96xf32>
    %214 = tpu.matmul %213, %6, %cst_70 {dimension_numbers = #tpu.dot_dimension_numbers<[1], [0], [0], [1], [0, 0, 1, 1], [], []>} : vector<2x32xbf16>, vector<32x96xbf16>, vector<2x96xf32> -> vector<2x96xf32>
    %215 = vector.broadcast %8 : vector<1x96xf32> to vector<2x96xf32>
    %216 = arith.addf %214, %215 : vector<2x96xf32>
    %217 = vector.extract_strided_slice %212 {offsets = [0, 0], sizes = [2, 32], strides = [1, 1]} : vector<2x96xf32> to vector<2x32xf32>
    %218 = vector.extract_strided_slice %216 {offsets = [0, 0], sizes = [2, 32], strides = [1, 1]} : vector<2x96xf32> to vector<2x32xf32>
    %219 = arith.addf %217, %218 : vector<2x32xf32>
    %220 = arith.negf %219 : vector<2x32xf32>
    %221 = math.exp %220 : vector<2x32xf32>
    %cst_71 = arith.constant 1.000000e+00 : f32
    %222 = vector.broadcast %cst_71 : f32 to vector<2x32xf32>
    %223 = arith.addf %222, %221 : vector<2x32xf32>
    %224 = arith.divf %222, %223 : vector<2x32xf32>
    %225 = vector.extract_strided_slice %212 {offsets = [0, 32], sizes = [2, 32], strides = [1, 1]} : vector<2x96xf32> to vector<2x32xf32>
    %226 = vector.extract_strided_slice %216 {offsets = [0, 32], sizes = [2, 32], strides = [1, 1]} : vector<2x96xf32> to vector<2x32xf32>
    %227 = arith.addf %225, %226 : vector<2x32xf32>
    %228 = arith.negf %227 : vector<2x32xf32>
    %229 = math.exp %228 : vector<2x32xf32>
    %cst_72 = arith.constant 1.000000e+00 : f32
    %230 = vector.broadcast %cst_72 : f32 to vector<2x32xf32>
    %231 = arith.addf %230, %229 : vector<2x32xf32>
    %232 = arith.divf %230, %231 : vector<2x32xf32>
    %233 = vector.extract_strided_slice %212 {offsets = [0, 64], sizes = [2, 32], strides = [1, 1]} : vector<2x96xf32> to vector<2x32xf32>
    %234 = vector.extract_strided_slice %216 {offsets = [0, 64], sizes = [2, 32], strides = [1, 1]} : vector<2x96xf32> to vector<2x32xf32>
    %235 = arith.mulf %224, %234 : vector<2x32xf32>
    %236 = arith.addf %233, %235 : vector<2x32xf32>
    %237 = math.tanh %236 : vector<2x32xf32>
    %cst_73 = arith.constant 1.000000e+00 : f32
    %238 = vector.broadcast %cst_73 : f32 to vector<2x32xf32>
    %239 = arith.subf %238, %232 : vector<2x32xf32>
    %240 = arith.mulf %239, %237 : vector<2x32xf32>
    %241 = arith.mulf %232, %210 : vector<2x32xf32>
    %242 = arith.addf %240, %241 : vector<2x32xf32>
    %c6 = arith.constant 6 : index
    %c0_74 = arith.constant 0 : index
    %c0_75 = arith.constant 0 : index
    %243 = vector.load %arg18[%c6, %c0_74, %c0_75] : memref<32x2x96xf32, #tpu.memory_space<vmem>>, vector<1x2x96xf32>
    %244 = vector.shape_cast %243 : vector<1x2x96xf32> to vector<2x96xf32>
    %245 = arith.truncf %242 : vector<2x32xf32> to vector<2x32xbf16>
    %cst_76 = arith.constant dense<0.000000e+00> : vector<2x96xf32>
    %246 = tpu.matmul %245, %6, %cst_76 {dimension_numbers = #tpu.dot_dimension_numbers<[1], [0], [0], [1], [0, 0, 1, 1], [], []>} : vector<2x32xbf16>, vector<32x96xbf16>, vector<2x96xf32> -> vector<2x96xf32>
    %247 = vector.broadcast %8 : vector<1x96xf32> to vector<2x96xf32>
    %248 = arith.addf %246, %247 : vector<2x96xf32>
    %249 = vector.extract_strided_slice %244 {offsets = [0, 0], sizes = [2, 32], strides = [1, 1]} : vector<2x96xf32> to vector<2x32xf32>
    %250 = vector.extract_strided_slice %248 {offsets = [0, 0], sizes = [2, 32], strides = [1, 1]} : vector<2x96xf32> to vector<2x32xf32>
    %251 = arith.addf %249, %250 : vector<2x32xf32>
    %252 = arith.negf %251 : vector<2x32xf32>
    %253 = math.exp %252 : vector<2x32xf32>
    %cst_77 = arith.constant 1.000000e+00 : f32
    %254 = vector.broadcast %cst_77 : f32 to vector<2x32xf32>
    %255 = arith.addf %254, %253 : vector<2x32xf32>
    %256 = arith.divf %254, %255 : vector<2x32xf32>
    %257 = vector.extract_strided_slice %244 {offsets = [0, 32], sizes = [2, 32], strides = [1, 1]} : vector<2x96xf32> to vector<2x32xf32>
    %258 = vector.extract_strided_slice %248 {offsets = [0, 32], sizes = [2, 32], strides = [1, 1]} : vector<2x96xf32> to vector<2x32xf32>
    %259 = arith.addf %257, %258 : vector<2x32xf32>
    %260 = arith.negf %259 : vector<2x32xf32>
    %261 = math.exp %260 : vector<2x32xf32>
    %cst_78 = arith.constant 1.000000e+00 : f32
    %262 = vector.broadcast %cst_78 : f32 to vector<2x32xf32>
    %263 = arith.addf %262, %261 : vector<2x32xf32>
    %264 = arith.divf %262, %263 : vector<2x32xf32>
    %265 = vector.extract_strided_slice %244 {offsets = [0, 64], sizes = [2, 32], strides = [1, 1]} : vector<2x96xf32> to vector<2x32xf32>
    %266 = vector.extract_strided_slice %248 {offsets = [0, 64], sizes = [2, 32], strides = [1, 1]} : vector<2x96xf32> to vector<2x32xf32>
    %267 = arith.mulf %256, %266 : vector<2x32xf32>
    %268 = arith.addf %265, %267 : vector<2x32xf32>
    %269 = math.tanh %268 : vector<2x32xf32>
    %cst_79 = arith.constant 1.000000e+00 : f32
    %270 = vector.broadcast %cst_79 : f32 to vector<2x32xf32>
    %271 = arith.subf %270, %264 : vector<2x32xf32>
    %272 = arith.mulf %271, %269 : vector<2x32xf32>
    %273 = arith.mulf %264, %242 : vector<2x32xf32>
    %274 = arith.addf %272, %273 : vector<2x32xf32>
    %c7 = arith.constant 7 : index
    %c0_80 = arith.constant 0 : index
    %c0_81 = arith.constant 0 : index
    %275 = vector.load %arg18[%c7, %c0_80, %c0_81] : memref<32x2x96xf32, #tpu.memory_space<vmem>>, vector<1x2x96xf32>
    %276 = vector.shape_cast %275 : vector<1x2x96xf32> to vector<2x96xf32>
    %277 = arith.truncf %274 : vector<2x32xf32> to vector<2x32xbf16>
    %cst_82 = arith.constant dense<0.000000e+00> : vector<2x96xf32>
    %278 = tpu.matmul %277, %6, %cst_82 {dimension_numbers = #tpu.dot_dimension_numbers<[1], [0], [0], [1], [0, 0, 1, 1], [], []>} : vector<2x32xbf16>, vector<32x96xbf16>, vector<2x96xf32> -> vector<2x96xf32>
    %279 = vector.broadcast %8 : vector<1x96xf32> to vector<2x96xf32>
    %280 = arith.addf %278, %279 : vector<2x96xf32>
    %281 = vector.extract_strided_slice %276 {offsets = [0, 0], sizes = [2, 32], strides = [1, 1]} : vector<2x96xf32> to vector<2x32xf32>
    %282 = vector.extract_strided_slice %280 {offsets = [0, 0], sizes = [2, 32], strides = [1, 1]} : vector<2x96xf32> to vector<2x32xf32>
    %283 = arith.addf %281, %282 : vector<2x32xf32>
    %284 = arith.negf %283 : vector<2x32xf32>
    %285 = math.exp %284 : vector<2x32xf32>
    %cst_83 = arith.constant 1.000000e+00 : f32
    %286 = vector.broadcast %cst_83 : f32 to vector<2x32xf32>
    %287 = arith.addf %286, %285 : vector<2x32xf32>
    %288 = arith.divf %286, %287 : vector<2x32xf32>
    %289 = vector.extract_strided_slice %276 {offsets = [0, 32], sizes = [2, 32], strides = [1, 1]} : vector<2x96xf32> to vector<2x32xf32>
    %290 = vector.extract_strided_slice %280 {offsets = [0, 32], sizes = [2, 32], strides = [1, 1]} : vector<2x96xf32> to vector<2x32xf32>
    %291 = arith.addf %289, %290 : vector<2x32xf32>
    %292 = arith.negf %291 : vector<2x32xf32>
    %293 = math.exp %292 : vector<2x32xf32>
    %cst_84 = arith.constant 1.000000e+00 : f32
    %294 = vector.broadcast %cst_84 : f32 to vector<2x32xf32>
    %295 = arith.addf %294, %293 : vector<2x32xf32>
    %296 = arith.divf %294, %295 : vector<2x32xf32>
    %297 = vector.extract_strided_slice %276 {offsets = [0, 64], sizes = [2, 32], strides = [1, 1]} : vector<2x96xf32> to vector<2x32xf32>
    %298 = vector.extract_strided_slice %280 {offsets = [0, 64], sizes = [2, 32], strides = [1, 1]} : vector<2x96xf32> to vector<2x32xf32>
    %299 = arith.mulf %288, %298 : vector<2x32xf32>
    %300 = arith.addf %297, %299 : vector<2x32xf32>
    %301 = math.tanh %300 : vector<2x32xf32>
    %cst_85 = arith.constant 1.000000e+00 : f32
    %302 = vector.broadcast %cst_85 : f32 to vector<2x32xf32>
    %303 = arith.subf %302, %296 : vector<2x32xf32>
    %304 = arith.mulf %303, %301 : vector<2x32xf32>
    %305 = arith.mulf %296, %274 : vector<2x32xf32>
    %306 = arith.addf %304, %305 : vector<2x32xf32>
    %c8 = arith.constant 8 : index
    %c0_86 = arith.constant 0 : index
    %c0_87 = arith.constant 0 : index
    %307 = vector.load %arg18[%c8, %c0_86, %c0_87] : memref<32x2x96xf32, #tpu.memory_space<vmem>>, vector<1x2x96xf32>
    %308 = vector.shape_cast %307 : vector<1x2x96xf32> to vector<2x96xf32>
    %309 = arith.truncf %306 : vector<2x32xf32> to vector<2x32xbf16>
    %cst_88 = arith.constant dense<0.000000e+00> : vector<2x96xf32>
    %310 = tpu.matmul %309, %6, %cst_88 {dimension_numbers = #tpu.dot_dimension_numbers<[1], [0], [0], [1], [0, 0, 1, 1], [], []>} : vector<2x32xbf16>, vector<32x96xbf16>, vector<2x96xf32> -> vector<2x96xf32>
    %311 = vector.broadcast %8 : vector<1x96xf32> to vector<2x96xf32>
    %312 = arith.addf %310, %311 : vector<2x96xf32>
    %313 = vector.extract_strided_slice %308 {offsets = [0, 0], sizes = [2, 32], strides = [1, 1]} : vector<2x96xf32> to vector<2x32xf32>
    %314 = vector.extract_strided_slice %312 {offsets = [0, 0], sizes = [2, 32], strides = [1, 1]} : vector<2x96xf32> to vector<2x32xf32>
    %315 = arith.addf %313, %314 : vector<2x32xf32>
    %316 = arith.negf %315 : vector<2x32xf32>
    %317 = math.exp %316 : vector<2x32xf32>
    %cst_89 = arith.constant 1.000000e+00 : f32
    %318 = vector.broadcast %cst_89 : f32 to vector<2x32xf32>
    %319 = arith.addf %318, %317 : vector<2x32xf32>
    %320 = arith.divf %318, %319 : vector<2x32xf32>
    %321 = vector.extract_strided_slice %308 {offsets = [0, 32], sizes = [2, 32], strides = [1, 1]} : vector<2x96xf32> to vector<2x32xf32>
    %322 = vector.extract_strided_slice %312 {offsets = [0, 32], sizes = [2, 32], strides = [1, 1]} : vector<2x96xf32> to vector<2x32xf32>
    %323 = arith.addf %321, %322 : vector<2x32xf32>
    %324 = arith.negf %323 : vector<2x32xf32>
    %325 = math.exp %324 : vector<2x32xf32>
    %cst_90 = arith.constant 1.000000e+00 : f32
    %326 = vector.broadcast %cst_90 : f32 to vector<2x32xf32>
    %327 = arith.addf %326, %325 : vector<2x32xf32>
    %328 = arith.divf %326, %327 : vector<2x32xf32>
    %329 = vector.extract_strided_slice %308 {offsets = [0, 64], sizes = [2, 32], strides = [1, 1]} : vector<2x96xf32> to vector<2x32xf32>
    %330 = vector.extract_strided_slice %312 {offsets = [0, 64], sizes = [2, 32], strides = [1, 1]} : vector<2x96xf32> to vector<2x32xf32>
    %331 = arith.mulf %320, %330 : vector<2x32xf32>
    %332 = arith.addf %329, %331 : vector<2x32xf32>
    %333 = math.tanh %332 : vector<2x32xf32>
    %cst_91 = arith.constant 1.000000e+00 : f32
    %334 = vector.broadcast %cst_91 : f32 to vector<2x32xf32>
    %335 = arith.subf %334, %328 : vector<2x32xf32>
    %336 = arith.mulf %335, %333 : vector<2x32xf32>
    %337 = arith.mulf %328, %306 : vector<2x32xf32>
    %338 = arith.addf %336, %337 : vector<2x32xf32>
    %c9 = arith.constant 9 : index
    %c0_92 = arith.constant 0 : index
    %c0_93 = arith.constant 0 : index
    %339 = vector.load %arg18[%c9, %c0_92, %c0_93] : memref<32x2x96xf32, #tpu.memory_space<vmem>>, vector<1x2x96xf32>
    %340 = vector.shape_cast %339 : vector<1x2x96xf32> to vector<2x96xf32>
    %341 = arith.truncf %338 : vector<2x32xf32> to vector<2x32xbf16>
    %cst_94 = arith.constant dense<0.000000e+00> : vector<2x96xf32>
    %342 = tpu.matmul %341, %6, %cst_94 {dimension_numbers = #tpu.dot_dimension_numbers<[1], [0], [0], [1], [0, 0, 1, 1], [], []>} : vector<2x32xbf16>, vector<32x96xbf16>, vector<2x96xf32> -> vector<2x96xf32>
    %343 = vector.broadcast %8 : vector<1x96xf32> to vector<2x96xf32>
    %344 = arith.addf %342, %343 : vector<2x96xf32>
    %345 = vector.extract_strided_slice %340 {offsets = [0, 0], sizes = [2, 32], strides = [1, 1]} : vector<2x96xf32> to vector<2x32xf32>
    %346 = vector.extract_strided_slice %344 {offsets = [0, 0], sizes = [2, 32], strides = [1, 1]} : vector<2x96xf32> to vector<2x32xf32>
    %347 = arith.addf %345, %346 : vector<2x32xf32>
    %348 = arith.negf %347 : vector<2x32xf32>
    %349 = math.exp %348 : vector<2x32xf32>
    %cst_95 = arith.constant 1.000000e+00 : f32
    %350 = vector.broadcast %cst_95 : f32 to vector<2x32xf32>
    %351 = arith.addf %350, %349 : vector<2x32xf32>
    %352 = arith.divf %350, %351 : vector<2x32xf32>
    %353 = vector.extract_strided_slice %340 {offsets = [0, 32], sizes = [2, 32], strides = [1, 1]} : vector<2x96xf32> to vector<2x32xf32>
    %354 = vector.extract_strided_slice %344 {offsets = [0, 32], sizes = [2, 32], strides = [1, 1]} : vector<2x96xf32> to vector<2x32xf32>
    %355 = arith.addf %353, %354 : vector<2x32xf32>
    %356 = arith.negf %355 : vector<2x32xf32>
    %357 = math.exp %356 : vector<2x32xf32>
    %cst_96 = arith.constant 1.000000e+00 : f32
    %358 = vector.broadcast %cst_96 : f32 to vector<2x32xf32>
    %359 = arith.addf %358, %357 : vector<2x32xf32>
    %360 = arith.divf %358, %359 : vector<2x32xf32>
    %361 = vector.extract_strided_slice %340 {offsets = [0, 64], sizes = [2, 32], strides = [1, 1]} : vector<2x96xf32> to vector<2x32xf32>
    %362 = vector.extract_strided_slice %344 {offsets = [0, 64], sizes = [2, 32], strides = [1, 1]} : vector<2x96xf32> to vector<2x32xf32>
    %363 = arith.mulf %352, %362 : vector<2x32xf32>
    %364 = arith.addf %361, %363 : vector<2x32xf32>
    %365 = math.tanh %364 : vector<2x32xf32>
    %cst_97 = arith.constant 1.000000e+00 : f32
    %366 = vector.broadcast %cst_97 : f32 to vector<2x32xf32>
    %367 = arith.subf %366, %360 : vector<2x32xf32>
    %368 = arith.mulf %367, %365 : vector<2x32xf32>
    %369 = arith.mulf %360, %338 : vector<2x32xf32>
    %370 = arith.addf %368, %369 : vector<2x32xf32>
    %c10 = arith.constant 10 : index
    %c0_98 = arith.constant 0 : index
    %c0_99 = arith.constant 0 : index
    %371 = vector.load %arg18[%c10, %c0_98, %c0_99] : memref<32x2x96xf32, #tpu.memory_space<vmem>>, vector<1x2x96xf32>
    %372 = vector.shape_cast %371 : vector<1x2x96xf32> to vector<2x96xf32>
    %373 = arith.truncf %370 : vector<2x32xf32> to vector<2x32xbf16>
    %cst_100 = arith.constant dense<0.000000e+00> : vector<2x96xf32>
    %374 = tpu.matmul %373, %6, %cst_100 {dimension_numbers = #tpu.dot_dimension_numbers<[1], [0], [0], [1], [0, 0, 1, 1], [], []>} : vector<2x32xbf16>, vector<32x96xbf16>, vector<2x96xf32> -> vector<2x96xf32>
    %375 = vector.broadcast %8 : vector<1x96xf32> to vector<2x96xf32>
    %376 = arith.addf %374, %375 : vector<2x96xf32>
    %377 = vector.extract_strided_slice %372 {offsets = [0, 0], sizes = [2, 32], strides = [1, 1]} : vector<2x96xf32> to vector<2x32xf32>
    %378 = vector.extract_strided_slice %376 {offsets = [0, 0], sizes = [2, 32], strides = [1, 1]} : vector<2x96xf32> to vector<2x32xf32>
    %379 = arith.addf %377, %378 : vector<2x32xf32>
    %380 = arith.negf %379 : vector<2x32xf32>
    %381 = math.exp %380 : vector<2x32xf32>
    %cst_101 = arith.constant 1.000000e+00 : f32
    %382 = vector.broadcast %cst_101 : f32 to vector<2x32xf32>
    %383 = arith.addf %382, %381 : vector<2x32xf32>
    %384 = arith.divf %382, %383 : vector<2x32xf32>
    %385 = vector.extract_strided_slice %372 {offsets = [0, 32], sizes = [2, 32], strides = [1, 1]} : vector<2x96xf32> to vector<2x32xf32>
    %386 = vector.extract_strided_slice %376 {offsets = [0, 32], sizes = [2, 32], strides = [1, 1]} : vector<2x96xf32> to vector<2x32xf32>
    %387 = arith.addf %385, %386 : vector<2x32xf32>
    %388 = arith.negf %387 : vector<2x32xf32>
    %389 = math.exp %388 : vector<2x32xf32>
    %cst_102 = arith.constant 1.000000e+00 : f32
    %390 = vector.broadcast %cst_102 : f32 to vector<2x32xf32>
    %391 = arith.addf %390, %389 : vector<2x32xf32>
    %392 = arith.divf %390, %391 : vector<2x32xf32>
    %393 = vector.extract_strided_slice %372 {offsets = [0, 64], sizes = [2, 32], strides = [1, 1]} : vector<2x96xf32> to vector<2x32xf32>
    %394 = vector.extract_strided_slice %376 {offsets = [0, 64], sizes = [2, 32], strides = [1, 1]} : vector<2x96xf32> to vector<2x32xf32>
    %395 = arith.mulf %384, %394 : vector<2x32xf32>
    %396 = arith.addf %393, %395 : vector<2x32xf32>
    %397 = math.tanh %396 : vector<2x32xf32>
    %cst_103 = arith.constant 1.000000e+00 : f32
    %398 = vector.broadcast %cst_103 : f32 to vector<2x32xf32>
    %399 = arith.subf %398, %392 : vector<2x32xf32>
    %400 = arith.mulf %399, %397 : vector<2x32xf32>
    %401 = arith.mulf %392, %370 : vector<2x32xf32>
    %402 = arith.addf %400, %401 : vector<2x32xf32>
    %c11 = arith.constant 11 : index
    %c0_104 = arith.constant 0 : index
    %c0_105 = arith.constant 0 : index
    %403 = vector.load %arg18[%c11, %c0_104, %c0_105] : memref<32x2x96xf32, #tpu.memory_space<vmem>>, vector<1x2x96xf32>
    %404 = vector.shape_cast %403 : vector<1x2x96xf32> to vector<2x96xf32>
    %405 = arith.truncf %402 : vector<2x32xf32> to vector<2x32xbf16>
    %cst_106 = arith.constant dense<0.000000e+00> : vector<2x96xf32>
    %406 = tpu.matmul %405, %6, %cst_106 {dimension_numbers = #tpu.dot_dimension_numbers<[1], [0], [0], [1], [0, 0, 1, 1], [], []>} : vector<2x32xbf16>, vector<32x96xbf16>, vector<2x96xf32> -> vector<2x96xf32>
    %407 = vector.broadcast %8 : vector<1x96xf32> to vector<2x96xf32>
    %408 = arith.addf %406, %407 : vector<2x96xf32>
    %409 = vector.extract_strided_slice %404 {offsets = [0, 0], sizes = [2, 32], strides = [1, 1]} : vector<2x96xf32> to vector<2x32xf32>
    %410 = vector.extract_strided_slice %408 {offsets = [0, 0], sizes = [2, 32], strides = [1, 1]} : vector<2x96xf32> to vector<2x32xf32>
    %411 = arith.addf %409, %410 : vector<2x32xf32>
    %412 = arith.negf %411 : vector<2x32xf32>
    %413 = math.exp %412 : vector<2x32xf32>
    %cst_107 = arith.constant 1.000000e+00 : f32
    %414 = vector.broadcast %cst_107 : f32 to vector<2x32xf32>
    %415 = arith.addf %414, %413 : vector<2x32xf32>
    %416 = arith.divf %414, %415 : vector<2x32xf32>
    %417 = vector.extract_strided_slice %404 {offsets = [0, 32], sizes = [2, 32], strides = [1, 1]} : vector<2x96xf32> to vector<2x32xf32>
    %418 = vector.extract_strided_slice %408 {offsets = [0, 32], sizes = [2, 32], strides = [1, 1]} : vector<2x96xf32> to vector<2x32xf32>
    %419 = arith.addf %417, %418 : vector<2x32xf32>
    %420 = arith.negf %419 : vector<2x32xf32>
    %421 = math.exp %420 : vector<2x32xf32>
    %cst_108 = arith.constant 1.000000e+00 : f32
    %422 = vector.broadcast %cst_108 : f32 to vector<2x32xf32>
    %423 = arith.addf %422, %421 : vector<2x32xf32>
    %424 = arith.divf %422, %423 : vector<2x32xf32>
    %425 = vector.extract_strided_slice %404 {offsets = [0, 64], sizes = [2, 32], strides = [1, 1]} : vector<2x96xf32> to vector<2x32xf32>
    %426 = vector.extract_strided_slice %408 {offsets = [0, 64], sizes = [2, 32], strides = [1, 1]} : vector<2x96xf32> to vector<2x32xf32>
    %427 = arith.mulf %416, %426 : vector<2x32xf32>
    %428 = arith.addf %425, %427 : vector<2x32xf32>
    %429 = math.tanh %428 : vector<2x32xf32>
    %cst_109 = arith.constant 1.000000e+00 : f32
    %430 = vector.broadcast %cst_109 : f32 to vector<2x32xf32>
    %431 = arith.subf %430, %424 : vector<2x32xf32>
    %432 = arith.mulf %431, %429 : vector<2x32xf32>
    %433 = arith.mulf %424, %402 : vector<2x32xf32>
    %434 = arith.addf %432, %433 : vector<2x32xf32>
    %c12 = arith.constant 12 : index
    %c0_110 = arith.constant 0 : index
    %c0_111 = arith.constant 0 : index
    %435 = vector.load %arg18[%c12, %c0_110, %c0_111] : memref<32x2x96xf32, #tpu.memory_space<vmem>>, vector<1x2x96xf32>
    %436 = vector.shape_cast %435 : vector<1x2x96xf32> to vector<2x96xf32>
    %437 = arith.truncf %434 : vector<2x32xf32> to vector<2x32xbf16>
    %cst_112 = arith.constant dense<0.000000e+00> : vector<2x96xf32>
    %438 = tpu.matmul %437, %6, %cst_112 {dimension_numbers = #tpu.dot_dimension_numbers<[1], [0], [0], [1], [0, 0, 1, 1], [], []>} : vector<2x32xbf16>, vector<32x96xbf16>, vector<2x96xf32> -> vector<2x96xf32>
    %439 = vector.broadcast %8 : vector<1x96xf32> to vector<2x96xf32>
    %440 = arith.addf %438, %439 : vector<2x96xf32>
    %441 = vector.extract_strided_slice %436 {offsets = [0, 0], sizes = [2, 32], strides = [1, 1]} : vector<2x96xf32> to vector<2x32xf32>
    %442 = vector.extract_strided_slice %440 {offsets = [0, 0], sizes = [2, 32], strides = [1, 1]} : vector<2x96xf32> to vector<2x32xf32>
    %443 = arith.addf %441, %442 : vector<2x32xf32>
    %444 = arith.negf %443 : vector<2x32xf32>
    %445 = math.exp %444 : vector<2x32xf32>
    %cst_113 = arith.constant 1.000000e+00 : f32
    %446 = vector.broadcast %cst_113 : f32 to vector<2x32xf32>
    %447 = arith.addf %446, %445 : vector<2x32xf32>
    %448 = arith.divf %446, %447 : vector<2x32xf32>
    %449 = vector.extract_strided_slice %436 {offsets = [0, 32], sizes = [2, 32], strides = [1, 1]} : vector<2x96xf32> to vector<2x32xf32>
    %450 = vector.extract_strided_slice %440 {offsets = [0, 32], sizes = [2, 32], strides = [1, 1]} : vector<2x96xf32> to vector<2x32xf32>
    %451 = arith.addf %449, %450 : vector<2x32xf32>
    %452 = arith.negf %451 : vector<2x32xf32>
    %453 = math.exp %452 : vector<2x32xf32>
    %cst_114 = arith.constant 1.000000e+00 : f32
    %454 = vector.broadcast %cst_114 : f32 to vector<2x32xf32>
    %455 = arith.addf %454, %453 : vector<2x32xf32>
    %456 = arith.divf %454, %455 : vector<2x32xf32>
    %457 = vector.extract_strided_slice %436 {offsets = [0, 64], sizes = [2, 32], strides = [1, 1]} : vector<2x96xf32> to vector<2x32xf32>
    %458 = vector.extract_strided_slice %440 {offsets = [0, 64], sizes = [2, 32], strides = [1, 1]} : vector<2x96xf32> to vector<2x32xf32>
    %459 = arith.mulf %448, %458 : vector<2x32xf32>
    %460 = arith.addf %457, %459 : vector<2x32xf32>
    %461 = math.tanh %460 : vector<2x32xf32>
    %cst_115 = arith.constant 1.000000e+00 : f32
    %462 = vector.broadcast %cst_115 : f32 to vector<2x32xf32>
    %463 = arith.subf %462, %456 : vector<2x32xf32>
    %464 = arith.mulf %463, %461 : vector<2x32xf32>
    %465 = arith.mulf %456, %434 : vector<2x32xf32>
    %466 = arith.addf %464, %465 : vector<2x32xf32>
    %c13 = arith.constant 13 : index
    %c0_116 = arith.constant 0 : index
    %c0_117 = arith.constant 0 : index
    %467 = vector.load %arg18[%c13, %c0_116, %c0_117] : memref<32x2x96xf32, #tpu.memory_space<vmem>>, vector<1x2x96xf32>
    %468 = vector.shape_cast %467 : vector<1x2x96xf32> to vector<2x96xf32>
    %469 = arith.truncf %466 : vector<2x32xf32> to vector<2x32xbf16>
    %cst_118 = arith.constant dense<0.000000e+00> : vector<2x96xf32>
    %470 = tpu.matmul %469, %6, %cst_118 {dimension_numbers = #tpu.dot_dimension_numbers<[1], [0], [0], [1], [0, 0, 1, 1], [], []>} : vector<2x32xbf16>, vector<32x96xbf16>, vector<2x96xf32> -> vector<2x96xf32>
    %471 = vector.broadcast %8 : vector<1x96xf32> to vector<2x96xf32>
    %472 = arith.addf %470, %471 : vector<2x96xf32>
    %473 = vector.extract_strided_slice %468 {offsets = [0, 0], sizes = [2, 32], strides = [1, 1]} : vector<2x96xf32> to vector<2x32xf32>
    %474 = vector.extract_strided_slice %472 {offsets = [0, 0], sizes = [2, 32], strides = [1, 1]} : vector<2x96xf32> to vector<2x32xf32>
    %475 = arith.addf %473, %474 : vector<2x32xf32>
    %476 = arith.negf %475 : vector<2x32xf32>
    %477 = math.exp %476 : vector<2x32xf32>
    %cst_119 = arith.constant 1.000000e+00 : f32
    %478 = vector.broadcast %cst_119 : f32 to vector<2x32xf32>
    %479 = arith.addf %478, %477 : vector<2x32xf32>
    %480 = arith.divf %478, %479 : vector<2x32xf32>
    %481 = vector.extract_strided_slice %468 {offsets = [0, 32], sizes = [2, 32], strides = [1, 1]} : vector<2x96xf32> to vector<2x32xf32>
    %482 = vector.extract_strided_slice %472 {offsets = [0, 32], sizes = [2, 32], strides = [1, 1]} : vector<2x96xf32> to vector<2x32xf32>
    %483 = arith.addf %481, %482 : vector<2x32xf32>
    %484 = arith.negf %483 : vector<2x32xf32>
    %485 = math.exp %484 : vector<2x32xf32>
    %cst_120 = arith.constant 1.000000e+00 : f32
    %486 = vector.broadcast %cst_120 : f32 to vector<2x32xf32>
    %487 = arith.addf %486, %485 : vector<2x32xf32>
    %488 = arith.divf %486, %487 : vector<2x32xf32>
    %489 = vector.extract_strided_slice %468 {offsets = [0, 64], sizes = [2, 32], strides = [1, 1]} : vector<2x96xf32> to vector<2x32xf32>
    %490 = vector.extract_strided_slice %472 {offsets = [0, 64], sizes = [2, 32], strides = [1, 1]} : vector<2x96xf32> to vector<2x32xf32>
    %491 = arith.mulf %480, %490 : vector<2x32xf32>
    %492 = arith.addf %489, %491 : vector<2x32xf32>
    %493 = math.tanh %492 : vector<2x32xf32>
    %cst_121 = arith.constant 1.000000e+00 : f32
    %494 = vector.broadcast %cst_121 : f32 to vector<2x32xf32>
    %495 = arith.subf %494, %488 : vector<2x32xf32>
    %496 = arith.mulf %495, %493 : vector<2x32xf32>
    %497 = arith.mulf %488, %466 : vector<2x32xf32>
    %498 = arith.addf %496, %497 : vector<2x32xf32>
    %c14 = arith.constant 14 : index
    %c0_122 = arith.constant 0 : index
    %c0_123 = arith.constant 0 : index
    %499 = vector.load %arg18[%c14, %c0_122, %c0_123] : memref<32x2x96xf32, #tpu.memory_space<vmem>>, vector<1x2x96xf32>
    %500 = vector.shape_cast %499 : vector<1x2x96xf32> to vector<2x96xf32>
    %501 = arith.truncf %498 : vector<2x32xf32> to vector<2x32xbf16>
    %cst_124 = arith.constant dense<0.000000e+00> : vector<2x96xf32>
    %502 = tpu.matmul %501, %6, %cst_124 {dimension_numbers = #tpu.dot_dimension_numbers<[1], [0], [0], [1], [0, 0, 1, 1], [], []>} : vector<2x32xbf16>, vector<32x96xbf16>, vector<2x96xf32> -> vector<2x96xf32>
    %503 = vector.broadcast %8 : vector<1x96xf32> to vector<2x96xf32>
    %504 = arith.addf %502, %503 : vector<2x96xf32>
    %505 = vector.extract_strided_slice %500 {offsets = [0, 0], sizes = [2, 32], strides = [1, 1]} : vector<2x96xf32> to vector<2x32xf32>
    %506 = vector.extract_strided_slice %504 {offsets = [0, 0], sizes = [2, 32], strides = [1, 1]} : vector<2x96xf32> to vector<2x32xf32>
    %507 = arith.addf %505, %506 : vector<2x32xf32>
    %508 = arith.negf %507 : vector<2x32xf32>
    %509 = math.exp %508 : vector<2x32xf32>
    %cst_125 = arith.constant 1.000000e+00 : f32
    %510 = vector.broadcast %cst_125 : f32 to vector<2x32xf32>
    %511 = arith.addf %510, %509 : vector<2x32xf32>
    %512 = arith.divf %510, %511 : vector<2x32xf32>
    %513 = vector.extract_strided_slice %500 {offsets = [0, 32], sizes = [2, 32], strides = [1, 1]} : vector<2x96xf32> to vector<2x32xf32>
    %514 = vector.extract_strided_slice %504 {offsets = [0, 32], sizes = [2, 32], strides = [1, 1]} : vector<2x96xf32> to vector<2x32xf32>
    %515 = arith.addf %513, %514 : vector<2x32xf32>
    %516 = arith.negf %515 : vector<2x32xf32>
    %517 = math.exp %516 : vector<2x32xf32>
    %cst_126 = arith.constant 1.000000e+00 : f32
    %518 = vector.broadcast %cst_126 : f32 to vector<2x32xf32>
    %519 = arith.addf %518, %517 : vector<2x32xf32>
    %520 = arith.divf %518, %519 : vector<2x32xf32>
    %521 = vector.extract_strided_slice %500 {offsets = [0, 64], sizes = [2, 32], strides = [1, 1]} : vector<2x96xf32> to vector<2x32xf32>
    %522 = vector.extract_strided_slice %504 {offsets = [0, 64], sizes = [2, 32], strides = [1, 1]} : vector<2x96xf32> to vector<2x32xf32>
    %523 = arith.mulf %512, %522 : vector<2x32xf32>
    %524 = arith.addf %521, %523 : vector<2x32xf32>
    %525 = math.tanh %524 : vector<2x32xf32>
    %cst_127 = arith.constant 1.000000e+00 : f32
    %526 = vector.broadcast %cst_127 : f32 to vector<2x32xf32>
    %527 = arith.subf %526, %520 : vector<2x32xf32>
    %528 = arith.mulf %527, %525 : vector<2x32xf32>
    %529 = arith.mulf %520, %498 : vector<2x32xf32>
    %530 = arith.addf %528, %529 : vector<2x32xf32>
    %c15 = arith.constant 15 : index
    %c0_128 = arith.constant 0 : index
    %c0_129 = arith.constant 0 : index
    %531 = vector.load %arg18[%c15, %c0_128, %c0_129] : memref<32x2x96xf32, #tpu.memory_space<vmem>>, vector<1x2x96xf32>
    %532 = vector.shape_cast %531 : vector<1x2x96xf32> to vector<2x96xf32>
    %533 = arith.truncf %530 : vector<2x32xf32> to vector<2x32xbf16>
    %cst_130 = arith.constant dense<0.000000e+00> : vector<2x96xf32>
    %534 = tpu.matmul %533, %6, %cst_130 {dimension_numbers = #tpu.dot_dimension_numbers<[1], [0], [0], [1], [0, 0, 1, 1], [], []>} : vector<2x32xbf16>, vector<32x96xbf16>, vector<2x96xf32> -> vector<2x96xf32>
    %535 = vector.broadcast %8 : vector<1x96xf32> to vector<2x96xf32>
    %536 = arith.addf %534, %535 : vector<2x96xf32>
    %537 = vector.extract_strided_slice %532 {offsets = [0, 0], sizes = [2, 32], strides = [1, 1]} : vector<2x96xf32> to vector<2x32xf32>
    %538 = vector.extract_strided_slice %536 {offsets = [0, 0], sizes = [2, 32], strides = [1, 1]} : vector<2x96xf32> to vector<2x32xf32>
    %539 = arith.addf %537, %538 : vector<2x32xf32>
    %540 = arith.negf %539 : vector<2x32xf32>
    %541 = math.exp %540 : vector<2x32xf32>
    %cst_131 = arith.constant 1.000000e+00 : f32
    %542 = vector.broadcast %cst_131 : f32 to vector<2x32xf32>
    %543 = arith.addf %542, %541 : vector<2x32xf32>
    %544 = arith.divf %542, %543 : vector<2x32xf32>
    %545 = vector.extract_strided_slice %532 {offsets = [0, 32], sizes = [2, 32], strides = [1, 1]} : vector<2x96xf32> to vector<2x32xf32>
    %546 = vector.extract_strided_slice %536 {offsets = [0, 32], sizes = [2, 32], strides = [1, 1]} : vector<2x96xf32> to vector<2x32xf32>
    %547 = arith.addf %545, %546 : vector<2x32xf32>
    %548 = arith.negf %547 : vector<2x32xf32>
    %549 = math.exp %548 : vector<2x32xf32>
    %cst_132 = arith.constant 1.000000e+00 : f32
    %550 = vector.broadcast %cst_132 : f32 to vector<2x32xf32>
    %551 = arith.addf %550, %549 : vector<2x32xf32>
    %552 = arith.divf %550, %551 : vector<2x32xf32>
    %553 = vector.extract_strided_slice %532 {offsets = [0, 64], sizes = [2, 32], strides = [1, 1]} : vector<2x96xf32> to vector<2x32xf32>
    %554 = vector.extract_strided_slice %536 {offsets = [0, 64], sizes = [2, 32], strides = [1, 1]} : vector<2x96xf32> to vector<2x32xf32>
    %555 = arith.mulf %544, %554 : vector<2x32xf32>
    %556 = arith.addf %553, %555 : vector<2x32xf32>
    %557 = math.tanh %556 : vector<2x32xf32>
    %cst_133 = arith.constant 1.000000e+00 : f32
    %558 = vector.broadcast %cst_133 : f32 to vector<2x32xf32>
    %559 = arith.subf %558, %552 : vector<2x32xf32>
    %560 = arith.mulf %559, %557 : vector<2x32xf32>
    %561 = arith.mulf %552, %530 : vector<2x32xf32>
    %562 = arith.addf %560, %561 : vector<2x32xf32>
    %c16 = arith.constant 16 : index
    %c0_134 = arith.constant 0 : index
    %c0_135 = arith.constant 0 : index
    %563 = vector.load %arg18[%c16, %c0_134, %c0_135] : memref<32x2x96xf32, #tpu.memory_space<vmem>>, vector<1x2x96xf32>
    %564 = vector.shape_cast %563 : vector<1x2x96xf32> to vector<2x96xf32>
    %565 = arith.truncf %562 : vector<2x32xf32> to vector<2x32xbf16>
    %cst_136 = arith.constant dense<0.000000e+00> : vector<2x96xf32>
    %566 = tpu.matmul %565, %6, %cst_136 {dimension_numbers = #tpu.dot_dimension_numbers<[1], [0], [0], [1], [0, 0, 1, 1], [], []>} : vector<2x32xbf16>, vector<32x96xbf16>, vector<2x96xf32> -> vector<2x96xf32>
    %567 = vector.broadcast %8 : vector<1x96xf32> to vector<2x96xf32>
    %568 = arith.addf %566, %567 : vector<2x96xf32>
    %569 = vector.extract_strided_slice %564 {offsets = [0, 0], sizes = [2, 32], strides = [1, 1]} : vector<2x96xf32> to vector<2x32xf32>
    %570 = vector.extract_strided_slice %568 {offsets = [0, 0], sizes = [2, 32], strides = [1, 1]} : vector<2x96xf32> to vector<2x32xf32>
    %571 = arith.addf %569, %570 : vector<2x32xf32>
    %572 = arith.negf %571 : vector<2x32xf32>
    %573 = math.exp %572 : vector<2x32xf32>
    %cst_137 = arith.constant 1.000000e+00 : f32
    %574 = vector.broadcast %cst_137 : f32 to vector<2x32xf32>
    %575 = arith.addf %574, %573 : vector<2x32xf32>
    %576 = arith.divf %574, %575 : vector<2x32xf32>
    %577 = vector.extract_strided_slice %564 {offsets = [0, 32], sizes = [2, 32], strides = [1, 1]} : vector<2x96xf32> to vector<2x32xf32>
    %578 = vector.extract_strided_slice %568 {offsets = [0, 32], sizes = [2, 32], strides = [1, 1]} : vector<2x96xf32> to vector<2x32xf32>
    %579 = arith.addf %577, %578 : vector<2x32xf32>
    %580 = arith.negf %579 : vector<2x32xf32>
    %581 = math.exp %580 : vector<2x32xf32>
    %cst_138 = arith.constant 1.000000e+00 : f32
    %582 = vector.broadcast %cst_138 : f32 to vector<2x32xf32>
    %583 = arith.addf %582, %581 : vector<2x32xf32>
    %584 = arith.divf %582, %583 : vector<2x32xf32>
    %585 = vector.extract_strided_slice %564 {offsets = [0, 64], sizes = [2, 32], strides = [1, 1]} : vector<2x96xf32> to vector<2x32xf32>
    %586 = vector.extract_strided_slice %568 {offsets = [0, 64], sizes = [2, 32], strides = [1, 1]} : vector<2x96xf32> to vector<2x32xf32>
    %587 = arith.mulf %576, %586 : vector<2x32xf32>
    %588 = arith.addf %585, %587 : vector<2x32xf32>
    %589 = math.tanh %588 : vector<2x32xf32>
    %cst_139 = arith.constant 1.000000e+00 : f32
    %590 = vector.broadcast %cst_139 : f32 to vector<2x32xf32>
    %591 = arith.subf %590, %584 : vector<2x32xf32>
    %592 = arith.mulf %591, %589 : vector<2x32xf32>
    %593 = arith.mulf %584, %562 : vector<2x32xf32>
    %594 = arith.addf %592, %593 : vector<2x32xf32>
    %c17 = arith.constant 17 : index
    %c0_140 = arith.constant 0 : index
    %c0_141 = arith.constant 0 : index
    %595 = vector.load %arg18[%c17, %c0_140, %c0_141] : memref<32x2x96xf32, #tpu.memory_space<vmem>>, vector<1x2x96xf32>
    %596 = vector.shape_cast %595 : vector<1x2x96xf32> to vector<2x96xf32>
    %597 = arith.truncf %594 : vector<2x32xf32> to vector<2x32xbf16>
    %cst_142 = arith.constant dense<0.000000e+00> : vector<2x96xf32>
    %598 = tpu.matmul %597, %6, %cst_142 {dimension_numbers = #tpu.dot_dimension_numbers<[1], [0], [0], [1], [0, 0, 1, 1], [], []>} : vector<2x32xbf16>, vector<32x96xbf16>, vector<2x96xf32> -> vector<2x96xf32>
    %599 = vector.broadcast %8 : vector<1x96xf32> to vector<2x96xf32>
    %600 = arith.addf %598, %599 : vector<2x96xf32>
    %601 = vector.extract_strided_slice %596 {offsets = [0, 0], sizes = [2, 32], strides = [1, 1]} : vector<2x96xf32> to vector<2x32xf32>
    %602 = vector.extract_strided_slice %600 {offsets = [0, 0], sizes = [2, 32], strides = [1, 1]} : vector<2x96xf32> to vector<2x32xf32>
    %603 = arith.addf %601, %602 : vector<2x32xf32>
    %604 = arith.negf %603 : vector<2x32xf32>
    %605 = math.exp %604 : vector<2x32xf32>
    %cst_143 = arith.constant 1.000000e+00 : f32
    %606 = vector.broadcast %cst_143 : f32 to vector<2x32xf32>
    %607 = arith.addf %606, %605 : vector<2x32xf32>
    %608 = arith.divf %606, %607 : vector<2x32xf32>
    %609 = vector.extract_strided_slice %596 {offsets = [0, 32], sizes = [2, 32], strides = [1, 1]} : vector<2x96xf32> to vector<2x32xf32>
    %610 = vector.extract_strided_slice %600 {offsets = [0, 32], sizes = [2, 32], strides = [1, 1]} : vector<2x96xf32> to vector<2x32xf32>
    %611 = arith.addf %609, %610 : vector<2x32xf32>
    %612 = arith.negf %611 : vector<2x32xf32>
    %613 = math.exp %612 : vector<2x32xf32>
    %cst_144 = arith.constant 1.000000e+00 : f32
    %614 = vector.broadcast %cst_144 : f32 to vector<2x32xf32>
    %615 = arith.addf %614, %613 : vector<2x32xf32>
    %616 = arith.divf %614, %615 : vector<2x32xf32>
    %617 = vector.extract_strided_slice %596 {offsets = [0, 64], sizes = [2, 32], strides = [1, 1]} : vector<2x96xf32> to vector<2x32xf32>
    %618 = vector.extract_strided_slice %600 {offsets = [0, 64], sizes = [2, 32], strides = [1, 1]} : vector<2x96xf32> to vector<2x32xf32>
    %619 = arith.mulf %608, %618 : vector<2x32xf32>
    %620 = arith.addf %617, %619 : vector<2x32xf32>
    %621 = math.tanh %620 : vector<2x32xf32>
    %cst_145 = arith.constant 1.000000e+00 : f32
    %622 = vector.broadcast %cst_145 : f32 to vector<2x32xf32>
    %623 = arith.subf %622, %616 : vector<2x32xf32>
    %624 = arith.mulf %623, %621 : vector<2x32xf32>
    %625 = arith.mulf %616, %594 : vector<2x32xf32>
    %626 = arith.addf %624, %625 : vector<2x32xf32>
    %c18 = arith.constant 18 : index
    %c0_146 = arith.constant 0 : index
    %c0_147 = arith.constant 0 : index
    %627 = vector.load %arg18[%c18, %c0_146, %c0_147] : memref<32x2x96xf32, #tpu.memory_space<vmem>>, vector<1x2x96xf32>
    %628 = vector.shape_cast %627 : vector<1x2x96xf32> to vector<2x96xf32>
    %629 = arith.truncf %626 : vector<2x32xf32> to vector<2x32xbf16>
    %cst_148 = arith.constant dense<0.000000e+00> : vector<2x96xf32>
    %630 = tpu.matmul %629, %6, %cst_148 {dimension_numbers = #tpu.dot_dimension_numbers<[1], [0], [0], [1], [0, 0, 1, 1], [], []>} : vector<2x32xbf16>, vector<32x96xbf16>, vector<2x96xf32> -> vector<2x96xf32>
    %631 = vector.broadcast %8 : vector<1x96xf32> to vector<2x96xf32>
    %632 = arith.addf %630, %631 : vector<2x96xf32>
    %633 = vector.extract_strided_slice %628 {offsets = [0, 0], sizes = [2, 32], strides = [1, 1]} : vector<2x96xf32> to vector<2x32xf32>
    %634 = vector.extract_strided_slice %632 {offsets = [0, 0], sizes = [2, 32], strides = [1, 1]} : vector<2x96xf32> to vector<2x32xf32>
    %635 = arith.addf %633, %634 : vector<2x32xf32>
    %636 = arith.negf %635 : vector<2x32xf32>
    %637 = math.exp %636 : vector<2x32xf32>
    %cst_149 = arith.constant 1.000000e+00 : f32
    %638 = vector.broadcast %cst_149 : f32 to vector<2x32xf32>
    %639 = arith.addf %638, %637 : vector<2x32xf32>
    %640 = arith.divf %638, %639 : vector<2x32xf32>
    %641 = vector.extract_strided_slice %628 {offsets = [0, 32], sizes = [2, 32], strides = [1, 1]} : vector<2x96xf32> to vector<2x32xf32>
    %642 = vector.extract_strided_slice %632 {offsets = [0, 32], sizes = [2, 32], strides = [1, 1]} : vector<2x96xf32> to vector<2x32xf32>
    %643 = arith.addf %641, %642 : vector<2x32xf32>
    %644 = arith.negf %643 : vector<2x32xf32>
    %645 = math.exp %644 : vector<2x32xf32>
    %cst_150 = arith.constant 1.000000e+00 : f32
    %646 = vector.broadcast %cst_150 : f32 to vector<2x32xf32>
    %647 = arith.addf %646, %645 : vector<2x32xf32>
    %648 = arith.divf %646, %647 : vector<2x32xf32>
    %649 = vector.extract_strided_slice %628 {offsets = [0, 64], sizes = [2, 32], strides = [1, 1]} : vector<2x96xf32> to vector<2x32xf32>
    %650 = vector.extract_strided_slice %632 {offsets = [0, 64], sizes = [2, 32], strides = [1, 1]} : vector<2x96xf32> to vector<2x32xf32>
    %651 = arith.mulf %640, %650 : vector<2x32xf32>
    %652 = arith.addf %649, %651 : vector<2x32xf32>
    %653 = math.tanh %652 : vector<2x32xf32>
    %cst_151 = arith.constant 1.000000e+00 : f32
    %654 = vector.broadcast %cst_151 : f32 to vector<2x32xf32>
    %655 = arith.subf %654, %648 : vector<2x32xf32>
    %656 = arith.mulf %655, %653 : vector<2x32xf32>
    %657 = arith.mulf %648, %626 : vector<2x32xf32>
    %658 = arith.addf %656, %657 : vector<2x32xf32>
    %c19 = arith.constant 19 : index
    %c0_152 = arith.constant 0 : index
    %c0_153 = arith.constant 0 : index
    %659 = vector.load %arg18[%c19, %c0_152, %c0_153] : memref<32x2x96xf32, #tpu.memory_space<vmem>>, vector<1x2x96xf32>
    %660 = vector.shape_cast %659 : vector<1x2x96xf32> to vector<2x96xf32>
    %661 = arith.truncf %658 : vector<2x32xf32> to vector<2x32xbf16>
    %cst_154 = arith.constant dense<0.000000e+00> : vector<2x96xf32>
    %662 = tpu.matmul %661, %6, %cst_154 {dimension_numbers = #tpu.dot_dimension_numbers<[1], [0], [0], [1], [0, 0, 1, 1], [], []>} : vector<2x32xbf16>, vector<32x96xbf16>, vector<2x96xf32> -> vector<2x96xf32>
    %663 = vector.broadcast %8 : vector<1x96xf32> to vector<2x96xf32>
    %664 = arith.addf %662, %663 : vector<2x96xf32>
    %665 = vector.extract_strided_slice %660 {offsets = [0, 0], sizes = [2, 32], strides = [1, 1]} : vector<2x96xf32> to vector<2x32xf32>
    %666 = vector.extract_strided_slice %664 {offsets = [0, 0], sizes = [2, 32], strides = [1, 1]} : vector<2x96xf32> to vector<2x32xf32>
    %667 = arith.addf %665, %666 : vector<2x32xf32>
    %668 = arith.negf %667 : vector<2x32xf32>
    %669 = math.exp %668 : vector<2x32xf32>
    %cst_155 = arith.constant 1.000000e+00 : f32
    %670 = vector.broadcast %cst_155 : f32 to vector<2x32xf32>
    %671 = arith.addf %670, %669 : vector<2x32xf32>
    %672 = arith.divf %670, %671 : vector<2x32xf32>
    %673 = vector.extract_strided_slice %660 {offsets = [0, 32], sizes = [2, 32], strides = [1, 1]} : vector<2x96xf32> to vector<2x32xf32>
    %674 = vector.extract_strided_slice %664 {offsets = [0, 32], sizes = [2, 32], strides = [1, 1]} : vector<2x96xf32> to vector<2x32xf32>
    %675 = arith.addf %673, %674 : vector<2x32xf32>
    %676 = arith.negf %675 : vector<2x32xf32>
    %677 = math.exp %676 : vector<2x32xf32>
    %cst_156 = arith.constant 1.000000e+00 : f32
    %678 = vector.broadcast %cst_156 : f32 to vector<2x32xf32>
    %679 = arith.addf %678, %677 : vector<2x32xf32>
    %680 = arith.divf %678, %679 : vector<2x32xf32>
    %681 = vector.extract_strided_slice %660 {offsets = [0, 64], sizes = [2, 32], strides = [1, 1]} : vector<2x96xf32> to vector<2x32xf32>
    %682 = vector.extract_strided_slice %664 {offsets = [0, 64], sizes = [2, 32], strides = [1, 1]} : vector<2x96xf32> to vector<2x32xf32>
    %683 = arith.mulf %672, %682 : vector<2x32xf32>
    %684 = arith.addf %681, %683 : vector<2x32xf32>
    %685 = math.tanh %684 : vector<2x32xf32>
    %cst_157 = arith.constant 1.000000e+00 : f32
    %686 = vector.broadcast %cst_157 : f32 to vector<2x32xf32>
    %687 = arith.subf %686, %680 : vector<2x32xf32>
    %688 = arith.mulf %687, %685 : vector<2x32xf32>
    %689 = arith.mulf %680, %658 : vector<2x32xf32>
    %690 = arith.addf %688, %689 : vector<2x32xf32>
    %c20 = arith.constant 20 : index
    %c0_158 = arith.constant 0 : index
    %c0_159 = arith.constant 0 : index
    %691 = vector.load %arg18[%c20, %c0_158, %c0_159] : memref<32x2x96xf32, #tpu.memory_space<vmem>>, vector<1x2x96xf32>
    %692 = vector.shape_cast %691 : vector<1x2x96xf32> to vector<2x96xf32>
    %693 = arith.truncf %690 : vector<2x32xf32> to vector<2x32xbf16>
    %cst_160 = arith.constant dense<0.000000e+00> : vector<2x96xf32>
    %694 = tpu.matmul %693, %6, %cst_160 {dimension_numbers = #tpu.dot_dimension_numbers<[1], [0], [0], [1], [0, 0, 1, 1], [], []>} : vector<2x32xbf16>, vector<32x96xbf16>, vector<2x96xf32> -> vector<2x96xf32>
    %695 = vector.broadcast %8 : vector<1x96xf32> to vector<2x96xf32>
    %696 = arith.addf %694, %695 : vector<2x96xf32>
    %697 = vector.extract_strided_slice %692 {offsets = [0, 0], sizes = [2, 32], strides = [1, 1]} : vector<2x96xf32> to vector<2x32xf32>
    %698 = vector.extract_strided_slice %696 {offsets = [0, 0], sizes = [2, 32], strides = [1, 1]} : vector<2x96xf32> to vector<2x32xf32>
    %699 = arith.addf %697, %698 : vector<2x32xf32>
    %700 = arith.negf %699 : vector<2x32xf32>
    %701 = math.exp %700 : vector<2x32xf32>
    %cst_161 = arith.constant 1.000000e+00 : f32
    %702 = vector.broadcast %cst_161 : f32 to vector<2x32xf32>
    %703 = arith.addf %702, %701 : vector<2x32xf32>
    %704 = arith.divf %702, %703 : vector<2x32xf32>
    %705 = vector.extract_strided_slice %692 {offsets = [0, 32], sizes = [2, 32], strides = [1, 1]} : vector<2x96xf32> to vector<2x32xf32>
    %706 = vector.extract_strided_slice %696 {offsets = [0, 32], sizes = [2, 32], strides = [1, 1]} : vector<2x96xf32> to vector<2x32xf32>
    %707 = arith.addf %705, %706 : vector<2x32xf32>
    %708 = arith.negf %707 : vector<2x32xf32>
    %709 = math.exp %708 : vector<2x32xf32>
    %cst_162 = arith.constant 1.000000e+00 : f32
    %710 = vector.broadcast %cst_162 : f32 to vector<2x32xf32>
    %711 = arith.addf %710, %709 : vector<2x32xf32>
    %712 = arith.divf %710, %711 : vector<2x32xf32>
    %713 = vector.extract_strided_slice %692 {offsets = [0, 64], sizes = [2, 32], strides = [1, 1]} : vector<2x96xf32> to vector<2x32xf32>
    %714 = vector.extract_strided_slice %696 {offsets = [0, 64], sizes = [2, 32], strides = [1, 1]} : vector<2x96xf32> to vector<2x32xf32>
    %715 = arith.mulf %704, %714 : vector<2x32xf32>
    %716 = arith.addf %713, %715 : vector<2x32xf32>
    %717 = math.tanh %716 : vector<2x32xf32>
    %cst_163 = arith.constant 1.000000e+00 : f32
    %718 = vector.broadcast %cst_163 : f32 to vector<2x32xf32>
    %719 = arith.subf %718, %712 : vector<2x32xf32>
    %720 = arith.mulf %719, %717 : vector<2x32xf32>
    %721 = arith.mulf %712, %690 : vector<2x32xf32>
    %722 = arith.addf %720, %721 : vector<2x32xf32>
    %c21 = arith.constant 21 : index
    %c0_164 = arith.constant 0 : index
    %c0_165 = arith.constant 0 : index
    %723 = vector.load %arg18[%c21, %c0_164, %c0_165] : memref<32x2x96xf32, #tpu.memory_space<vmem>>, vector<1x2x96xf32>
    %724 = vector.shape_cast %723 : vector<1x2x96xf32> to vector<2x96xf32>
    %725 = arith.truncf %722 : vector<2x32xf32> to vector<2x32xbf16>
    %cst_166 = arith.constant dense<0.000000e+00> : vector<2x96xf32>
    %726 = tpu.matmul %725, %6, %cst_166 {dimension_numbers = #tpu.dot_dimension_numbers<[1], [0], [0], [1], [0, 0, 1, 1], [], []>} : vector<2x32xbf16>, vector<32x96xbf16>, vector<2x96xf32> -> vector<2x96xf32>
    %727 = vector.broadcast %8 : vector<1x96xf32> to vector<2x96xf32>
    %728 = arith.addf %726, %727 : vector<2x96xf32>
    %729 = vector.extract_strided_slice %724 {offsets = [0, 0], sizes = [2, 32], strides = [1, 1]} : vector<2x96xf32> to vector<2x32xf32>
    %730 = vector.extract_strided_slice %728 {offsets = [0, 0], sizes = [2, 32], strides = [1, 1]} : vector<2x96xf32> to vector<2x32xf32>
    %731 = arith.addf %729, %730 : vector<2x32xf32>
    %732 = arith.negf %731 : vector<2x32xf32>
    %733 = math.exp %732 : vector<2x32xf32>
    %cst_167 = arith.constant 1.000000e+00 : f32
    %734 = vector.broadcast %cst_167 : f32 to vector<2x32xf32>
    %735 = arith.addf %734, %733 : vector<2x32xf32>
    %736 = arith.divf %734, %735 : vector<2x32xf32>
    %737 = vector.extract_strided_slice %724 {offsets = [0, 32], sizes = [2, 32], strides = [1, 1]} : vector<2x96xf32> to vector<2x32xf32>
    %738 = vector.extract_strided_slice %728 {offsets = [0, 32], sizes = [2, 32], strides = [1, 1]} : vector<2x96xf32> to vector<2x32xf32>
    %739 = arith.addf %737, %738 : vector<2x32xf32>
    %740 = arith.negf %739 : vector<2x32xf32>
    %741 = math.exp %740 : vector<2x32xf32>
    %cst_168 = arith.constant 1.000000e+00 : f32
    %742 = vector.broadcast %cst_168 : f32 to vector<2x32xf32>
    %743 = arith.addf %742, %741 : vector<2x32xf32>
    %744 = arith.divf %742, %743 : vector<2x32xf32>
    %745 = vector.extract_strided_slice %724 {offsets = [0, 64], sizes = [2, 32], strides = [1, 1]} : vector<2x96xf32> to vector<2x32xf32>
    %746 = vector.extract_strided_slice %728 {offsets = [0, 64], sizes = [2, 32], strides = [1, 1]} : vector<2x96xf32> to vector<2x32xf32>
    %747 = arith.mulf %736, %746 : vector<2x32xf32>
    %748 = arith.addf %745, %747 : vector<2x32xf32>
    %749 = math.tanh %748 : vector<2x32xf32>
    %cst_169 = arith.constant 1.000000e+00 : f32
    %750 = vector.broadcast %cst_169 : f32 to vector<2x32xf32>
    %751 = arith.subf %750, %744 : vector<2x32xf32>
    %752 = arith.mulf %751, %749 : vector<2x32xf32>
    %753 = arith.mulf %744, %722 : vector<2x32xf32>
    %754 = arith.addf %752, %753 : vector<2x32xf32>
    %c22 = arith.constant 22 : index
    %c0_170 = arith.constant 0 : index
    %c0_171 = arith.constant 0 : index
    %755 = vector.load %arg18[%c22, %c0_170, %c0_171] : memref<32x2x96xf32, #tpu.memory_space<vmem>>, vector<1x2x96xf32>
    %756 = vector.shape_cast %755 : vector<1x2x96xf32> to vector<2x96xf32>
    %757 = arith.truncf %754 : vector<2x32xf32> to vector<2x32xbf16>
    %cst_172 = arith.constant dense<0.000000e+00> : vector<2x96xf32>
    %758 = tpu.matmul %757, %6, %cst_172 {dimension_numbers = #tpu.dot_dimension_numbers<[1], [0], [0], [1], [0, 0, 1, 1], [], []>} : vector<2x32xbf16>, vector<32x96xbf16>, vector<2x96xf32> -> vector<2x96xf32>
    %759 = vector.broadcast %8 : vector<1x96xf32> to vector<2x96xf32>
    %760 = arith.addf %758, %759 : vector<2x96xf32>
    %761 = vector.extract_strided_slice %756 {offsets = [0, 0], sizes = [2, 32], strides = [1, 1]} : vector<2x96xf32> to vector<2x32xf32>
    %762 = vector.extract_strided_slice %760 {offsets = [0, 0], sizes = [2, 32], strides = [1, 1]} : vector<2x96xf32> to vector<2x32xf32>
    %763 = arith.addf %761, %762 : vector<2x32xf32>
    %764 = arith.negf %763 : vector<2x32xf32>
    %765 = math.exp %764 : vector<2x32xf32>
    %cst_173 = arith.constant 1.000000e+00 : f32
    %766 = vector.broadcast %cst_173 : f32 to vector<2x32xf32>
    %767 = arith.addf %766, %765 : vector<2x32xf32>
    %768 = arith.divf %766, %767 : vector<2x32xf32>
    %769 = vector.extract_strided_slice %756 {offsets = [0, 32], sizes = [2, 32], strides = [1, 1]} : vector<2x96xf32> to vector<2x32xf32>
    %770 = vector.extract_strided_slice %760 {offsets = [0, 32], sizes = [2, 32], strides = [1, 1]} : vector<2x96xf32> to vector<2x32xf32>
    %771 = arith.addf %769, %770 : vector<2x32xf32>
    %772 = arith.negf %771 : vector<2x32xf32>
    %773 = math.exp %772 : vector<2x32xf32>
    %cst_174 = arith.constant 1.000000e+00 : f32
    %774 = vector.broadcast %cst_174 : f32 to vector<2x32xf32>
    %775 = arith.addf %774, %773 : vector<2x32xf32>
    %776 = arith.divf %774, %775 : vector<2x32xf32>
    %777 = vector.extract_strided_slice %756 {offsets = [0, 64], sizes = [2, 32], strides = [1, 1]} : vector<2x96xf32> to vector<2x32xf32>
    %778 = vector.extract_strided_slice %760 {offsets = [0, 64], sizes = [2, 32], strides = [1, 1]} : vector<2x96xf32> to vector<2x32xf32>
    %779 = arith.mulf %768, %778 : vector<2x32xf32>
    %780 = arith.addf %777, %779 : vector<2x32xf32>
    %781 = math.tanh %780 : vector<2x32xf32>
    %cst_175 = arith.constant 1.000000e+00 : f32
    %782 = vector.broadcast %cst_175 : f32 to vector<2x32xf32>
    %783 = arith.subf %782, %776 : vector<2x32xf32>
    %784 = arith.mulf %783, %781 : vector<2x32xf32>
    %785 = arith.mulf %776, %754 : vector<2x32xf32>
    %786 = arith.addf %784, %785 : vector<2x32xf32>
    %c23 = arith.constant 23 : index
    %c0_176 = arith.constant 0 : index
    %c0_177 = arith.constant 0 : index
    %787 = vector.load %arg18[%c23, %c0_176, %c0_177] : memref<32x2x96xf32, #tpu.memory_space<vmem>>, vector<1x2x96xf32>
    %788 = vector.shape_cast %787 : vector<1x2x96xf32> to vector<2x96xf32>
    %789 = arith.truncf %786 : vector<2x32xf32> to vector<2x32xbf16>
    %cst_178 = arith.constant dense<0.000000e+00> : vector<2x96xf32>
    %790 = tpu.matmul %789, %6, %cst_178 {dimension_numbers = #tpu.dot_dimension_numbers<[1], [0], [0], [1], [0, 0, 1, 1], [], []>} : vector<2x32xbf16>, vector<32x96xbf16>, vector<2x96xf32> -> vector<2x96xf32>
    %791 = vector.broadcast %8 : vector<1x96xf32> to vector<2x96xf32>
    %792 = arith.addf %790, %791 : vector<2x96xf32>
    %793 = vector.extract_strided_slice %788 {offsets = [0, 0], sizes = [2, 32], strides = [1, 1]} : vector<2x96xf32> to vector<2x32xf32>
    %794 = vector.extract_strided_slice %792 {offsets = [0, 0], sizes = [2, 32], strides = [1, 1]} : vector<2x96xf32> to vector<2x32xf32>
    %795 = arith.addf %793, %794 : vector<2x32xf32>
    %796 = arith.negf %795 : vector<2x32xf32>
    %797 = math.exp %796 : vector<2x32xf32>
    %cst_179 = arith.constant 1.000000e+00 : f32
    %798 = vector.broadcast %cst_179 : f32 to vector<2x32xf32>
    %799 = arith.addf %798, %797 : vector<2x32xf32>
    %800 = arith.divf %798, %799 : vector<2x32xf32>
    %801 = vector.extract_strided_slice %788 {offsets = [0, 32], sizes = [2, 32], strides = [1, 1]} : vector<2x96xf32> to vector<2x32xf32>
    %802 = vector.extract_strided_slice %792 {offsets = [0, 32], sizes = [2, 32], strides = [1, 1]} : vector<2x96xf32> to vector<2x32xf32>
    %803 = arith.addf %801, %802 : vector<2x32xf32>
    %804 = arith.negf %803 : vector<2x32xf32>
    %805 = math.exp %804 : vector<2x32xf32>
    %cst_180 = arith.constant 1.000000e+00 : f32
    %806 = vector.broadcast %cst_180 : f32 to vector<2x32xf32>
    %807 = arith.addf %806, %805 : vector<2x32xf32>
    %808 = arith.divf %806, %807 : vector<2x32xf32>
    %809 = vector.extract_strided_slice %788 {offsets = [0, 64], sizes = [2, 32], strides = [1, 1]} : vector<2x96xf32> to vector<2x32xf32>
    %810 = vector.extract_strided_slice %792 {offsets = [0, 64], sizes = [2, 32], strides = [1, 1]} : vector<2x96xf32> to vector<2x32xf32>
    %811 = arith.mulf %800, %810 : vector<2x32xf32>
    %812 = arith.addf %809, %811 : vector<2x32xf32>
    %813 = math.tanh %812 : vector<2x32xf32>
    %cst_181 = arith.constant 1.000000e+00 : f32
    %814 = vector.broadcast %cst_181 : f32 to vector<2x32xf32>
    %815 = arith.subf %814, %808 : vector<2x32xf32>
    %816 = arith.mulf %815, %813 : vector<2x32xf32>
    %817 = arith.mulf %808, %786 : vector<2x32xf32>
    %818 = arith.addf %816, %817 : vector<2x32xf32>
    %c24 = arith.constant 24 : index
    %c0_182 = arith.constant 0 : index
    %c0_183 = arith.constant 0 : index
    %819 = vector.load %arg18[%c24, %c0_182, %c0_183] : memref<32x2x96xf32, #tpu.memory_space<vmem>>, vector<1x2x96xf32>
    %820 = vector.shape_cast %819 : vector<1x2x96xf32> to vector<2x96xf32>
    %821 = arith.truncf %818 : vector<2x32xf32> to vector<2x32xbf16>
    %cst_184 = arith.constant dense<0.000000e+00> : vector<2x96xf32>
    %822 = tpu.matmul %821, %6, %cst_184 {dimension_numbers = #tpu.dot_dimension_numbers<[1], [0], [0], [1], [0, 0, 1, 1], [], []>} : vector<2x32xbf16>, vector<32x96xbf16>, vector<2x96xf32> -> vector<2x96xf32>
    %823 = vector.broadcast %8 : vector<1x96xf32> to vector<2x96xf32>
    %824 = arith.addf %822, %823 : vector<2x96xf32>
    %825 = vector.extract_strided_slice %820 {offsets = [0, 0], sizes = [2, 32], strides = [1, 1]} : vector<2x96xf32> to vector<2x32xf32>
    %826 = vector.extract_strided_slice %824 {offsets = [0, 0], sizes = [2, 32], strides = [1, 1]} : vector<2x96xf32> to vector<2x32xf32>
    %827 = arith.addf %825, %826 : vector<2x32xf32>
    %828 = arith.negf %827 : vector<2x32xf32>
    %829 = math.exp %828 : vector<2x32xf32>
    %cst_185 = arith.constant 1.000000e+00 : f32
    %830 = vector.broadcast %cst_185 : f32 to vector<2x32xf32>
    %831 = arith.addf %830, %829 : vector<2x32xf32>
    %832 = arith.divf %830, %831 : vector<2x32xf32>
    %833 = vector.extract_strided_slice %820 {offsets = [0, 32], sizes = [2, 32], strides = [1, 1]} : vector<2x96xf32> to vector<2x32xf32>
    %834 = vector.extract_strided_slice %824 {offsets = [0, 32], sizes = [2, 32], strides = [1, 1]} : vector<2x96xf32> to vector<2x32xf32>
    %835 = arith.addf %833, %834 : vector<2x32xf32>
    %836 = arith.negf %835 : vector<2x32xf32>
    %837 = math.exp %836 : vector<2x32xf32>
    %cst_186 = arith.constant 1.000000e+00 : f32
    %838 = vector.broadcast %cst_186 : f32 to vector<2x32xf32>
    %839 = arith.addf %838, %837 : vector<2x32xf32>
    %840 = arith.divf %838, %839 : vector<2x32xf32>
    %841 = vector.extract_strided_slice %820 {offsets = [0, 64], sizes = [2, 32], strides = [1, 1]} : vector<2x96xf32> to vector<2x32xf32>
    %842 = vector.extract_strided_slice %824 {offsets = [0, 64], sizes = [2, 32], strides = [1, 1]} : vector<2x96xf32> to vector<2x32xf32>
    %843 = arith.mulf %832, %842 : vector<2x32xf32>
    %844 = arith.addf %841, %843 : vector<2x32xf32>
    %845 = math.tanh %844 : vector<2x32xf32>
    %cst_187 = arith.constant 1.000000e+00 : f32
    %846 = vector.broadcast %cst_187 : f32 to vector<2x32xf32>
    %847 = arith.subf %846, %840 : vector<2x32xf32>
    %848 = arith.mulf %847, %845 : vector<2x32xf32>
    %849 = arith.mulf %840, %818 : vector<2x32xf32>
    %850 = arith.addf %848, %849 : vector<2x32xf32>
    %c25 = arith.constant 25 : index
    %c0_188 = arith.constant 0 : index
    %c0_189 = arith.constant 0 : index
    %851 = vector.load %arg18[%c25, %c0_188, %c0_189] : memref<32x2x96xf32, #tpu.memory_space<vmem>>, vector<1x2x96xf32>
    %852 = vector.shape_cast %851 : vector<1x2x96xf32> to vector<2x96xf32>
    %853 = arith.truncf %850 : vector<2x32xf32> to vector<2x32xbf16>
    %cst_190 = arith.constant dense<0.000000e+00> : vector<2x96xf32>
    %854 = tpu.matmul %853, %6, %cst_190 {dimension_numbers = #tpu.dot_dimension_numbers<[1], [0], [0], [1], [0, 0, 1, 1], [], []>} : vector<2x32xbf16>, vector<32x96xbf16>, vector<2x96xf32> -> vector<2x96xf32>
    %855 = vector.broadcast %8 : vector<1x96xf32> to vector<2x96xf32>
    %856 = arith.addf %854, %855 : vector<2x96xf32>
    %857 = vector.extract_strided_slice %852 {offsets = [0, 0], sizes = [2, 32], strides = [1, 1]} : vector<2x96xf32> to vector<2x32xf32>
    %858 = vector.extract_strided_slice %856 {offsets = [0, 0], sizes = [2, 32], strides = [1, 1]} : vector<2x96xf32> to vector<2x32xf32>
    %859 = arith.addf %857, %858 : vector<2x32xf32>
    %860 = arith.negf %859 : vector<2x32xf32>
    %861 = math.exp %860 : vector<2x32xf32>
    %cst_191 = arith.constant 1.000000e+00 : f32
    %862 = vector.broadcast %cst_191 : f32 to vector<2x32xf32>
    %863 = arith.addf %862, %861 : vector<2x32xf32>
    %864 = arith.divf %862, %863 : vector<2x32xf32>
    %865 = vector.extract_strided_slice %852 {offsets = [0, 32], sizes = [2, 32], strides = [1, 1]} : vector<2x96xf32> to vector<2x32xf32>
    %866 = vector.extract_strided_slice %856 {offsets = [0, 32], sizes = [2, 32], strides = [1, 1]} : vector<2x96xf32> to vector<2x32xf32>
    %867 = arith.addf %865, %866 : vector<2x32xf32>
    %868 = arith.negf %867 : vector<2x32xf32>
    %869 = math.exp %868 : vector<2x32xf32>
    %cst_192 = arith.constant 1.000000e+00 : f32
    %870 = vector.broadcast %cst_192 : f32 to vector<2x32xf32>
    %871 = arith.addf %870, %869 : vector<2x32xf32>
    %872 = arith.divf %870, %871 : vector<2x32xf32>
    %873 = vector.extract_strided_slice %852 {offsets = [0, 64], sizes = [2, 32], strides = [1, 1]} : vector<2x96xf32> to vector<2x32xf32>
    %874 = vector.extract_strided_slice %856 {offsets = [0, 64], sizes = [2, 32], strides = [1, 1]} : vector<2x96xf32> to vector<2x32xf32>
    %875 = arith.mulf %864, %874 : vector<2x32xf32>
    %876 = arith.addf %873, %875 : vector<2x32xf32>
    %877 = math.tanh %876 : vector<2x32xf32>
    %cst_193 = arith.constant 1.000000e+00 : f32
    %878 = vector.broadcast %cst_193 : f32 to vector<2x32xf32>
    %879 = arith.subf %878, %872 : vector<2x32xf32>
    %880 = arith.mulf %879, %877 : vector<2x32xf32>
    %881 = arith.mulf %872, %850 : vector<2x32xf32>
    %882 = arith.addf %880, %881 : vector<2x32xf32>
    %c26 = arith.constant 26 : index
    %c0_194 = arith.constant 0 : index
    %c0_195 = arith.constant 0 : index
    %883 = vector.load %arg18[%c26, %c0_194, %c0_195] : memref<32x2x96xf32, #tpu.memory_space<vmem>>, vector<1x2x96xf32>
    %884 = vector.shape_cast %883 : vector<1x2x96xf32> to vector<2x96xf32>
    %885 = arith.truncf %882 : vector<2x32xf32> to vector<2x32xbf16>
    %cst_196 = arith.constant dense<0.000000e+00> : vector<2x96xf32>
    %886 = tpu.matmul %885, %6, %cst_196 {dimension_numbers = #tpu.dot_dimension_numbers<[1], [0], [0], [1], [0, 0, 1, 1], [], []>} : vector<2x32xbf16>, vector<32x96xbf16>, vector<2x96xf32> -> vector<2x96xf32>
    %887 = vector.broadcast %8 : vector<1x96xf32> to vector<2x96xf32>
    %888 = arith.addf %886, %887 : vector<2x96xf32>
    %889 = vector.extract_strided_slice %884 {offsets = [0, 0], sizes = [2, 32], strides = [1, 1]} : vector<2x96xf32> to vector<2x32xf32>
    %890 = vector.extract_strided_slice %888 {offsets = [0, 0], sizes = [2, 32], strides = [1, 1]} : vector<2x96xf32> to vector<2x32xf32>
    %891 = arith.addf %889, %890 : vector<2x32xf32>
    %892 = arith.negf %891 : vector<2x32xf32>
    %893 = math.exp %892 : vector<2x32xf32>
    %cst_197 = arith.constant 1.000000e+00 : f32
    %894 = vector.broadcast %cst_197 : f32 to vector<2x32xf32>
    %895 = arith.addf %894, %893 : vector<2x32xf32>
    %896 = arith.divf %894, %895 : vector<2x32xf32>
    %897 = vector.extract_strided_slice %884 {offsets = [0, 32], sizes = [2, 32], strides = [1, 1]} : vector<2x96xf32> to vector<2x32xf32>
    %898 = vector.extract_strided_slice %888 {offsets = [0, 32], sizes = [2, 32], strides = [1, 1]} : vector<2x96xf32> to vector<2x32xf32>
    %899 = arith.addf %897, %898 : vector<2x32xf32>
    %900 = arith.negf %899 : vector<2x32xf32>
    %901 = math.exp %900 : vector<2x32xf32>
    %cst_198 = arith.constant 1.000000e+00 : f32
    %902 = vector.broadcast %cst_198 : f32 to vector<2x32xf32>
    %903 = arith.addf %902, %901 : vector<2x32xf32>
    %904 = arith.divf %902, %903 : vector<2x32xf32>
    %905 = vector.extract_strided_slice %884 {offsets = [0, 64], sizes = [2, 32], strides = [1, 1]} : vector<2x96xf32> to vector<2x32xf32>
    %906 = vector.extract_strided_slice %888 {offsets = [0, 64], sizes = [2, 32], strides = [1, 1]} : vector<2x96xf32> to vector<2x32xf32>
    %907 = arith.mulf %896, %906 : vector<2x32xf32>
    %908 = arith.addf %905, %907 : vector<2x32xf32>
    %909 = math.tanh %908 : vector<2x32xf32>
    %cst_199 = arith.constant 1.000000e+00 : f32
    %910 = vector.broadcast %cst_199 : f32 to vector<2x32xf32>
    %911 = arith.subf %910, %904 : vector<2x32xf32>
    %912 = arith.mulf %911, %909 : vector<2x32xf32>
    %913 = arith.mulf %904, %882 : vector<2x32xf32>
    %914 = arith.addf %912, %913 : vector<2x32xf32>
    %c27 = arith.constant 27 : index
    %c0_200 = arith.constant 0 : index
    %c0_201 = arith.constant 0 : index
    %915 = vector.load %arg18[%c27, %c0_200, %c0_201] : memref<32x2x96xf32, #tpu.memory_space<vmem>>, vector<1x2x96xf32>
    %916 = vector.shape_cast %915 : vector<1x2x96xf32> to vector<2x96xf32>
    %917 = arith.truncf %914 : vector<2x32xf32> to vector<2x32xbf16>
    %cst_202 = arith.constant dense<0.000000e+00> : vector<2x96xf32>
    %918 = tpu.matmul %917, %6, %cst_202 {dimension_numbers = #tpu.dot_dimension_numbers<[1], [0], [0], [1], [0, 0, 1, 1], [], []>} : vector<2x32xbf16>, vector<32x96xbf16>, vector<2x96xf32> -> vector<2x96xf32>
    %919 = vector.broadcast %8 : vector<1x96xf32> to vector<2x96xf32>
    %920 = arith.addf %918, %919 : vector<2x96xf32>
    %921 = vector.extract_strided_slice %916 {offsets = [0, 0], sizes = [2, 32], strides = [1, 1]} : vector<2x96xf32> to vector<2x32xf32>
    %922 = vector.extract_strided_slice %920 {offsets = [0, 0], sizes = [2, 32], strides = [1, 1]} : vector<2x96xf32> to vector<2x32xf32>
    %923 = arith.addf %921, %922 : vector<2x32xf32>
    %924 = arith.negf %923 : vector<2x32xf32>
    %925 = math.exp %924 : vector<2x32xf32>
    %cst_203 = arith.constant 1.000000e+00 : f32
    %926 = vector.broadcast %cst_203 : f32 to vector<2x32xf32>
    %927 = arith.addf %926, %925 : vector<2x32xf32>
    %928 = arith.divf %926, %927 : vector<2x32xf32>
    %929 = vector.extract_strided_slice %916 {offsets = [0, 32], sizes = [2, 32], strides = [1, 1]} : vector<2x96xf32> to vector<2x32xf32>
    %930 = vector.extract_strided_slice %920 {offsets = [0, 32], sizes = [2, 32], strides = [1, 1]} : vector<2x96xf32> to vector<2x32xf32>
    %931 = arith.addf %929, %930 : vector<2x32xf32>
    %932 = arith.negf %931 : vector<2x32xf32>
    %933 = math.exp %932 : vector<2x32xf32>
    %cst_204 = arith.constant 1.000000e+00 : f32
    %934 = vector.broadcast %cst_204 : f32 to vector<2x32xf32>
    %935 = arith.addf %934, %933 : vector<2x32xf32>
    %936 = arith.divf %934, %935 : vector<2x32xf32>
    %937 = vector.extract_strided_slice %916 {offsets = [0, 64], sizes = [2, 32], strides = [1, 1]} : vector<2x96xf32> to vector<2x32xf32>
    %938 = vector.extract_strided_slice %920 {offsets = [0, 64], sizes = [2, 32], strides = [1, 1]} : vector<2x96xf32> to vector<2x32xf32>
    %939 = arith.mulf %928, %938 : vector<2x32xf32>
    %940 = arith.addf %937, %939 : vector<2x32xf32>
    %941 = math.tanh %940 : vector<2x32xf32>
    %cst_205 = arith.constant 1.000000e+00 : f32
    %942 = vector.broadcast %cst_205 : f32 to vector<2x32xf32>
    %943 = arith.subf %942, %936 : vector<2x32xf32>
    %944 = arith.mulf %943, %941 : vector<2x32xf32>
    %945 = arith.mulf %936, %914 : vector<2x32xf32>
    %946 = arith.addf %944, %945 : vector<2x32xf32>
    %c28 = arith.constant 28 : index
    %c0_206 = arith.constant 0 : index
    %c0_207 = arith.constant 0 : index
    %947 = vector.load %arg18[%c28, %c0_206, %c0_207] : memref<32x2x96xf32, #tpu.memory_space<vmem>>, vector<1x2x96xf32>
    %948 = vector.shape_cast %947 : vector<1x2x96xf32> to vector<2x96xf32>
    %949 = arith.truncf %946 : vector<2x32xf32> to vector<2x32xbf16>
    %cst_208 = arith.constant dense<0.000000e+00> : vector<2x96xf32>
    %950 = tpu.matmul %949, %6, %cst_208 {dimension_numbers = #tpu.dot_dimension_numbers<[1], [0], [0], [1], [0, 0, 1, 1], [], []>} : vector<2x32xbf16>, vector<32x96xbf16>, vector<2x96xf32> -> vector<2x96xf32>
    %951 = vector.broadcast %8 : vector<1x96xf32> to vector<2x96xf32>
    %952 = arith.addf %950, %951 : vector<2x96xf32>
    %953 = vector.extract_strided_slice %948 {offsets = [0, 0], sizes = [2, 32], strides = [1, 1]} : vector<2x96xf32> to vector<2x32xf32>
    %954 = vector.extract_strided_slice %952 {offsets = [0, 0], sizes = [2, 32], strides = [1, 1]} : vector<2x96xf32> to vector<2x32xf32>
    %955 = arith.addf %953, %954 : vector<2x32xf32>
    %956 = arith.negf %955 : vector<2x32xf32>
    %957 = math.exp %956 : vector<2x32xf32>
    %cst_209 = arith.constant 1.000000e+00 : f32
    %958 = vector.broadcast %cst_209 : f32 to vector<2x32xf32>
    %959 = arith.addf %958, %957 : vector<2x32xf32>
    %960 = arith.divf %958, %959 : vector<2x32xf32>
    %961 = vector.extract_strided_slice %948 {offsets = [0, 32], sizes = [2, 32], strides = [1, 1]} : vector<2x96xf32> to vector<2x32xf32>
    %962 = vector.extract_strided_slice %952 {offsets = [0, 32], sizes = [2, 32], strides = [1, 1]} : vector<2x96xf32> to vector<2x32xf32>
    %963 = arith.addf %961, %962 : vector<2x32xf32>
    %964 = arith.negf %963 : vector<2x32xf32>
    %965 = math.exp %964 : vector<2x32xf32>
    %cst_210 = arith.constant 1.000000e+00 : f32
    %966 = vector.broadcast %cst_210 : f32 to vector<2x32xf32>
    %967 = arith.addf %966, %965 : vector<2x32xf32>
    %968 = arith.divf %966, %967 : vector<2x32xf32>
    %969 = vector.extract_strided_slice %948 {offsets = [0, 64], sizes = [2, 32], strides = [1, 1]} : vector<2x96xf32> to vector<2x32xf32>
    %970 = vector.extract_strided_slice %952 {offsets = [0, 64], sizes = [2, 32], strides = [1, 1]} : vector<2x96xf32> to vector<2x32xf32>
    %971 = arith.mulf %960, %970 : vector<2x32xf32>
    %972 = arith.addf %969, %971 : vector<2x32xf32>
    %973 = math.tanh %972 : vector<2x32xf32>
    %cst_211 = arith.constant 1.000000e+00 : f32
    %974 = vector.broadcast %cst_211 : f32 to vector<2x32xf32>
    %975 = arith.subf %974, %968 : vector<2x32xf32>
    %976 = arith.mulf %975, %973 : vector<2x32xf32>
    %977 = arith.mulf %968, %946 : vector<2x32xf32>
    %978 = arith.addf %976, %977 : vector<2x32xf32>
    %c29 = arith.constant 29 : index
    %c0_212 = arith.constant 0 : index
    %c0_213 = arith.constant 0 : index
    %979 = vector.load %arg18[%c29, %c0_212, %c0_213] : memref<32x2x96xf32, #tpu.memory_space<vmem>>, vector<1x2x96xf32>
    %980 = vector.shape_cast %979 : vector<1x2x96xf32> to vector<2x96xf32>
    %981 = arith.truncf %978 : vector<2x32xf32> to vector<2x32xbf16>
    %cst_214 = arith.constant dense<0.000000e+00> : vector<2x96xf32>
    %982 = tpu.matmul %981, %6, %cst_214 {dimension_numbers = #tpu.dot_dimension_numbers<[1], [0], [0], [1], [0, 0, 1, 1], [], []>} : vector<2x32xbf16>, vector<32x96xbf16>, vector<2x96xf32> -> vector<2x96xf32>
    %983 = vector.broadcast %8 : vector<1x96xf32> to vector<2x96xf32>
    %984 = arith.addf %982, %983 : vector<2x96xf32>
    %985 = vector.extract_strided_slice %980 {offsets = [0, 0], sizes = [2, 32], strides = [1, 1]} : vector<2x96xf32> to vector<2x32xf32>
    %986 = vector.extract_strided_slice %984 {offsets = [0, 0], sizes = [2, 32], strides = [1, 1]} : vector<2x96xf32> to vector<2x32xf32>
    %987 = arith.addf %985, %986 : vector<2x32xf32>
    %988 = arith.negf %987 : vector<2x32xf32>
    %989 = math.exp %988 : vector<2x32xf32>
    %cst_215 = arith.constant 1.000000e+00 : f32
    %990 = vector.broadcast %cst_215 : f32 to vector<2x32xf32>
    %991 = arith.addf %990, %989 : vector<2x32xf32>
    %992 = arith.divf %990, %991 : vector<2x32xf32>
    %993 = vector.extract_strided_slice %980 {offsets = [0, 32], sizes = [2, 32], strides = [1, 1]} : vector<2x96xf32> to vector<2x32xf32>
    %994 = vector.extract_strided_slice %984 {offsets = [0, 32], sizes = [2, 32], strides = [1, 1]} : vector<2x96xf32> to vector<2x32xf32>
    %995 = arith.addf %993, %994 : vector<2x32xf32>
    %996 = arith.negf %995 : vector<2x32xf32>
    %997 = math.exp %996 : vector<2x32xf32>
    %cst_216 = arith.constant 1.000000e+00 : f32
    %998 = vector.broadcast %cst_216 : f32 to vector<2x32xf32>
    %999 = arith.addf %998, %997 : vector<2x32xf32>
    %1000 = arith.divf %998, %999 : vector<2x32xf32>
    %1001 = vector.extract_strided_slice %980 {offsets = [0, 64], sizes = [2, 32], strides = [1, 1]} : vector<2x96xf32> to vector<2x32xf32>
    %1002 = vector.extract_strided_slice %984 {offsets = [0, 64], sizes = [2, 32], strides = [1, 1]} : vector<2x96xf32> to vector<2x32xf32>
    %1003 = arith.mulf %992, %1002 : vector<2x32xf32>
    %1004 = arith.addf %1001, %1003 : vector<2x32xf32>
    %1005 = math.tanh %1004 : vector<2x32xf32>
    %cst_217 = arith.constant 1.000000e+00 : f32
    %1006 = vector.broadcast %cst_217 : f32 to vector<2x32xf32>
    %1007 = arith.subf %1006, %1000 : vector<2x32xf32>
    %1008 = arith.mulf %1007, %1005 : vector<2x32xf32>
    %1009 = arith.mulf %1000, %978 : vector<2x32xf32>
    %1010 = arith.addf %1008, %1009 : vector<2x32xf32>
    %c30 = arith.constant 30 : index
    %c0_218 = arith.constant 0 : index
    %c0_219 = arith.constant 0 : index
    %1011 = vector.load %arg18[%c30, %c0_218, %c0_219] : memref<32x2x96xf32, #tpu.memory_space<vmem>>, vector<1x2x96xf32>
    %1012 = vector.shape_cast %1011 : vector<1x2x96xf32> to vector<2x96xf32>
    %1013 = arith.truncf %1010 : vector<2x32xf32> to vector<2x32xbf16>
    %cst_220 = arith.constant dense<0.000000e+00> : vector<2x96xf32>
    %1014 = tpu.matmul %1013, %6, %cst_220 {dimension_numbers = #tpu.dot_dimension_numbers<[1], [0], [0], [1], [0, 0, 1, 1], [], []>} : vector<2x32xbf16>, vector<32x96xbf16>, vector<2x96xf32> -> vector<2x96xf32>
    %1015 = vector.broadcast %8 : vector<1x96xf32> to vector<2x96xf32>
    %1016 = arith.addf %1014, %1015 : vector<2x96xf32>
    %1017 = vector.extract_strided_slice %1012 {offsets = [0, 0], sizes = [2, 32], strides = [1, 1]} : vector<2x96xf32> to vector<2x32xf32>
    %1018 = vector.extract_strided_slice %1016 {offsets = [0, 0], sizes = [2, 32], strides = [1, 1]} : vector<2x96xf32> to vector<2x32xf32>
    %1019 = arith.addf %1017, %1018 : vector<2x32xf32>
    %1020 = arith.negf %1019 : vector<2x32xf32>
    %1021 = math.exp %1020 : vector<2x32xf32>
    %cst_221 = arith.constant 1.000000e+00 : f32
    %1022 = vector.broadcast %cst_221 : f32 to vector<2x32xf32>
    %1023 = arith.addf %1022, %1021 : vector<2x32xf32>
    %1024 = arith.divf %1022, %1023 : vector<2x32xf32>
    %1025 = vector.extract_strided_slice %1012 {offsets = [0, 32], sizes = [2, 32], strides = [1, 1]} : vector<2x96xf32> to vector<2x32xf32>
    %1026 = vector.extract_strided_slice %1016 {offsets = [0, 32], sizes = [2, 32], strides = [1, 1]} : vector<2x96xf32> to vector<2x32xf32>
    %1027 = arith.addf %1025, %1026 : vector<2x32xf32>
    %1028 = arith.negf %1027 : vector<2x32xf32>
    %1029 = math.exp %1028 : vector<2x32xf32>
    %cst_222 = arith.constant 1.000000e+00 : f32
    %1030 = vector.broadcast %cst_222 : f32 to vector<2x32xf32>
    %1031 = arith.addf %1030, %1029 : vector<2x32xf32>
    %1032 = arith.divf %1030, %1031 : vector<2x32xf32>
    %1033 = vector.extract_strided_slice %1012 {offsets = [0, 64], sizes = [2, 32], strides = [1, 1]} : vector<2x96xf32> to vector<2x32xf32>
    %1034 = vector.extract_strided_slice %1016 {offsets = [0, 64], sizes = [2, 32], strides = [1, 1]} : vector<2x96xf32> to vector<2x32xf32>
    %1035 = arith.mulf %1024, %1034 : vector<2x32xf32>
    %1036 = arith.addf %1033, %1035 : vector<2x32xf32>
    %1037 = math.tanh %1036 : vector<2x32xf32>
    %cst_223 = arith.constant 1.000000e+00 : f32
    %1038 = vector.broadcast %cst_223 : f32 to vector<2x32xf32>
    %1039 = arith.subf %1038, %1032 : vector<2x32xf32>
    %1040 = arith.mulf %1039, %1037 : vector<2x32xf32>
    %1041 = arith.mulf %1032, %1010 : vector<2x32xf32>
    %1042 = arith.addf %1040, %1041 : vector<2x32xf32>
    %c31 = arith.constant 31 : index
    %c0_224 = arith.constant 0 : index
    %c0_225 = arith.constant 0 : index
    %1043 = vector.load %arg18[%c31, %c0_224, %c0_225] : memref<32x2x96xf32, #tpu.memory_space<vmem>>, vector<1x2x96xf32>
    %1044 = vector.shape_cast %1043 : vector<1x2x96xf32> to vector<2x96xf32>
    %1045 = arith.truncf %1042 : vector<2x32xf32> to vector<2x32xbf16>
    %cst_226 = arith.constant dense<0.000000e+00> : vector<2x96xf32>
    %1046 = tpu.matmul %1045, %6, %cst_226 {dimension_numbers = #tpu.dot_dimension_numbers<[1], [0], [0], [1], [0, 0, 1, 1], [], []>} : vector<2x32xbf16>, vector<32x96xbf16>, vector<2x96xf32> -> vector<2x96xf32>
    %1047 = vector.broadcast %8 : vector<1x96xf32> to vector<2x96xf32>
    %1048 = arith.addf %1046, %1047 : vector<2x96xf32>
    %1049 = vector.extract_strided_slice %1044 {offsets = [0, 0], sizes = [2, 32], strides = [1, 1]} : vector<2x96xf32> to vector<2x32xf32>
    %1050 = vector.extract_strided_slice %1048 {offsets = [0, 0], sizes = [2, 32], strides = [1, 1]} : vector<2x96xf32> to vector<2x32xf32>
    %1051 = arith.addf %1049, %1050 : vector<2x32xf32>
    %1052 = arith.negf %1051 : vector<2x32xf32>
    %1053 = math.exp %1052 : vector<2x32xf32>
    %cst_227 = arith.constant 1.000000e+00 : f32
    %1054 = vector.broadcast %cst_227 : f32 to vector<2x32xf32>
    %1055 = arith.addf %1054, %1053 : vector<2x32xf32>
    %1056 = arith.divf %1054, %1055 : vector<2x32xf32>
    %1057 = vector.extract_strided_slice %1044 {offsets = [0, 32], sizes = [2, 32], strides = [1, 1]} : vector<2x96xf32> to vector<2x32xf32>
    %1058 = vector.extract_strided_slice %1048 {offsets = [0, 32], sizes = [2, 32], strides = [1, 1]} : vector<2x96xf32> to vector<2x32xf32>
    %1059 = arith.addf %1057, %1058 : vector<2x32xf32>
    %1060 = arith.negf %1059 : vector<2x32xf32>
    %1061 = math.exp %1060 : vector<2x32xf32>
    %cst_228 = arith.constant 1.000000e+00 : f32
    %1062 = vector.broadcast %cst_228 : f32 to vector<2x32xf32>
    %1063 = arith.addf %1062, %1061 : vector<2x32xf32>
    %1064 = arith.divf %1062, %1063 : vector<2x32xf32>
    %1065 = vector.extract_strided_slice %1044 {offsets = [0, 64], sizes = [2, 32], strides = [1, 1]} : vector<2x96xf32> to vector<2x32xf32>
    %1066 = vector.extract_strided_slice %1048 {offsets = [0, 64], sizes = [2, 32], strides = [1, 1]} : vector<2x96xf32> to vector<2x32xf32>
    %1067 = arith.mulf %1056, %1066 : vector<2x32xf32>
    %1068 = arith.addf %1065, %1067 : vector<2x32xf32>
    %1069 = math.tanh %1068 : vector<2x32xf32>
    %cst_229 = arith.constant 1.000000e+00 : f32
    %1070 = vector.broadcast %cst_229 : f32 to vector<2x32xf32>
    %1071 = arith.subf %1070, %1064 : vector<2x32xf32>
    %1072 = arith.mulf %1071, %1069 : vector<2x32xf32>
    %1073 = arith.mulf %1064, %1042 : vector<2x32xf32>
    %1074 = arith.addf %1072, %1073 : vector<2x32xf32>
    %c0_230 = arith.constant 0 : index
    %c0_231 = arith.constant 0 : index
    %1075 = vector.load %arg9[%c0_230, %c0_231] : memref<12x8xf32, #tpu.memory_space<vmem>>, vector<12x8xf32>
    %1076 = arith.truncf %1075 : vector<12x8xf32> to vector<12x8xbf16>
    %c0_232 = arith.constant 0 : index
    %c0_233 = arith.constant 0 : index
    %1077 = vector.load %arg10[%c0_232, %c0_233] : memref<8x96xf32, #tpu.memory_space<vmem>>, vector<8x96xf32>
    %1078 = arith.truncf %1077 : vector<8x96xf32> to vector<8x96xbf16>
    %cst_234 = arith.constant dense<0.000000e+00> : vector<12x96xf32>
    %1079 = tpu.matmul %1076, %1078, %cst_234 {dimension_numbers = #tpu.dot_dimension_numbers<[1], [0], [0], [1], [0, 0, 1, 1], [], []>} : vector<12x8xbf16>, vector<8x96xbf16>, vector<12x96xf32> -> vector<12x96xf32>
    %1080 = arith.truncf %1079 : vector<12x96xf32> to vector<12x96xbf16>
    %1081 = arith.truncf %1074 : vector<2x32xf32> to vector<2x32xbf16>
    %c0_235 = arith.constant 0 : index
    %c0_236 = arith.constant 0 : index
    %1082 = vector.load %arg11[%c0_235, %c0_236] : memref<32x96xf32, #tpu.memory_space<vmem>>, vector<32x96xf32>
    %1083 = arith.truncf %1082 : vector<32x96xf32> to vector<32x96xbf16>
    %cst_237 = arith.constant dense<0.000000e+00> : vector<2x96xf32>
    %1084 = tpu.matmul %1081, %1083, %cst_237 {dimension_numbers = #tpu.dot_dimension_numbers<[1], [0], [0], [1], [0, 0, 1, 1], [], []>} : vector<2x32xbf16>, vector<32x96xbf16>, vector<2x96xf32> -> vector<2x96xf32>
    %1085 = vector.broadcast %11 : vector<1x96xf32> to vector<2x96xf32>
    %1086 = arith.addf %1084, %1085 : vector<2x96xf32>
    %1087 = tpu.iota {dimensions = array<i32: 1>} : vector<1x12xi32>
    %c0_238 = arith.constant 0 : index
    %c0_239 = arith.constant 0 : index
    %1088 = vector.load %arg2[%c0_238, %c0_239] : memref<2x1xi32, #tpu.memory_space<vmem>>, vector<2x1xi32>
    %1089 = vector.broadcast %1088 : vector<2x1xi32> to vector<2x12xi32>
    %1090 = vector.broadcast %1087 : vector<1x12xi32> to vector<2x12xi32>
    %1091 = arith.cmpi eq, %1089, %1090 : vector<2x12xi32>
    %1092 = arith.extui %1091 : vector<2x12xi1> to vector<2x12xi32>
    %1093 = arith.sitofp %1092 : vector<2x12xi32> to vector<2x12xf32>
    %1094 = arith.truncf %1093 : vector<2x12xf32> to vector<2x12xbf16>
    %cst_240 = arith.constant dense<0.000000e+00> : vector<2x96xf32>
    %1095 = tpu.matmul %1094, %1080, %cst_240 {dimension_numbers = #tpu.dot_dimension_numbers<[1], [0], [0], [1], [0, 0, 1, 1], [], []>} : vector<2x12xbf16>, vector<12x96xbf16>, vector<2x96xf32> -> vector<2x96xf32>
    %1096 = arith.addf %1095, %1086 : vector<2x96xf32>
    %1097 = arith.truncf %1074 : vector<2x32xf32> to vector<2x32xbf16>
    %cst_241 = arith.constant dense<0.000000e+00> : vector<2x96xf32>
    %1098 = tpu.matmul %1097, %10, %cst_241 {dimension_numbers = #tpu.dot_dimension_numbers<[1], [0], [0], [1], [0, 0, 1, 1], [], []>} : vector<2x32xbf16>, vector<32x96xbf16>, vector<2x96xf32> -> vector<2x96xf32>
    %1099 = vector.broadcast %12 : vector<1x96xf32> to vector<2x96xf32>
    %1100 = arith.addf %1098, %1099 : vector<2x96xf32>
    %1101 = vector.extract_strided_slice %1096 {offsets = [0, 0], sizes = [2, 32], strides = [1, 1]} : vector<2x96xf32> to vector<2x32xf32>
    %1102 = vector.extract_strided_slice %1100 {offsets = [0, 0], sizes = [2, 32], strides = [1, 1]} : vector<2x96xf32> to vector<2x32xf32>
    %1103 = arith.addf %1101, %1102 : vector<2x32xf32>
    %1104 = arith.negf %1103 : vector<2x32xf32>
    %1105 = math.exp %1104 : vector<2x32xf32>
    %cst_242 = arith.constant 1.000000e+00 : f32
    %1106 = vector.broadcast %cst_242 : f32 to vector<2x32xf32>
    %1107 = arith.addf %1106, %1105 : vector<2x32xf32>
    %1108 = arith.divf %1106, %1107 : vector<2x32xf32>
    %1109 = vector.extract_strided_slice %1096 {offsets = [0, 32], sizes = [2, 32], strides = [1, 1]} : vector<2x96xf32> to vector<2x32xf32>
    %1110 = vector.extract_strided_slice %1100 {offsets = [0, 32], sizes = [2, 32], strides = [1, 1]} : vector<2x96xf32> to vector<2x32xf32>
    %1111 = arith.addf %1109, %1110 : vector<2x32xf32>
    %1112 = arith.negf %1111 : vector<2x32xf32>
    %1113 = math.exp %1112 : vector<2x32xf32>
    %cst_243 = arith.constant 1.000000e+00 : f32
    %1114 = vector.broadcast %cst_243 : f32 to vector<2x32xf32>
    %1115 = arith.addf %1114, %1113 : vector<2x32xf32>
    %1116 = arith.divf %1114, %1115 : vector<2x32xf32>
    %1117 = vector.extract_strided_slice %1096 {offsets = [0, 64], sizes = [2, 32], strides = [1, 1]} : vector<2x96xf32> to vector<2x32xf32>
    %1118 = vector.extract_strided_slice %1100 {offsets = [0, 64], sizes = [2, 32], strides = [1, 1]} : vector<2x96xf32> to vector<2x32xf32>
    %1119 = arith.mulf %1108, %1118 : vector<2x32xf32>
    %1120 = arith.addf %1117, %1119 : vector<2x32xf32>
    %1121 = math.tanh %1120 : vector<2x32xf32>
    %cst_244 = arith.constant 1.000000e+00 : f32
    %1122 = vector.broadcast %cst_244 : f32 to vector<2x32xf32>
    %1123 = arith.subf %1122, %1116 : vector<2x32xf32>
    %1124 = arith.mulf %1123, %1121 : vector<2x32xf32>
    %1125 = arith.mulf %1116, %1074 : vector<2x32xf32>
    %1126 = arith.addf %1124, %1125 : vector<2x32xf32>
    %1127 = arith.truncf %1126 : vector<2x32xf32> to vector<2x32xbf16>
    %cst_245 = arith.constant dense<0.000000e+00> : vector<2x12xf32>
    %1128 = tpu.matmul %1127, %14, %cst_245 {dimension_numbers = #tpu.dot_dimension_numbers<[1], [0], [0], [1], [0, 0, 1, 1], [], []>} : vector<2x32xbf16>, vector<32x12xbf16>, vector<2x12xf32> -> vector<2x12xf32>
    %1129 = vector.broadcast %15 : vector<1x12xf32> to vector<2x12xf32>
    %1130 = arith.addf %1128, %1129 : vector<2x12xf32>
    %1131 = vector.shape_cast %1130 : vector<2x12xf32> to vector<2x1x12xf32>
    %c0_246 = arith.constant 0 : index
    %c0_247 = arith.constant 0 : index
    %c0_248 = arith.constant 0 : index
    %1132 = vector.load %arg17[%c0_246, %c0_247, %c0_248] : memref<2x6x12xf32, #tpu.memory_space<vmem>>, vector<2x1x12xf32>
    tpu.vector_store %arg17[%c0_246, %c0_247, %c0_248], %1131 {strides = array<i32>} : memref<2x6x12xf32, #tpu.memory_space<vmem>>, vector<2x1x12xf32>,
    %cst_249 = arith.constant dense<0xFF800000> : vector<2xf32>
    %1133 = vector.multi_reduction <maximumf>, %1130, %cst_249 [1] : vector<2x12xf32> to vector<2xf32>
    %1134 = vector.shape_cast %1133 : vector<2xf32> to vector<2x1xf32>
    %1135 = vector.broadcast %1134 : vector<2x1xf32> to vector<2x12xf32>
    %1136 = arith.cmpf oeq, %1130, %1135 : vector<2x12xf32>
    %c12_i32 = arith.constant 12 : i32
    %1137 = vector.shape_cast %1087 : vector<1x12xi32> to vector<1x12xi32>
    %1138 = vector.broadcast %1137 : vector<1x12xi32> to vector<2x12xi32>
    %1139 = vector.broadcast %c12_i32 : i32 to vector<2x12xi32>
    %1140 = arith.select %1136, %1138, %1139 : vector<2x12xi1>, vector<2x12xi32>
    %cst_250 = arith.constant dense<2147483647> : vector<2xi32>
    %1141 = vector.multi_reduction <minsi>, %1140, %cst_250 [1] : vector<2x12xi32> to vector<2xi32>
    %1142 = vector.shape_cast %1141 : vector<2xi32> to vector<2x1xi32>
    %1143 = vector.broadcast %1142 : vector<2x1xi32> to vector<2x12xi32>
    %1144 = vector.broadcast %1087 : vector<1x12xi32> to vector<2x12xi32>
    %1145 = arith.cmpi eq, %1143, %1144 : vector<2x12xi32>
    %1146 = arith.extui %1145 : vector<2x12xi1> to vector<2x12xi32>
    %1147 = arith.sitofp %1146 : vector<2x12xi32> to vector<2x12xf32>
    %1148 = arith.truncf %1147 : vector<2x12xf32> to vector<2x12xbf16>
    %cst_251 = arith.constant dense<0.000000e+00> : vector<2x96xf32>
    %1149 = tpu.matmul %1148, %1080, %cst_251 {dimension_numbers = #tpu.dot_dimension_numbers<[1], [0], [0], [1], [0, 0, 1, 1], [], []>} : vector<2x12xbf16>, vector<12x96xbf16>, vector<2x96xf32> -> vector<2x96xf32>
    %1150 = arith.addf %1149, %1086 : vector<2x96xf32>
    %1151 = arith.truncf %1126 : vector<2x32xf32> to vector<2x32xbf16>
    %cst_252 = arith.constant dense<0.000000e+00> : vector<2x96xf32>
    %1152 = tpu.matmul %1151, %10, %cst_252 {dimension_numbers = #tpu.dot_dimension_numbers<[1], [0], [0], [1], [0, 0, 1, 1], [], []>} : vector<2x32xbf16>, vector<32x96xbf16>, vector<2x96xf32> -> vector<2x96xf32>
    %1153 = vector.broadcast %12 : vector<1x96xf32> to vector<2x96xf32>
    %1154 = arith.addf %1152, %1153 : vector<2x96xf32>
    %1155 = vector.extract_strided_slice %1150 {offsets = [0, 0], sizes = [2, 32], strides = [1, 1]} : vector<2x96xf32> to vector<2x32xf32>
    %1156 = vector.extract_strided_slice %1154 {offsets = [0, 0], sizes = [2, 32], strides = [1, 1]} : vector<2x96xf32> to vector<2x32xf32>
    %1157 = arith.addf %1155, %1156 : vector<2x32xf32>
    %1158 = arith.negf %1157 : vector<2x32xf32>
    %1159 = math.exp %1158 : vector<2x32xf32>
    %cst_253 = arith.constant 1.000000e+00 : f32
    %1160 = vector.broadcast %cst_253 : f32 to vector<2x32xf32>
    %1161 = arith.addf %1160, %1159 : vector<2x32xf32>
    %1162 = arith.divf %1160, %1161 : vector<2x32xf32>
    %1163 = vector.extract_strided_slice %1150 {offsets = [0, 32], sizes = [2, 32], strides = [1, 1]} : vector<2x96xf32> to vector<2x32xf32>
    %1164 = vector.extract_strided_slice %1154 {offsets = [0, 32], sizes = [2, 32], strides = [1, 1]} : vector<2x96xf32> to vector<2x32xf32>
    %1165 = arith.addf %1163, %1164 : vector<2x32xf32>
    %1166 = arith.negf %1165 : vector<2x32xf32>
    %1167 = math.exp %1166 : vector<2x32xf32>
    %cst_254 = arith.constant 1.000000e+00 : f32
    %1168 = vector.broadcast %cst_254 : f32 to vector<2x32xf32>
    %1169 = arith.addf %1168, %1167 : vector<2x32xf32>
    %1170 = arith.divf %1168, %1169 : vector<2x32xf32>
    %1171 = vector.extract_strided_slice %1150 {offsets = [0, 64], sizes = [2, 32], strides = [1, 1]} : vector<2x96xf32> to vector<2x32xf32>
    %1172 = vector.extract_strided_slice %1154 {offsets = [0, 64], sizes = [2, 32], strides = [1, 1]} : vector<2x96xf32> to vector<2x32xf32>
    %1173 = arith.mulf %1162, %1172 : vector<2x32xf32>
    %1174 = arith.addf %1171, %1173 : vector<2x32xf32>
    %1175 = math.tanh %1174 : vector<2x32xf32>
    %cst_255 = arith.constant 1.000000e+00 : f32
    %1176 = vector.broadcast %cst_255 : f32 to vector<2x32xf32>
    %1177 = arith.subf %1176, %1170 : vector<2x32xf32>
    %1178 = arith.mulf %1177, %1175 : vector<2x32xf32>
    %1179 = arith.mulf %1170, %1126 : vector<2x32xf32>
    %1180 = arith.addf %1178, %1179 : vector<2x32xf32>
    %1181 = arith.truncf %1180 : vector<2x32xf32> to vector<2x32xbf16>
    %cst_256 = arith.constant dense<0.000000e+00> : vector<2x12xf32>
    %1182 = tpu.matmul %1181, %14, %cst_256 {dimension_numbers = #tpu.dot_dimension_numbers<[1], [0], [0], [1], [0, 0, 1, 1], [], []>} : vector<2x32xbf16>, vector<32x12xbf16>, vector<2x12xf32> -> vector<2x12xf32>
    %1183 = vector.broadcast %15 : vector<1x12xf32> to vector<2x12xf32>
    %1184 = arith.addf %1182, %1183 : vector<2x12xf32>
    %1185 = vector.shape_cast %1184 : vector<2x12xf32> to vector<2x1x12xf32>
    %c0_257 = arith.constant 0 : index
    %c1_258 = arith.constant 1 : index
    %c0_259 = arith.constant 0 : index
    %1186 = vector.load %arg17[%c0_257, %c1_258, %c0_259] : memref<2x6x12xf32, #tpu.memory_space<vmem>>, vector<2x1x12xf32>
    tpu.vector_store %arg17[%c0_257, %c1_258, %c0_259], %1185 {strides = array<i32>} : memref<2x6x12xf32, #tpu.memory_space<vmem>>, vector<2x1x12xf32>,
    %cst_260 = arith.constant dense<0xFF800000> : vector<2xf32>
    %1187 = vector.multi_reduction <maximumf>, %1184, %cst_260 [1] : vector<2x12xf32> to vector<2xf32>
    %1188 = vector.shape_cast %1187 : vector<2xf32> to vector<2x1xf32>
    %1189 = vector.broadcast %1188 : vector<2x1xf32> to vector<2x12xf32>
    %1190 = arith.cmpf oeq, %1184, %1189 : vector<2x12xf32>
    %c12_i32_261 = arith.constant 12 : i32
    %1191 = vector.shape_cast %1087 : vector<1x12xi32> to vector<1x12xi32>
    %1192 = vector.broadcast %1191 : vector<1x12xi32> to vector<2x12xi32>
    %1193 = vector.broadcast %c12_i32_261 : i32 to vector<2x12xi32>
    %1194 = arith.select %1190, %1192, %1193 : vector<2x12xi1>, vector<2x12xi32>
    %cst_262 = arith.constant dense<2147483647> : vector<2xi32>
    %1195 = vector.multi_reduction <minsi>, %1194, %cst_262 [1] : vector<2x12xi32> to vector<2xi32>
    %1196 = vector.shape_cast %1195 : vector<2xi32> to vector<2x1xi32>
    %1197 = vector.broadcast %1196 : vector<2x1xi32> to vector<2x12xi32>
    %1198 = vector.broadcast %1087 : vector<1x12xi32> to vector<2x12xi32>
    %1199 = arith.cmpi eq, %1197, %1198 : vector<2x12xi32>
    %1200 = arith.extui %1199 : vector<2x12xi1> to vector<2x12xi32>
    %1201 = arith.sitofp %1200 : vector<2x12xi32> to vector<2x12xf32>
    %1202 = arith.truncf %1201 : vector<2x12xf32> to vector<2x12xbf16>
    %cst_263 = arith.constant dense<0.000000e+00> : vector<2x96xf32>
    %1203 = tpu.matmul %1202, %1080, %cst_263 {dimension_numbers = #tpu.dot_dimension_numbers<[1], [0], [0], [1], [0, 0, 1, 1], [], []>} : vector<2x12xbf16>, vector<12x96xbf16>, vector<2x96xf32> -> vector<2x96xf32>
    %1204 = arith.addf %1203, %1086 : vector<2x96xf32>
    %1205 = arith.truncf %1180 : vector<2x32xf32> to vector<2x32xbf16>
    %cst_264 = arith.constant dense<0.000000e+00> : vector<2x96xf32>
    %1206 = tpu.matmul %1205, %10, %cst_264 {dimension_numbers = #tpu.dot_dimension_numbers<[1], [0], [0], [1], [0, 0, 1, 1], [], []>} : vector<2x32xbf16>, vector<32x96xbf16>, vector<2x96xf32> -> vector<2x96xf32>
    %1207 = vector.broadcast %12 : vector<1x96xf32> to vector<2x96xf32>
    %1208 = arith.addf %1206, %1207 : vector<2x96xf32>
    %1209 = vector.extract_strided_slice %1204 {offsets = [0, 0], sizes = [2, 32], strides = [1, 1]} : vector<2x96xf32> to vector<2x32xf32>
    %1210 = vector.extract_strided_slice %1208 {offsets = [0, 0], sizes = [2, 32], strides = [1, 1]} : vector<2x96xf32> to vector<2x32xf32>
    %1211 = arith.addf %1209, %1210 : vector<2x32xf32>
    %1212 = arith.negf %1211 : vector<2x32xf32>
    %1213 = math.exp %1212 : vector<2x32xf32>
    %cst_265 = arith.constant 1.000000e+00 : f32
    %1214 = vector.broadcast %cst_265 : f32 to vector<2x32xf32>
    %1215 = arith.addf %1214, %1213 : vector<2x32xf32>
    %1216 = arith.divf %1214, %1215 : vector<2x32xf32>
    %1217 = vector.extract_strided_slice %1204 {offsets = [0, 32], sizes = [2, 32], strides = [1, 1]} : vector<2x96xf32> to vector<2x32xf32>
    %1218 = vector.extract_strided_slice %1208 {offsets = [0, 32], sizes = [2, 32], strides = [1, 1]} : vector<2x96xf32> to vector<2x32xf32>
    %1219 = arith.addf %1217, %1218 : vector<2x32xf32>
    %1220 = arith.negf %1219 : vector<2x32xf32>
    %1221 = math.exp %1220 : vector<2x32xf32>
    %cst_266 = arith.constant 1.000000e+00 : f32
    %1222 = vector.broadcast %cst_266 : f32 to vector<2x32xf32>
    %1223 = arith.addf %1222, %1221 : vector<2x32xf32>
    %1224 = arith.divf %1222, %1223 : vector<2x32xf32>
    %1225 = vector.extract_strided_slice %1204 {offsets = [0, 64], sizes = [2, 32], strides = [1, 1]} : vector<2x96xf32> to vector<2x32xf32>
    %1226 = vector.extract_strided_slice %1208 {offsets = [0, 64], sizes = [2, 32], strides = [1, 1]} : vector<2x96xf32> to vector<2x32xf32>
    %1227 = arith.mulf %1216, %1226 : vector<2x32xf32>
    %1228 = arith.addf %1225, %1227 : vector<2x32xf32>
    %1229 = math.tanh %1228 : vector<2x32xf32>
    %cst_267 = arith.constant 1.000000e+00 : f32
    %1230 = vector.broadcast %cst_267 : f32 to vector<2x32xf32>
    %1231 = arith.subf %1230, %1224 : vector<2x32xf32>
    %1232 = arith.mulf %1231, %1229 : vector<2x32xf32>
    %1233 = arith.mulf %1224, %1180 : vector<2x32xf32>
    %1234 = arith.addf %1232, %1233 : vector<2x32xf32>
    %1235 = arith.truncf %1234 : vector<2x32xf32> to vector<2x32xbf16>
    %cst_268 = arith.constant dense<0.000000e+00> : vector<2x12xf32>
    %1236 = tpu.matmul %1235, %14, %cst_268 {dimension_numbers = #tpu.dot_dimension_numbers<[1], [0], [0], [1], [0, 0, 1, 1], [], []>} : vector<2x32xbf16>, vector<32x12xbf16>, vector<2x12xf32> -> vector<2x12xf32>
    %1237 = vector.broadcast %15 : vector<1x12xf32> to vector<2x12xf32>
    %1238 = arith.addf %1236, %1237 : vector<2x12xf32>
    %1239 = vector.shape_cast %1238 : vector<2x12xf32> to vector<2x1x12xf32>
    %c0_269 = arith.constant 0 : index
    %c2_270 = arith.constant 2 : index
    %c0_271 = arith.constant 0 : index
    %1240 = vector.load %arg17[%c0_269, %c2_270, %c0_271] : memref<2x6x12xf32, #tpu.memory_space<vmem>>, vector<2x1x12xf32>
    tpu.vector_store %arg17[%c0_269, %c2_270, %c0_271], %1239 {strides = array<i32>} : memref<2x6x12xf32, #tpu.memory_space<vmem>>, vector<2x1x12xf32>,
    %cst_272 = arith.constant dense<0xFF800000> : vector<2xf32>
    %1241 = vector.multi_reduction <maximumf>, %1238, %cst_272 [1] : vector<2x12xf32> to vector<2xf32>
    %1242 = vector.shape_cast %1241 : vector<2xf32> to vector<2x1xf32>
    %1243 = vector.broadcast %1242 : vector<2x1xf32> to vector<2x12xf32>
    %1244 = arith.cmpf oeq, %1238, %1243 : vector<2x12xf32>
    %c12_i32_273 = arith.constant 12 : i32
    %1245 = vector.shape_cast %1087 : vector<1x12xi32> to vector<1x12xi32>
    %1246 = vector.broadcast %1245 : vector<1x12xi32> to vector<2x12xi32>
    %1247 = vector.broadcast %c12_i32_273 : i32 to vector<2x12xi32>
    %1248 = arith.select %1244, %1246, %1247 : vector<2x12xi1>, vector<2x12xi32>
    %cst_274 = arith.constant dense<2147483647> : vector<2xi32>
    %1249 = vector.multi_reduction <minsi>, %1248, %cst_274 [1] : vector<2x12xi32> to vector<2xi32>
    %1250 = vector.shape_cast %1249 : vector<2xi32> to vector<2x1xi32>
    %1251 = vector.broadcast %1250 : vector<2x1xi32> to vector<2x12xi32>
    %1252 = vector.broadcast %1087 : vector<1x12xi32> to vector<2x12xi32>
    %1253 = arith.cmpi eq, %1251, %1252 : vector<2x12xi32>
    %1254 = arith.extui %1253 : vector<2x12xi1> to vector<2x12xi32>
    %1255 = arith.sitofp %1254 : vector<2x12xi32> to vector<2x12xf32>
    %1256 = arith.truncf %1255 : vector<2x12xf32> to vector<2x12xbf16>
    %cst_275 = arith.constant dense<0.000000e+00> : vector<2x96xf32>
    %1257 = tpu.matmul %1256, %1080, %cst_275 {dimension_numbers = #tpu.dot_dimension_numbers<[1], [0], [0], [1], [0, 0, 1, 1], [], []>} : vector<2x12xbf16>, vector<12x96xbf16>, vector<2x96xf32> -> vector<2x96xf32>
    %1258 = arith.addf %1257, %1086 : vector<2x96xf32>
    %1259 = arith.truncf %1234 : vector<2x32xf32> to vector<2x32xbf16>
    %cst_276 = arith.constant dense<0.000000e+00> : vector<2x96xf32>
    %1260 = tpu.matmul %1259, %10, %cst_276 {dimension_numbers = #tpu.dot_dimension_numbers<[1], [0], [0], [1], [0, 0, 1, 1], [], []>} : vector<2x32xbf16>, vector<32x96xbf16>, vector<2x96xf32> -> vector<2x96xf32>
    %1261 = vector.broadcast %12 : vector<1x96xf32> to vector<2x96xf32>
    %1262 = arith.addf %1260, %1261 : vector<2x96xf32>
    %1263 = vector.extract_strided_slice %1258 {offsets = [0, 0], sizes = [2, 32], strides = [1, 1]} : vector<2x96xf32> to vector<2x32xf32>
    %1264 = vector.extract_strided_slice %1262 {offsets = [0, 0], sizes = [2, 32], strides = [1, 1]} : vector<2x96xf32> to vector<2x32xf32>
    %1265 = arith.addf %1263, %1264 : vector<2x32xf32>
    %1266 = arith.negf %1265 : vector<2x32xf32>
    %1267 = math.exp %1266 : vector<2x32xf32>
    %cst_277 = arith.constant 1.000000e+00 : f32
    %1268 = vector.broadcast %cst_277 : f32 to vector<2x32xf32>
    %1269 = arith.addf %1268, %1267 : vector<2x32xf32>
    %1270 = arith.divf %1268, %1269 : vector<2x32xf32>
    %1271 = vector.extract_strided_slice %1258 {offsets = [0, 32], sizes = [2, 32], strides = [1, 1]} : vector<2x96xf32> to vector<2x32xf32>
    %1272 = vector.extract_strided_slice %1262 {offsets = [0, 32], sizes = [2, 32], strides = [1, 1]} : vector<2x96xf32> to vector<2x32xf32>
    %1273 = arith.addf %1271, %1272 : vector<2x32xf32>
    %1274 = arith.negf %1273 : vector<2x32xf32>
    %1275 = math.exp %1274 : vector<2x32xf32>
    %cst_278 = arith.constant 1.000000e+00 : f32
    %1276 = vector.broadcast %cst_278 : f32 to vector<2x32xf32>
    %1277 = arith.addf %1276, %1275 : vector<2x32xf32>
    %1278 = arith.divf %1276, %1277 : vector<2x32xf32>
    %1279 = vector.extract_strided_slice %1258 {offsets = [0, 64], sizes = [2, 32], strides = [1, 1]} : vector<2x96xf32> to vector<2x32xf32>
    %1280 = vector.extract_strided_slice %1262 {offsets = [0, 64], sizes = [2, 32], strides = [1, 1]} : vector<2x96xf32> to vector<2x32xf32>
    %1281 = arith.mulf %1270, %1280 : vector<2x32xf32>
    %1282 = arith.addf %1279, %1281 : vector<2x32xf32>
    %1283 = math.tanh %1282 : vector<2x32xf32>
    %cst_279 = arith.constant 1.000000e+00 : f32
    %1284 = vector.broadcast %cst_279 : f32 to vector<2x32xf32>
    %1285 = arith.subf %1284, %1278 : vector<2x32xf32>
    %1286 = arith.mulf %1285, %1283 : vector<2x32xf32>
    %1287 = arith.mulf %1278, %1234 : vector<2x32xf32>
    %1288 = arith.addf %1286, %1287 : vector<2x32xf32>
    %1289 = arith.truncf %1288 : vector<2x32xf32> to vector<2x32xbf16>
    %cst_280 = arith.constant dense<0.000000e+00> : vector<2x12xf32>
    %1290 = tpu.matmul %1289, %14, %cst_280 {dimension_numbers = #tpu.dot_dimension_numbers<[1], [0], [0], [1], [0, 0, 1, 1], [], []>} : vector<2x32xbf16>, vector<32x12xbf16>, vector<2x12xf32> -> vector<2x12xf32>
    %1291 = vector.broadcast %15 : vector<1x12xf32> to vector<2x12xf32>
    %1292 = arith.addf %1290, %1291 : vector<2x12xf32>
    %1293 = vector.shape_cast %1292 : vector<2x12xf32> to vector<2x1x12xf32>
    %c0_281 = arith.constant 0 : index
    %c3_282 = arith.constant 3 : index
    %c0_283 = arith.constant 0 : index
    %1294 = vector.load %arg17[%c0_281, %c3_282, %c0_283] : memref<2x6x12xf32, #tpu.memory_space<vmem>>, vector<2x1x12xf32>
    tpu.vector_store %arg17[%c0_281, %c3_282, %c0_283], %1293 {strides = array<i32>} : memref<2x6x12xf32, #tpu.memory_space<vmem>>, vector<2x1x12xf32>,
    %cst_284 = arith.constant dense<0xFF800000> : vector<2xf32>
    %1295 = vector.multi_reduction <maximumf>, %1292, %cst_284 [1] : vector<2x12xf32> to vector<2xf32>
    %1296 = vector.shape_cast %1295 : vector<2xf32> to vector<2x1xf32>
    %1297 = vector.broadcast %1296 : vector<2x1xf32> to vector<2x12xf32>
    %1298 = arith.cmpf oeq, %1292, %1297 : vector<2x12xf32>
    %c12_i32_285 = arith.constant 12 : i32
    %1299 = vector.shape_cast %1087 : vector<1x12xi32> to vector<1x12xi32>
    %1300 = vector.broadcast %1299 : vector<1x12xi32> to vector<2x12xi32>
    %1301 = vector.broadcast %c12_i32_285 : i32 to vector<2x12xi32>
    %1302 = arith.select %1298, %1300, %1301 : vector<2x12xi1>, vector<2x12xi32>
    %cst_286 = arith.constant dense<2147483647> : vector<2xi32>
    %1303 = vector.multi_reduction <minsi>, %1302, %cst_286 [1] : vector<2x12xi32> to vector<2xi32>
    %1304 = vector.shape_cast %1303 : vector<2xi32> to vector<2x1xi32>
    %1305 = vector.broadcast %1304 : vector<2x1xi32> to vector<2x12xi32>
    %1306 = vector.broadcast %1087 : vector<1x12xi32> to vector<2x12xi32>
    %1307 = arith.cmpi eq, %1305, %1306 : vector<2x12xi32>
    %1308 = arith.extui %1307 : vector<2x12xi1> to vector<2x12xi32>
    %1309 = arith.sitofp %1308 : vector<2x12xi32> to vector<2x12xf32>
    %1310 = arith.truncf %1309 : vector<2x12xf32> to vector<2x12xbf16>
    %cst_287 = arith.constant dense<0.000000e+00> : vector<2x96xf32>
    %1311 = tpu.matmul %1310, %1080, %cst_287 {dimension_numbers = #tpu.dot_dimension_numbers<[1], [0], [0], [1], [0, 0, 1, 1], [], []>} : vector<2x12xbf16>, vector<12x96xbf16>, vector<2x96xf32> -> vector<2x96xf32>
    %1312 = arith.addf %1311, %1086 : vector<2x96xf32>
    %1313 = arith.truncf %1288 : vector<2x32xf32> to vector<2x32xbf16>
    %cst_288 = arith.constant dense<0.000000e+00> : vector<2x96xf32>
    %1314 = tpu.matmul %1313, %10, %cst_288 {dimension_numbers = #tpu.dot_dimension_numbers<[1], [0], [0], [1], [0, 0, 1, 1], [], []>} : vector<2x32xbf16>, vector<32x96xbf16>, vector<2x96xf32> -> vector<2x96xf32>
    %1315 = vector.broadcast %12 : vector<1x96xf32> to vector<2x96xf32>
    %1316 = arith.addf %1314, %1315 : vector<2x96xf32>
    %1317 = vector.extract_strided_slice %1312 {offsets = [0, 0], sizes = [2, 32], strides = [1, 1]} : vector<2x96xf32> to vector<2x32xf32>
    %1318 = vector.extract_strided_slice %1316 {offsets = [0, 0], sizes = [2, 32], strides = [1, 1]} : vector<2x96xf32> to vector<2x32xf32>
    %1319 = arith.addf %1317, %1318 : vector<2x32xf32>
    %1320 = arith.negf %1319 : vector<2x32xf32>
    %1321 = math.exp %1320 : vector<2x32xf32>
    %cst_289 = arith.constant 1.000000e+00 : f32
    %1322 = vector.broadcast %cst_289 : f32 to vector<2x32xf32>
    %1323 = arith.addf %1322, %1321 : vector<2x32xf32>
    %1324 = arith.divf %1322, %1323 : vector<2x32xf32>
    %1325 = vector.extract_strided_slice %1312 {offsets = [0, 32], sizes = [2, 32], strides = [1, 1]} : vector<2x96xf32> to vector<2x32xf32>
    %1326 = vector.extract_strided_slice %1316 {offsets = [0, 32], sizes = [2, 32], strides = [1, 1]} : vector<2x96xf32> to vector<2x32xf32>
    %1327 = arith.addf %1325, %1326 : vector<2x32xf32>
    %1328 = arith.negf %1327 : vector<2x32xf32>
    %1329 = math.exp %1328 : vector<2x32xf32>
    %cst_290 = arith.constant 1.000000e+00 : f32
    %1330 = vector.broadcast %cst_290 : f32 to vector<2x32xf32>
    %1331 = arith.addf %1330, %1329 : vector<2x32xf32>
    %1332 = arith.divf %1330, %1331 : vector<2x32xf32>
    %1333 = vector.extract_strided_slice %1312 {offsets = [0, 64], sizes = [2, 32], strides = [1, 1]} : vector<2x96xf32> to vector<2x32xf32>
    %1334 = vector.extract_strided_slice %1316 {offsets = [0, 64], sizes = [2, 32], strides = [1, 1]} : vector<2x96xf32> to vector<2x32xf32>
    %1335 = arith.mulf %1324, %1334 : vector<2x32xf32>
    %1336 = arith.addf %1333, %1335 : vector<2x32xf32>
    %1337 = math.tanh %1336 : vector<2x32xf32>
    %cst_291 = arith.constant 1.000000e+00 : f32
    %1338 = vector.broadcast %cst_291 : f32 to vector<2x32xf32>
    %1339 = arith.subf %1338, %1332 : vector<2x32xf32>
    %1340 = arith.mulf %1339, %1337 : vector<2x32xf32>
    %1341 = arith.mulf %1332, %1288 : vector<2x32xf32>
    %1342 = arith.addf %1340, %1341 : vector<2x32xf32>
    %1343 = arith.truncf %1342 : vector<2x32xf32> to vector<2x32xbf16>
    %cst_292 = arith.constant dense<0.000000e+00> : vector<2x12xf32>
    %1344 = tpu.matmul %1343, %14, %cst_292 {dimension_numbers = #tpu.dot_dimension_numbers<[1], [0], [0], [1], [0, 0, 1, 1], [], []>} : vector<2x32xbf16>, vector<32x12xbf16>, vector<2x12xf32> -> vector<2x12xf32>
    %1345 = vector.broadcast %15 : vector<1x12xf32> to vector<2x12xf32>
    %1346 = arith.addf %1344, %1345 : vector<2x12xf32>
    %1347 = vector.shape_cast %1346 : vector<2x12xf32> to vector<2x1x12xf32>
    %c0_293 = arith.constant 0 : index
    %c4_294 = arith.constant 4 : index
    %c0_295 = arith.constant 0 : index
    %1348 = vector.load %arg17[%c0_293, %c4_294, %c0_295] : memref<2x6x12xf32, #tpu.memory_space<vmem>>, vector<2x1x12xf32>
    tpu.vector_store %arg17[%c0_293, %c4_294, %c0_295], %1347 {strides = array<i32>} : memref<2x6x12xf32, #tpu.memory_space<vmem>>, vector<2x1x12xf32>,
    %cst_296 = arith.constant dense<0xFF800000> : vector<2xf32>
    %1349 = vector.multi_reduction <maximumf>, %1346, %cst_296 [1] : vector<2x12xf32> to vector<2xf32>
    %1350 = vector.shape_cast %1349 : vector<2xf32> to vector<2x1xf32>
    %1351 = vector.broadcast %1350 : vector<2x1xf32> to vector<2x12xf32>
    %1352 = arith.cmpf oeq, %1346, %1351 : vector<2x12xf32>
    %c12_i32_297 = arith.constant 12 : i32
    %1353 = vector.shape_cast %1087 : vector<1x12xi32> to vector<1x12xi32>
    %1354 = vector.broadcast %1353 : vector<1x12xi32> to vector<2x12xi32>
    %1355 = vector.broadcast %c12_i32_297 : i32 to vector<2x12xi32>
    %1356 = arith.select %1352, %1354, %1355 : vector<2x12xi1>, vector<2x12xi32>
    %cst_298 = arith.constant dense<2147483647> : vector<2xi32>
    %1357 = vector.multi_reduction <minsi>, %1356, %cst_298 [1] : vector<2x12xi32> to vector<2xi32>
    %1358 = vector.shape_cast %1357 : vector<2xi32> to vector<2x1xi32>
    %1359 = vector.broadcast %1358 : vector<2x1xi32> to vector<2x12xi32>
    %1360 = vector.broadcast %1087 : vector<1x12xi32> to vector<2x12xi32>
    %1361 = arith.cmpi eq, %1359, %1360 : vector<2x12xi32>
    %1362 = arith.extui %1361 : vector<2x12xi1> to vector<2x12xi32>
    %1363 = arith.sitofp %1362 : vector<2x12xi32> to vector<2x12xf32>
    %1364 = arith.truncf %1363 : vector<2x12xf32> to vector<2x12xbf16>
    %cst_299 = arith.constant dense<0.000000e+00> : vector<2x96xf32>
    %1365 = tpu.matmul %1364, %1080, %cst_299 {dimension_numbers = #tpu.dot_dimension_numbers<[1], [0], [0], [1], [0, 0, 1, 1], [], []>} : vector<2x12xbf16>, vector<12x96xbf16>, vector<2x96xf32> -> vector<2x96xf32>
    %1366 = arith.addf %1365, %1086 : vector<2x96xf32>
    %1367 = arith.truncf %1342 : vector<2x32xf32> to vector<2x32xbf16>
    %cst_300 = arith.constant dense<0.000000e+00> : vector<2x96xf32>
    %1368 = tpu.matmul %1367, %10, %cst_300 {dimension_numbers = #tpu.dot_dimension_numbers<[1], [0], [0], [1], [0, 0, 1, 1], [], []>} : vector<2x32xbf16>, vector<32x96xbf16>, vector<2x96xf32> -> vector<2x96xf32>
    %1369 = vector.broadcast %12 : vector<1x96xf32> to vector<2x96xf32>
    %1370 = arith.addf %1368, %1369 : vector<2x96xf32>
    %1371 = vector.extract_strided_slice %1366 {offsets = [0, 0], sizes = [2, 32], strides = [1, 1]} : vector<2x96xf32> to vector<2x32xf32>
    %1372 = vector.extract_strided_slice %1370 {offsets = [0, 0], sizes = [2, 32], strides = [1, 1]} : vector<2x96xf32> to vector<2x32xf32>
    %1373 = arith.addf %1371, %1372 : vector<2x32xf32>
    %1374 = arith.negf %1373 : vector<2x32xf32>
    %1375 = math.exp %1374 : vector<2x32xf32>
    %cst_301 = arith.constant 1.000000e+00 : f32
    %1376 = vector.broadcast %cst_301 : f32 to vector<2x32xf32>
    %1377 = arith.addf %1376, %1375 : vector<2x32xf32>
    %1378 = arith.divf %1376, %1377 : vector<2x32xf32>
    %1379 = vector.extract_strided_slice %1366 {offsets = [0, 32], sizes = [2, 32], strides = [1, 1]} : vector<2x96xf32> to vector<2x32xf32>
    %1380 = vector.extract_strided_slice %1370 {offsets = [0, 32], sizes = [2, 32], strides = [1, 1]} : vector<2x96xf32> to vector<2x32xf32>
    %1381 = arith.addf %1379, %1380 : vector<2x32xf32>
    %1382 = arith.negf %1381 : vector<2x32xf32>
    %1383 = math.exp %1382 : vector<2x32xf32>
    %cst_302 = arith.constant 1.000000e+00 : f32
    %1384 = vector.broadcast %cst_302 : f32 to vector<2x32xf32>
    %1385 = arith.addf %1384, %1383 : vector<2x32xf32>
    %1386 = arith.divf %1384, %1385 : vector<2x32xf32>
    %1387 = vector.extract_strided_slice %1366 {offsets = [0, 64], sizes = [2, 32], strides = [1, 1]} : vector<2x96xf32> to vector<2x32xf32>
    %1388 = vector.extract_strided_slice %1370 {offsets = [0, 64], sizes = [2, 32], strides = [1, 1]} : vector<2x96xf32> to vector<2x32xf32>
    %1389 = arith.mulf %1378, %1388 : vector<2x32xf32>
    %1390 = arith.addf %1387, %1389 : vector<2x32xf32>
    %1391 = math.tanh %1390 : vector<2x32xf32>
    %cst_303 = arith.constant 1.000000e+00 : f32
    %1392 = vector.broadcast %cst_303 : f32 to vector<2x32xf32>
    %1393 = arith.subf %1392, %1386 : vector<2x32xf32>
    %1394 = arith.mulf %1393, %1391 : vector<2x32xf32>
    %1395 = arith.mulf %1386, %1342 : vector<2x32xf32>
    %1396 = arith.addf %1394, %1395 : vector<2x32xf32>
    %1397 = arith.truncf %1396 : vector<2x32xf32> to vector<2x32xbf16>
    %cst_304 = arith.constant dense<0.000000e+00> : vector<2x12xf32>
    %1398 = tpu.matmul %1397, %14, %cst_304 {dimension_numbers = #tpu.dot_dimension_numbers<[1], [0], [0], [1], [0, 0, 1, 1], [], []>} : vector<2x32xbf16>, vector<32x12xbf16>, vector<2x12xf32> -> vector<2x12xf32>
    %1399 = vector.broadcast %15 : vector<1x12xf32> to vector<2x12xf32>
    %1400 = arith.addf %1398, %1399 : vector<2x12xf32>
    %1401 = vector.shape_cast %1400 : vector<2x12xf32> to vector<2x1x12xf32>
    %c0_305 = arith.constant 0 : index
    %c5_306 = arith.constant 5 : index
    %c0_307 = arith.constant 0 : index
    %1402 = vector.load %arg17[%c0_305, %c5_306, %c0_307] : memref<2x6x12xf32, #tpu.memory_space<vmem>>, vector<2x1x12xf32>
    tpu.vector_store %arg17[%c0_305, %c5_306, %c0_307], %1401 {strides = array<i32>} : memref<2x6x12xf32, #tpu.memory_space<vmem>>, vector<2x1x12xf32>,
    return
  }
  func.func @transform_0(%arg0: i32) -> (i32, i32, i32) {
    %c0_i32 = arith.constant 0 : i32
    %c0_i32_0 = arith.constant 0 : i32
    %c0_i32_1 = arith.constant 0 : i32
    return %arg0, %c0_i32, %c0_i32_0 : i32, i32, i32
  }
  func.func @transform_1(%arg0: i32) -> (i32, i32) {
    %c0_i32 = arith.constant 0 : i32
    %c0_i32_0 = arith.constant 0 : i32
    return %arg0, %c0_i32 : i32, i32
  }
  func.func @transform_2(%arg0: i32) -> (i32, i32) {
    %c0_i32 = arith.constant 0 : i32
    %c0_i32_0 = arith.constant 0 : i32
    %c0_i32_1 = arith.constant 0 : i32
    return %c0_i32, %c0_i32_0 : i32, i32
  }
  func.func @transform_3(%arg0: i32) -> (i32, i32) {
    %c0_i32 = arith.constant 0 : i32
    %c0_i32_0 = arith.constant 0 : i32
    %c0_i32_1 = arith.constant 0 : i32
    return %c0_i32, %c0_i32_0 : i32, i32
  }
  func.func @transform_4(%arg0: i32) -> (i32, i32) {
    %c0_i32 = arith.constant 0 : i32
    %c0_i32_0 = arith.constant 0 : i32
    %c0_i32_1 = arith.constant 0 : i32
    return %c0_i32, %c0_i32_0 : i32, i32
  }
  func.func @transform_5(%arg0: i32) -> (i32, i32) {
    %c0_i32 = arith.constant 0 : i32
    %c0_i32_0 = arith.constant 0 : i32
    %c0_i32_1 = arith.constant 0 : i32
    return %c0_i32, %c0_i32_0 : i32, i32
  }
  func.func @transform_6(%arg0: i32) -> (i32, i32) {
    %c0_i32 = arith.constant 0 : i32
    %c0_i32_0 = arith.constant 0 : i32
    %c0_i32_1 = arith.constant 0 : i32
    return %c0_i32, %c0_i32_0 : i32, i32
  }
  func.func @transform_7(%arg0: i32) -> (i32, i32) {
    %c0_i32 = arith.constant 0 : i32
    %c0_i32_0 = arith.constant 0 : i32
    %c0_i32_1 = arith.constant 0 : i32
    return %c0_i32, %c0_i32_0 : i32, i32
  }
  func.func @transform_8(%arg0: i32) -> (i32, i32) {
    %c0_i32 = arith.constant 0 : i32
    %c0_i32_0 = arith.constant 0 : i32
    %c0_i32_1 = arith.constant 0 : i32
    return %c0_i32, %c0_i32_0 : i32, i32
  }
  func.func @transform_9(%arg0: i32) -> (i32, i32) {
    %c0_i32 = arith.constant 0 : i32
    %c0_i32_0 = arith.constant 0 : i32
    %c0_i32_1 = arith.constant 0 : i32
    return %c0_i32, %c0_i32_0 : i32, i32
  }
  func.func @transform_10(%arg0: i32) -> (i32, i32) {
    %c0_i32 = arith.constant 0 : i32
    %c0_i32_0 = arith.constant 0 : i32
    %c0_i32_1 = arith.constant 0 : i32
    return %c0_i32, %c0_i32_0 : i32, i32
  }
  func.func @transform_11(%arg0: i32) -> (i32, i32) {
    %c0_i32 = arith.constant 0 : i32
    %c0_i32_0 = arith.constant 0 : i32
    %c0_i32_1 = arith.constant 0 : i32
    return %c0_i32, %c0_i32_0 : i32, i32
  }
  func.func @transform_12(%arg0: i32) -> (i32, i32) {
    %c0_i32 = arith.constant 0 : i32
    %c0_i32_0 = arith.constant 0 : i32
    %c0_i32_1 = arith.constant 0 : i32
    return %c0_i32, %c0_i32_0 : i32, i32
  }
  func.func @transform_13(%arg0: i32) -> (i32, i32) {
    %c0_i32 = arith.constant 0 : i32
    %c0_i32_0 = arith.constant 0 : i32
    %c0_i32_1 = arith.constant 0 : i32
    return %c0_i32, %c0_i32_0 : i32, i32
  }
  func.func @transform_14(%arg0: i32) -> (i32, i32) {
    %c0_i32 = arith.constant 0 : i32
    %c0_i32_0 = arith.constant 0 : i32
    %c0_i32_1 = arith.constant 0 : i32
    return %c0_i32, %c0_i32_0 : i32, i32
  }
  func.func @transform_15(%arg0: i32) -> (i32, i32) {
    %c0_i32 = arith.constant 0 : i32
    %c0_i32_0 = arith.constant 0 : i32
    %c0_i32_1 = arith.constant 0 : i32
    return %c0_i32, %c0_i32_0 : i32, i32
  }
  func.func @transform_16(%arg0: i32) -> (i32, i32, i32) {
    %c0_i32 = arith.constant 0 : i32
    %c0_i32_0 = arith.constant 0 : i32
    %c0_i32_1 = arith.constant 0 : i32
    return %arg0, %c0_i32, %c0_i32_0 : i32, i32, i32
  }
}

</mosaic_0001>

<llo_original>
// kernel: baseline_forward.1
$region0: #{baseline_forward.1}
  #allocation0 [shape = 'u32[]', space=smem, size = 0x4, offset = 0x4, fixed_abs, tag = 'smem constant byte address 0x4 - core index']
  #allocation1 [shape = 'u32[144,128]{1,0:T(1,128)}', space=vmem, size = 0x12000, scoped, tag = 'internal scratch']
  #allocation2 [shape = 'f32[32,2,96]{2,1,0:T(2,128)}', space=vmem, size = 0x8000, scoped, tag = 'scratch operand']
  %s0 = inlined_call_operand.vmem [shape: f32[2,4,18], index: 0, kind: input, shape index: {}]
  %s1 = inlined_call_operand.vmem [shape: s32[2,1], index: 1, kind: input, shape index: {}]
  %s2 = inlined_call_operand.vmem [shape: f32[32,12], index: 2, kind: input, shape index: {}]
  %s3 = inlined_call_operand.vmem [shape: f32[32,1], index: 3, kind: input, shape index: {}]
  %s4 = inlined_call_operand.vmem [shape: f32[16,96], index: 4, kind: input, shape index: {}]
  %s5 = inlined_call_operand.vmem [shape: f32[32,96], index: 5, kind: input, shape index: {}]
  %s6 = inlined_call_operand.vmem [shape: f32[1,96], index: 6, kind: input, shape index: {}]
  %s7 = inlined_call_operand.vmem [shape: f32[1,96], index: 7, kind: input, shape index: {}]
  %s8 = inlined_call_operand.vmem [shape: f32[12,8], index: 8, kind: input, shape index: {}]
  %s9 = inlined_call_operand.vmem [shape: f32[8,96], index: 9, kind: input, shape index: {}]
  %s10 = inlined_call_operand.vmem [shape: f32[32,96], index: 10, kind: input, shape index: {}]
  %s11 = inlined_call_operand.vmem [shape: f32[32,96], index: 11, kind: input, shape index: {}]
  %s12 = inlined_call_operand.vmem [shape: f32[1,96], index: 12, kind: input, shape index: {}]
  %s13 = inlined_call_operand.vmem [shape: f32[1,96], index: 13, kind: input, shape index: {}]
  %s14 = inlined_call_operand.vmem [shape: f32[32,12], index: 14, kind: input, shape index: {}]
  %s15 = inlined_call_operand.vmem [shape: f32[1,12], index: 15, kind: input, shape index: {}]
  %s16 = inlined_call_operand.vmem [shape: f32[2,6,12], index: 16, kind: output, shape index: {}]
  %s17 = sld [smem:[#allocation0]]
  $region74: #{baseline_forward.1} parent=0
    _
  %s19 = ssub.s32 1, %s17
  %s20 = scalar_select 0, %s19, %s17
  // Predicated region
  $region2: #{baseline_forward.1} parent=0 // pred_check
    _
  $region3: #{baseline_forward.1} parent=0 // pred_check_branch
    %22 = sbr.rel (0) target = $region5
  $region4: #{baseline_forward.1} parent=0 // pred_region
    _
  $region5: #{baseline_forward.1} parent=0 // pred_fallthru
    _
  // Predicated region
  $region6: #{baseline_forward.1} parent=0 // pred_check
    _
  $region7: #{baseline_forward.1} parent=0 // pred_check_branch
    %24 = sbr.rel (0) target = $region9
  $region8: #{baseline_forward.1} parent=0 // pred_region
    _
  $region9: #{baseline_forward.1} parent=0 // pred_fallthru
    _
  // Predicated region
  $region10: #{baseline_forward.1} parent=0 // pred_check
    _
  $region11: #{baseline_forward.1} parent=0 // pred_check_branch
    %26 = sbr.rel (0) target = $region13
  $region12: #{baseline_forward.1} parent=0 // pred_region
    _
  $region13: #{baseline_forward.1} parent=0 // pred_fallthru
    _
  // Predicated region
  $region14: #{baseline_forward.1} parent=0 // pred_check
    _
  $region15: #{baseline_forward.1} parent=0 // pred_check_branch
    %28 = sbr.rel (0) target = $region17
  $region16: #{baseline_forward.1} parent=0 // pred_region
    _
  $region17: #{baseline_forward.1} parent=0 // pred_fallthru
    _
  // Predicated region
  $region18: #{baseline_forward.1} parent=0 // pred_check
    _
  $region19: #{baseline_forward.1} parent=0 // pred_check_branch
    %30 = sbr.rel (0) target = $region21
  $region20: #{baseline_forward.1} parent=0 // pred_region
    _
  $region21: #{baseline_forward.1} parent=0 // pred_fallthru
    _
  // Predicated region
  $region22: #{baseline_forward.1} parent=0 // pred_check
    _
  $region23: #{baseline_forward.1} parent=0 // pred_check_branch
    %32 = sbr.rel (0) target = $region25
  $region24: #{baseline_forward.1} parent=0 // pred_region
    _
  $region25: #{baseline_forward.1} parent=0 // pred_fallthru
    _
  // Predicated region
  $region26: #{baseline_forward.1} parent=0 // pred_check
    _
  $region27: #{baseline_forward.1} parent=0 // pred_check_branch
    %34 = sbr.rel (0) target = $region29
  $region28: #{baseline_forward.1} parent=0 // pred_region
    _
  $region29: #{baseline_forward.1} parent=0 // pred_fallthru
    _
  // Predicated region
  $region30: #{baseline_forward.1} parent=0 // pred_check
    _
  $region31: #{baseline_forward.1} parent=0 // pred_check_branch
    %36 = sbr.rel (0) target = $region33
  $region32: #{baseline_forward.1} parent=0 // pred_region
    _
  $region33: #{baseline_forward.1} parent=0 // pred_fallthru
    _
  // Predicated region
  $region34: #{baseline_forward.1} parent=0 // pred_check
    _
  $region35: #{baseline_forward.1} parent=0 // pred_check_branch
    %38 = sbr.rel (0) target = $region37
  $region36: #{baseline_forward.1} parent=0 // pred_region
    _
  $region37: #{baseline_forward.1} parent=0 // pred_fallthru
    _
  // Predicated region
  $region38: #{baseline_forward.1} parent=0 // pred_check
    _
  $region39: #{baseline_forward.1} parent=0 // pred_check_branch
    %40 = sbr.rel (0) target = $region41
  $region40: #{baseline_forward.1} parent=0 // pred_region
    _
  $region41: #{baseline_forward.1} parent=0 // pred_fallthru
    _
  // Predicated region
  $region42: #{baseline_forward.1} parent=0 // pred_check
    _
  $region43: #{baseline_forward.1} parent=0 // pred_check_branch
    %42 = sbr.rel (0) target = $region45
  $region44: #{baseline_forward.1} parent=0 // pred_region
    _
  $region45: #{baseline_forward.1} parent=0 // pred_fallthru
    _
  // Predicated region
  $region46: #{baseline_forward.1} parent=0 // pred_check
    _
  $region47: #{baseline_forward.1} parent=0 // pred_check_branch
    %44 = sbr.rel (0) target = $region49
  $region48: #{baseline_forward.1} parent=0 // pred_region
    _
  $region49: #{baseline_forward.1} parent=0 // pred_fallthru
    _
  // Predicated region
  $region50: #{baseline_forward.1} parent=0 // pred_check
    _
  $region51: #{baseline_forward.1} parent=0 // pred_check_branch
    %46 = sbr.rel (0) target = $region53
  $region52: #{baseline_forward.1} parent=0 // pred_region
    _
  $region53: #{baseline_forward.1} parent=0 // pred_fallthru
    _
  // Predicated region
  $region54: #{baseline_forward.1} parent=0 // pred_check
    _
  $region55: #{baseline_forward.1} parent=0 // pred_check_branch
    %48 = sbr.rel (0) target = $region57
  $region56: #{baseline_forward.1} parent=0 // pred_region
    _
  $region57: #{baseline_forward.1} parent=0 // pred_fallthru
    _
  // Predicated region
  $region58: #{baseline_forward.1} parent=0 // pred_check
    _
  $region59: #{baseline_forward.1} parent=0 // pred_check_branch
    %50 = sbr.rel (0) target = $region61
  $region60: #{baseline_forward.1} parent=0 // pred_region
    _
  $region61: #{baseline_forward.1} parent=0 // pred_fallthru
    _
  // Predicated region
  $region62: #{baseline_forward.1} parent=0 // pred_check
    _
  $region63: #{baseline_forward.1} parent=0 // pred_check_branch
    %52 = sbr.rel (0) target = $region65
  $region64: #{baseline_forward.1} parent=0 // pred_region
    _
  $region65: #{baseline_forward.1} parent=0 // pred_fallthru
    _
  %v54 = vld [vmem:[%s2] sm:$0xff]
  %v55 = vld [vmem:[%s2 + $0x8] sm:$0xff]
  %v56 = vld [vmem:[%s2 + $0x10] sm:$0xff]
  %v57 = vld [vmem:[%s2 + $0x18] sm:$0xff]
  %v58 = vpack.c.bf16 %v55, %v54
  %v59 = vpack.c.bf16 %v57, %v56
  %v60 = vld [vmem:[%s3] sm:$0xff]
  %v61 = vld [vmem:[%s3 + $0x8] sm:$0xff]
  %v62 = vld [vmem:[%s3 + $0x10] sm:$0xff]
  %v63 = vld [vmem:[%s3 + $0x18] sm:$0xff]
  %v64 = vld [vmem:[%s4] sm:$0xff]
  %v65 = vld [vmem:[%s4 + $0x8] sm:$0xff]
  %v66 = vpack.c.bf16 %v65, %v64
  %v67 = vld [vmem:[%s5] sm:$0xff]
  %v68 = vld [vmem:[%s5 + $0x8] sm:$0xff]
  %v69 = vld [vmem:[%s5 + $0x10] sm:$0xff]
  %v70 = vld [vmem:[%s5 + $0x18] sm:$0xff]
  %v71 = vpack.c.bf16 %v68, %v67
  %v72 = vpack.c.bf16 %v70, %v69
  %v73 = vld [vmem:[%s6] sm:$0x1]
  %v74 = vld [vmem:[%s7] sm:$0x1]
  %v75 = vld [vmem:[%s11] sm:$0xff]
  %v76 = vld [vmem:[%s11 + $0x8] sm:$0xff]
  %v77 = vld [vmem:[%s11 + $0x10] sm:$0xff]
  %v78 = vld [vmem:[%s11 + $0x18] sm:$0xff]
  %v79 = vpack.c.bf16 %v76, %v75
  %v80 = vpack.c.bf16 %v78, %v77
  %v81 = vld [vmem:[%s12] sm:$0x1]
  %v82 = vld [vmem:[%s13] sm:$0x1]
  %v83 = vld [vmem:[%s14] sm:$0xff]
  %v84 = vld [vmem:[%s14 + $0x8] sm:$0xff]
  %v85 = vld [vmem:[%s14 + $0x10] sm:$0xff]
  %v86 = vld [vmem:[%s14 + $0x18] sm:$0xff]
  %v87 = vpack.c.bf16 %v84, %v83
  %v88 = vpack.c.bf16 %v86, %v85
  %v89 = vld [vmem:[%s15] sm:$0x1]
  %v90 = vld [vmem:[%s0] sm:$0xf]
  %v91 = vpack.c.bf16 %v90, %v90
  %v93 = vrot.slane %v91, 6
  %94 = vrot.lane.b32.xlu0 %v93, 127
  %v95 = vpop.permute.xlu0 %94
  %v96 = vrot.slane %v91, 4
  %97 = vrot.lane.b32.xlu0 %v96, 126
  %v98 = vpop.permute.xlu0 %97
  %vm99 = vcmask 1041408
  %v102 = vsel %vm99, %v91, %v95
  %vm103 = vcmask 1043456
  %v105 = vsel %vm103, %v102, %v98
  %s106 = scalar_lea.vmem %s0, 4
  %v107 = vld [vmem:[%s106] sm:$0xf]
  %v108 = vpack.c.bf16 %v107, %v107
  %v110 = vrot.slane %v108, 6
  %111 = vrot.lane.b32.xlu0 %v110, 127
  %v112 = vpop.permute.xlu0 %111
  %v113 = vrot.slane %v108, 4
  %114 = vrot.lane.b32.xlu0 %v113, 126
  %v115 = vpop.permute.xlu0 %114
  %v118 = vsel %vm99, %v108, %v112
  %v120 = vsel %vm103, %v118, %v115
  %122 = vrot.lane.b32.xlu0 %v120, 16
  %v123 = vpop.permute.xlu0 %122
  %vm124 = vcmask 130048
  %v126 = vsel %vm124, %v105, %v123
  %128 = vset.pattern.permute.xlu0 0
  %129 = vperm.xlu0 %128, %v60
  %v130 = vpop.permute.xlu0 %129
  %133 = vset.pattern.permute.xlu0 0
  %134 = vperm.xlu0 %133, %v61
  %v135 = vpop.permute.xlu0 %134
  %138 = vset.pattern.permute.xlu0 0
  %139 = vperm.xlu0 %138, %v62
  %v140 = vpop.permute.xlu0 %139
  %143 = vset.pattern.permute.xlu0 0
  %144 = vperm.xlu0 %143, %v63
  %v145 = vpop.permute.xlu0 %144
  %vm147 = vcmask 97280
  %v149 = vsel %vm147, %v58, 0
  %v152 = vsel %vm147, %v59, 0
  %vm154 = vcmask 1045504
  %v155 = vsel %vm154, %v126, 0
  %157 = vmatprep.subr.bf16.mxu0 0
  %158 = vmatpush1.bf16.msra.mxu0 %v155
  %159 = vmatprep.subr.bf16.mxu0 0
  %160 = vmatpush1.bf16.msra.mxu0 0
  %161 = vmatprep.subr.bf16.mxu0 0
  %162 = vmatpush1.bf16.msra.mxu0 0
  %163 = vmatprep.subr.bf16.mxu0 0
  %164 = vmatpush1.bf16.msra.mxu0 0
  %165 = vmatprep.subr.bf16.mxu0 0
  %166 = vmatpush1.bf16.msra.mxu0 0
  %167 = vmatprep.subr.bf16.mxu0 0
  %168 = vmatpush1.bf16.msra.mxu0 0
  %169 = vmatprep.subr.bf16.mxu0 0
  %170 = vmatpush1.bf16.msra.mxu0 0
  %171 = vmatprep.subr.bf16.mxu0 0
  %172 = vmatpush1.bf16.msra.mxu0 0
  %173 = vmatprep.subr.bf16.mxu0 0
  %174 = vmatpush1.bf16.msra.mxu0 0
  %175 = vmatprep.subr.bf16.mxu0 0
  %176 = vmatpush1.bf16.msra.mxu0 0
  %177 = vmatprep.subr.bf16.mxu0 0
  %178 = vmatpush1.bf16.msra.mxu0 0
  %179 = vmatprep.subr.bf16.mxu0 0
  %180 = vmatpush1.bf16.msra.mxu0 0
  %181 = vmatprep.subr.bf16.mxu0 0
  %182 = vmatpush1.bf16.msra.mxu0 0
  %183 = vmatprep.subr.bf16.mxu0 0
  %184 = vmatpush1.bf16.msra.mxu0 0
  %185 = vmatprep.subr.bf16.mxu0 0
  %186 = vmatpush1.bf16.msra.mxu0 0
  %187 = vmatprep.subr.bf16.mxu0 0
  %188 = vmatpush1.bf16.msra.mxu0 0
  %189 = vmatprep.mubr.bf16.mxu0 0
  %190 = vmatmul.mubr.bf16.gmra.mrb[0].mxu0 %v149
  %v191 = vpop.f32.mrb[0].mxu0
  %v192 = vadd.f32 %v130, %v191
  %v193 = vpop.f32.mrb[0].mxu0
  %v194 = vpop.f32.mrb[0].mxu0
  %v195 = vadd.f32 %v135, %v194
  %v196 = vpop.f32.mrb[0].mxu0
  %197 = vmatprep.mubr.bf16.mxu0 0
  %198 = vmatmul.mubr.bf16.gmra.mrb[0].mxu0 %v152
  %v199 = vpop.f32.mrb[0].mxu0
  %v200 = vadd.f32 %v140, %v199
  %v201 = vpop.f32.mrb[0].mxu0
  %v202 = vpop.f32.mrb[0].mxu0
  %v203 = vadd.f32 %v145, %v202
  %v204 = vpop.f32.mrb[0].mxu0
  %205 = vdwg.mxu0
  %v206 = vmax.f32 %v192, 0.0
  %v207 = vmax.f32 %v195, 0.0
  %v208 = vmax.f32 %v200, 0.0
  %v209 = vmax.f32 %v203, 0.0
  %v210 = vpack.c.bf16 %v207, %v206
  %v211 = vpack.c.bf16 %v209, %v208
  %v213 = vlaneseq
  %v214 = vshrl.u32 %v213, 7
  %v215 = vsub.s32 0, %v214
  %v216 = vrot.slane %v73, %v215
  %v219 = vsel %vm124, %v210, 0
  %v222 = vsel %vm124, %v211, 0
  %224 = vmatprep.subr.bf16.mxu0 0
  %225 = vmatpush1.bf16.msra.mxu0 %v66
  %226 = vmatprep.subr.bf16.mxu0 0
  %227 = vmatpush1.bf16.msra.mxu0 0
  %228 = vmatprep.subr.bf16.mxu0 0
  %229 = vmatpush1.bf16.msra.mxu0 0
  %230 = vmatprep.subr.bf16.mxu0 0
  %231 = vmatpush1.bf16.msra.mxu0 0
  %232 = vmatprep.subr.bf16.mxu0 0
  %233 = vmatpush1.bf16.msra.mxu0 0
  %234 = vmatprep.subr.bf16.mxu0 0
  %235 = vmatpush1.bf16.msra.mxu0 0
  %236 = vmatprep.subr.bf16.mxu0 0
  %237 = vmatpush1.bf16.msra.mxu0 0
  %238 = vmatprep.subr.bf16.mxu0 0
  %239 = vmatpush1.bf16.msra.mxu0 0
  %240 = vmatprep.subr.bf16.mxu0 0
  %241 = vmatpush1.bf16.msra.mxu0 0
  %242 = vmatprep.subr.bf16.mxu0 0
  %243 = vmatpush1.bf16.msra.mxu0 0
  %244 = vmatprep.subr.bf16.mxu0 0
  %245 = vmatpush1.bf16.msra.mxu0 0
  %246 = vmatprep.subr.bf16.mxu0 0
  %247 = vmatpush1.bf16.msra.mxu0 0
  %248 = vmatprep.subr.bf16.mxu0 0
  %249 = vmatpush1.bf16.msra.mxu0 0
  %250 = vmatprep.subr.bf16.mxu0 0
  %251 = vmatpush1.bf16.msra.mxu0 0
  %252 = vmatprep.subr.bf16.mxu0 0
  %253 = vmatpush1.bf16.msra.mxu0 0
  %254 = vmatprep.subr.bf16.mxu0 0
  %255 = vmatpush1.bf16.msra.mxu0 0
  %256 = vmatprep.mubr.bf16.mxu0 0
  %257 = vmatmul.mubr.bf16.gmra.mrb[0].mxu0 %v219
  %v258 = vpop.f32.mrb[0].mxu0
  %v259 = vadd.f32 %v216, %v258
  %v260 = vpop.f32.mrb[0].mxu0
  %v261 = vpop.f32.mrb[0].mxu0
  %v262 = vadd.f32 %v216, %v261
  %v263 = vpop.f32.mrb[0].mxu0
  %264 = vmatprep.mubr.bf16.mxu0 0
  %265 = vmatmul.mubr.bf16.gmra.mrb[0].mxu0 %v222
  %v266 = vpop.f32.mrb[0].mxu0
  %v267 = vadd.f32 %v216, %v266
  %v268 = vpop.f32.mrb[0].mxu0
  %v269 = vpop.f32.mrb[0].mxu0
  %v270 = vadd.f32 %v216, %v269
  %v271 = vpop.f32.mrb[0].mxu0
  %272 = vdwg.mxu0
  %v277 = vcombine.high %v259, %v259
  %v279 = vunpack.c.l.s4 1966171168
  %v280 = vunpack.c.0.s8 %v279
  %v281 = vlaneseq
  %v282 = vshrl.u32 %v281, 7
  %v283 = vsub.s32 %v280, %v282
  %v284 = vrot.slane %v259, %v283
  %v286 = vunpack.c.l.s4 1966171168
  %v287 = vunpack.c.0.s8 %v286
  %v288 = vlaneseq
  %v289 = vshrl.u32 %v288, 7
  %v290 = vsub.s32 %v287, %v289
  %v291 = vrot.slane %v277, %v290
  %v292 = vcombine.high %v284, %v284
  %v293 = vcombine.high %v291, %v291
  %v295 = vunpack.c.l.s4 1966171168
  %v296 = vunpack.c.0.s8 %v295
  %v297 = vlaneseq
  %v298 = vshrl.u32 %v297, 7
  %v299 = vsub.s32 %v296, %v298
  %v300 = vrot.slane %v284, %v299
  %v302 = vunpack.c.l.s4 1966171168
  %v303 = vunpack.c.0.s8 %v302
  %v304 = vlaneseq
  %v305 = vshrl.u32 %v304, 7
  %v306 = vsub.s32 %v303, %v305
  %v307 = vrot.slane %v291, %v306
  %v309 = vunpack.c.l.s4 1966171168
  %v310 = vunpack.c.0.s8 %v309
  %v311 = vlaneseq
  %v312 = vshrl.u32 %v311, 7
  %v313 = vsub.s32 %v310, %v312
  %v314 = vrot.slane %v292, %v313
  %v316 = vunpack.c.l.s4 1966171168
  %v317 = vunpack.c.0.s8 %v316
  %v318 = vlaneseq
  %v319 = vshrl.u32 %v318, 7
  %v320 = vsub.s32 %v317, %v319
  %v321 = vrot.slane %v293, %v320
  %v322 = vcombine.high %v300, %v300
  %v323 = vcombine.high %v307, %v307
  %v324 = vcombine.high %v314, %v314
  %v325 = vcombine.high %v321, %v321
  %v326 = vcombine.high %v262, %v262
  %v328 = vunpack.c.l.s4 1966171168
  %v329 = vunpack.c.0.s8 %v328
  %v330 = vlaneseq
  %v331 = vshrl.u32 %v330, 7
  %v332 = vsub.s32 %v329, %v331
  %v333 = vrot.slane %v262, %v332
  %v335 = vunpack.c.l.s4 1966171168
  %v336 = vunpack.c.0.s8 %v335
  %v337 = vlaneseq
  %v338 = vshrl.u32 %v337, 7
  %v339 = vsub.s32 %v336, %v338
  %v340 = vrot.slane %v326, %v339
  %v341 = vcombine.high %v333, %v333
  %v342 = vcombine.high %v340, %v340
  %v344 = vunpack.c.l.s4 1966171168
  %v345 = vunpack.c.0.s8 %v344
  %v346 = vlaneseq
  %v347 = vshrl.u32 %v346, 7
  %v348 = vsub.s32 %v345, %v347
  %v349 = vrot.slane %v333, %v348
  %v351 = vunpack.c.l.s4 1966171168
  %v352 = vunpack.c.0.s8 %v351
  %v353 = vlaneseq
  %v354 = vshrl.u32 %v353, 7
  %v355 = vsub.s32 %v352, %v354
  %v356 = vrot.slane %v340, %v355
  %v358 = vunpack.c.l.s4 1966171168
  %v359 = vunpack.c.0.s8 %v358
  %v360 = vlaneseq
  %v361 = vshrl.u32 %v360, 7
  %v362 = vsub.s32 %v359, %v361
  %v363 = vrot.slane %v341, %v362
  %v365 = vunpack.c.l.s4 1966171168
  %v366 = vunpack.c.0.s8 %v365
  %v367 = vlaneseq
  %v368 = vshrl.u32 %v367, 7
  %v369 = vsub.s32 %v366, %v368
  %v370 = vrot.slane %v342, %v369
  %v371 = vcombine.high %v349, %v349
  %v372 = vcombine.high %v356, %v356
  %v373 = vcombine.high %v363, %v363
  %v374 = vcombine.high %v370, %v370
  %v375 = vcombine.high %v267, %v267
  %v377 = vunpack.c.l.s4 1966171168
  %v378 = vunpack.c.0.s8 %v377
  %v379 = vlaneseq
  %v380 = vshrl.u32 %v379, 7
  %v381 = vsub.s32 %v378, %v380
  %v382 = vrot.slane %v267, %v381
  %v384 = vunpack.c.l.s4 1966171168
  %v385 = vunpack.c.0.s8 %v384
  %v386 = vlaneseq
  %v387 = vshrl.u32 %v386, 7
  %v388 = vsub.s32 %v385, %v387
  %v389 = vrot.slane %v375, %v388
  %v390 = vcombine.high %v382, %v382
  %v391 = vcombine.high %v389, %v389
  %v393 = vunpack.c.l.s4 1966171168
  %v394 = vunpack.c.0.s8 %v393
  %v395 = vlaneseq
  %v396 = vshrl.u32 %v395, 7
  %v397 = vsub.s32 %v394, %v396
  %v398 = vrot.slane %v382, %v397
  %v400 = vunpack.c.l.s4 1966171168
  %v401 = vunpack.c.0.s8 %v400
  %v402 = vlaneseq
  %v403 = vshrl.u32 %v402, 7
  %v404 = vsub.s32 %v401, %v403
  %v405 = vrot.slane %v389, %v404
  %v407 = vunpack.c.l.s4 1966171168
  %v408 = vunpack.c.0.s8 %v407
  %v409 = vlaneseq
  %v410 = vshrl.u32 %v409, 7
  %v411 = vsub.s32 %v408, %v410
  %v412 = vrot.slane %v390, %v411
  %v414 = vunpack.c.l.s4 1966171168
  %v415 = vunpack.c.0.s8 %v414
  %v416 = vlaneseq
  %v417 = vshrl.u32 %v416, 7
  %v418 = vsub.s32 %v415, %v417
  %v419 = vrot.slane %v391, %v418
  %v420 = vcombine.high %v398, %v398
  %v421 = vcombine.high %v405, %v405
  %v422 = vcombine.high %v412, %v412
  %v423 = vcombine.high %v419, %v419
  %v424 = vcombine.high %v270, %v270
  %v426 = vunpack.c.l.s4 1966171168
  %v427 = vunpack.c.0.s8 %v426
  %v428 = vlaneseq
  %v429 = vshrl.u32 %v428, 7
  %v430 = vsub.s32 %v427, %v429
  %v431 = vrot.slane %v270, %v430
  %v433 = vunpack.c.l.s4 1966171168
  %v434 = vunpack.c.0.s8 %v433
  %v435 = vlaneseq
  %v436 = vshrl.u32 %v435, 7
  %v437 = vsub.s32 %v434, %v436
  %v438 = vrot.slane %v424, %v437
  %v439 = vcombine.high %v431, %v431
  %v440 = vcombine.high %v438, %v438
  %v442 = vunpack.c.l.s4 1966171168
  %v443 = vunpack.c.0.s8 %v442
  %v444 = vlaneseq
  %v445 = vshrl.u32 %v444, 7
  %v446 = vsub.s32 %v443, %v445
  %v447 = vrot.slane %v431, %v446
  %v449 = vunpack.c.l.s4 1966171168
  %v450 = vunpack.c.0.s8 %v449
  %v451 = vlaneseq
  %v452 = vshrl.u32 %v451, 7
  %v453 = vsub.s32 %v450, %v452
  %v454 = vrot.slane %v438, %v453
  %v456 = vunpack.c.l.s4 1966171168
  %v457 = vunpack.c.0.s8 %v456
  %v458 = vlaneseq
  %v459 = vshrl.u32 %v458, 7
  %v460 = vsub.s32 %v457, %v459
  %v461 = vrot.slane %v439, %v460
  %v463 = vunpack.c.l.s4 1966171168
  %v464 = vunpack.c.0.s8 %v463
  %v465 = vlaneseq
  %v466 = vshrl.u32 %v465, 7
  %v467 = vsub.s32 %v464, %v466
  %v468 = vrot.slane %v440, %v467
  %v469 = vcombine.high %v447, %v447
  %v470 = vcombine.high %v454, %v454
  %v471 = vcombine.high %v461, %v461
  %v472 = vcombine.high %v468, %v468
  %vm505 = vcmask 778240
  %506 = vst.msk [vmem:[#allocation2] sm:$0x1] %vm505, %v300
  %507 = vst.msk [vmem:[#allocation2 + $0x2] sm:$0x1] %vm505, %v314
  %508 = vst.msk [vmem:[#allocation2 + $0x4] sm:$0x1] %vm505, %v322
  %509 = vst.msk [vmem:[#allocation2 + $0x6] sm:$0x1] %vm505, %v324
  %510 = vst.msk [vmem:[#allocation2 + $0x8] sm:$0x1] %vm505, %v307
  %511 = vst.msk [vmem:[#allocation2 + $0xa] sm:$0x1] %vm505, %v321
  %512 = vst.msk [vmem:[#allocation2 + $0xc] sm:$0x1] %vm505, %v323
  %513 = vst.msk [vmem:[#allocation2 + $0xe] sm:$0x1] %vm505, %v325
  %514 = vst.msk [vmem:[#allocation2 + $0x10] sm:$0x1] %vm505, %v349
  %515 = vst.msk [vmem:[#allocation2 + $0x12] sm:$0x1] %vm505, %v363
  %516 = vst.msk [vmem:[#allocation2 + $0x14] sm:$0x1] %vm505, %v371
  %517 = vst.msk [vmem:[#allocation2 + $0x16] sm:$0x1] %vm505, %v373
  %518 = vst.msk [vmem:[#allocation2 + $0x18] sm:$0x1] %vm505, %v356
  %519 = vst.msk [vmem:[#allocation2 + $0x1a] sm:$0x1] %vm505, %v370
  %520 = vst.msk [vmem:[#allocation2 + $0x1c] sm:$0x1] %vm505, %v372
  %521 = vst.msk [vmem:[#allocation2 + $0x1e] sm:$0x1] %vm505, %v374
  %522 = vst.msk [vmem:[#allocation2 + $0x20] sm:$0x1] %vm505, %v398
  %523 = vst.msk [vmem:[#allocation2 + $0x22] sm:$0x1] %vm505, %v412
  %524 = vst.msk [vmem:[#allocation2 + $0x24] sm:$0x1] %vm505, %v420
  %525 = vst.msk [vmem:[#allocation2 + $0x26] sm:$0x1] %vm505, %v422
  %526 = vst.msk [vmem:[#allocation2 + $0x28] sm:$0x1] %vm505, %v405
  %527 = vst.msk [vmem:[#allocation2 + $0x2a] sm:$0x1] %vm505, %v419
  %528 = vst.msk [vmem:[#allocation2 + $0x2c] sm:$0x1] %vm505, %v421
  %529 = vst.msk [vmem:[#allocation2 + $0x2e] sm:$0x1] %vm505, %v423
  %530 = vst.msk [vmem:[#allocation2 + $0x30] sm:$0x1] %vm505, %v447
  %531 = vst.msk [vmem:[#allocation2 + $0x32] sm:$0x1] %vm505, %v461
  %532 = vst.msk [vmem:[#allocation2 + $0x34] sm:$0x1] %vm505, %v469
  %533 = vst.msk [vmem:[#allocation2 + $0x36] sm:$0x1] %vm505, %v471
  %534 = vst.msk [vmem:[#allocation2 + $0x38] sm:$0x1] %vm505, %v454
  %535 = vst.msk [vmem:[#allocation2 + $0x3a] sm:$0x1] %vm505, %v468
  %536 = vst.msk [vmem:[#allocation2 + $0x3c] sm:$0x1] %vm505, %v470
  %537 = vst.msk [vmem:[#allocation2 + $0x3e] sm:$0x1] %vm505, %v472
  %540 = vrot.lane.b32.xlu0 %v210, 112
  %v541 = vpop.permute.xlu0 %540
  %542 = vrot.lane.b32.xlu0 %v211, 112
  %v543 = vpop.permute.xlu0 %542
  %v545 = vsel %vm124, %v541, 0
  %v548 = vsel %vm124, %v543, 0
  %550 = vmatprep.subr.bf16.mxu0 0
  %551 = vmatpush1.bf16.msra.mxu0 %v66
  %552 = vmatprep.subr.bf16.mxu0 0
  %553 = vmatpush1.bf16.msra.mxu0 0
  %554 = vmatprep.subr.bf16.mxu0 0
  %555 = vmatpush1.bf16.msra.mxu0 0
  %556 = vmatprep.subr.bf16.mxu0 0
  %557 = vmatpush1.bf16.msra.mxu0 0
  %558 = vmatprep.subr.bf16.mxu0 0
  %559 = vmatpush1.bf16.msra.mxu0 0
  %560 = vmatprep.subr.bf16.mxu0 0
  %561 = vmatpush1.bf16.msra.mxu0 0
  %562 = vmatprep.subr.bf16.mxu0 0
  %563 = vmatpush1.bf16.msra.mxu0 0
  %564 = vmatprep.subr.bf16.mxu0 0
  %565 = vmatpush1.bf16.msra.mxu0 0
  %566 = vmatprep.subr.bf16.mxu0 0
  %567 = vmatpush1.bf16.msra.mxu0 0
  %568 = vmatprep.subr.bf16.mxu0 0
  %569 = vmatpush1.bf16.msra.mxu0 0
  %570 = vmatprep.subr.bf16.mxu0 0
  %571 = vmatpush1.bf16.msra.mxu0 0
  %572 = vmatprep.subr.bf16.mxu0 0
  %573 = vmatpush1.bf16.msra.mxu0 0
  %574 = vmatprep.subr.bf16.mxu0 0
  %575 = vmatpush1.bf16.msra.mxu0 0
  %576 = vmatprep.subr.bf16.mxu0 0
  %577 = vmatpush1.bf16.msra.mxu0 0
  %578 = vmatprep.subr.bf16.mxu0 0
  %579 = vmatpush1.bf16.msra.mxu0 0
  %580 = vmatprep.subr.bf16.mxu0 0
  %581 = vmatpush1.bf16.msra.mxu0 0
  %582 = vmatprep.mubr.bf16.mxu0 0
  %583 = vmatmul.mubr.bf16.gmra.mrb[0].mxu0 %v545
  %v584 = vpop.f32.mrb[0].mxu0
  %v585 = vadd.f32 %v216, %v584
  %v586 = vpop.f32.mrb[0].mxu0
  %v587 = vpop.f32.mrb[0].mxu0
  %v588 = vadd.f32 %v216, %v587
  %v589 = vpop.f32.mrb[0].mxu0
  %590 = vmatprep.mubr.bf16.mxu0 0
  %591 = vmatmul.mubr.bf16.gmra.mrb[0].mxu0 %v548
  %v592 = vpop.f32.mrb[0].mxu0
  %v593 = vadd.f32 %v216, %v592
  %v594 = vpop.f32.mrb[0].mxu0
  %v595 = vpop.f32.mrb[0].mxu0
  %v596 = vadd.f32 %v216, %v595
  %v597 = vpop.f32.mrb[0].mxu0
  %598 = vdwg.mxu0
  %v603 = vcombine.high %v585, %v585
  %v605 = vunpack.c.l.s4 1966171168
  %v606 = vunpack.c.0.s8 %v605
  %v607 = vlaneseq
  %v608 = vshrl.u32 %v607, 7
  %v609 = vsub.s32 %v606, %v608
  %v610 = vrot.slane %v585, %v609
  %v612 = vunpack.c.l.s4 1966171168
  %v613 = vunpack.c.0.s8 %v612
  %v614 = vlaneseq
  %v615 = vshrl.u32 %v614, 7
  %v616 = vsub.s32 %v613, %v615
  %v617 = vrot.slane %v603, %v616
  %v618 = vcombine.high %v610, %v610
  %v619 = vcombine.high %v617, %v617
  %v621 = vunpack.c.l.s4 1966171168
  %v622 = vunpack.c.0.s8 %v621
  %v623 = vlaneseq
  %v624 = vshrl.u32 %v623, 7
  %v625 = vsub.s32 %v622, %v624
  %v626 = vrot.slane %v610, %v625
  %v628 = vunpack.c.l.s4 1966171168
  %v629 = vunpack.c.0.s8 %v628
  %v630 = vlaneseq
  %v631 = vshrl.u32 %v630, 7
  %v632 = vsub.s32 %v629, %v631
  %v633 = vrot.slane %v617, %v632
  %v635 = vunpack.c.l.s4 1966171168
  %v636 = vunpack.c.0.s8 %v635
  %v637 = vlaneseq
  %v638 = vshrl.u32 %v637, 7
  %v639 = vsub.s32 %v636, %v638
  %v640 = vrot.slane %v618, %v639
  %v642 = vunpack.c.l.s4 1966171168
  %v643 = vunpack.c.0.s8 %v642
  %v644 = vlaneseq
  %v645 = vshrl.u32 %v644, 7
  %v646 = vsub.s32 %v643, %v645
  %v647 = vrot.slane %v619, %v646
  %v648 = vcombine.high %v626, %v626
  %v649 = vcombine.high %v633, %v633
  %v650 = vcombine.high %v640, %v640
  %v651 = vcombine.high %v647, %v647
  %v652 = vcombine.high %v588, %v588
  %v654 = vunpack.c.l.s4 1966171168
  %v655 = vunpack.c.0.s8 %v654
  %v656 = vlaneseq
  %v657 = vshrl.u32 %v656, 7
  %v658 = vsub.s32 %v655, %v657
  %v659 = vrot.slane %v588, %v658
  %v661 = vunpack.c.l.s4 1966171168
  %v662 = vunpack.c.0.s8 %v661
  %v663 = vlaneseq
  %v664 = vshrl.u32 %v663, 7
  %v665 = vsub.s32 %v662, %v664
  %v666 = vrot.slane %v652, %v665
  %v667 = vcombine.high %v659, %v659
  %v668 = vcombine.high %v666, %v666
  %v670 = vunpack.c.l.s4 1966171168
  %v671 = vunpack.c.0.s8 %v670
  %v672 = vlaneseq
  %v673 = vshrl.u32 %v672, 7
  %v674 = vsub.s32 %v671, %v673
  %v675 = vrot.slane %v659, %v674
  %v677 = vunpack.c.l.s4 1966171168
  %v678 = vunpack.c.0.s8 %v677
  %v679 = vlaneseq
  %v680 = vshrl.u32 %v679, 7
  %v681 = vsub.s32 %v678, %v680
  %v682 = vrot.slane %v666, %v681
  %v684 = vunpack.c.l.s4 1966171168
  %v685 = vunpack.c.0.s8 %v684
  %v686 = vlaneseq
  %v687 = vshrl.u32 %v686, 7
  %v688 = vsub.s32 %v685, %v687
  %v689 = vrot.slane %v667, %v688
  %v691 = vunpack.c.l.s4 1966171168
  %v692 = vunpack.c.0.s8 %v691
  %v693 = vlaneseq
  %v694 = vshrl.u32 %v693, 7
  %v695 = vsub.s32 %v692, %v694
  %v696 = vrot.slane %v668, %v695
  %v697 = vcombine.high %v675, %v675
  %v698 = vcombine.high %v682, %v682
  %v699 = vcombine.high %v689, %v689
  %v700 = vcombine.high %v696, %v696
  %v701 = vcombine.high %v593, %v593
  %v703 = vunpack.c.l.s4 1966171168
  %v704 = vunpack.c.0.s8 %v703
  %v705 = vlaneseq
  %v706 = vshrl.u32 %v705, 7
  %v707 = vsub.s32 %v704, %v706
  %v708 = vrot.slane %v593, %v707
  %v710 = vunpack.c.l.s4 1966171168
  %v711 = vunpack.c.0.s8 %v710
  %v712 = vlaneseq
  %v713 = vshrl.u32 %v712, 7
  %v714 = vsub.s32 %v711, %v713
  %v715 = vrot.slane %v701, %v714
  %v716 = vcombine.high %v708, %v708
  %v717 = vcombine.high %v715, %v715
  %v719 = vunpack.c.l.s4 1966171168
  %v720 = vunpack.c.0.s8 %v719
  %v721 = vlaneseq
  %v722 = vshrl.u32 %v721, 7
  %v723 = vsub.s32 %v720, %v722
  %v724 = vrot.slane %v708, %v723
  %v726 = vunpack.c.l.s4 1966171168
  %v727 = vunpack.c.0.s8 %v726
  %v728 = vlaneseq
  %v729 = vshrl.u32 %v728, 7
  %v730 = vsub.s32 %v727, %v729
  %v731 = vrot.slane %v715, %v730
  %v733 = vunpack.c.l.s4 1966171168
  %v734 = vunpack.c.0.s8 %v733
  %v735 = vlaneseq
  %v736 = vshrl.u32 %v735, 7
  %v737 = vsub.s32 %v734, %v736
  %v738 = vrot.slane %v716, %v737
  %v740 = vunpack.c.l.s4 1966171168
  %v741 = vunpack.c.0.s8 %v740
  %v742 = vlaneseq
  %v743 = vshrl.u32 %v742, 7
  %v744 = vsub.s32 %v741, %v743
  %v745 = vrot.slane %v717, %v744
  %v746 = vcombine.high %v724, %v724
  %v747 = vcombine.high %v731, %v731
  %v748 = vcombine.high %v738, %v738
  %v749 = vcombine.high %v745, %v745
  %v750 = vcombine.high %v596, %v596
  %v752 = vunpack.c.l.s4 1966171168
  %v753 = vunpack.c.0.s8 %v752
  %v754 = vlaneseq
  %v755 = vshrl.u32 %v754, 7
  %v756 = vsub.s32 %v753, %v755
  %v757 = vrot.slane %v596, %v756
  %v759 = vunpack.c.l.s4 1966171168
  %v760 = vunpack.c.0.s8 %v759
  %v761 = vlaneseq
  %v762 = vshrl.u32 %v761, 7
  %v763 = vsub.s32 %v760, %v762
  %v764 = vrot.slane %v750, %v763
  %v765 = vcombine.high %v757, %v757
  %v766 = vcombine.high %v764, %v764
  %v768 = vunpack.c.l.s4 1966171168
  %v769 = vunpack.c.0.s8 %v768
  %v770 = vlaneseq
  %v771 = vshrl.u32 %v770, 7
  %v772 = vsub.s32 %v769, %v771
  %v773 = vrot.slane %v757, %v772
  %v775 = vunpack.c.l.s4 1966171168
  %v776 = vunpack.c.0.s8 %v775
  %v777 = vlaneseq
  %v778 = vshrl.u32 %v777, 7
  %v779 = vsub.s32 %v776, %v778
  %v780 = vrot.slane %v764, %v779
  %v782 = vunpack.c.l.s4 1966171168
  %v783 = vunpack.c.0.s8 %v782
  %v784 = vlaneseq
  %v785 = vshrl.u32 %v784, 7
  %v786 = vsub.s32 %v783, %v785
  %v787 = vrot.slane %v765, %v786
  %v789 = vunpack.c.l.s4 1966171168
  %v790 = vunpack.c.0.s8 %v789
  %v791 = vlaneseq
  %v792 = vshrl.u32 %v791, 7
  %v793 = vsub.s32 %v790, %v792
  %v794 = vrot.slane %v766, %v793
  %v795 = vcombine.high %v773, %v773
  %v796 = vcombine.high %v780, %v780
  %v797 = vcombine.high %v787, %v787
  %v798 = vcombine.high %v794, %v794
  %831 = vst.msk [vmem:[#allocation2 + $0x1] sm:$0x1] %vm505, %v626
  %832 = vst.msk [vmem:[#allocation2 + $0x3] sm:$0x1] %vm505, %v640
  %833 = vst.msk [vmem:[#allocation2 + $0x5] sm:$0x1] %vm505, %v648
  %834 = vst.msk [vmem:[#allocation2 + $0x7] sm:$0x1] %vm505, %v650
  %835 = vst.msk [vmem:[#allocation2 + $0x9] sm:$0x1] %vm505, %v633
  %836 = vst.msk [vmem:[#allocation2 + $0xb] sm:$0x1] %vm505, %v647
  %837 = vst.msk [vmem:[#allocation2 + $0xd] sm:$0x1] %vm505, %v649
  %838 = vst.msk [vmem:[#allocation2 + $0xf] sm:$0x1] %vm505, %v651
  %839 = vst.msk [vmem:[#allocation2 + $0x11] sm:$0x1] %vm505, %v675
  %840 = vst.msk [vmem:[#allocation2 + $0x13] sm:$0x1] %vm505, %v689
  %841 = vst.msk [vmem:[#allocation2 + $0x15] sm:$0x1] %vm505, %v697
  %842 = vst.msk [vmem:[#allocation2 + $0x17] sm:$0x1] %vm505, %v699
  %843 = vst.msk [vmem:[#allocation2 + $0x19] sm:$0x1] %vm505, %v682
  %844 = vst.msk [vmem:[#allocation2 + $0x1b] sm:$0x1] %vm505, %v696
  %845 = vst.msk [vmem:[#allocation2 + $0x1d] sm:$0x1] %vm505, %v698
  %846 = vst.msk [vmem:[#allocation2 + $0x1f] sm:$0x1] %vm505, %v700
  %847 = vst.msk [vmem:[#allocation2 + $0x21] sm:$0x1] %vm505, %v724
  %848 = vst.msk [vmem:[#allocation2 + $0x23] sm:$0x1] %vm505, %v738
  %849 = vst.msk [vmem:[#allocation2 + $0x25] sm:$0x1] %vm505, %v746
  %850 = vst.msk [vmem:[#allocation2 + $0x27] sm:$0x1] %vm505, %v748
  %851 = vst.msk [vmem:[#allocation2 + $0x29] sm:$0x1] %vm505, %v731
  %852 = vst.msk [vmem:[#allocation2 + $0x2b] sm:$0x1] %vm505, %v745
  %853 = vst.msk [vmem:[#allocation2 + $0x2d] sm:$0x1] %vm505, %v747
  %854 = vst.msk [vmem:[#allocation2 + $0x2f] sm:$0x1] %vm505, %v749
  %855 = vst.msk [vmem:[#allocation2 + $0x31] sm:$0x1] %vm505, %v773
  %856 = vst.msk [vmem:[#allocation2 + $0x33] sm:$0x1] %vm505, %v787
  %857 = vst.msk [vmem:[#allocation2 + $0x35] sm:$0x1] %vm505, %v795
  %858 = vst.msk [vmem:[#allocation2 + $0x37] sm:$0x1] %vm505, %v797
  %859 = vst.msk [vmem:[#allocation2 + $0x39] sm:$0x1] %vm505, %v780
  %860 = vst.msk [vmem:[#allocation2 + $0x3b] sm:$0x1] %vm505, %v794
  %861 = vst.msk [vmem:[#allocation2 + $0x3d] sm:$0x1] %vm505, %v796
  %862 = vst.msk [vmem:[#allocation2 + $0x3f] sm:$0x1] %vm505, %v798
  %v863 = vld [vmem:[#allocation2] sm:$0x3]
  %v865 = vlaneseq
  %v866 = vshrl.u32 %v865, 7
  %v867 = vsub.s32 0, %v866
  %v868 = vrot.slane %v74, %v867
  %vm870 = vcmask 261120
  %v872 = vsel %vm870, 0, 0
  %874 = vmatprep.subr.bf16.mxu0 0
  %875 = vmatpush1.bf16.msra.mxu0 %v71
  %876 = vmatprep.subr.bf16.mxu0 0
  %877 = vmatpush1.bf16.msra.mxu0 %v72
  %878 = vmatprep.subr.bf16.mxu0 0
  %879 = vmatpush1.bf16.msra.mxu0 0
  %880 = vmatprep.subr.bf16.mxu0 0
  %881 = vmatpush1.bf16.msra.mxu0 0
  %882 = vmatprep.subr.bf16.mxu0 0
  %883 = vmatpush1.bf16.msra.mxu0 0
  %884 = vmatprep.subr.bf16.mxu0 0
  %885 = vmatpush1.bf16.msra.mxu0 0
  %886 = vmatprep.subr.bf16.mxu0 0
  %887 = vmatpush1.bf16.msra.mxu0 0
  %888 = vmatprep.subr.bf16.mxu0 0
  %889 = vmatpush1.bf16.msra.mxu0 0
  %890 = vmatprep.subr.bf16.mxu0 0
  %891 = vmatpush1.bf16.msra.mxu0 0
  %892 = vmatprep.subr.bf16.mxu0 0
  %893 = vmatpush1.bf16.msra.mxu0 0
  %894 = vmatprep.subr.bf16.mxu0 0
  %895 = vmatpush1.bf16.msra.mxu0 0
  %896 = vmatprep.subr.bf16.mxu0 0
  %897 = vmatpush1.bf16.msra.mxu0 0
  %898 = vmatprep.subr.bf16.mxu0 0
  %899 = vmatpush1.bf16.msra.mxu0 0
  %900 = vmatprep.subr.bf16.mxu0 0
  %901 = vmatpush1.bf16.msra.mxu0 0
  %902 = vmatprep.subr.bf16.mxu0 0
  %903 = vmatpush1.bf16.msra.mxu0 0
  %904 = vmatprep.subr.bf16.mxu0 0
  %905 = vmatpush1.bf16.msra.mxu0 0
  %906 = vmatprep.mubr.bf16.mxu0 0
  %907 = vmatmul.mubr.bf16.gmra.mrb[0].mxu0 %v872
  %v908 = vpop.f32.mrb[0].mxu0
  %v909 = vadd.f32 %v868, %v908
  %v910 = vpop.f32.mrb[0].mxu0
  %v911 = vpop.f32.mrb[0].mxu0
  %v912 = vpop.f32.mrb[0].mxu0
  %913 = vdwg.mxu0
  %v914 = vadd.f32 %v863, %v909
  %v915 = vxor.u32 %v914, 2147483648
  %v916 = vmul.f32 %v915, 1.442695
  %v917 = vpow.pop %v916
  %v918 = vadd.f32 %v917, 1.0
  %v919 = vrcp.pop %v918
  %v920 = vmul.f32 1.0, %v919
  %922 = vrot.lane.b32.xlu0 %v909, 64
  %v923 = vpop.permute.xlu0 %922
  %v925 = vmul.f32 %v920, %v923
  %927 = vrot.lane.b32.xlu0 %v925, 64
  %v928 = vpop.permute.xlu0 %927
  %v930 = vadd.f32 %v863, %v928
  %v931 = vtanh.pop %v930
  %v932 = vsub.f32 1.0, %v920
  %934 = vrot.lane.b32.xlu0 %v931, 96
  %v935 = vpop.permute.xlu0 %934
  %v937 = vmul.f32 %v932, %v935
  %v938 = vmul.f32 %v920, 0.0
  %v939 = vadd.f32 %v937, %v938
  %s940 = scalar_lea.vmem [#allocation2], 2
  %v941 = vld [vmem:[%s940] sm:$0x3]
  %v942 = vpack.c.bf16 %v939, %v939
  %944 = vrot.lane.b32.xlu0 %v942, 96
  %v945 = vpop.permute.xlu0 %944
  %v947 = vsel %vm870, %v945, 0
  %949 = vmatprep.subr.bf16.mxu0 0
  %950 = vmatpush1.bf16.msra.mxu0 %v71
  %951 = vmatprep.subr.bf16.mxu0 0
  %952 = vmatpush1.bf16.msra.mxu0 %v72
  %953 = vmatprep.subr.bf16.mxu0 0
  %954 = vmatpush1.bf16.msra.mxu0 0
  %955 = vmatprep.subr.bf16.mxu0 0
  %956 = vmatpush1.bf16.msra.mxu0 0
  %957 = vmatprep.subr.bf16.mxu0 0
  %958 = vmatpush1.bf16.msra.mxu0 0
  %959 = vmatprep.subr.bf16.mxu0 0
  %960 = vmatpush1.bf16.msra.mxu0 0
  %961 = vmatprep.subr.bf16.mxu0 0
  %962 = vmatpush1.bf16.msra.mxu0 0
  %963 = vmatprep.subr.bf16.mxu0 0
  %964 = vmatpush1.bf16.msra.mxu0 0
  %965 = vmatprep.subr.bf16.mxu0 0
  %966 = vmatpush1.bf16.msra.mxu0 0
  %967 = vmatprep.subr.bf16.mxu0 0
  %968 = vmatpush1.bf16.msra.mxu0 0
  %969 = vmatprep.subr.bf16.mxu0 0
  %970 = vmatpush1.bf16.msra.mxu0 0
  %971 = vmatprep.subr.bf16.mxu0 0
  %972 = vmatpush1.bf16.msra.mxu0 0
  %973 = vmatprep.subr.bf16.mxu0 0
  %974 = vmatpush1.bf16.msra.mxu0 0
  %975 = vmatprep.subr.bf16.mxu0 0
  %976 = vmatpush1.bf16.msra.mxu0 0
  %977 = vmatprep.subr.bf16.mxu0 0
  %978 = vmatpush1.bf16.msra.mxu0 0
  %979 = vmatprep.subr.bf16.mxu0 0
  %980 = vmatpush1.bf16.msra.mxu0 0
  %981 = vmatprep.mubr.bf16.mxu0 0
  %982 = vmatmul.mubr.bf16.gmra.mrb[0].mxu0 %v947
  %v983 = vpop.f32.mrb[0].mxu0
  %v984 = vadd.f32 %v868, %v983
  %v985 = vpop.f32.mrb[0].mxu0
  %v986 = vpop.f32.mrb[0].mxu0
  %v987 = vpop.f32.mrb[0].mxu0
  %988 = vdwg.mxu0
  %v989 = vadd.f32 %v941, %v984
  %v990 = vxor.u32 %v989, 2147483648
  %v991 = vmul.f32 %v990, 1.442695
  %v992 = vpow.pop %v991
  %v993 = vadd.f32 %v992, 1.0
  %v994 = vrcp.pop %v993
  %v995 = vmul.f32 1.0, %v994
  %997 = vrot.lane.b32.xlu0 %v984, 64
  %v998 = vpop.permute.xlu0 %997
  %v1000 = vmul.f32 %v995, %v998
  %1002 = vrot.lane.b32.xlu0 %v1000, 64
  %v1003 = vpop.permute.xlu0 %1002
  %v1005 = vadd.f32 %v941, %v1003
  %v1006 = vtanh.pop %v1005
  %v1007 = vsub.f32 1.0, %v995
  %1009 = vrot.lane.b32.xlu0 %v1006, 96
  %v1010 = vpop.permute.xlu0 %1009
  %v1012 = vmul.f32 %v1007, %v1010
  %v1013 = vmul.f32 %v995, %v939
  %v1014 = vadd.f32 %v1012, %v1013
  %s1015 = scalar_lea.vmem [#allocation2], 4
  %v1016 = vld [vmem:[%s1015] sm:$0x3]
  %v1017 = vpack.c.bf16 %v1014, %v1014
  %1019 = vrot.lane.b32.xlu0 %v1017, 96
  %v1020 = vpop.permute.xlu0 %1019
  %v1022 = vsel %vm870, %v1020, 0
  %1024 = vmatprep.subr.bf16.mxu0 0
  %1025 = vmatpush1.bf16.msra.mxu0 %v71
  %1026 = vmatprep.subr.bf16.mxu0 0
  %1027 = vmatpush1.bf16.msra.mxu0 %v72
  %1028 = vmatprep.subr.bf16.mxu0 0
  %1029 = vmatpush1.bf16.msra.mxu0 0
  %1030 = vmatprep.subr.bf16.mxu0 0
  %1031 = vmatpush1.bf16.msra.mxu0 0
  %1032 = vmatprep.subr.bf16.mxu0 0
  %1033 = vmatpush1.bf16.msra.mxu0 0
  %1034 = vmatprep.subr.bf16.mxu0 0
  %1035 = vmatpush1.bf16.msra.mxu0 0
  %1036 = vmatprep.subr.bf16.mxu0 0
  %1037 = vmatpush1.bf16.msra.mxu0 0
  %1038 = vmatprep.subr.bf16.mxu0 0
  %1039 = vmatpush1.bf16.msra.mxu0 0
  %1040 = vmatprep.subr.bf16.mxu0 0
  %1041 = vmatpush1.bf16.msra.mxu0 0
  %1042 = vmatprep.subr.bf16.mxu0 0
  %1043 = vmatpush1.bf16.msra.mxu0 0
  %1044 = vmatprep.subr.bf16.mxu0 0
  %1045 = vmatpush1.bf16.msra.mxu0 0
  %1046 = vmatprep.subr.bf16.mxu0 0
  %1047 = vmatpush1.bf16.msra.mxu0 0
  %1048 = vmatprep.subr.bf16.mxu0 0
  %1049 = vmatpush1.bf16.msra.mxu0 0
  %1050 = vmatprep.subr.bf16.mxu0 0
  %1051 = vmatpush1.bf16.msra.mxu0 0
  %1052 = vmatprep.subr.bf16.mxu0 0
  %1053 = vmatpush1.bf16.msra.mxu0 0
  %1054 = vmatprep.subr.bf16.mxu0 0
  %1055 = vmatpush1.bf16.msra.mxu0 0
  %1056 = vmatprep.mubr.bf16.mxu0 0
  %1057 = vmatmul.mubr.bf16.gmra.mrb[0].mxu0 %v1022
  %v1058 = vpop.f32.mrb[0].mxu0
  %v1059 = vadd.f32 %v868, %v1058
  %v1060 = vpop.f32.mrb[0].mxu0
  %v1061 = vpop.f32.mrb[0].mxu0
  %v1062 = vpop.f32.mrb[0].mxu0
  %1063 = vdwg.mxu0
  %v1064 = vadd.f32 %v1016, %v1059
  %v1065 = vxor.u32 %v1064, 2147483648
  %v1066 = vmul.f32 %v1065, 1.442695
  %v1067 = vpow.pop %v1066
  %v1068 = vadd.f32 %v1067, 1.0
  %v1069 = vrcp.pop %v1068
  %v1070 = vmul.f32 1.0, %v1069
  %1072 = vrot.lane.b32.xlu0 %v1059, 64
  %v1073 = vpop.permute.xlu0 %1072
  %v1075 = vmul.f32 %v1070, %v1073
  %1077 = vrot.lane.b32.xlu0 %v1075, 64
  %v1078 = vpop.permute.xlu0 %1077
  %v1080 = vadd.f32 %v1016, %v1078
  %v1081 = vtanh.pop %v1080
  %v1082 = vsub.f32 1.0, %v1070
  %1084 = vrot.lane.b32.xlu0 %v1081, 96
  %v1085 = vpop.permute.xlu0 %1084
  %v1087 = vmul.f32 %v1082, %v1085
  %v1088 = vmul.f32 %v1070, %v1014
  %v1089 = vadd.f32 %v1087, %v1088
  %s1090 = scalar_lea.vmem [#allocation2], 6
  %v1091 = vld [vmem:[%s1090] sm:$0x3]
  %v1092 = vpack.c.bf16 %v1089, %v1089
  %1094 = vrot.lane.b32.xlu0 %v1092, 96
  %v1095 = vpop.permute.xlu0 %1094
  %v1097 = vsel %vm870, %v1095, 0
  %1099 = vmatprep.subr.bf16.mxu0 0
  %1100 = vmatpush1.bf16.msra.mxu0 %v71
  %1101 = vmatprep.subr.bf16.mxu0 0
  %1102 = vmatpush1.bf16.msra.mxu0 %v72
  %1103 = vmatprep.subr.bf16.mxu0 0
  %1104 = vmatpush1.bf16.msra.mxu0 0
  %1105 = vmatprep.subr.bf16.mxu0 0
  %1106 = vmatpush1.bf16.msra.mxu0 0
  %1107 = vmatprep.subr.bf16.mxu0 0
  %1108 = vmatpush1.bf16.msra.mxu0 0
  %1109 = vmatprep.subr.bf16.mxu0 0
  %1110 = vmatpush1.bf16.msra.mxu0 0
  %1111 = vmatprep.subr.bf16.mxu0 0
  %1112 = vmatpush1.bf16.msra.mxu0 0
  %1113 = vmatprep.subr.bf16.mxu0 0
  %1114 = vmatpush1.bf16.msra.mxu0 0
  %1115 = vmatprep.subr.bf16.mxu0 0
  %1116 = vmatpush1.bf16.msra.mxu0 0
  %1117 = vmatprep.subr.bf16.mxu0 0
  %1118 = vmatpush1.bf16.msra.mxu0 0
  %1119 = vmatprep.subr.bf16.mxu0 0
  %1120 = vmatpush1.bf16.msra.mxu0 0
  %1121 = vmatprep.subr.bf16.mxu0 0
  %1122 = vmatpush1.bf16.msra.mxu0 0
  %1123 = vmatprep.subr.bf16.mxu0 0
  %1124 = vmatpush1.bf16.msra.mxu0 0
  %1125 = vmatprep.subr.bf16.mxu0 0
  %1126 = vmatpush1.bf16.msra.mxu0 0
  %1127 = vmatprep.subr.bf16.mxu0 0
  %1128 = vmatpush1.bf16.msra.mxu0 0
  %1129 = vmatprep.subr.bf16.mxu0 0
  %1130 = vmatpush1.bf16.msra.mxu0 0
  %1131 = vmatprep.mubr.bf16.mxu0 0
  %1132 = vmatmul.mubr.bf16.gmra.mrb[0].mxu0 %v1097
  %v1133 = vpop.f32.mrb[0].mxu0
  %v1134 = vadd.f32 %v868, %v1133
  %v1135 = vpop.f32.mrb[0].mxu0
  %v1136 = vpop.f32.mrb[0].mxu0
  %v1137 = vpop.f32.mrb[0].mxu0
  %1138 = vdwg.mxu0
  %v1139 = vadd.f32 %v1091, %v1134
  %v1140 = vxor.u32 %v1139, 2147483648
  %v1141 = vmul.f32 %v1140, 1.442695
  %v1142 = vpow.pop %v1141
  %v1143 = vadd.f32 %v1142, 1.0
  %v1144 = vrcp.pop %v1143
  %v1145 = vmul.f32 1.0, %v1144
  %1147 = vrot.lane.b32.xlu0 %v1134, 64
  %v1148 = vpop.permute.xlu0 %1147
  %v1150 = vmul.f32 %v1145, %v1148
  %1152 = vrot.lane.b32.xlu0 %v1150, 64
  %v1153 = vpop.permute.xlu0 %1152
  %v1155 = vadd.f32 %v1091, %v1153
  %v1156 = vtanh.pop %v1155
  %v1157 = vsub.f32 1.0, %v1145
  %1159 = vrot.lane.b32.xlu0 %v1156, 96
  %v1160 = vpop.permute.xlu0 %1159
  %v1162 = vmul.f32 %v1157, %v1160
  %v1163 = vmul.f32 %v1145, %v1089
  %v1164 = vadd.f32 %v1162, %v1163
  %s1165 = scalar_lea.vmem [#allocation2], 8
  %v1166 = vld [vmem:[%s1165] sm:$0x3]
  %v1167 = vpack.c.bf16 %v1164, %v1164
  %1169 = vrot.lane.b32.xlu0 %v1167, 96
  %v1170 = vpop.permute.xlu0 %1169
  %v1172 = vsel %vm870, %v1170, 0
  %1174 = vmatprep.subr.bf16.mxu0 0
  %1175 = vmatpush1.bf16.msra.mxu0 %v71
  %1176 = vmatprep.subr.bf16.mxu0 0
  %1177 = vmatpush1.bf16.msra.mxu0 %v72
  %1178 = vmatprep.subr.bf16.mxu0 0
  %1179 = vmatpush1.bf16.msra.mxu0 0
  %1180 = vmatprep.subr.bf16.mxu0 0
  %1181 = vmatpush1.bf16.msra.mxu0 0
  %1182 = vmatprep.subr.bf16.mxu0 0
  %1183 = vmatpush1.bf16.msra.mxu0 0
  %1184 = vmatprep.subr.bf16.mxu0 0
  %1185 = vmatpush1.bf16.msra.mxu0 0
  %1186 = vmatprep.subr.bf16.mxu0 0
  %1187 = vmatpush1.bf16.msra.mxu0 0
  %1188 = vmatprep.subr.bf16.mxu0 0
  %1189 = vmatpush1.bf16.msra.mxu0 0
  %1190 = vmatprep.subr.bf16.mxu0 0
  %1191 = vmatpush1.bf16.msra.mxu0 0
  %1192 = vmatprep.subr.bf16.mxu0 0
  %1193 = vmatpush1.bf16.msra.mxu0 0
  %1194 = vmatprep.subr.bf16.mxu0 0
  %1195 = vmatpush1.bf16.msra.mxu0 0
  %1196 = vmatprep.subr.bf16.mxu0 0
  %1197 = vmatpush1.bf16.msra.mxu0 0
  %1198 = vmatprep.subr.bf16.mxu0 0
  %1199 = vmatpush1.bf16.msra.mxu0 0
  %1200 = vmatprep.subr.bf16.mxu0 0
  %1201 = vmatpush1.bf16.msra.mxu0 0
  %1202 = vmatprep.subr.bf16.mxu0 0
  %1203 = vmatpush1.bf16.msra.mxu0 0
  %1204 = vmatprep.subr.bf16.mxu0 0
  %1205 = vmatpush1.bf16.msra.mxu0 0
  %1206 = vmatprep.mubr.bf16.mxu0 0
  %1207 = vmatmul.mubr.bf16.gmra.mrb[0].mxu0 %v1172
  %v1208 = vpop.f32.mrb[0].mxu0
  %v1209 = vadd.f32 %v868, %v1208
  %v1210 = vpop.f32.mrb[0].mxu0
  %v1211 = vpop.f32.mrb[0].mxu0
  %v1212 = vpop.f32.mrb[0].mxu0
  %1213 = vdwg.mxu0
  %v1214 = vadd.f32 %v1166, %v1209
  %v1215 = vxor.u32 %v1214, 2147483648
  %v1216 = vmul.f32 %v1215, 1.442695
  %v1217 = vpow.pop %v1216
  %v1218 = vadd.f32 %v1217, 1.0
  %v1219 = vrcp.pop %v1218
  %v1220 = vmul.f32 1.0, %v1219
  %1222 = vrot.lane.b32.xlu0 %v1209, 64
  %v1223 = vpop.permute.xlu0 %1222
  %v1225 = vmul.f32 %v1220, %v1223
  %1227 = vrot.lane.b32.xlu0 %v1225, 64
  %v1228 = vpop.permute.xlu0 %1227
  %v1230 = vadd.f32 %v1166, %v1228
  %v1231 = vtanh.pop %v1230
  %v1232 = vsub.f32 1.0, %v1220
  %1234 = vrot.lane.b32.xlu0 %v1231, 96
  %v1235 = vpop.permute.xlu0 %1234
  %v1237 = vmul.f32 %v1232, %v1235
  %v1238 = vmul.f32 %v1220, %v1164
  %v1239 = vadd.f32 %v1237, %v1238
  %s1240 = scalar_lea.vmem [#allocation2], 10
  %v1241 = vld [vmem:[%s1240] sm:$0x3]
  %v1242 = vpack.c.bf16 %v1239, %v1239
  %1244 = vrot.lane.b32.xlu0 %v1242, 96
  %v1245 = vpop.permute.xlu0 %1244
  %v1247 = vsel %vm870, %v1245, 0
  %1249 = vmatprep.subr.bf16.mxu0 0
  %1250 = vmatpush1.bf16.msra.mxu0 %v71
  %1251 = vmatprep.subr.bf16.mxu0 0
  %1252 = vmatpush1.bf16.msra.mxu0 %v72
  %1253 = vmatprep.subr.bf16.mxu0 0
  %1254 = vmatpush1.bf16.msra.mxu0 0
  %1255 = vmatprep.subr.bf16.mxu0 0
  %1256 = vmatpush1.bf16.msra.mxu0 0
  %1257 = vmatprep.subr.bf16.mxu0 0
  %1258 = vmatpush1.bf16.msra.mxu0 0
  %1259 = vmatprep.subr.bf16.mxu0 0
  %1260 = vmatpush1.bf16.msra.mxu0 0
  %1261 = vmatprep.subr.bf16.mxu0 0
  %1262 = vmatpush1.bf16.msra.mxu0 0
  %1263 = vmatprep.subr.bf16.mxu0 0
  %1264 = vmatpush1.bf16.msra.mxu0 0
  %1265 = vmatprep.subr.bf16.mxu0 0
  %1266 = vmatpush1.bf16.msra.mxu0 0
  %1267 = vmatprep.subr.bf16.mxu0 0
  %1268 = vmatpush1.bf16.msra.mxu0 0
  %1269 = vmatprep.subr.bf16.mxu0 0
  %1270 = vmatpush1.bf16.msra.mxu0 0
  %1271 = vmatprep.subr.bf16.mxu0 0
  %1272 = vmatpush1.bf16.msra.mxu0 0
  %1273 = vmatprep.subr.bf16.mxu0 0
  %1274 = vmatpush1.bf16.msra.mxu0 0
  %1275 = vmatprep.subr.bf16.mxu0 0
  %1276 = vmatpush1.bf16.msra.mxu0 0
  %1277 = vmatprep.subr.bf16.mxu0 0
  %1278 = vmatpush1.bf16.msra.mxu0 0
  %1279 = vmatprep.subr.bf16.mxu0 0
  %1280 = vmatpush1.bf16.msra.mxu0 0
  %1281 = vmatprep.mubr.bf16.mxu0 0
  %1282 = vmatmul.mubr.bf16.gmra.mrb[0].mxu0 %v1247
  %v1283 = vpop.f32.mrb[0].mxu0
  %v1284 = vadd.f32 %v868, %v1283
  %v1285 = vpop.f32.mrb[0].mxu0
  %v1286 = vpop.f32.mrb[0].mxu0
  %v1287 = vpop.f32.mrb[0].mxu0
  %1288 = vdwg.mxu0
  %v1289 = vadd.f32 %v1241, %v1284
  %v1290 = vxor.u32 %v1289, 2147483648
  %v1291 = vmul.f32 %v1290, 1.442695
  %v1292 = vpow.pop %v1291
  %v1293 = vadd.f32 %v1292, 1.0
  %v1294 = vrcp.pop %v1293
  %v1295 = vmul.f32 1.0, %v1294
  %1297 = vrot.lane.b32.xlu0 %v1284, 64
  %v1298 = vpop.permute.xlu0 %1297
  %v1300 = vmul.f32 %v1295, %v1298
  %1302 = vrot.lane.b32.xlu0 %v1300, 64
  %v1303 = vpop.permute.xlu0 %1302
  %v1305 = vadd.f32 %v1241, %v1303
  %v1306 = vtanh.pop %v1305
  %v1307 = vsub.f32 1.0, %v1295
  %1309 = vrot.lane.b32.xlu0 %v1306, 96
  %v1310 = vpop.permute.xlu0 %1309
  %v1312 = vmul.f32 %v1307, %v1310
  %v1313 = vmul.f32 %v1295, %v1239
  %v1314 = vadd.f32 %v1312, %v1313
  %s1315 = scalar_lea.vmem [#allocation2], 12
  %v1316 = vld [vmem:[%s1315] sm:$0x3]
  %v1317 = vpack.c.bf16 %v1314, %v1314
  %1319 = vrot.lane.b32.xlu0 %v1317, 96
  %v1320 = vpop.permute.xlu0 %1319
  %v1322 = vsel %vm870, %v1320, 0
  %1324 = vmatprep.subr.bf16.mxu0 0
  %1325 = vmatpush1.bf16.msra.mxu0 %v71
  %1326 = vmatprep.subr.bf16.mxu0 0
  %1327 = vmatpush1.bf16.msra.mxu0 %v72
  %1328 = vmatprep.subr.bf16.mxu0 0
  %1329 = vmatpush1.bf16.msra.mxu0 0
  %1330 = vmatprep.subr.bf16.mxu0 0
  %1331 = vmatpush1.bf16.msra.mxu0 0
  %1332 = vmatprep.subr.bf16.mxu0 0
  %1333 = vmatpush1.bf16.msra.mxu0 0
  %1334 = vmatprep.subr.bf16.mxu0 0
  %1335 = vmatpush1.bf16.msra.mxu0 0
  %1336 = vmatprep.subr.bf16.mxu0 0
  %1337 = vmatpush1.bf16.msra.mxu0 0
  %1338 = vmatprep.subr.bf16.mxu0 0
  %1339 = vmatpush1.bf16.msra.mxu0 0
  %1340 = vmatprep.subr.bf16.mxu0 0
  %1341 = vmatpush1.bf16.msra.mxu0 0
  %1342 = vmatprep.subr.bf16.mxu0 0
  %1343 = vmatpush1.bf16.msra.mxu0 0
  %1344 = vmatprep.subr.bf16.mxu0 0
  %1345 = vmatpush1.bf16.msra.mxu0 0
  %1346 = vmatprep.subr.bf16.mxu0 0
  %1347 = vmatpush1.bf16.msra.mxu0 0
  %1348 = vmatprep.subr.bf16.mxu0 0
  %1349 = vmatpush1.bf16.msra.mxu0 0
  %1350 = vmatprep.subr.bf16.mxu0 0
  %1351 = vmatpush1.bf16.msra.mxu0 0
  %1352 = vmatprep.subr.bf16.mxu0 0
  %1353 = vmatpush1.bf16.msra.mxu0 0
  %1354 = vmatprep.subr.bf16.mxu0 0
  %1355 = vmatpush1.bf16.msra.mxu0 0
  %1356 = vmatprep.mubr.bf16.mxu0 0
  %1357 = vmatmul.mubr.bf16.gmra.mrb[0].mxu0 %v1322
  %v1358 = vpop.f32.mrb[0].mxu0
  %v1359 = vadd.f32 %v868, %v1358
  %v1360 = vpop.f32.mrb[0].mxu0
  %v1361 = vpop.f32.mrb[0].mxu0
  %v1362 = vpop.f32.mrb[0].mxu0
  %1363 = vdwg.mxu0
  %v1364 = vadd.f32 %v1316, %v1359
  %v1365 = vxor.u32 %v1364, 2147483648
  %v1366 = vmul.f32 %v1365, 1.442695
  %v1367 = vpow.pop %v1366
  %v1368 = vadd.f32 %v1367, 1.0
  %v1369 = vrcp.pop %v1368
  %v1370 = vmul.f32 1.0, %v1369
  %1372 = vrot.lane.b32.xlu0 %v1359, 64
  %v1373 = vpop.permute.xlu0 %1372
  %v1375 = vmul.f32 %v1370, %v1373
  %1377 = vrot.lane.b32.xlu0 %v1375, 64
  %v1378 = vpop.permute.xlu0 %1377
  %v1380 = vadd.f32 %v1316, %v1378
  %v1381 = vtanh.pop %v1380
  %v1382 = vsub.f32 1.0, %v1370
  %1384 = vrot.lane.b32.xlu0 %v1381, 96
  %v1385 = vpop.permute.xlu0 %1384
  %v1387 = vmul.f32 %v1382, %v1385
  %v1388 = vmul.f32 %v1370, %v1314
  %v1389 = vadd.f32 %v1387, %v1388
  %s1390 = scalar_lea.vmem [#allocation2], 14
  %v1391 = vld [vmem:[%s1390] sm:$0x3]
  %v1392 = vpack.c.bf16 %v1389, %v1389
  %1394 = vrot.lane.b32.xlu0 %v1392, 96
  %v1395 = vpop.permute.xlu0 %1394
  %v1397 = vsel %vm870, %v1395, 0
  %1399 = vmatprep.subr.bf16.mxu0 0
  %1400 = vmatpush1.bf16.msra.mxu0 %v71
  %1401 = vmatprep.subr.bf16.mxu0 0
  %1402 = vmatpush1.bf16.msra.mxu0 %v72
  %1403 = vmatprep.subr.bf16.mxu0 0
  %1404 = vmatpush1.bf16.msra.mxu0 0
  %1405 = vmatprep.subr.bf16.mxu0 0
  %1406 = vmatpush1.bf16.msra.mxu0 0
  %1407 = vmatprep.subr.bf16.mxu0 0
  %1408 = vmatpush1.bf16.msra.mxu0 0
  %1409 = vmatprep.subr.bf16.mxu0 0
  %1410 = vmatpush1.bf16.msra.mxu0 0
  %1411 = vmatprep.subr.bf16.mxu0 0
  %1412 = vmatpush1.bf16.msra.mxu0 0
  %1413 = vmatprep.subr.bf16.mxu0 0
  %1414 = vmatpush1.bf16.msra.mxu0 0
  %1415 = vmatprep.subr.bf16.mxu0 0
  %1416 = vmatpush1.bf16.msra.mxu0 0
  %1417 = vmatprep.subr.bf16.mxu0 0
  %1418 = vmatpush1.bf16.msra.mxu0 0
  %1419 = vmatprep.subr.bf16.mxu0 0
  %1420 = vmatpush1.bf16.msra.mxu0 0
  %1421 = vmatprep.subr.bf16.mxu0 0
  %1422 = vmatpush1.bf16.msra.mxu0 0
  %1423 = vmatprep.subr.bf16.mxu0 0
  %1424 = vmatpush1.bf16.msra.mxu0 0
  %1425 = vmatprep.subr.bf16.mxu0 0
  %1426 = vmatpush1.bf16.msra.mxu0 0
  %1427 = vmatprep.subr.bf16.mxu0 0
  %1428 = vmatpush1.bf16.msra.mxu0 0
  %1429 = vmatprep.subr.bf16.mxu0 0
  %1430 = vmatpush1.bf16.msra.mxu0 0
  %1431 = vmatprep.mubr.bf16.mxu0 0
  %1432 = vmatmul.mubr.bf16.gmra.mrb[0].mxu0 %v1397
  %v1433 = vpop.f32.mrb[0].mxu0
  %v1434 = vadd.f32 %v868, %v1433
  %v1435 = vpop.f32.mrb[0].mxu0
  %v1436 = vpop.f32.mrb[0].mxu0
  %v1437 = vpop.f32.mrb[0].mxu0
  %1438 = vdwg.mxu0
  %v1439 = vadd.f32 %v1391, %v1434
  %v1440 = vxor.u32 %v1439, 2147483648
  %v1441 = vmul.f32 %v1440, 1.442695
  %v1442 = vpow.pop %v1441
  %v1443 = vadd.f32 %v1442, 1.0
  %v1444 = vrcp.pop %v1443
  %v1445 = vmul.f32 1.0, %v1444
  %1447 = vrot.lane.b32.xlu0 %v1434, 64
  %v1448 = vpop.permute.xlu0 %1447
  %v1450 = vmul.f32 %v1445, %v1448
  %1452 = vrot.lane.b32.xlu0 %v1450, 64
  %v1453 = vpop.permute.xlu0 %1452
  %v1455 = vadd.f32 %v1391, %v1453
  %v1456 = vtanh.pop %v1455
  %v1457 = vsub.f32 1.0, %v1445
  %1459 = vrot.lane.b32.xlu0 %v1456, 96
  %v1460 = vpop.permute.xlu0 %1459
  %v1462 = vmul.f32 %v1457, %v1460
  %v1463 = vmul.f32 %v1445, %v1389
  %v1464 = vadd.f32 %v1462, %v1463
  %s1465 = scalar_lea.vmem [#allocation2], 16
  %v1466 = vld [vmem:[%s1465] sm:$0x3]
  %v1467 = vpack.c.bf16 %v1464, %v1464
  %1469 = vrot.lane.b32.xlu0 %v1467, 96
  %v1470 = vpop.permute.xlu0 %1469
  %v1472 = vsel %vm870, %v1470, 0
  %1474 = vmatprep.subr.bf16.mxu0 0
  %1475 = vmatpush1.bf16.msra.mxu0 %v71
  %1476 = vmatprep.subr.bf16.mxu0 0
  %1477 = vmatpush1.bf16.msra.mxu0 %v72
  %1478 = vmatprep.subr.bf16.mxu0 0
  %1479 = vmatpush1.bf16.msra.mxu0 0
  %1480 = vmatprep.subr.bf16.mxu0 0
  %1481 = vmatpush1.bf16.msra.mxu0 0
  %1482 = vmatprep.subr.bf16.mxu0 0
  %1483 = vmatpush1.bf16.msra.mxu0 0
  %1484 = vmatprep.subr.bf16.mxu0 0
  %1485 = vmatpush1.bf16.msra.mxu0 0
  %1486 = vmatprep.subr.bf16.mxu0 0
  %1487 = vmatpush1.bf16.msra.mxu0 0
  %1488 = vmatprep.subr.bf16.mxu0 0
  %1489 = vmatpush1.bf16.msra.mxu0 0
  %1490 = vmatprep.subr.bf16.mxu0 0
  %1491 = vmatpush1.bf16.msra.mxu0 0
  %1492 = vmatprep.subr.bf16.mxu0 0
  %1493 = vmatpush1.bf16.msra.mxu0 0
  %1494 = vmatprep.subr.bf16.mxu0 0
  %1495 = vmatpush1.bf16.msra.mxu0 0
  %1496 = vmatprep.subr.bf16.mxu0 0
  %1497 = vmatpush1.bf16.msra.mxu0 0
  %1498 = vmatprep.subr.bf16.mxu0 0
  %1499 = vmatpush1.bf16.msra.mxu0 0
  %1500 = vmatprep.subr.bf16.mxu0 0
  %1501 = vmatpush1.bf16.msra.mxu0 0
  %1502 = vmatprep.subr.bf16.mxu0 0
  %1503 = vmatpush1.bf16.msra.mxu0 0
  %1504 = vmatprep.subr.bf16.mxu0 0
  %1505 = vmatpush1.bf16.msra.mxu0 0
  %1506 = vmatprep.mubr.bf16.mxu0 0
  %1507 = vmatmul.mubr.bf16.gmra.mrb[0].mxu0 %v1472
  %v1508 = vpop.f32.mrb[0].mxu0
  %v1509 = vadd.f32 %v868, %v1508
  %v1510 = vpop.f32.mrb[0].mxu0
  %v1511 = vpop.f32.mrb[0].mxu0
  %v1512 = vpop.f32.mrb[0].mxu0
  %1513 = vdwg.mxu0
  %v1514 = vadd.f32 %v1466, %v1509
  %v1515 = vxor.u32 %v1514, 2147483648
  %v1516 = vmul.f32 %v1515, 1.442695
  %v1517 = vpow.pop %v1516
  %v1518 = vadd.f32 %v1517, 1.0
  %v1519 = vrcp.pop %v1518
  %v1520 = vmul.f32 1.0, %v1519
  %1522 = vrot.lane.b32.xlu0 %v1509, 64
  %v1523 = vpop.permute.xlu0 %1522
  %v1525 = vmul.f32 %v1520, %v1523
  %1527 = vrot.lane.b32.xlu0 %v1525, 64
  %v1528 = vpop.permute.xlu0 %1527
  %v1530 = vadd.f32 %v1466, %v1528
  %v1531 = vtanh.pop %v1530
  %v1532 = vsub.f32 1.0, %v1520
  %1534 = vrot.lane.b32.xlu0 %v1531, 96
  %v1535 = vpop.permute.xlu0 %1534
  %v1537 = vmul.f32 %v1532, %v1535
  %v1538 = vmul.f32 %v1520, %v1464
  %v1539 = vadd.f32 %v1537, %v1538
  %s1540 = scalar_lea.vmem [#allocation2], 18
  %v1541 = vld [vmem:[%s1540] sm:$0x3]
  %v1542 = vpack.c.bf16 %v1539, %v1539
  %1544 = vrot.lane.b32.xlu0 %v1542, 96
  %v1545 = vpop.permute.xlu0 %1544
  %v1547 = vsel %vm870, %v1545, 0
  %1549 = vmatprep.subr.bf16.mxu0 0
  %1550 = vmatpush1.bf16.msra.mxu0 %v71
  %1551 = vmatprep.subr.bf16.mxu0 0
  %1552 = vmatpush1.bf16.msra.mxu0 %v72
  %1553 = vmatprep.subr.bf16.mxu0 0
  %1554 = vmatpush1.bf16.msra.mxu0 0
  %1555 = vmatprep.subr.bf16.mxu0 0
  %1556 = vmatpush1.bf16.msra.mxu0 0
  %1557 = vmatprep.subr.bf16.mxu0 0
  %1558 = vmatpush1.bf16.msra.mxu0 0
  %1559 = vmatprep.subr.bf16.mxu0 0
  %1560 = vmatpush1.bf16.msra.mxu0 0
  %1561 = vmatprep.subr.bf16.mxu0 0
  %1562 = vmatpush1.bf16.msra.mxu0 0
  %1563 = vmatprep.subr.bf16.mxu0 0
  %1564 = vmatpush1.bf16.msra.mxu0 0
  %1565 = vmatprep.subr.bf16.mxu0 0
  %1566 = vmatpush1.bf16.msra.mxu0 0
  %1567 = vmatprep.subr.bf16.mxu0 0
  %1568 = vmatpush1.bf16.msra.mxu0 0
  %1569 = vmatprep.subr.bf16.mxu0 0
  %1570 = vmatpush1.bf16.msra.mxu0 0
  %1571 = vmatprep.subr.bf16.mxu0 0
  %1572 = vmatpush1.bf16.msra.mxu0 0
  %1573 = vmatprep.subr.bf16.mxu0 0
  %1574 = vmatpush1.bf16.msra.mxu0 0
  %1575 = vmatprep.subr.bf16.mxu0 0
  %1576 = vmatpush1.bf16.msra.mxu0 0
  %1577 = vmatprep.subr.bf16.mxu0 0
  %1578 = vmatpush1.bf16.msra.mxu0 0
  %1579 = vmatprep.subr.bf16.mxu0 0
  %1580 = vmatpush1.bf16.msra.mxu0 0
  %1581 = vmatprep.mubr.bf16.mxu0 0
  %1582 = vmatmul.mubr.bf16.gmra.mrb[0].mxu0 %v1547
  %v1583 = vpop.f32.mrb[0].mxu0
  %v1584 = vadd.f32 %v868, %v1583
  %v1585 = vpop.f32.mrb[0].mxu0
  %v1586 = vpop.f32.mrb[0].mxu0
  %v1587 = vpop.f32.mrb[0].mxu0
  %1588 = vdwg.mxu0
  %v1589 = vadd.f32 %v1541, %v1584
  %v1590 = vxor.u32 %v1589, 2147483648
  %v1591 = vmul.f32 %v1590, 1.442695
  %v1592 = vpow.pop %v1591
  %v1593 = vadd.f32 %v1592, 1.0
  %v1594 = vrcp.pop %v1593
  %v1595 = vmul.f32 1.0, %v1594
  %1597 = vrot.lane.b32.xlu0 %v1584, 64
  %v1598 = vpop.permute.xlu0 %1597
  %v1600 = vmul.f32 %v1595, %v1598
  %1602 = vrot.lane.b32.xlu0 %v1600, 64
  %v1603 = vpop.permute.xlu0 %1602
  %v1605 = vadd.f32 %v1541, %v1603
  %v1606 = vtanh.pop %v1605
  %v1607 = vsub.f32 1.0, %v1595
  %1609 = vrot.lane.b32.xlu0 %v1606, 96
  %v1610 = vpop.permute.xlu0 %1609
  %v1612 = vmul.f32 %v1607, %v1610
  %v1613 = vmul.f32 %v1595, %v1539
  %v1614 = vadd.f32 %v1612, %v1613
  %s1615 = scalar_lea.vmem [#allocation2], 20
  %v1616 = vld [vmem:[%s1615] sm:$0x3]
  %v1617 = vpack.c.bf16 %v1614, %v1614
  %1619 = vrot.lane.b32.xlu0 %v1617, 96
  %v1620 = vpop.permute.xlu0 %1619
  %v1622 = vsel %vm870, %v1620, 0
  %1624 = vmatprep.subr.bf16.mxu0 0
  %1625 = vmatpush1.bf16.msra.mxu0 %v71
  %1626 = vmatprep.subr.bf16.mxu0 0
  %1627 = vmatpush1.bf16.msra.mxu0 %v72
  %1628 = vmatprep.subr.bf16.mxu0 0
  %1629 = vmatpush1.bf16.msra.mxu0 0
  %1630 = vmatprep.subr.bf16.mxu0 0
  %1631 = vmatpush1.bf16.msra.mxu0 0
  %1632 = vmatprep.subr.bf16.mxu0 0
  %1633 = vmatpush1.bf16.msra.mxu0 0
  %1634 = vmatprep.subr.bf16.mxu0 0
  %1635 = vmatpush1.bf16.msra.mxu0 0
  %1636 = vmatprep.subr.bf16.mxu0 0
  %1637 = vmatpush1.bf16.msra.mxu0 0
  %1638 = vmatprep.subr.bf16.mxu0 0
  %1639 = vmatpush1.bf16.msra.mxu0 0
  %1640 = vmatprep.subr.bf16.mxu0 0
  %1641 = vmatpush1.bf16.msra.mxu0 0
  %1642 = vmatprep.subr.bf16.mxu0 0
  %1643 = vmatpush1.bf16.msra.mxu0 0
  %1644 = vmatprep.subr.bf16.mxu0 0
  %1645 = vmatpush1.bf16.msra.mxu0 0
  %1646 = vmatprep.subr.bf16.mxu0 0
  %1647 = vmatpush1.bf16.msra.mxu0 0
  %1648 = vmatprep.subr.bf16.mxu0 0
  %1649 = vmatpush1.bf16.msra.mxu0 0
  %1650 = vmatprep.subr.bf16.mxu0 0
  %1651 = vmatpush1.bf16.msra.mxu0 0
  %1652 = vmatprep.subr.bf16.mxu0 0
  %1653 = vmatpush1.bf16.msra.mxu0 0
  %1654 = vmatprep.subr.bf16.mxu0 0
  %1655 = vmatpush1.bf16.msra.mxu0 0
  %1656 = vmatprep.mubr.bf16.mxu0 0
  %1657 = vmatmul.mubr.bf16.gmra.mrb[0].mxu0 %v1622
  %v1658 = vpop.f32.mrb[0].mxu0
  %v1659 = vadd.f32 %v868, %v1658
  %v1660 = vpop.f32.mrb[0].mxu0
  %v1661 = vpop.f32.mrb[0].mxu0
  %v1662 = vpop.f32.mrb[0].mxu0
  %1663 = vdwg.mxu0
  %v1664 = vadd.f32 %v1616, %v1659
  %v1665 = vxor.u32 %v1664, 2147483648
  %v1666 = vmul.f32 %v1665, 1.442695
  %v1667 = vpow.pop %v1666
  %v1668 = vadd.f32 %v1667, 1.0
  %v1669 = vrcp.pop %v1668
  %v1670 = vmul.f32 1.0, %v1669
  %1672 = vrot.lane.b32.xlu0 %v1659, 64
  %v1673 = vpop.permute.xlu0 %1672
  %v1675 = vmul.f32 %v1670, %v1673
  %1677 = vrot.lane.b32.xlu0 %v1675, 64
  %v1678 = vpop.permute.xlu0 %1677
  %v1680 = vadd.f32 %v1616, %v1678
  %v1681 = vtanh.pop %v1680
  %v1682 = vsub.f32 1.0, %v1670
  %1684 = vrot.lane.b32.xlu0 %v1681, 96
  %v1685 = vpop.permute.xlu0 %1684
  %v1687 = vmul.f32 %v1682, %v1685
  %v1688 = vmul.f32 %v1670, %v1614
  %v1689 = vadd.f32 %v1687, %v1688
  %s1690 = scalar_lea.vmem [#allocation2], 22
  %v1691 = vld [vmem:[%s1690] sm:$0x3]
  %v1692 = vpack.c.bf16 %v1689, %v1689
  %1694 = vrot.lane.b32.xlu0 %v1692, 96
  %v1695 = vpop.permute.xlu0 %1694
  %v1697 = vsel %vm870, %v1695, 0
  %1699 = vmatprep.subr.bf16.mxu0 0
  %1700 = vmatpush1.bf16.msra.mxu0 %v71
  %1701 = vmatprep.subr.bf16.mxu0 0
  %1702 = vmatpush1.bf16.msra.mxu0 %v72
  %1703 = vmatprep.subr.bf16.mxu0 0
  %1704 = vmatpush1.bf16.msra.mxu0 0
  %1705 = vmatprep.subr.bf16.mxu0 0
  %1706 = vmatpush1.bf16.msra.mxu0 0
  %1707 = vmatprep.subr.bf16.mxu0 0
  %1708 = vmatpush1.bf16.msra.mxu0 0
  %1709 = vmatprep.subr.bf16.mxu0 0
  %1710 = vmatpush1.bf16.msra.mxu0 0
  %1711 = vmatprep.subr.bf16.mxu0 0
  %1712 = vmatpush1.bf16.msra.mxu0 0
  %1713 = vmatprep.subr.bf16.mxu0 0
  %1714 = vmatpush1.bf16.msra.mxu0 0
  %1715 = vmatprep.subr.bf16.mxu0 0
  %1716 = vmatpush1.bf16.msra.mxu0 0
  %1717 = vmatprep.subr.bf16.mxu0 0
  %1718 = vmatpush1.bf16.msra.mxu0 0
  %1719 = vmatprep.subr.bf16.mxu0 0
  %1720 = vmatpush1.bf16.msra.mxu0 0
  %1721 = vmatprep.subr.bf16.mxu0 0
  %1722 = vmatpush1.bf16.msra.mxu0 0
  %1723 = vmatprep.subr.bf16.mxu0 0
  %1724 = vmatpush1.bf16.msra.mxu0 0
  %1725 = vmatprep.subr.bf16.mxu0 0
  %1726 = vmatpush1.bf16.msra.mxu0 0
  %1727 = vmatprep.subr.bf16.mxu0 0
  %1728 = vmatpush1.bf16.msra.mxu0 0
  %1729 = vmatprep.subr.bf16.mxu0 0
  %1730 = vmatpush1.bf16.msra.mxu0 0
  %1731 = vmatprep.mubr.bf16.mxu0 0
  %1732 = vmatmul.mubr.bf16.gmra.mrb[0].mxu0 %v1697
  %v1733 = vpop.f32.mrb[0].mxu0
  %v1734 = vadd.f32 %v868, %v1733
  %v1735 = vpop.f32.mrb[0].mxu0
  %v1736 = vpop.f32.mrb[0].mxu0
  %v1737 = vpop.f32.mrb[0].mxu0
  %1738 = vdwg.mxu0
  %v1739 = vadd.f32 %v1691, %v1734
  %v1740 = vxor.u32 %v1739, 2147483648
  %v1741 = vmul.f32 %v1740, 1.442695
  %v1742 = vpow.pop %v1741
  %v1743 = vadd.f32 %v1742, 1.0
  %v1744 = vrcp.pop %v1743
  %v1745 = vmul.f32 1.0, %v1744
  %1747 = vrot.lane.b32.xlu0 %v1734, 64
  %v1748 = vpop.permute.xlu0 %1747
  %v1750 = vmul.f32 %v1745, %v1748
  %1752 = vrot.lane.b32.xlu0 %v1750, 64
  %v1753 = vpop.permute.xlu0 %1752
  %v1755 = vadd.f32 %v1691, %v1753
  %v1756 = vtanh.pop %v1755
  %v1757 = vsub.f32 1.0, %v1745
  %1759 = vrot.lane.b32.xlu0 %v1756, 96
  %v1760 = vpop.permute.xlu0 %1759
  %v1762 = vmul.f32 %v1757, %v1760
  %v1763 = vmul.f32 %v1745, %v1689
  %v1764 = vadd.f32 %v1762, %v1763
  %s1765 = scalar_lea.vmem [#allocation2], 24
  %v1766 = vld [vmem:[%s1765] sm:$0x3]
  %v1767 = vpack.c.bf16 %v1764, %v1764
  %1769 = vrot.lane.b32.xlu0 %v1767, 96
  %v1770 = vpop.permute.xlu0 %1769
  %v1772 = vsel %vm870, %v1770, 0
  %1774 = vmatprep.subr.bf16.mxu0 0
  %1775 = vmatpush1.bf16.msra.mxu0 %v71
  %1776 = vmatprep.subr.bf16.mxu0 0
  %1777 = vmatpush1.bf16.msra.mxu0 %v72
  %1778 = vmatprep.subr.bf16.mxu0 0
  %1779 = vmatpush1.bf16.msra.mxu0 0
  %1780 = vmatprep.subr.bf16.mxu0 0
  %1781 = vmatpush1.bf16.msra.mxu0 0
  %1782 = vmatprep.subr.bf16.mxu0 0
  %1783 = vmatpush1.bf16.msra.mxu0 0
  %1784 = vmatprep.subr.bf16.mxu0 0
  %1785 = vmatpush1.bf16.msra.mxu0 0
  %1786 = vmatprep.subr.bf16.mxu0 0
  %1787 = vmatpush1.bf16.msra.mxu0 0
  %1788 = vmatprep.subr.bf16.mxu0 0
  %1789 = vmatpush1.bf16.msra.mxu0 0
  %1790 = vmatprep.subr.bf16.mxu0 0
  %1791 = vmatpush1.bf16.msra.mxu0 0
  %1792 = vmatprep.subr.bf16.mxu0 0
  %1793 = vmatpush1.bf16.msra.mxu0 0
  %1794 = vmatprep.subr.bf16.mxu0 0
  %1795 = vmatpush1.bf16.msra.mxu0 0
  %1796 = vmatprep.subr.bf16.mxu0 0
  %1797 = vmatpush1.bf16.msra.mxu0 0
  %1798 = vmatprep.subr.bf16.mxu0 0
  %1799 = vmatpush1.bf16.msra.mxu0 0
  %1800 = vmatprep.subr.bf16.mxu0 0
  %1801 = vmatpush1.bf16.msra.mxu0 0
  %1802 = vmatprep.subr.bf16.mxu0 0
  %1803 = vmatpush1.bf16.msra.mxu0 0
  %1804 = vmatprep.subr.bf16.mxu0 0
  %1805 = vmatpush1.bf16.msra.mxu0 0
  %1806 = vmatprep.mubr.bf16.mxu0 0
  %1807 = vmatmul.mubr.bf16.gmra.mrb[0].mxu0 %v1772
  %v1808 = vpop.f32.mrb[0].mxu0
  %v1809 = vadd.f32 %v868, %v1808
  %v1810 = vpop.f32.mrb[0].mxu0
  %v1811 = vpop.f32.mrb[0].mxu0
  %v1812 = vpop.f32.mrb[0].mxu0
  %1813 = vdwg.mxu0
  %v1814 = vadd.f32 %v1766, %v1809
  %v1815 = vxor.u32 %v1814, 2147483648
  %v1816 = vmul.f32 %v1815, 1.442695
  %v1817 = vpow.pop %v1816
  %v1818 = vadd.f32 %v1817, 1.0
  %v1819 = vrcp.pop %v1818
  %v1820 = vmul.f32 1.0, %v1819
  %1822 = vrot.lane.b32.xlu0 %v1809, 64
  %v1823 = vpop.permute.xlu0 %1822
  %v1825 = vmul.f32 %v1820, %v1823
  %1827 = vrot.lane.b32.xlu0 %v1825, 64
  %v1828 = vpop.permute.xlu0 %1827
  %v1830 = vadd.f32 %v1766, %v1828
  %v1831 = vtanh.pop %v1830
  %v1832 = vsub.f32 1.0, %v1820
  %1834 = vrot.lane.b32.xlu0 %v1831, 96
  %v1835 = vpop.permute.xlu0 %1834
  %v1837 = vmul.f32 %v1832, %v1835
  %v1838 = vmul.f32 %v1820, %v1764
  %v1839 = vadd.f32 %v1837, %v1838
  %s1840 = scalar_lea.vmem [#allocation2], 26
  %v1841 = vld [vmem:[%s1840] sm:$0x3]
  %v1842 = vpack.c.bf16 %v1839, %v1839
  %1844 = vrot.lane.b32.xlu0 %v1842, 96
  %v1845 = vpop.permute.xlu0 %1844
  %v1847 = vsel %vm870, %v1845, 0
  %1849 = vmatprep.subr.bf16.mxu0 0
  %1850 = vmatpush1.bf16.msra.mxu0 %v71
  %1851 = vmatprep.subr.bf16.mxu0 0
  %1852 = vmatpush1.bf16.msra.mxu0 %v72
  %1853 = vmatprep.subr.bf16.mxu0 0
  %1854 = vmatpush1.bf16.msra.mxu0 0
  %1855 = vmatprep.subr.bf16.mxu0 0
  %1856 = vmatpush1.bf16.msra.mxu0 0
  %1857 = vmatprep.subr.bf16.mxu0 0
  %1858 = vmatpush1.bf16.msra.mxu0 0
  %1859 = vmatprep.subr.bf16.mxu0 0
  %1860 = vmatpush1.bf16.msra.mxu0 0
  %1861 = vmatprep.subr.bf16.mxu0 0
  %1862 = vmatpush1.bf16.msra.mxu0 0
  %1863 = vmatprep.subr.bf16.mxu0 0
  %1864 = vmatpush1.bf16.msra.mxu0 0
  %1865 = vmatprep.subr.bf16.mxu0 0
  %1866 = vmatpush1.bf16.msra.mxu0 0
  %1867 = vmatprep.subr.bf16.mxu0 0
  %1868 = vmatpush1.bf16.msra.mxu0 0
  %1869 = vmatprep.subr.bf16.mxu0 0
  %1870 = vmatpush1.bf16.msra.mxu0 0
  %1871 = vmatprep.subr.bf16.mxu0 0
  %1872 = vmatpush1.bf16.msra.mxu0 0
  %1873 = vmatprep.subr.bf16.mxu0 0
  %1874 = vmatpush1.bf16.msra.mxu0 0
  %1875 = vmatprep.subr.bf16.mxu0 0
  %1876 = vmatpush1.bf16.msra.mxu0 0
  %1877 = vmatprep.subr.bf16.mxu0 0
  %1878 = vmatpush1.bf16.msra.mxu0 0
  %1879 = vmatprep.subr.bf16.mxu0 0
  %1880 = vmatpush1.bf16.msra.mxu0 0
  %1881 = vmatprep.mubr.bf16.mxu0 0
  %1882 = vmatmul.mubr.bf16.gmra.mrb[0].mxu0 %v1847
  %v1883 = vpop.f32.mrb[0].mxu0
  %v1884 = vadd.f32 %v868, %v1883
  %v1885 = vpop.f32.mrb[0].mxu0
  %v1886 = vpop.f32.mrb[0].mxu0
  %v1887 = vpop.f32.mrb[0].mxu0
  %1888 = vdwg.mxu0
  %v1889 = vadd.f32 %v1841, %v1884
  %v1890 = vxor.u32 %v1889, 2147483648
  %v1891 = vmul.f32 %v1890, 1.442695
  %v1892 = vpow.pop %v1891
  %v1893 = vadd.f32 %v1892, 1.0
  %v1894 = vrcp.pop %v1893
  %v1895 = vmul.f32 1.0, %v1894
  %1897 = vrot.lane.b32.xlu0 %v1884, 64
  %v1898 = vpop.permute.xlu0 %1897
  %v1900 = vmul.f32 %v1895, %v1898
  %1902 = vrot.lane.b32.xlu0 %v1900, 64
  %v1903 = vpop.permute.xlu0 %1902
  %v1905 = vadd.f32 %v1841, %v1903
  %v1906 = vtanh.pop %v1905
  %v1907 = vsub.f32 1.0, %v1895
  %1909 = vrot.lane.b32.xlu0 %v1906, 96
  %v1910 = vpop.permute.xlu0 %1909
  %v1912 = vmul.f32 %v1907, %v1910
  %v1913 = vmul.f32 %v1895, %v1839
  %v1914 = vadd.f32 %v1912, %v1913
  %s1915 = scalar_lea.vmem [#allocation2], 28
  %v1916 = vld [vmem:[%s1915] sm:$0x3]
  %v1917 = vpack.c.bf16 %v1914, %v1914
  %1919 = vrot.lane.b32.xlu0 %v1917, 96
  %v1920 = vpop.permute.xlu0 %1919
  %v1922 = vsel %vm870, %v1920, 0
  %1924 = vmatprep.subr.bf16.mxu0 0
  %1925 = vmatpush1.bf16.msra.mxu0 %v71
  %1926 = vmatprep.subr.bf16.mxu0 0
  %1927 = vmatpush1.bf16.msra.mxu0 %v72
  %1928 = vmatprep.subr.bf16.mxu0 0
  %1929 = vmatpush1.bf16.msra.mxu0 0
  %1930 = vmatprep.subr.bf16.mxu0 0
  %1931 = vmatpush1.bf16.msra.mxu0 0
  %1932 = vmatprep.subr.bf16.mxu0 0
  %1933 = vmatpush1.bf16.msra.mxu0 0
  %1934 = vmatprep.subr.bf16.mxu0 0
  %1935 = vmatpush1.bf16.msra.mxu0 0
  %1936 = vmatprep.subr.bf16.mxu0 0
  %1937 = vmatpush1.bf16.msra.mxu0 0
  %1938 = vmatprep.subr.bf16.mxu0 0
  %1939 = vmatpush1.bf16.msra.mxu0 0
  %1940 = vmatprep.subr.bf16.mxu0 0
  %1941 = vmatpush1.bf16.msra.mxu0 0
  %1942 = vmatprep.subr.bf16.mxu0 0
  %1943 = vmatpush1.bf16.msra.mxu0 0
  %1944 = vmatprep.subr.bf16.mxu0 0
  %1945 = vmatpush1.bf16.msra.mxu0 0
  %1946 = vmatprep.subr.bf16.mxu0 0
  %1947 = vmatpush1.bf16.msra.mxu0 0
  %1948 = vmatprep.subr.bf16.mxu0 0
  %1949 = vmatpush1.bf16.msra.mxu0 0
  %1950 = vmatprep.subr.bf16.mxu0 0
  %1951 = vmatpush1.bf16.msra.mxu0 0
  %1952 = vmatprep.subr.bf16.mxu0 0
  %1953 = vmatpush1.bf16.msra.mxu0 0
  %1954 = vmatprep.subr.bf16.mxu0 0
  %1955 = vmatpush1.bf16.msra.mxu0 0
  %1956 = vmatprep.mubr.bf16.mxu0 0
  %1957 = vmatmul.mubr.bf16.gmra.mrb[0].mxu0 %v1922
  %v1958 = vpop.f32.mrb[0].mxu0
  %v1959 = vadd.f32 %v868, %v1958
  %v1960 = vpop.f32.mrb[0].mxu0
  %v1961 = vpop.f32.mrb[0].mxu0
  %v1962 = vpop.f32.mrb[0].mxu0
  %1963 = vdwg.mxu0
  %v1964 = vadd.f32 %v1916, %v1959
  %v1965 = vxor.u32 %v1964, 2147483648
  %v1966 = vmul.f32 %v1965, 1.442695
  %v1967 = vpow.pop %v1966
  %v1968 = vadd.f32 %v1967, 1.0
  %v1969 = vrcp.pop %v1968
  %v1970 = vmul.f32 1.0, %v1969
  %1972 = vrot.lane.b32.xlu0 %v1959, 64
  %v1973 = vpop.permute.xlu0 %1972
  %v1975 = vmul.f32 %v1970, %v1973
  %1977 = vrot.lane.b32.xlu0 %v1975, 64
  %v1978 = vpop.permute.xlu0 %1977
  %v1980 = vadd.f32 %v1916, %v1978
  %v1981 = vtanh.pop %v1980
  %v1982 = vsub.f32 1.0, %v1970
  %1984 = vrot.lane.b32.xlu0 %v1981, 96
  %v1985 = vpop.permute.xlu0 %1984
  %v1987 = vmul.f32 %v1982, %v1985
  %v1988 = vmul.f32 %v1970, %v1914
  %v1989 = vadd.f32 %v1987, %v1988
  %s1990 = scalar_lea.vmem [#allocation2], 30
  %v1991 = vld [vmem:[%s1990] sm:$0x3]
  %v1992 = vpack.c.bf16 %v1989, %v1989
  %1994 = vrot.lane.b32.xlu0 %v1992, 96
  %v1995 = vpop.permute.xlu0 %1994
  %v1997 = vsel %vm870, %v1995, 0
  %1999 = vmatprep.subr.bf16.mxu0 0
  %2000 = vmatpush1.bf16.msra.mxu0 %v71
  %2001 = vmatprep.subr.bf16.mxu0 0
  %2002 = vmatpush1.bf16.msra.mxu0 %v72
  %2003 = vmatprep.subr.bf16.mxu0 0
  %2004 = vmatpush1.bf16.msra.mxu0 0
  %2005 = vmatprep.subr.bf16.mxu0 0
  %2006 = vmatpush1.bf16.msra.mxu0 0
  %2007 = vmatprep.subr.bf16.mxu0 0
  %2008 = vmatpush1.bf16.msra.mxu0 0
  %2009 = vmatprep.subr.bf16.mxu0 0
  %2010 = vmatpush1.bf16.msra.mxu0 0
  %2011 = vmatprep.subr.bf16.mxu0 0
  %2012 = vmatpush1.bf16.msra.mxu0 0
  %2013 = vmatprep.subr.bf16.mxu0 0
  %2014 = vmatpush1.bf16.msra.mxu0 0
  %2015 = vmatprep.subr.bf16.mxu0 0
  %2016 = vmatpush1.bf16.msra.mxu0 0
  %2017 = vmatprep.subr.bf16.mxu0 0
  %2018 = vmatpush1.bf16.msra.mxu0 0
  %2019 = vmatprep.subr.bf16.mxu0 0
  %2020 = vmatpush1.bf16.msra.mxu0 0
  %2021 = vmatprep.subr.bf16.mxu0 0
  %2022 = vmatpush1.bf16.msra.mxu0 0
  %2023 = vmatprep.subr.bf16.mxu0 0
  %2024 = vmatpush1.bf16.msra.mxu0 0
  %2025 = vmatprep.subr.bf16.mxu0 0
  %2026 = vmatpush1.bf16.msra.mxu0 0
  %2027 = vmatprep.subr.bf16.mxu0 0
  %2028 = vmatpush1.bf16.msra.mxu0 0
  %2029 = vmatprep.subr.bf16.mxu0 0
  %2030 = vmatpush1.bf16.msra.mxu0 0
  %2031 = vmatprep.mubr.bf16.mxu0 0
  %2032 = vmatmul.mubr.bf16.gmra.mrb[0].mxu0 %v1997
  %v2033 = vpop.f32.mrb[0].mxu0
  %v2034 = vadd.f32 %v868, %v2033
  %v2035 = vpop.f32.mrb[0].mxu0
  %v2036 = vpop.f32.mrb[0].mxu0
  %v2037 = vpop.f32.mrb[0].mxu0
  %2038 = vdwg.mxu0
  %v2039 = vadd.f32 %v1991, %v2034
  %v2040 = vxor.u32 %v2039, 2147483648
  %v2041 = vmul.f32 %v2040, 1.442695
  %v2042 = vpow.pop %v2041
  %v2043 = vadd.f32 %v2042, 1.0
  %v2044 = vrcp.pop %v2043
  %v2045 = vmul.f32 1.0, %v2044
  %2047 = vrot.lane.b32.xlu0 %v2034, 64
  %v2048 = vpop.permute.xlu0 %2047
  %v2050 = vmul.f32 %v2045, %v2048
  %2052 = vrot.lane.b32.xlu0 %v2050, 64
  %v2053 = vpop.permute.xlu0 %2052
  %v2055 = vadd.f32 %v1991, %v2053
  %v2056 = vtanh.pop %v2055
  %v2057 = vsub.f32 1.0, %v2045
  %2059 = vrot.lane.b32.xlu0 %v2056, 96
  %v2060 = vpop.permute.xlu0 %2059
  %v2062 = vmul.f32 %v2057, %v2060
  %v2063 = vmul.f32 %v2045, %v1989
  %v2064 = vadd.f32 %v2062, %v2063
  %s2065 = scalar_lea.vmem [#allocation2], 32
  %v2066 = vld [vmem:[%s2065] sm:$0x3]
  %v2067 = vpack.c.bf16 %v2064, %v2064
  %2069 = vrot.lane.b32.xlu0 %v2067, 96
  %v2070 = vpop.permute.xlu0 %2069
  %v2072 = vsel %vm870, %v2070, 0
  %2074 = vmatprep.subr.bf16.mxu0 0
  %2075 = vmatpush1.bf16.msra.mxu0 %v71
  %2076 = vmatprep.subr.bf16.mxu0 0
  %2077 = vmatpush1.bf16.msra.mxu0 %v72
  %2078 = vmatprep.subr.bf16.mxu0 0
  %2079 = vmatpush1.bf16.msra.mxu0 0
  %2080 = vmatprep.subr.bf16.mxu0 0
  %2081 = vmatpush1.bf16.msra.mxu0 0
  %2082 = vmatprep.subr.bf16.mxu0 0
  %2083 = vmatpush1.bf16.msra.mxu0 0
  %2084 = vmatprep.subr.bf16.mxu0 0
  %2085 = vmatpush1.bf16.msra.mxu0 0
  %2086 = vmatprep.subr.bf16.mxu0 0
  %2087 = vmatpush1.bf16.msra.mxu0 0
  %2088 = vmatprep.subr.bf16.mxu0 0
  %2089 = vmatpush1.bf16.msra.mxu0 0
  %2090 = vmatprep.subr.bf16.mxu0 0
  %2091 = vmatpush1.bf16.msra.mxu0 0
  %2092 = vmatprep.subr.bf16.mxu0 0
  %2093 = vmatpush1.bf16.msra.mxu0 0
  %2094 = vmatprep.subr.bf16.mxu0 0
  %2095 = vmatpush1.bf16.msra.mxu0 0
  %2096 = vmatprep.subr.bf16.mxu0 0
  %2097 = vmatpush1.bf16.msra.mxu0 0
  %2098 = vmatprep.subr.bf16.mxu0 0
  %2099 = vmatpush1.bf16.msra.mxu0 0
  %2100 = vmatprep.subr.bf16.mxu0 0
  %2101 = vmatpush1.bf16.msra.mxu0 0
  %2102 = vmatprep.subr.bf16.mxu0 0
  %2103 = vmatpush1.bf16.msra.mxu0 0
  %2104 = vmatprep.subr.bf16.mxu0 0
  %2105 = vmatpush1.bf16.msra.mxu0 0
  %2106 = vmatprep.mubr.bf16.mxu0 0
  %2107 = vmatmul.mubr.bf16.gmra.mrb[0].mxu0 %v2072
  %v2108 = vpop.f32.mrb[0].mxu0
  %v2109 = vadd.f32 %v868, %v2108
  %v2110 = vpop.f32.mrb[0].mxu0
  %v2111 = vpop.f32.mrb[0].mxu0
  %v2112 = vpop.f32.mrb[0].mxu0
  %2113 = vdwg.mxu0
  %v2114 = vadd.f32 %v2066, %v2109
  %v2115 = vxor.u32 %v2114, 2147483648
  %v2116 = vmul.f32 %v2115, 1.442695
  %v2117 = vpow.pop %v2116
  %v2118 = vadd.f32 %v2117, 1.0
  %v2119 = vrcp.pop %v2118
  %v2120 = vmul.f32 1.0, %v2119
  %2122 = vrot.lane.b32.xlu0 %v2109, 64
  %v2123 = vpop.permute.xlu0 %2122
  %v2125 = vmul.f32 %v2120, %v2123
  %2127 = vrot.lane.b32.xlu0 %v2125, 64
  %v2128 = vpop.permute.xlu0 %2127
  %v2130 = vadd.f32 %v2066, %v2128
  %v2131 = vtanh.pop %v2130
  %v2132 = vsub.f32 1.0, %v2120
  %2134 = vrot.lane.b32.xlu0 %v2131, 96
  %v2135 = vpop.permute.xlu0 %2134
  %v2137 = vmul.f32 %v2132, %v2135
  %v2138 = vmul.f32 %v2120, %v2064
  %v2139 = vadd.f32 %v2137, %v2138
  %s2140 = scalar_lea.vmem [#allocation2], 34
  %v2141 = vld [vmem:[%s2140] sm:$0x3]
  %v2142 = vpack.c.bf16 %v2139, %v2139
  %2144 = vrot.lane.b32.xlu0 %v2142, 96
  %v2145 = vpop.permute.xlu0 %2144
  %v2147 = vsel %vm870, %v2145, 0
  %2149 = vmatprep.subr.bf16.mxu0 0
  %2150 = vmatpush1.bf16.msra.mxu0 %v71
  %2151 = vmatprep.subr.bf16.mxu0 0
  %2152 = vmatpush1.bf16.msra.mxu0 %v72
  %2153 = vmatprep.subr.bf16.mxu0 0
  %2154 = vmatpush1.bf16.msra.mxu0 0
  %2155 = vmatprep.subr.bf16.mxu0 0
  %2156 = vmatpush1.bf16.msra.mxu0 0
  %2157 = vmatprep.subr.bf16.mxu0 0
  %2158 = vmatpush1.bf16.msra.mxu0 0
  %2159 = vmatprep.subr.bf16.mxu0 0
  %2160 = vmatpush1.bf16.msra.mxu0 0
  %2161 = vmatprep.subr.bf16.mxu0 0
  %2162 = vmatpush1.bf16.msra.mxu0 0
  %2163 = vmatprep.subr.bf16.mxu0 0
  %2164 = vmatpush1.bf16.msra.mxu0 0
  %2165 = vmatprep.subr.bf16.mxu0 0
  %2166 = vmatpush1.bf16.msra.mxu0 0
  %2167 = vmatprep.subr.bf16.mxu0 0
  %2168 = vmatpush1.bf16.msra.mxu0 0
  %2169 = vmatprep.subr.bf16.mxu0 0
  %2170 = vmatpush1.bf16.msra.mxu0 0
  %2171 = vmatprep.subr.bf16.mxu0 0
  %2172 = vmatpush1.bf16.msra.mxu0 0
  %2173 = vmatprep.subr.bf16.mxu0 0
  %2174 = vmatpush1.bf16.msra.mxu0 0
  %2175 = vmatprep.subr.bf16.mxu0 0
  %2176 = vmatpush1.bf16.msra.mxu0 0
  %2177 = vmatprep.subr.bf16.mxu0 0
  %2178 = vmatpush1.bf16.msra.mxu0 0
  %2179 = vmatprep.subr.bf16.mxu0 0
  %2180 = vmatpush1.bf16.msra.mxu0 0
  %2181 = vmatprep.mubr.bf16.mxu0 0
  %2182 = vmatmul.mubr.bf16.gmra.mrb[0].mxu0 %v2147
  %v2183 = vpop.f32.mrb[0].mxu0
  %v2184 = vadd.f32 %v868, %v2183
  %v2185 = vpop.f32.mrb[0].mxu0
  %v2186 = vpop.f32.mrb[0].mxu0
  %v2187 = vpop.f32.mrb[0].mxu0
  %2188 = vdwg.mxu0
  %v2189 = vadd.f32 %v2141, %v2184
  %v2190 = vxor.u32 %v2189, 2147483648
  %v2191 = vmul.f32 %v2190, 1.442695
  %v2192 = vpow.pop %v2191
  %v2193 = vadd.f32 %v2192, 1.0
  %v2194 = vrcp.pop %v2193
  %v2195 = vmul.f32 1.0, %v2194
  %2197 = vrot.lane.b32.xlu0 %v2184, 64
  %v2198 = vpop.permute.xlu0 %2197
  %v2200 = vmul.f32 %v2195, %v2198
  %2202 = vrot.lane.b32.xlu0 %v2200, 64
  %v2203 = vpop.permute.xlu0 %2202
  %v2205 = vadd.f32 %v2141, %v2203
  %v2206 = vtanh.pop %v2205
  %v2207 = vsub.f32 1.0, %v2195
  %2209 = vrot.lane.b32.xlu0 %v2206, 96
  %v2210 = vpop.permute.xlu0 %2209
  %v2212 = vmul.f32 %v2207, %v2210
  %v2213 = vmul.f32 %v2195, %v2139
  %v2214 = vadd.f32 %v2212, %v2213
  %s2215 = scalar_lea.vmem [#allocation2], 36
  %v2216 = vld [vmem:[%s2215] sm:$0x3]
  %v2217 = vpack.c.bf16 %v2214, %v2214
  %2219 = vrot.lane.b32.xlu0 %v2217, 96
  %v2220 = vpop.permute.xlu0 %2219
  %v2222 = vsel %vm870, %v2220, 0
  %2224 = vmatprep.subr.bf16.mxu0 0
  %2225 = vmatpush1.bf16.msra.mxu0 %v71
  %2226 = vmatprep.subr.bf16.mxu0 0
  %2227 = vmatpush1.bf16.msra.mxu0 %v72
  %2228 = vmatprep.subr.bf16.mxu0 0
  %2229 = vmatpush1.bf16.msra.mxu0 0
  %2230 = vmatprep.subr.bf16.mxu0 0
  %2231 = vmatpush1.bf16.msra.mxu0 0
  %2232 = vmatprep.subr.bf16.mxu0 0
  %2233 = vmatpush1.bf16.msra.mxu0 0
  %2234 = vmatprep.subr.bf16.mxu0 0
  %2235 = vmatpush1.bf16.msra.mxu0 0
  %2236 = vmatprep.subr.bf16.mxu0 0
  %2237 = vmatpush1.bf16.msra.mxu0 0
  %2238 = vmatprep.subr.bf16.mxu0 0
  %2239 = vmatpush1.bf16.msra.mxu0 0
  %2240 = vmatprep.subr.bf16.mxu0 0
  %2241 = vmatpush1.bf16.msra.mxu0 0
  %2242 = vmatprep.subr.bf16.mxu0 0
  %2243 = vmatpush1.bf16.msra.mxu0 0
  %2244 = vmatprep.subr.bf16.mxu0 0
  %2245 = vmatpush1.bf16.msra.mxu0 0
  %2246 = vmatprep.subr.bf16.mxu0 0
  %2247 = vmatpush1.bf16.msra.mxu0 0
  %2248 = vmatprep.subr.bf16.mxu0 0
  %2249 = vmatpush1.bf16.msra.mxu0 0
  %2250 = vmatprep.subr.bf16.mxu0 0
  %2251 = vmatpush1.bf16.msra.mxu0 0
  %2252 = vmatprep.subr.bf16.mxu0 0
  %2253 = vmatpush1.bf16.msra.mxu0 0
  %2254 = vmatprep.subr.bf16.mxu0 0
  %2255 = vmatpush1.bf16.msra.mxu0 0
  %2256 = vmatprep.mubr.bf16.mxu0 0
  %2257 = vmatmul.mubr.bf16.gmra.mrb[0].mxu0 %v2222
  %v2258 = vpop.f32.mrb[0].mxu0
  %v2259 = vadd.f32 %v868, %v2258
  %v2260 = vpop.f32.mrb[0].mxu0
  %v2261 = vpop.f32.mrb[0].mxu0
  %v2262 = vpop.f32.mrb[0].mxu0
  %2263 = vdwg.mxu0
  %v2264 = vadd.f32 %v2216, %v2259
  %v2265 = vxor.u32 %v2264, 2147483648
  %v2266 = vmul.f32 %v2265, 1.442695
  %v2267 = vpow.pop %v2266
  %v2268 = vadd.f32 %v2267, 1.0
  %v2269 = vrcp.pop %v2268
  %v2270 = vmul.f32 1.0, %v2269
  %2272 = vrot.lane.b32.xlu0 %v2259, 64
  %v2273 = vpop.permute.xlu0 %2272
  %v2275 = vmul.f32 %v2270, %v2273
  %2277 = vrot.lane.b32.xlu0 %v2275, 64
  %v2278 = vpop.permute.xlu0 %2277
  %v2280 = vadd.f32 %v2216, %v2278
  %v2281 = vtanh.pop %v2280
  %v2282 = vsub.f32 1.0, %v2270
  %2284 = vrot.lane.b32.xlu0 %v2281, 96
  %v2285 = vpop.permute.xlu0 %2284
  %v2287 = vmul.f32 %v2282, %v2285
  %v2288 = vmul.f32 %v2270, %v2214
  %v2289 = vadd.f32 %v2287, %v2288
  %s2290 = scalar_lea.vmem [#allocation2], 38
  %v2291 = vld [vmem:[%s2290] sm:$0x3]
  %v2292 = vpack.c.bf16 %v2289, %v2289
  %2294 = vrot.lane.b32.xlu0 %v2292, 96
  %v2295 = vpop.permute.xlu0 %2294
  %v2297 = vsel %vm870, %v2295, 0
  %2299 = vmatprep.subr.bf16.mxu0 0
  %2300 = vmatpush1.bf16.msra.mxu0 %v71
  %2301 = vmatprep.subr.bf16.mxu0 0
  %2302 = vmatpush1.bf16.msra.mxu0 %v72
  %2303 = vmatprep.subr.bf16.mxu0 0
  %2304 = vmatpush1.bf16.msra.mxu0 0
  %2305 = vmatprep.subr.bf16.mxu0 0
  %2306 = vmatpush1.bf16.msra.mxu0 0
  %2307 = vmatprep.subr.bf16.mxu0 0
  %2308 = vmatpush1.bf16.msra.mxu0 0
  %2309 = vmatprep.subr.bf16.mxu0 0
  %2310 = vmatpush1.bf16.msra.mxu0 0
  %2311 = vmatprep.subr.bf16.mxu0 0
  %2312 = vmatpush1.bf16.msra.mxu0 0
  %2313 = vmatprep.subr.bf16.mxu0 0
  %2314 = vmatpush1.bf16.msra.mxu0 0
  %2315 = vmatprep.subr.bf16.mxu0 0
  %2316 = vmatpush1.bf16.msra.mxu0 0
  %2317 = vmatprep.subr.bf16.mxu0 0
  %2318 = vmatpush1.bf16.msra.mxu0 0
  %2319 = vmatprep.subr.bf16.mxu0 0
  %2320 = vmatpush1.bf16.msra.mxu0 0
  %2321 = vmatprep.subr.bf16.mxu0 0
  %2322 = vmatpush1.bf16.msra.mxu0 0
  %2323 = vmatprep.subr.bf16.mxu0 0
  %2324 = vmatpush1.bf16.msra.mxu0 0
  %2325 = vmatprep.subr.bf16.mxu0 0
  %2326 = vmatpush1.bf16.msra.mxu0 0
  %2327 = vmatprep.subr.bf16.mxu0 0
  %2328 = vmatpush1.bf16.msra.mxu0 0
  %2329 = vmatprep.subr.bf16.mxu0 0
  %2330 = vmatpush1.bf16.msra.mxu0 0
  %2331 = vmatprep.mubr.bf16.mxu0 0
  %2332 = vmatmul.mubr.bf16.gmra.mrb[0].mxu0 %v2297
  %v2333 = vpop.f32.mrb[0].mxu0
  %v2334 = vadd.f32 %v868, %v2333
  %v2335 = vpop.f32.mrb[0].mxu0
  %v2336 = vpop.f32.mrb[0].mxu0
  %v2337 = vpop.f32.mrb[0].mxu0
  %2338 = vdwg.mxu0
  %v2339 = vadd.f32 %v2291, %v2334
  %v2340 = vxor.u32 %v2339, 2147483648
  %v2341 = vmul.f32 %v2340, 1.442695
  %v2342 = vpow.pop %v2341
  %v2343 = vadd.f32 %v2342, 1.0
  %v2344 = vrcp.pop %v2343
  %v2345 = vmul.f32 1.0, %v2344
  %2347 = vrot.lane.b32.xlu0 %v2334, 64
  %v2348 = vpop.permute.xlu0 %2347
  %v2350 = vmul.f32 %v2345, %v2348
  %2352 = vrot.lane.b32.xlu0 %v2350, 64
  %v2353 = vpop.permute.xlu0 %2352
  %v2355 = vadd.f32 %v2291, %v2353
  %v2356 = vtanh.pop %v2355
  %v2357 = vsub.f32 1.0, %v2345
  %2359 = vrot.lane.b32.xlu0 %v2356, 96
  %v2360 = vpop.permute.xlu0 %2359
  %v2362 = vmul.f32 %v2357, %v2360
  %v2363 = vmul.f32 %v2345, %v2289
  %v2364 = vadd.f32 %v2362, %v2363
  %s2365 = scalar_lea.vmem [#allocation2], 40
  %v2366 = vld [vmem:[%s2365] sm:$0x3]
  %v2367 = vpack.c.bf16 %v2364, %v2364
  %2369 = vrot.lane.b32.xlu0 %v2367, 96
  %v2370 = vpop.permute.xlu0 %2369
  %v2372 = vsel %vm870, %v2370, 0
  %2374 = vmatprep.subr.bf16.mxu0 0
  %2375 = vmatpush1.bf16.msra.mxu0 %v71
  %2376 = vmatprep.subr.bf16.mxu0 0
  %2377 = vmatpush1.bf16.msra.mxu0 %v72
  %2378 = vmatprep.subr.bf16.mxu0 0
  %2379 = vmatpush1.bf16.msra.mxu0 0
  %2380 = vmatprep.subr.bf16.mxu0 0
  %2381 = vmatpush1.bf16.msra.mxu0 0
  %2382 = vmatprep.subr.bf16.mxu0 0
  %2383 = vmatpush1.bf16.msra.mxu0 0
  %2384 = vmatprep.subr.bf16.mxu0 0
  %2385 = vmatpush1.bf16.msra.mxu0 0
  %2386 = vmatprep.subr.bf16.mxu0 0
  %2387 = vmatpush1.bf16.msra.mxu0 0
  %2388 = vmatprep.subr.bf16.mxu0 0
  %2389 = vmatpush1.bf16.msra.mxu0 0
  %2390 = vmatprep.subr.bf16.mxu0 0
  %2391 = vmatpush1.bf16.msra.mxu0 0
  %2392 = vmatprep.subr.bf16.mxu0 0
  %2393 = vmatpush1.bf16.msra.mxu0 0
  %2394 = vmatprep.subr.bf16.mxu0 0
  %2395 = vmatpush1.bf16.msra.mxu0 0
  %2396 = vmatprep.subr.bf16.mxu0 0
  %2397 = vmatpush1.bf16.msra.mxu0 0
  %2398 = vmatprep.subr.bf16.mxu0 0
  %2399 = vmatpush1.bf16.msra.mxu0 0
  %2400 = vmatprep.subr.bf16.mxu0 0
  %2401 = vmatpush1.bf16.msra.mxu0 0
  %2402 = vmatprep.subr.bf16.mxu0 0
  %2403 = vmatpush1.bf16.msra.mxu0 0
  %2404 = vmatprep.subr.bf16.mxu0 0
  %2405 = vmatpush1.bf16.msra.mxu0 0
  %2406 = vmatprep.mubr.bf16.mxu0 0
  %2407 = vmatmul.mubr.bf16.gmra.mrb[0].mxu0 %v2372
  %v2408 = vpop.f32.mrb[0].mxu0
  %v2409 = vadd.f32 %v868, %v2408
  %v2410 = vpop.f32.mrb[0].mxu0
  %v2411 = vpop.f32.mrb[0].mxu0
  %v2412 = vpop.f32.mrb[0].mxu0
  %2413 = vdwg.mxu0
  %v2414 = vadd.f32 %v2366, %v2409
  %v2415 = vxor.u32 %v2414, 2147483648
  %v2416 = vmul.f32 %v2415, 1.442695
  %v2417 = vpow.pop %v2416
  %v2418 = vadd.f32 %v2417, 1.0
  %v2419 = vrcp.pop %v2418
  %v2420 = vmul.f32 1.0, %v2419
  %2422 = vrot.lane.b32.xlu0 %v2409, 64
  %v2423 = vpop.permute.xlu0 %2422
  %v2425 = vmul.f32 %v2420, %v2423
  %2427 = vrot.lane.b32.xlu0 %v2425, 64
  %v2428 = vpop.permute.xlu0 %2427
  %v2430 = vadd.f32 %v2366, %v2428
  %v2431 = vtanh.pop %v2430
  %v2432 = vsub.f32 1.0, %v2420
  %2434 = vrot.lane.b32.xlu0 %v2431, 96
  %v2435 = vpop.permute.xlu0 %2434
  %v2437 = vmul.f32 %v2432, %v2435
  %v2438 = vmul.f32 %v2420, %v2364
  %v2439 = vadd.f32 %v2437, %v2438
  %s2440 = scalar_lea.vmem [#allocation2], 42
  %v2441 = vld [vmem:[%s2440] sm:$0x3]
  %v2442 = vpack.c.bf16 %v2439, %v2439
  %2444 = vrot.lane.b32.xlu0 %v2442, 96
  %v2445 = vpop.permute.xlu0 %2444
  %v2447 = vsel %vm870, %v2445, 0
  %2449 = vmatprep.subr.bf16.mxu0 0
  %2450 = vmatpush1.bf16.msra.mxu0 %v71
  %2451 = vmatprep.subr.bf16.mxu0 0
  %2452 = vmatpush1.bf16.msra.mxu0 %v72
  %2453 = vmatprep.subr.bf16.mxu0 0
  %2454 = vmatpush1.bf16.msra.mxu0 0
  %2455 = vmatprep.subr.bf16.mxu0 0
  %2456 = vmatpush1.bf16.msra.mxu0 0
  %2457 = vmatprep.subr.bf16.mxu0 0
  %2458 = vmatpush1.bf16.msra.mxu0 0
  %2459 = vmatprep.subr.bf16.mxu0 0
  %2460 = vmatpush1.bf16.msra.mxu0 0
  %2461 = vmatprep.subr.bf16.mxu0 0
  %2462 = vmatpush1.bf16.msra.mxu0 0
  %2463 = vmatprep.subr.bf16.mxu0 0
  %2464 = vmatpush1.bf16.msra.mxu0 0
  %2465 = vmatprep.subr.bf16.mxu0 0
  %2466 = vmatpush1.bf16.msra.mxu0 0
  %2467 = vmatprep.subr.bf16.mxu0 0
  %2468 = vmatpush1.bf16.msra.mxu0 0
  %2469 = vmatprep.subr.bf16.mxu0 0
  %2470 = vmatpush1.bf16.msra.mxu0 0
  %2471 = vmatprep.subr.bf16.mxu0 0
  %2472 = vmatpush1.bf16.msra.mxu0 0
  %2473 = vmatprep.subr.bf16.mxu0 0
  %2474 = vmatpush1.bf16.msra.mxu0 0
  %2475 = vmatprep.subr.bf16.mxu0 0
  %2476 = vmatpush1.bf16.msra.mxu0 0
  %2477 = vmatprep.subr.bf16.mxu0 0
  %2478 = vmatpush1.bf16.msra.mxu0 0
  %2479 = vmatprep.subr.bf16.mxu0 0
  %2480 = vmatpush1.bf16.msra.mxu0 0
  %2481 = vmatprep.mubr.bf16.mxu0 0
  %2482 = vmatmul.mubr.bf16.gmra.mrb[0].mxu0 %v2447
  %v2483 = vpop.f32.mrb[0].mxu0
  %v2484 = vadd.f32 %v868, %v2483
  %v2485 = vpop.f32.mrb[0].mxu0
  %v2486 = vpop.f32.mrb[0].mxu0
  %v2487 = vpop.f32.mrb[0].mxu0
  %2488 = vdwg.mxu0
  %v2489 = vadd.f32 %v2441, %v2484
  %v2490 = vxor.u32 %v2489, 2147483648
  %v2491 = vmul.f32 %v2490, 1.442695
  %v2492 = vpow.pop %v2491
  %v2493 = vadd.f32 %v2492, 1.0
  %v2494 = vrcp.pop %v2493
  %v2495 = vmul.f32 1.0, %v2494
  %2497 = vrot.lane.b32.xlu0 %v2484, 64
  %v2498 = vpop.permute.xlu0 %2497
  %v2500 = vmul.f32 %v2495, %v2498
  %2502 = vrot.lane.b32.xlu0 %v2500, 64
  %v2503 = vpop.permute.xlu0 %2502
  %v2505 = vadd.f32 %v2441, %v2503
  %v2506 = vtanh.pop %v2505
  %v2507 = vsub.f32 1.0, %v2495
  %2509 = vrot.lane.b32.xlu0 %v2506, 96
  %v2510 = vpop.permute.xlu0 %2509
  %v2512 = vmul.f32 %v2507, %v2510
  %v2513 = vmul.f32 %v2495, %v2439
  %v2514 = vadd.f32 %v2512, %v2513
  %s2515 = scalar_lea.vmem [#allocation2], 44
  %v2516 = vld [vmem:[%s2515] sm:$0x3]
  %v2517 = vpack.c.bf16 %v2514, %v2514
  %2519 = vrot.lane.b32.xlu0 %v2517, 96
  %v2520 = vpop.permute.xlu0 %2519
  %v2522 = vsel %vm870, %v2520, 0
  %2524 = vmatprep.subr.bf16.mxu0 0
  %2525 = vmatpush1.bf16.msra.mxu0 %v71
  %2526 = vmatprep.subr.bf16.mxu0 0
  %2527 = vmatpush1.bf16.msra.mxu0 %v72
  %2528 = vmatprep.subr.bf16.mxu0 0
  %2529 = vmatpush1.bf16.msra.mxu0 0
  %2530 = vmatprep.subr.bf16.mxu0 0
  %2531 = vmatpush1.bf16.msra.mxu0 0
  %2532 = vmatprep.subr.bf16.mxu0 0
  %2533 = vmatpush1.bf16.msra.mxu0 0
  %2534 = vmatprep.subr.bf16.mxu0 0
  %2535 = vmatpush1.bf16.msra.mxu0 0
  %2536 = vmatprep.subr.bf16.mxu0 0
  %2537 = vmatpush1.bf16.msra.mxu0 0
  %2538 = vmatprep.subr.bf16.mxu0 0
  %2539 = vmatpush1.bf16.msra.mxu0 0
  %2540 = vmatprep.subr.bf16.mxu0 0
  %2541 = vmatpush1.bf16.msra.mxu0 0
  %2542 = vmatprep.subr.bf16.mxu0 0
  %2543 = vmatpush1.bf16.msra.mxu0 0
  %2544 = vmatprep.subr.bf16.mxu0 0
  %2545 = vmatpush1.bf16.msra.mxu0 0
  %2546 = vmatprep.subr.bf16.mxu0 0
  %2547 = vmatpush1.bf16.msra.mxu0 0
  %2548 = vmatprep.subr.bf16.mxu0 0
  %2549 = vmatpush1.bf16.msra.mxu0 0
  %2550 = vmatprep.subr.bf16.mxu0 0
  %2551 = vmatpush1.bf16.msra.mxu0 0
  %2552 = vmatprep.subr.bf16.mxu0 0
  %2553 = vmatpush1.bf16.msra.mxu0 0
  %2554 = vmatprep.subr.bf16.mxu0 0
  %2555 = vmatpush1.bf16.msra.mxu0 0
  %2556 = vmatprep.mubr.bf16.mxu0 0
  %2557 = vmatmul.mubr.bf16.gmra.mrb[0].mxu0 %v2522
  %v2558 = vpop.f32.mrb[0].mxu0
  %v2559 = vadd.f32 %v868, %v2558
  %v2560 = vpop.f32.mrb[0].mxu0
  %v2561 = vpop.f32.mrb[0].mxu0
  %v2562 = vpop.f32.mrb[0].mxu0
  %2563 = vdwg.mxu0
  %v2564 = vadd.f32 %v2516, %v2559
  %v2565 = vxor.u32 %v2564, 2147483648
  %v2566 = vmul.f32 %v2565, 1.442695
  %v2567 = vpow.pop %v2566
  %v2568 = vadd.f32 %v2567, 1.0
  %v2569 = vrcp.pop %v2568
  %v2570 = vmul.f32 1.0, %v2569
  %2572 = vrot.lane.b32.xlu0 %v2559, 64
  %v2573 = vpop.permute.xlu0 %2572
  %v2575 = vmul.f32 %v2570, %v2573
  %2577 = vrot.lane.b32.xlu0 %v2575, 64
  %v2578 = vpop.permute.xlu0 %2577
  %v2580 = vadd.f32 %v2516, %v2578
  %v2581 = vtanh.pop %v2580
  %v2582 = vsub.f32 1.0, %v2570
  %2584 = vrot.lane.b32.xlu0 %v2581, 96
  %v2585 = vpop.permute.xlu0 %2584
  %v2587 = vmul.f32 %v2582, %v2585
  %v2588 = vmul.f32 %v2570, %v2514
  %v2589 = vadd.f32 %v2587, %v2588
  %s2590 = scalar_lea.vmem [#allocation2], 46
  %v2591 = vld [vmem:[%s2590] sm:$0x3]
  %v2592 = vpack.c.bf16 %v2589, %v2589
  %2594 = vrot.lane.b32.xlu0 %v2592, 96
  %v2595 = vpop.permute.xlu0 %2594
  %v2597 = vsel %vm870, %v2595, 0
  %2599 = vmatprep.subr.bf16.mxu0 0
  %2600 = vmatpush1.bf16.msra.mxu0 %v71
  %2601 = vmatprep.subr.bf16.mxu0 0
  %2602 = vmatpush1.bf16.msra.mxu0 %v72
  %2603 = vmatprep.subr.bf16.mxu0 0
  %2604 = vmatpush1.bf16.msra.mxu0 0
  %2605 = vmatprep.subr.bf16.mxu0 0
  %2606 = vmatpush1.bf16.msra.mxu0 0
  %2607 = vmatprep.subr.bf16.mxu0 0
  %2608 = vmatpush1.bf16.msra.mxu0 0
  %2609 = vmatprep.subr.bf16.mxu0 0
  %2610 = vmatpush1.bf16.msra.mxu0 0
  %2611 = vmatprep.subr.bf16.mxu0 0
  %2612 = vmatpush1.bf16.msra.mxu0 0
  %2613 = vmatprep.subr.bf16.mxu0 0
  %2614 = vmatpush1.bf16.msra.mxu0 0
  %2615 = vmatprep.subr.bf16.mxu0 0
  %2616 = vmatpush1.bf16.msra.mxu0 0
  %2617 = vmatprep.subr.bf16.mxu0 0
  %2618 = vmatpush1.bf16.msra.mxu0 0
  %2619 = vmatprep.subr.bf16.mxu0 0
  %2620 = vmatpush1.bf16.msra.mxu0 0
  %2621 = vmatprep.subr.bf16.mxu0 0
  %2622 = vmatpush1.bf16.msra.mxu0 0
  %2623 = vmatprep.subr.bf16.mxu0 0
  %2624 = vmatpush1.bf16.msra.mxu0 0
  %2625 = vmatprep.subr.bf16.mxu0 0
  %2626 = vmatpush1.bf16.msra.mxu0 0
  %2627 = vmatprep.subr.bf16.mxu0 0
  %2628 = vmatpush1.bf16.msra.mxu0 0
  %2629 = vmatprep.subr.bf16.mxu0 0
  %2630 = vmatpush1.bf16.msra.mxu0 0
  %2631 = vmatprep.mubr.bf16.mxu0 0
  %2632 = vmatmul.mubr.bf16.gmra.mrb[0].mxu0 %v2597
  %v2633 = vpop.f32.mrb[0].mxu0
  %v2634 = vadd.f32 %v868, %v2633
  %v2635 = vpop.f32.mrb[0].mxu0
  %v2636 = vpop.f32.mrb[0].mxu0
  %v2637 = vpop.f32.mrb[0].mxu0
  %2638 = vdwg.mxu0
  %v2639 = vadd.f32 %v2591, %v2634
  %v2640 = vxor.u32 %v2639, 2147483648
  %v2641 = vmul.f32 %v2640, 1.442695
  %v2642 = vpow.pop %v2641
  %v2643 = vadd.f32 %v2642, 1.0
  %v2644 = vrcp.pop %v2643
  %v2645 = vmul.f32 1.0, %v2644
  %2647 = vrot.lane.b32.xlu0 %v2634, 64
  %v2648 = vpop.permute.xlu0 %2647
  %v2650 = vmul.f32 %v2645, %v2648
  %2652 = vrot.lane.b32.xlu0 %v2650, 64
  %v2653 = vpop.permute.xlu0 %2652
  %v2655 = vadd.f32 %v2591, %v2653
  %v2656 = vtanh.pop %v2655
  %v2657 = vsub.f32 1.0, %v2645
  %2659 = vrot.lane.b32.xlu0 %v2656, 96
  %v2660 = vpop.permute.xlu0 %2659
  %v2662 = vmul.f32 %v2657, %v2660
  %v2663 = vmul.f32 %v2645, %v2589
  %v2664 = vadd.f32 %v2662, %v2663
  %s2665 = scalar_lea.vmem [#allocation2], 48
  %v2666 = vld [vmem:[%s2665] sm:$0x3]
  %v2667 = vpack.c.bf16 %v2664, %v2664
  %2669 = vrot.lane.b32.xlu0 %v2667, 96
  %v2670 = vpop.permute.xlu0 %2669
  %v2672 = vsel %vm870, %v2670, 0
  %2674 = vmatprep.subr.bf16.mxu0 0
  %2675 = vmatpush1.bf16.msra.mxu0 %v71
  %2676 = vmatprep.subr.bf16.mxu0 0
  %2677 = vmatpush1.bf16.msra.mxu0 %v72
  %2678 = vmatprep.subr.bf16.mxu0 0
  %2679 = vmatpush1.bf16.msra.mxu0 0
  %2680 = vmatprep.subr.bf16.mxu0 0
  %2681 = vmatpush1.bf16.msra.mxu0 0
  %2682 = vmatprep.subr.bf16.mxu0 0
  %2683 = vmatpush1.bf16.msra.mxu0 0
  %2684 = vmatprep.subr.bf16.mxu0 0
  %2685 = vmatpush1.bf16.msra.mxu0 0
  %2686 = vmatprep.subr.bf16.mxu0 0
  %2687 = vmatpush1.bf16.msra.mxu0 0
  %2688 = vmatprep.subr.bf16.mxu0 0
  %2689 = vmatpush1.bf16.msra.mxu0 0
  %2690 = vmatprep.subr.bf16.mxu0 0
  %2691 = vmatpush1.bf16.msra.mxu0 0
  %2692 = vmatprep.subr.bf16.mxu0 0
  %2693 = vmatpush1.bf16.msra.mxu0 0
  %2694 = vmatprep.subr.bf16.mxu0 0
  %2695 = vmatpush1.bf16.msra.mxu0 0
  %2696 = vmatprep.subr.bf16.mxu0 0
  %2697 = vmatpush1.bf16.msra.mxu0 0
  %2698 = vmatprep.subr.bf16.mxu0 0
  %2699 = vmatpush1.bf16.msra.mxu0 0
  %2700 = vmatprep.subr.bf16.mxu0 0
  %2701 = vmatpush1.bf16.msra.mxu0 0
  %2702 = vmatprep.subr.bf16.mxu0 0
  %2703 = vmatpush1.bf16.msra.mxu0 0
  %2704 = vmatprep.subr.bf16.mxu0 0
  %2705 = vmatpush1.bf16.msra.mxu0 0
  %2706 = vmatprep.mubr.bf16.mxu0 0
  %2707 = vmatmul.mubr.bf16.gmra.mrb[0].mxu0 %v2672
  %v2708 = vpop.f32.mrb[0].mxu0
  %v2709 = vadd.f32 %v868, %v2708
  %v2710 = vpop.f32.mrb[0].mxu0
  %v2711 = vpop.f32.mrb[0].mxu0
  %v2712 = vpop.f32.mrb[0].mxu0
  %2713 = vdwg.mxu0
  %v2714 = vadd.f32 %v2666, %v2709
  %v2715 = vxor.u32 %v2714, 2147483648
  %v2716 = vmul.f32 %v2715, 1.442695
  %v2717 = vpow.pop %v2716
  %v2718 = vadd.f32 %v2717, 1.0
  %v2719 = vrcp.pop %v2718
  %v2720 = vmul.f32 1.0, %v2719
  %2722 = vrot.lane.b32.xlu0 %v2709, 64
  %v2723 = vpop.permute.xlu0 %2722
  %v2725 = vmul.f32 %v2720, %v2723
  %2727 = vrot.lane.b32.xlu0 %v2725, 64
  %v2728 = vpop.permute.xlu0 %2727
  %v2730 = vadd.f32 %v2666, %v2728
  %v2731 = vtanh.pop %v2730
  %v2732 = vsub.f32 1.0, %v2720
  %2734 = vrot.lane.b32.xlu0 %v2731, 96
  %v2735 = vpop.permute.xlu0 %2734
  %v2737 = vmul.f32 %v2732, %v2735
  %v2738 = vmul.f32 %v2720, %v2664
  %v2739 = vadd.f32 %v2737, %v2738
  %s2740 = scalar_lea.vmem [#allocation2], 50
  %v2741 = vld [vmem:[%s2740] sm:$0x3]
  %v2742 = vpack.c.bf16 %v2739, %v2739
  %2744 = vrot.lane.b32.xlu0 %v2742, 96
  %v2745 = vpop.permute.xlu0 %2744
  %v2747 = vsel %vm870, %v2745, 0
  %2749 = vmatprep.subr.bf16.mxu0 0
  %2750 = vmatpush1.bf16.msra.mxu0 %v71
  %2751 = vmatprep.subr.bf16.mxu0 0
  %2752 = vmatpush1.bf16.msra.mxu0 %v72
  %2753 = vmatprep.subr.bf16.mxu0 0
  %2754 = vmatpush1.bf16.msra.mxu0 0
  %2755 = vmatprep.subr.bf16.mxu0 0
  %2756 = vmatpush1.bf16.msra.mxu0 0
  %2757 = vmatprep.subr.bf16.mxu0 0
  %2758 = vmatpush1.bf16.msra.mxu0 0
  %2759 = vmatprep.subr.bf16.mxu0 0
  %2760 = vmatpush1.bf16.msra.mxu0 0
  %2761 = vmatprep.subr.bf16.mxu0 0
  %2762 = vmatpush1.bf16.msra.mxu0 0
  %2763 = vmatprep.subr.bf16.mxu0 0
  %2764 = vmatpush1.bf16.msra.mxu0 0
  %2765 = vmatprep.subr.bf16.mxu0 0
  %2766 = vmatpush1.bf16.msra.mxu0 0
  %2767 = vmatprep.subr.bf16.mxu0 0
  %2768 = vmatpush1.bf16.msra.mxu0 0
  %2769 = vmatprep.subr.bf16.mxu0 0
  %2770 = vmatpush1.bf16.msra.mxu0 0
  %2771 = vmatprep.subr.bf16.mxu0 0
  %2772 = vmatpush1.bf16.msra.mxu0 0
  %2773 = vmatprep.subr.bf16.mxu0 0
  %2774 = vmatpush1.bf16.msra.mxu0 0
  %2775 = vmatprep.subr.bf16.mxu0 0
  %2776 = vmatpush1.bf16.msra.mxu0 0
  %2777 = vmatprep.subr.bf16.mxu0 0
  %2778 = vmatpush1.bf16.msra.mxu0 0
  %2779 = vmatprep.subr.bf16.mxu0 0
  %2780 = vmatpush1.bf16.msra.mxu0 0
  %2781 = vmatprep.mubr.bf16.mxu0 0
  %2782 = vmatmul.mubr.bf16.gmra.mrb[0].mxu0 %v2747
  %v2783 = vpop.f32.mrb[0].mxu0
  %v2784 = vadd.f32 %v868, %v2783
  %v2785 = vpop.f32.mrb[0].mxu0
  %v2786 = vpop.f32.mrb[0].mxu0
  %v2787 = vpop.f32.mrb[0].mxu0
  %2788 = vdwg.mxu0
  %v2789 = vadd.f32 %v2741, %v2784
  %v2790 = vxor.u32 %v2789, 2147483648
  %v2791 = vmul.f32 %v2790, 1.442695
  %v2792 = vpow.pop %v2791
  %v2793 = vadd.f32 %v2792, 1.0
  %v2794 = vrcp.pop %v2793
  %v2795 = vmul.f32 1.0, %v2794
  %2797 = vrot.lane.b32.xlu0 %v2784, 64
  %v2798 = vpop.permute.xlu0 %2797
  %v2800 = vmul.f32 %v2795, %v2798
  %2802 = vrot.lane.b32.xlu0 %v2800, 64
  %v2803 = vpop.permute.xlu0 %2802
  %v2805 = vadd.f32 %v2741, %v2803
  %v2806 = vtanh.pop %v2805
  %v2807 = vsub.f32 1.0, %v2795
  %2809 = vrot.lane.b32.xlu0 %v2806, 96
  %v2810 = vpop.permute.xlu0 %2809
  %v2812 = vmul.f32 %v2807, %v2810
  %v2813 = vmul.f32 %v2795, %v2739
  %v2814 = vadd.f32 %v2812, %v2813
  %s2815 = scalar_lea.vmem [#allocation2], 52
  %v2816 = vld [vmem:[%s2815] sm:$0x3]
  %v2817 = vpack.c.bf16 %v2814, %v2814
  %2819 = vrot.lane.b32.xlu0 %v2817, 96
  %v2820 = vpop.permute.xlu0 %2819
  %v2822 = vsel %vm870, %v2820, 0
  %2824 = vmatprep.subr.bf16.mxu0 0
  %2825 = vmatpush1.bf16.msra.mxu0 %v71
  %2826 = vmatprep.subr.bf16.mxu0 0
  %2827 = vmatpush1.bf16.msra.mxu0 %v72
  %2828 = vmatprep.subr.bf16.mxu0 0
  %2829 = vmatpush1.bf16.msra.mxu0 0
  %2830 = vmatprep.subr.bf16.mxu0 0
  %2831 = vmatpush1.bf16.msra.mxu0 0
  %2832 = vmatprep.subr.bf16.mxu0 0
  %2833 = vmatpush1.bf16.msra.mxu0 0
  %2834 = vmatprep.subr.bf16.mxu0 0
  %2835 = vmatpush1.bf16.msra.mxu0 0
  %2836 = vmatprep.subr.bf16.mxu0 0
  %2837 = vmatpush1.bf16.msra.mxu0 0
  %2838 = vmatprep.subr.bf16.mxu0 0
  %2839 = vmatpush1.bf16.msra.mxu0 0
  %2840 = vmatprep.subr.bf16.mxu0 0
  %2841 = vmatpush1.bf16.msra.mxu0 0
  %2842 = vmatprep.subr.bf16.mxu0 0
  %2843 = vmatpush1.bf16.msra.mxu0 0
  %2844 = vmatprep.subr.bf16.mxu0 0
  %2845 = vmatpush1.bf16.msra.mxu0 0
  %2846 = vmatprep.subr.bf16.mxu0 0
  %2847 = vmatpush1.bf16.msra.mxu0 0
  %2848 = vmatprep.subr.bf16.mxu0 0
  %2849 = vmatpush1.bf16.msra.mxu0 0
  %2850 = vmatprep.subr.bf16.mxu0 0
  %2851 = vmatpush1.bf16.msra.mxu0 0
  %2852 = vmatprep.subr.bf16.mxu0 0
  %2853 = vmatpush1.bf16.msra.mxu0 0
  %2854 = vmatprep.subr.bf16.mxu0 0
  %2855 = vmatpush1.bf16.msra.mxu0 0
  %2856 = vmatprep.mubr.bf16.mxu0 0
  %2857 = vmatmul.mubr.bf16.gmra.mrb[0].mxu0 %v2822
  %v2858 = vpop.f32.mrb[0].mxu0
  %v2859 = vadd.f32 %v868, %v2858
  %v2860 = vpop.f32.mrb[0].mxu0
  %v2861 = vpop.f32.mrb[0].mxu0
  %v2862 = vpop.f32.mrb[0].mxu0
  %2863 = vdwg.mxu0
  %v2864 = vadd.f32 %v2816, %v2859
  %v2865 = vxor.u32 %v2864, 2147483648
  %v2866 = vmul.f32 %v2865, 1.442695
  %v2867 = vpow.pop %v2866
  %v2868 = vadd.f32 %v2867, 1.0
  %v2869 = vrcp.pop %v2868
  %v2870 = vmul.f32 1.0, %v2869
  %2872 = vrot.lane.b32.xlu0 %v2859, 64
  %v2873 = vpop.permute.xlu0 %2872
  %v2875 = vmul.f32 %v2870, %v2873
  %2877 = vrot.lane.b32.xlu0 %v2875, 64
  %v2878 = vpop.permute.xlu0 %2877
  %v2880 = vadd.f32 %v2816, %v2878
  %v2881 = vtanh.pop %v2880
  %v2882 = vsub.f32 1.0, %v2870
  %2884 = vrot.lane.b32.xlu0 %v2881, 96
  %v2885 = vpop.permute.xlu0 %2884
  %v2887 = vmul.f32 %v2882, %v2885
  %v2888 = vmul.f32 %v2870, %v2814
  %v2889 = vadd.f32 %v2887, %v2888
  %s2890 = scalar_lea.vmem [#allocation2], 54
  %v2891 = vld [vmem:[%s2890] sm:$0x3]
  %v2892 = vpack.c.bf16 %v2889, %v2889
  %2894 = vrot.lane.b32.xlu0 %v2892, 96
  %v2895 = vpop.permute.xlu0 %2894
  %v2897 = vsel %vm870, %v2895, 0
  %2899 = vmatprep.subr.bf16.mxu0 0
  %2900 = vmatpush1.bf16.msra.mxu0 %v71
  %2901 = vmatprep.subr.bf16.mxu0 0
  %2902 = vmatpush1.bf16.msra.mxu0 %v72
  %2903 = vmatprep.subr.bf16.mxu0 0
  %2904 = vmatpush1.bf16.msra.mxu0 0
  %2905 = vmatprep.subr.bf16.mxu0 0
  %2906 = vmatpush1.bf16.msra.mxu0 0
  %2907 = vmatprep.subr.bf16.mxu0 0
  %2908 = vmatpush1.bf16.msra.mxu0 0
  %2909 = vmatprep.subr.bf16.mxu0 0
  %2910 = vmatpush1.bf16.msra.mxu0 0
  %2911 = vmatprep.subr.bf16.mxu0 0
  %2912 = vmatpush1.bf16.msra.mxu0 0
  %2913 = vmatprep.subr.bf16.mxu0 0
  %2914 = vmatpush1.bf16.msra.mxu0 0
  %2915 = vmatprep.subr.bf16.mxu0 0
  %2916 = vmatpush1.bf16.msra.mxu0 0
  %2917 = vmatprep.subr.bf16.mxu0 0
  %2918 = vmatpush1.bf16.msra.mxu0 0
  %2919 = vmatprep.subr.bf16.mxu0 0
  %2920 = vmatpush1.bf16.msra.mxu0 0
  %2921 = vmatprep.subr.bf16.mxu0 0
  %2922 = vmatpush1.bf16.msra.mxu0 0
  %2923 = vmatprep.subr.bf16.mxu0 0
  %2924 = vmatpush1.bf16.msra.mxu0 0
  %2925 = vmatprep.subr.bf16.mxu0 0
  %2926 = vmatpush1.bf16.msra.mxu0 0
  %2927 = vmatprep.subr.bf16.mxu0 0
  %2928 = vmatpush1.bf16.msra.mxu0 0
  %2929 = vmatprep.subr.bf16.mxu0 0
  %2930 = vmatpush1.bf16.msra.mxu0 0
  %2931 = vmatprep.mubr.bf16.mxu0 0
  %2932 = vmatmul.mubr.bf16.gmra.mrb[0].mxu0 %v2897
  %v2933 = vpop.f32.mrb[0].mxu0
  %v2934 = vadd.f32 %v868, %v2933
  %v2935 = vpop.f32.mrb[0].mxu0
  %v2936 = vpop.f32.mrb[0].mxu0
  %v2937 = vpop.f32.mrb[0].mxu0
  %2938 = vdwg.mxu0
  %v2939 = vadd.f32 %v2891, %v2934
  %v2940 = vxor.u32 %v2939, 2147483648
  %v2941 = vmul.f32 %v2940, 1.442695
  %v2942 = vpow.pop %v2941
  %v2943 = vadd.f32 %v2942, 1.0
  %v2944 = vrcp.pop %v2943
  %v2945 = vmul.f32 1.0, %v2944
  %2947 = vrot.lane.b32.xlu0 %v2934, 64
  %v2948 = vpop.permute.xlu0 %2947
  %v2950 = vmul.f32 %v2945, %v2948
  %2952 = vrot.lane.b32.xlu0 %v2950, 64
  %v2953 = vpop.permute.xlu0 %2952
  %v2955 = vadd.f32 %v2891, %v2953
  %v2956 = vtanh.pop %v2955
  %v2957 = vsub.f32 1.0, %v2945
  %2959 = vrot.lane.b32.xlu0 %v2956, 96
  %v2960 = vpop.permute.xlu0 %2959
  %v2962 = vmul.f32 %v2957, %v2960
  %v2963 = vmul.f32 %v2945, %v2889
  %v2964 = vadd.f32 %v2962, %v2963
  %s2965 = scalar_lea.vmem [#allocation2], 56
  %v2966 = vld [vmem:[%s2965] sm:$0x3]
  %v2967 = vpack.c.bf16 %v2964, %v2964
  %2969 = vrot.lane.b32.xlu0 %v2967, 96
  %v2970 = vpop.permute.xlu0 %2969
  %v2972 = vsel %vm870, %v2970, 0
  %2974 = vmatprep.subr.bf16.mxu0 0
  %2975 = vmatpush1.bf16.msra.mxu0 %v71
  %2976 = vmatprep.subr.bf16.mxu0 0
  %2977 = vmatpush1.bf16.msra.mxu0 %v72
  %2978 = vmatprep.subr.bf16.mxu0 0
  %2979 = vmatpush1.bf16.msra.mxu0 0
  %2980 = vmatprep.subr.bf16.mxu0 0
  %2981 = vmatpush1.bf16.msra.mxu0 0
  %2982 = vmatprep.subr.bf16.mxu0 0
  %2983 = vmatpush1.bf16.msra.mxu0 0
  %2984 = vmatprep.subr.bf16.mxu0 0
  %2985 = vmatpush1.bf16.msra.mxu0 0
  %2986 = vmatprep.subr.bf16.mxu0 0
  %2987 = vmatpush1.bf16.msra.mxu0 0
  %2988 = vmatprep.subr.bf16.mxu0 0
  %2989 = vmatpush1.bf16.msra.mxu0 0
  %2990 = vmatprep.subr.bf16.mxu0 0
  %2991 = vmatpush1.bf16.msra.mxu0 0
  %2992 = vmatprep.subr.bf16.mxu0 0
  %2993 = vmatpush1.bf16.msra.mxu0 0
  %2994 = vmatprep.subr.bf16.mxu0 0
  %2995 = vmatpush1.bf16.msra.mxu0 0
  %2996 = vmatprep.subr.bf16.mxu0 0
  %2997 = vmatpush1.bf16.msra.mxu0 0
  %2998 = vmatprep.subr.bf16.mxu0 0
  %2999 = vmatpush1.bf16.msra.mxu0 0
  %3000 = vmatprep.subr.bf16.mxu0 0
  %3001 = vmatpush1.bf16.msra.mxu0 0
  %3002 = vmatprep.subr.bf16.mxu0 0
  %3003 = vmatpush1.bf16.msra.mxu0 0
  %3004 = vmatprep.subr.bf16.mxu0 0
  %3005 = vmatpush1.bf16.msra.mxu0 0
  %3006 = vmatprep.mubr.bf16.mxu0 0
  %3007 = vmatmul.mubr.bf16.gmra.mrb[0].mxu0 %v2972
  %v3008 = vpop.f32.mrb[0].mxu0
  %v3009 = vadd.f32 %v868, %v3008
  %v3010 = vpop.f32.mrb[0].mxu0
  %v3011 = vpop.f32.mrb[0].mxu0
  %v3012 = vpop.f32.mrb[0].mxu0
  %3013 = vdwg.mxu0
  %v3014 = vadd.f32 %v2966, %v3009
  %v3015 = vxor.u32 %v3014, 2147483648
  %v3016 = vmul.f32 %v3015, 1.442695
  %v3017 = vpow.pop %v3016
  %v3018 = vadd.f32 %v3017, 1.0
  %v3019 = vrcp.pop %v3018
  %v3020 = vmul.f32 1.0, %v3019
  %3022 = vrot.lane.b32.xlu0 %v3009, 64
  %v3023 = vpop.permute.xlu0 %3022
  %v3025 = vmul.f32 %v3020, %v3023
  %3027 = vrot.lane.b32.xlu0 %v3025, 64
  %v3028 = vpop.permute.xlu0 %3027
  %v3030 = vadd.f32 %v2966, %v3028
  %v3031 = vtanh.pop %v3030
  %v3032 = vsub.f32 1.0, %v3020
  %3034 = vrot.lane.b32.xlu0 %v3031, 96
  %v3035 = vpop.permute.xlu0 %3034
  %v3037 = vmul.f32 %v3032, %v3035
  %v3038 = vmul.f32 %v3020, %v2964
  %v3039 = vadd.f32 %v3037, %v3038
  %s3040 = scalar_lea.vmem [#allocation2], 58
  %v3041 = vld [vmem:[%s3040] sm:$0x3]
  %v3042 = vpack.c.bf16 %v3039, %v3039
  %3044 = vrot.lane.b32.xlu0 %v3042, 96
  %v3045 = vpop.permute.xlu0 %3044
  %v3047 = vsel %vm870, %v3045, 0
  %3049 = vmatprep.subr.bf16.mxu0 0
  %3050 = vmatpush1.bf16.msra.mxu0 %v71
  %3051 = vmatprep.subr.bf16.mxu0 0
  %3052 = vmatpush1.bf16.msra.mxu0 %v72
  %3053 = vmatprep.subr.bf16.mxu0 0
  %3054 = vmatpush1.bf16.msra.mxu0 0
  %3055 = vmatprep.subr.bf16.mxu0 0
  %3056 = vmatpush1.bf16.msra.mxu0 0
  %3057 = vmatprep.subr.bf16.mxu0 0
  %3058 = vmatpush1.bf16.msra.mxu0 0
  %3059 = vmatprep.subr.bf16.mxu0 0
  %3060 = vmatpush1.bf16.msra.mxu0 0
  %3061 = vmatprep.subr.bf16.mxu0 0
  %3062 = vmatpush1.bf16.msra.mxu0 0
  %3063 = vmatprep.subr.bf16.mxu0 0
  %3064 = vmatpush1.bf16.msra.mxu0 0
  %3065 = vmatprep.subr.bf16.mxu0 0
  %3066 = vmatpush1.bf16.msra.mxu0 0
  %3067 = vmatprep.subr.bf16.mxu0 0
  %3068 = vmatpush1.bf16.msra.mxu0 0
  %3069 = vmatprep.subr.bf16.mxu0 0
  %3070 = vmatpush1.bf16.msra.mxu0 0
  %3071 = vmatprep.subr.bf16.mxu0 0
  %3072 = vmatpush1.bf16.msra.mxu0 0
  %3073 = vmatprep.subr.bf16.mxu0 0
  %3074 = vmatpush1.bf16.msra.mxu0 0
  %3075 = vmatprep.subr.bf16.mxu0 0
  %3076 = vmatpush1.bf16.msra.mxu0 0
  %3077 = vmatprep.subr.bf16.mxu0 0
  %3078 = vmatpush1.bf16.msra.mxu0 0
  %3079 = vmatprep.subr.bf16.mxu0 0
  %3080 = vmatpush1.bf16.msra.mxu0 0
  %3081 = vmatprep.mubr.bf16.mxu0 0
  %3082 = vmatmul.mubr.bf16.gmra.mrb[0].mxu0 %v3047
  %v3083 = vpop.f32.mrb[0].mxu0
  %v3084 = vadd.f32 %v868, %v3083
  %v3085 = vpop.f32.mrb[0].mxu0
  %v3086 = vpop.f32.mrb[0].mxu0
  %v3087 = vpop.f32.mrb[0].mxu0
  %3088 = vdwg.mxu0
  %v3089 = vadd.f32 %v3041, %v3084
  %v3090 = vxor.u32 %v3089, 2147483648
  %v3091 = vmul.f32 %v3090, 1.442695
  %v3092 = vpow.pop %v3091
  %v3093 = vadd.f32 %v3092, 1.0
  %v3094 = vrcp.pop %v3093
  %v3095 = vmul.f32 1.0, %v3094
  %3097 = vrot.lane.b32.xlu0 %v3084, 64
  %v3098 = vpop.permute.xlu0 %3097
  %v3100 = vmul.f32 %v3095, %v3098
  %3102 = vrot.lane.b32.xlu0 %v3100, 64
  %v3103 = vpop.permute.xlu0 %3102
  %v3105 = vadd.f32 %v3041, %v3103
  %v3106 = vtanh.pop %v3105
  %v3107 = vsub.f32 1.0, %v3095
  %3109 = vrot.lane.b32.xlu0 %v3106, 96
  %v3110 = vpop.permute.xlu0 %3109
  %v3112 = vmul.f32 %v3107, %v3110
  %v3113 = vmul.f32 %v3095, %v3039
  %v3114 = vadd.f32 %v3112, %v3113
  %s3115 = scalar_lea.vmem [#allocation2], 60
  %v3116 = vld [vmem:[%s3115] sm:$0x3]
  %v3117 = vpack.c.bf16 %v3114, %v3114
  %3119 = vrot.lane.b32.xlu0 %v3117, 96
  %v3120 = vpop.permute.xlu0 %3119
  %v3122 = vsel %vm870, %v3120, 0
  %3124 = vmatprep.subr.bf16.mxu0 0
  %3125 = vmatpush1.bf16.msra.mxu0 %v71
  %3126 = vmatprep.subr.bf16.mxu0 0
  %3127 = vmatpush1.bf16.msra.mxu0 %v72
  %3128 = vmatprep.subr.bf16.mxu0 0
  %3129 = vmatpush1.bf16.msra.mxu0 0
  %3130 = vmatprep.subr.bf16.mxu0 0
  %3131 = vmatpush1.bf16.msra.mxu0 0
  %3132 = vmatprep.subr.bf16.mxu0 0
  %3133 = vmatpush1.bf16.msra.mxu0 0
  %3134 = vmatprep.subr.bf16.mxu0 0
  %3135 = vmatpush1.bf16.msra.mxu0 0
  %3136 = vmatprep.subr.bf16.mxu0 0
  %3137 = vmatpush1.bf16.msra.mxu0 0
  %3138 = vmatprep.subr.bf16.mxu0 0
  %3139 = vmatpush1.bf16.msra.mxu0 0
  %3140 = vmatprep.subr.bf16.mxu0 0
  %3141 = vmatpush1.bf16.msra.mxu0 0
  %3142 = vmatprep.subr.bf16.mxu0 0
  %3143 = vmatpush1.bf16.msra.mxu0 0
  %3144 = vmatprep.subr.bf16.mxu0 0
  %3145 = vmatpush1.bf16.msra.mxu0 0
  %3146 = vmatprep.subr.bf16.mxu0 0
  %3147 = vmatpush1.bf16.msra.mxu0 0
  %3148 = vmatprep.subr.bf16.mxu0 0
  %3149 = vmatpush1.bf16.msra.mxu0 0
  %3150 = vmatprep.subr.bf16.mxu0 0
  %3151 = vmatpush1.bf16.msra.mxu0 0
  %3152 = vmatprep.subr.bf16.mxu0 0
  %3153 = vmatpush1.bf16.msra.mxu0 0
  %3154 = vmatprep.subr.bf16.mxu0 0
  %3155 = vmatpush1.bf16.msra.mxu0 0
  %3156 = vmatprep.mubr.bf16.mxu0 0
  %3157 = vmatmul.mubr.bf16.gmra.mrb[0].mxu0 %v3122
  %v3158 = vpop.f32.mrb[0].mxu0
  %v3159 = vadd.f32 %v868, %v3158
  %v3160 = vpop.f32.mrb[0].mxu0
  %v3161 = vpop.f32.mrb[0].mxu0
  %v3162 = vpop.f32.mrb[0].mxu0
  %3163 = vdwg.mxu0
  %v3164 = vadd.f32 %v3116, %v3159
  %v3165 = vxor.u32 %v3164, 2147483648
  %v3166 = vmul.f32 %v3165, 1.442695
  %v3167 = vpow.pop %v3166
  %v3168 = vadd.f32 %v3167, 1.0
  %v3169 = vrcp.pop %v3168
  %v3170 = vmul.f32 1.0, %v3169
  %3172 = vrot.lane.b32.xlu0 %v3159, 64
  %v3173 = vpop.permute.xlu0 %3172
  %v3175 = vmul.f32 %v3170, %v3173
  %3177 = vrot.lane.b32.xlu0 %v3175, 64
  %v3178 = vpop.permute.xlu0 %3177
  %v3180 = vadd.f32 %v3116, %v3178
  %v3181 = vtanh.pop %v3180
  %v3182 = vsub.f32 1.0, %v3170
  %3184 = vrot.lane.b32.xlu0 %v3181, 96
  %v3185 = vpop.permute.xlu0 %3184
  %v3187 = vmul.f32 %v3182, %v3185
  %v3188 = vmul.f32 %v3170, %v3114
  %v3189 = vadd.f32 %v3187, %v3188
  %s3190 = scalar_lea.vmem [#allocation2], 62
  %v3191 = vld [vmem:[%s3190] sm:$0x3]
  %v3192 = vpack.c.bf16 %v3189, %v3189
  %3194 = vrot.lane.b32.xlu0 %v3192, 96
  %v3195 = vpop.permute.xlu0 %3194
  %v3197 = vsel %vm870, %v3195, 0
  %3199 = vmatprep.subr.bf16.mxu0 0
  %3200 = vmatpush1.bf16.msra.mxu0 %v71
  %3201 = vmatprep.subr.bf16.mxu0 0
  %3202 = vmatpush1.bf16.msra.mxu0 %v72
  %3203 = vmatprep.subr.bf16.mxu0 0
  %3204 = vmatpush1.bf16.msra.mxu0 0
  %3205 = vmatprep.subr.bf16.mxu0 0
  %3206 = vmatpush1.bf16.msra.mxu0 0
  %3207 = vmatprep.subr.bf16.mxu0 0
  %3208 = vmatpush1.bf16.msra.mxu0 0
  %3209 = vmatprep.subr.bf16.mxu0 0
  %3210 = vmatpush1.bf16.msra.mxu0 0
  %3211 = vmatprep.subr.bf16.mxu0 0
  %3212 = vmatpush1.bf16.msra.mxu0 0
  %3213 = vmatprep.subr.bf16.mxu0 0
  %3214 = vmatpush1.bf16.msra.mxu0 0
  %3215 = vmatprep.subr.bf16.mxu0 0
  %3216 = vmatpush1.bf16.msra.mxu0 0
  %3217 = vmatprep.subr.bf16.mxu0 0
  %3218 = vmatpush1.bf16.msra.mxu0 0
  %3219 = vmatprep.subr.bf16.mxu0 0
  %3220 = vmatpush1.bf16.msra.mxu0 0
  %3221 = vmatprep.subr.bf16.mxu0 0
  %3222 = vmatpush1.bf16.msra.mxu0 0
  %3223 = vmatprep.subr.bf16.mxu0 0
  %3224 = vmatpush1.bf16.msra.mxu0 0
  %3225 = vmatprep.subr.bf16.mxu0 0
  %3226 = vmatpush1.bf16.msra.mxu0 0
  %3227 = vmatprep.subr.bf16.mxu0 0
  %3228 = vmatpush1.bf16.msra.mxu0 0
  %3229 = vmatprep.subr.bf16.mxu0 0
  %3230 = vmatpush1.bf16.msra.mxu0 0
  %3231 = vmatprep.mubr.bf16.mxu0 0
  %3232 = vmatmul.mubr.bf16.gmra.mrb[0].mxu0 %v3197
  %v3233 = vpop.f32.mrb[0].mxu0
  %v3234 = vadd.f32 %v868, %v3233
  %v3235 = vpop.f32.mrb[0].mxu0
  %v3236 = vpop.f32.mrb[0].mxu0
  %v3237 = vpop.f32.mrb[0].mxu0
  %3238 = vdwg.mxu0
  %v3239 = vadd.f32 %v3191, %v3234
  %v3240 = vxor.u32 %v3239, 2147483648
  %v3241 = vmul.f32 %v3240, 1.442695
  %v3242 = vpow.pop %v3241
  %v3243 = vadd.f32 %v3242, 1.0
  %v3244 = vrcp.pop %v3243
  %v3245 = vmul.f32 1.0, %v3244
  %3247 = vrot.lane.b32.xlu0 %v3234, 64
  %v3248 = vpop.permute.xlu0 %3247
  %v3250 = vmul.f32 %v3245, %v3248
  %3252 = vrot.lane.b32.xlu0 %v3250, 64
  %v3253 = vpop.permute.xlu0 %3252
  %v3255 = vadd.f32 %v3191, %v3253
  %v3256 = vtanh.pop %v3255
  %v3257 = vsub.f32 1.0, %v3245
  %3259 = vrot.lane.b32.xlu0 %v3256, 96
  %v3260 = vpop.permute.xlu0 %3259
  %v3262 = vmul.f32 %v3257, %v3260
  %v3263 = vmul.f32 %v3245, %v3189
  %v3264 = vadd.f32 %v3262, %v3263
  %v3265 = vld [vmem:[%s8] sm:$0xff]
  %v3266 = vld [vmem:[%s8 + $0x8] sm:$0xf]
  %v3267 = vpack.c.bf16 %v3266, %v3265
  %v3268 = vld [vmem:[%s9] sm:$0xff]
  %v3269 = vpack.c.bf16 %v3268, %v3268
  %vm3270 = vcmask 64512
  %v3272 = vsel %vm3270, %v3267, 0
  %v3275 = vsel %vm103, %v3269, 0
  %3277 = vmatprep.subr.bf16.mxu0 0
  %3278 = vmatpush1.bf16.msra.mxu0 %v3275
  %3279 = vmatprep.subr.bf16.mxu0 0
  %3280 = vmatpush1.bf16.msra.mxu0 0
  %3281 = vmatprep.subr.bf16.mxu0 0
  %3282 = vmatpush1.bf16.msra.mxu0 0
  %3283 = vmatprep.subr.bf16.mxu0 0
  %3284 = vmatpush1.bf16.msra.mxu0 0
  %3285 = vmatprep.subr.bf16.mxu0 0
  %3286 = vmatpush1.bf16.msra.mxu0 0
  %3287 = vmatprep.subr.bf16.mxu0 0
  %3288 = vmatpush1.bf16.msra.mxu0 0
  %3289 = vmatprep.subr.bf16.mxu0 0
  %3290 = vmatpush1.bf16.msra.mxu0 0
  %3291 = vmatprep.subr.bf16.mxu0 0
  %3292 = vmatpush1.bf16.msra.mxu0 0
  %3293 = vmatprep.subr.bf16.mxu0 0
  %3294 = vmatpush1.bf16.msra.mxu0 0
  %3295 = vmatprep.subr.bf16.mxu0 0
  %3296 = vmatpush1.bf16.msra.mxu0 0
  %3297 = vmatprep.subr.bf16.mxu0 0
  %3298 = vmatpush1.bf16.msra.mxu0 0
  %3299 = vmatprep.subr.bf16.mxu0 0
  %3300 = vmatpush1.bf16.msra.mxu0 0
  %3301 = vmatprep.subr.bf16.mxu0 0
  %3302 = vmatpush1.bf16.msra.mxu0 0
  %3303 = vmatprep.subr.bf16.mxu0 0
  %3304 = vmatpush1.bf16.msra.mxu0 0
  %3305 = vmatprep.subr.bf16.mxu0 0
  %3306 = vmatpush1.bf16.msra.mxu0 0
  %3307 = vmatprep.subr.bf16.mxu0 0
  %3308 = vmatpush1.bf16.msra.mxu0 0
  %3309 = vmatprep.mubr.bf16.mxu0 0
  %3310 = vmatmul.mubr.bf16.gmra.mrb[0].mxu0 %v3272
  %v3311 = vpop.f32.mrb[0].mxu0
  %v3312 = vadd.f32 0.0, %v3311
  %v3313 = vpop.f32.mrb[0].mxu0
  %v3314 = vpop.f32.mrb[0].mxu0
  %v3315 = vadd.f32 0.0, %v3314
  %v3316 = vpop.f32.mrb[0].mxu0
  %3317 = vdwg.mxu0
  %v3318 = vpack.c.bf16 %v3315, %v3312
  %v3319 = vpack.c.bf16 %v3264, %v3264
  %v3320 = vld [vmem:[%s10] sm:$0xff]
  %v3321 = vld [vmem:[%s10 + $0x8] sm:$0xff]
  %v3322 = vld [vmem:[%s10 + $0x10] sm:$0xff]
  %v3323 = vld [vmem:[%s10 + $0x18] sm:$0xff]
  %v3324 = vpack.c.bf16 %v3321, %v3320
  %v3325 = vpack.c.bf16 %v3323, %v3322
  %v3327 = vlaneseq
  %v3328 = vshrl.u32 %v3327, 7
  %v3329 = vsub.s32 0, %v3328
  %v3330 = vrot.slane %v81, %v3329
  %3333 = vrot.lane.b32.xlu0 %v3319, 96
  %v3334 = vpop.permute.xlu0 %3333
  %v3336 = vsel %vm870, %v3334, 0
  %3338 = vmatprep.subr.bf16.mxu0 0
  %3339 = vmatpush1.bf16.msra.mxu0 %v3324
  %3340 = vmatprep.subr.bf16.mxu0 0
  %3341 = vmatpush1.bf16.msra.mxu0 %v3325
  %3342 = vmatprep.subr.bf16.mxu0 0
  %3343 = vmatpush1.bf16.msra.mxu0 0
  %3344 = vmatprep.subr.bf16.mxu0 0
  %3345 = vmatpush1.bf16.msra.mxu0 0
  %3346 = vmatprep.subr.bf16.mxu0 0
  %3347 = vmatpush1.bf16.msra.mxu0 0
  %3348 = vmatprep.subr.bf16.mxu0 0
  %3349 = vmatpush1.bf16.msra.mxu0 0
  %3350 = vmatprep.subr.bf16.mxu0 0
  %3351 = vmatpush1.bf16.msra.mxu0 0
  %3352 = vmatprep.subr.bf16.mxu0 0
  %3353 = vmatpush1.bf16.msra.mxu0 0
  %3354 = vmatprep.subr.bf16.mxu0 0
  %3355 = vmatpush1.bf16.msra.mxu0 0
  %3356 = vmatprep.subr.bf16.mxu0 0
  %3357 = vmatpush1.bf16.msra.mxu0 0
  %3358 = vmatprep.subr.bf16.mxu0 0
  %3359 = vmatpush1.bf16.msra.mxu0 0
  %3360 = vmatprep.subr.bf16.mxu0 0
  %3361 = vmatpush1.bf16.msra.mxu0 0
  %3362 = vmatprep.subr.bf16.mxu0 0
  %3363 = vmatpush1.bf16.msra.mxu0 0
  %3364 = vmatprep.subr.bf16.mxu0 0
  %3365 = vmatpush1.bf16.msra.mxu0 0
  %3366 = vmatprep.subr.bf16.mxu0 0
  %3367 = vmatpush1.bf16.msra.mxu0 0
  %3368 = vmatprep.subr.bf16.mxu0 0
  %3369 = vmatpush1.bf16.msra.mxu0 0
  %3370 = vmatprep.mubr.bf16.mxu0 0
  %3371 = vmatmul.mubr.bf16.gmra.mrb[0].mxu0 %v3336
  %v3372 = vpop.f32.mrb[0].mxu0
  %v3373 = vadd.f32 %v3330, %v3372
  %v3374 = vpop.f32.mrb[0].mxu0
  %v3375 = vpop.f32.mrb[0].mxu0
  %v3376 = vpop.f32.mrb[0].mxu0
  %3377 = vdwg.mxu0
  %v3378 = vlaneseq
  %v3379 = vand.u32 %v3378, 127
  %v3380 = vld [vmem:[%s1] sm:$0x3]
  %3381 = vset.pattern.permute.xlu0 0
  %3382 = vperm.xlu0 %3381, %v3380
  %v3383 = vpop.permute.xlu0 %3382
  %vm3384 = vcmp.eq.s32.totalorder %v3383, %v3379
  %v3385 = vsel %vm3384, 1, 0
  %v3386 = vcvt.s32.f32 %v3385
  %v3387 = vpack.c.bf16 %v3386, %v3386
  %v3389 = vsel %vm147, %v3387, 0
  %v3392 = vsel %vm154, %v3318, 0
  %3394 = vmatprep.subr.bf16.mxu0 0
  %3395 = vmatpush1.bf16.msra.mxu0 %v3392
  %3396 = vmatprep.subr.bf16.mxu0 0
  %3397 = vmatpush1.bf16.msra.mxu0 0
  %3398 = vmatprep.subr.bf16.mxu0 0
  %3399 = vmatpush1.bf16.msra.mxu0 0
  %3400 = vmatprep.subr.bf16.mxu0 0
  %3401 = vmatpush1.bf16.msra.mxu0 0
  %3402 = vmatprep.subr.bf16.mxu0 0
  %3403 = vmatpush1.bf16.msra.mxu0 0
  %3404 = vmatprep.subr.bf16.mxu0 0
  %3405 = vmatpush1.bf16.msra.mxu0 0
  %3406 = vmatprep.subr.bf16.mxu0 0
  %3407 = vmatpush1.bf16.msra.mxu0 0
  %3408 = vmatprep.subr.bf16.mxu0 0
  %3409 = vmatpush1.bf16.msra.mxu0 0
  %3410 = vmatprep.subr.bf16.mxu0 0
  %3411 = vmatpush1.bf16.msra.mxu0 0
  %3412 = vmatprep.subr.bf16.mxu0 0
  %3413 = vmatpush1.bf16.msra.mxu0 0
  %3414 = vmatprep.subr.bf16.mxu0 0
  %3415 = vmatpush1.bf16.msra.mxu0 0
  %3416 = vmatprep.subr.bf16.mxu0 0
  %3417 = vmatpush1.bf16.msra.mxu0 0
  %3418 = vmatprep.subr.bf16.mxu0 0
  %3419 = vmatpush1.bf16.msra.mxu0 0
  %3420 = vmatprep.subr.bf16.mxu0 0
  %3421 = vmatpush1.bf16.msra.mxu0 0
  %3422 = vmatprep.subr.bf16.mxu0 0
  %3423 = vmatpush1.bf16.msra.mxu0 0
  %3424 = vmatprep.subr.bf16.mxu0 0
  %3425 = vmatpush1.bf16.msra.mxu0 0
  %3426 = vmatprep.mubr.bf16.mxu0 0
  %3427 = vmatmul.mubr.bf16.gmra.mrb[0].mxu0 %v3389
  %v3428 = vpop.f32.mrb[0].mxu0
  %v3429 = vadd.f32 %v3373, %v3428
  %v3430 = vpop.f32.mrb[0].mxu0
  %v3431 = vpop.f32.mrb[0].mxu0
  %v3432 = vpop.f32.mrb[0].mxu0
  %3433 = vdwg.mxu0
  %v3435 = vlaneseq
  %v3436 = vshrl.u32 %v3435, 7
  %v3437 = vsub.s32 0, %v3436
  %v3438 = vrot.slane %v82, %v3437
  %3440 = vmatprep.subr.bf16.mxu0 0
  %3441 = vmatpush1.bf16.msra.mxu0 %v79
  %3442 = vmatprep.subr.bf16.mxu0 0
  %3443 = vmatpush1.bf16.msra.mxu0 %v80
  %3444 = vmatprep.subr.bf16.mxu0 0
  %3445 = vmatpush1.bf16.msra.mxu0 0
  %3446 = vmatprep.subr.bf16.mxu0 0
  %3447 = vmatpush1.bf16.msra.mxu0 0
  %3448 = vmatprep.subr.bf16.mxu0 0
  %3449 = vmatpush1.bf16.msra.mxu0 0
  %3450 = vmatprep.subr.bf16.mxu0 0
  %3451 = vmatpush1.bf16.msra.mxu0 0
  %3452 = vmatprep.subr.bf16.mxu0 0
  %3453 = vmatpush1.bf16.msra.mxu0 0
  %3454 = vmatprep.subr.bf16.mxu0 0
  %3455 = vmatpush1.bf16.msra.mxu0 0
  %3456 = vmatprep.subr.bf16.mxu0 0
  %3457 = vmatpush1.bf16.msra.mxu0 0
  %3458 = vmatprep.subr.bf16.mxu0 0
  %3459 = vmatpush1.bf16.msra.mxu0 0
  %3460 = vmatprep.subr.bf16.mxu0 0
  %3461 = vmatpush1.bf16.msra.mxu0 0
  %3462 = vmatprep.subr.bf16.mxu0 0
  %3463 = vmatpush1.bf16.msra.mxu0 0
  %3464 = vmatprep.subr.bf16.mxu0 0
  %3465 = vmatpush1.bf16.msra.mxu0 0
  %3466 = vmatprep.subr.bf16.mxu0 0
  %3467 = vmatpush1.bf16.msra.mxu0 0
  %3468 = vmatprep.subr.bf16.mxu0 0
  %3469 = vmatpush1.bf16.msra.mxu0 0
  %3470 = vmatprep.subr.bf16.mxu0 0
  %3471 = vmatpush1.bf16.msra.mxu0 0
  %3472 = vmatprep.mubr.bf16.mxu0 0
  %3473 = vmatmul.mubr.bf16.gmra.mrb[0].mxu0 %v3336
  %v3474 = vpop.f32.mrb[0].mxu0
  %v3475 = vadd.f32 %v3438, %v3474
  %v3476 = vpop.f32.mrb[0].mxu0
  %v3477 = vpop.f32.mrb[0].mxu0
  %v3478 = vpop.f32.mrb[0].mxu0
  %3479 = vdwg.mxu0
  %v3480 = vadd.f32 %v3429, %v3475
  %v3481 = vxor.u32 %v3480, 2147483648
  %v3482 = vmul.f32 %v3481, 1.442695
  %v3483 = vpow.pop %v3482
  %v3484 = vadd.f32 %v3483, 1.0
  %v3485 = vrcp.pop %v3484
  %v3486 = vmul.f32 1.0, %v3485
  %3488 = vrot.lane.b32.xlu0 %v3475, 64
  %v3489 = vpop.permute.xlu0 %3488
  %v3491 = vmul.f32 %v3486, %v3489
  %3493 = vrot.lane.b32.xlu0 %v3491, 64
  %v3494 = vpop.permute.xlu0 %3493
  %v3496 = vadd.f32 %v3429, %v3494
  %v3497 = vtanh.pop %v3496
  %v3498 = vsub.f32 1.0, %v3486
  %3500 = vrot.lane.b32.xlu0 %v3497, 96
  %v3501 = vpop.permute.xlu0 %3500
  %v3503 = vmul.f32 %v3498, %v3501
  %v3504 = vmul.f32 %v3486, %v3264
  %v3505 = vadd.f32 %v3503, %v3504
  %v3506 = vpack.c.bf16 %v3505, %v3505
  %v3508 = vlaneseq
  %v3509 = vshrl.u32 %v3508, 7
  %v3510 = vsub.s32 0, %v3509
  %v3511 = vrot.slane %v89, %v3510
  %3514 = vrot.lane.b32.xlu0 %v3506, 96
  %v3515 = vpop.permute.xlu0 %3514
  %v3517 = vsel %vm870, %v3515, 0
  %3519 = vmatprep.subr.bf16.mxu0 0
  %3520 = vmatpush1.bf16.msra.mxu0 %v87
  %3521 = vmatprep.subr.bf16.mxu0 0
  %3522 = vmatpush1.bf16.msra.mxu0 %v88
  %3523 = vmatprep.subr.bf16.mxu0 0
  %3524 = vmatpush1.bf16.msra.mxu0 0
  %3525 = vmatprep.subr.bf16.mxu0 0
  %3526 = vmatpush1.bf16.msra.mxu0 0
  %3527 = vmatprep.subr.bf16.mxu0 0
  %3528 = vmatpush1.bf16.msra.mxu0 0
  %3529 = vmatprep.subr.bf16.mxu0 0
  %3530 = vmatpush1.bf16.msra.mxu0 0
  %3531 = vmatprep.subr.bf16.mxu0 0
  %3532 = vmatpush1.bf16.msra.mxu0 0
  %3533 = vmatprep.subr.bf16.mxu0 0
  %3534 = vmatpush1.bf16.msra.mxu0 0
  %3535 = vmatprep.subr.bf16.mxu0 0
  %3536 = vmatpush1.bf16.msra.mxu0 0
  %3537 = vmatprep.subr.bf16.mxu0 0
  %3538 = vmatpush1.bf16.msra.mxu0 0
  %3539 = vmatprep.subr.bf16.mxu0 0
  %3540 = vmatpush1.bf16.msra.mxu0 0
  %3541 = vmatprep.subr.bf16.mxu0 0
  %3542 = vmatpush1.bf16.msra.mxu0 0
  %3543 = vmatprep.subr.bf16.mxu0 0
  %3544 = vmatpush1.bf16.msra.mxu0 0
  %3545 = vmatprep.subr.bf16.mxu0 0
  %3546 = vmatpush1.bf16.msra.mxu0 0
  %3547 = vmatprep.subr.bf16.mxu0 0
  %3548 = vmatpush1.bf16.msra.mxu0 0
  %3549 = vmatprep.subr.bf16.mxu0 0
  %3550 = vmatpush1.bf16.msra.mxu0 0
  %3551 = vmatprep.mubr.bf16.mxu0 0
  %3552 = vmatmul.mubr.bf16.gmra.mrb[0].mxu0 %v3517
  %v3553 = vpop.f32.mrb[0].mxu0
  %v3554 = vadd.f32 %v3511, %v3553
  %v3555 = vpop.f32.mrb[0].mxu0
  %v3556 = vpop.f32.mrb[0].mxu0
  %v3557 = vpop.f32.mrb[0].mxu0
  %3558 = vdwg.mxu0
  %v3561 = vunpack.c.l.s4 1966171168
  %v3562 = vunpack.c.0.s8 %v3561
  %v3563 = vlaneseq
  %v3564 = vshrl.u32 %v3563, 7
  %v3565 = vsub.s32 %v3562, %v3564
  %v3566 = vrot.slane %v3554, %v3565
  %v3567 = vcombine.high %v3566, %v3566
  %v3569 = vunpack.c.l.s4 1966171168
  %v3570 = vunpack.c.0.s8 %v3569
  %v3571 = vlaneseq
  %v3572 = vshrl.u32 %v3571, 7
  %v3573 = vsub.s32 %v3570, %v3572
  %v3574 = vrot.slane %v3566, %v3573
  %v3576 = vunpack.c.l.s4 1966171168
  %v3577 = vunpack.c.0.s8 %v3576
  %v3578 = vlaneseq
  %v3579 = vshrl.u32 %v3578, 7
  %v3580 = vsub.s32 %v3577, %v3579
  %v3581 = vrot.slane %v3567, %v3580
  %vm3584 = vcmask 90112
  %3585 = vst.msk [vmem:[%s16] sm:$0x1] %vm3584, %v3574
  %3586 = vst.msk [vmem:[%s16 + $0x8] sm:$0x1] %vm3584, %v3581
  %vm3587 = vcmask 91136
  %v3588 = vsel %vm3587, %v3554, -inf
  %3589 = vmax.xlane.f32.xlu0 %v3588
  %v3590 = vpop.xlane.xlu0 %3589
  %vm3591 = vcmp.eq.f32.partialorder %v3554, %v3590
  %v3592 = vsel %vm3591, %v3379, 12
  %v3593 = vsel %vm3587, %v3592, 2147483647
  %v3594 = vand.u32 %v3593, 65535
  %v3595 = vshra.s32 %v3593, 16
  %v3596 = vcvt.s32.f32 %v3594
  %v3597 = vcvt.s32.f32 %v3595
  %3598 = vmin.xlane.f32.xlu0 %v3597
  %v3599 = vpop.xlane.xlu0 %3598
  %vm3600 = vcmp.eq.f32.partialorder %v3597, %v3599
  %v3601 = vsel %vm3600, %v3596, inf
  %3602 = vmin.xlane.f32.xlu0 %v3601
  %v3603 = vpop.xlane.xlu0 %3602
  %v3604 = vcvt.f32.s32 %v3603
  %v3605 = vcvt.f32.s32 %v3599
  %v3606 = vshll.u32 %v3605, 16
  %v3607 = vadd.s32 %v3606, %v3604
  %vm3608 = vcmp.eq.s32.totalorder %v3607, %v3379
  %v3609 = vsel %vm3608, 1, 0
  %v3610 = vcvt.s32.f32 %v3609
  %v3611 = vpack.c.bf16 %v3610, %v3610
  %v3613 = vsel %vm147, %v3611, 0
  %3615 = vmatprep.subr.bf16.mxu0 0
  %3616 = vmatpush1.bf16.msra.mxu0 %v3392
  %3617 = vmatprep.subr.bf16.mxu0 0
  %3618 = vmatpush1.bf16.msra.mxu0 0
  %3619 = vmatprep.subr.bf16.mxu0 0
  %3620 = vmatpush1.bf16.msra.mxu0 0
  %3621 = vmatprep.subr.bf16.mxu0 0
  %3622 = vmatpush1.bf16.msra.mxu0 0
  %3623 = vmatprep.subr.bf16.mxu0 0
  %3624 = vmatpush1.bf16.msra.mxu0 0
  %3625 = vmatprep.subr.bf16.mxu0 0
  %3626 = vmatpush1.bf16.msra.mxu0 0
  %3627 = vmatprep.subr.bf16.mxu0 0
  %3628 = vmatpush1.bf16.msra.mxu0 0
  %3629 = vmatprep.subr.bf16.mxu0 0
  %3630 = vmatpush1.bf16.msra.mxu0 0
  %3631 = vmatprep.subr.bf16.mxu0 0
  %3632 = vmatpush1.bf16.msra.mxu0 0
  %3633 = vmatprep.subr.bf16.mxu0 0
  %3634 = vmatpush1.bf16.msra.mxu0 0
  %3635 = vmatprep.subr.bf16.mxu0 0
  %3636 = vmatpush1.bf16.msra.mxu0 0
  %3637 = vmatprep.subr.bf16.mxu0 0
  %3638 = vmatpush1.bf16.msra.mxu0 0
  %3639 = vmatprep.subr.bf16.mxu0 0
  %3640 = vmatpush1.bf16.msra.mxu0 0
  %3641 = vmatprep.subr.bf16.mxu0 0
  %3642 = vmatpush1.bf16.msra.mxu0 0
  %3643 = vmatprep.subr.bf16.mxu0 0
  %3644 = vmatpush1.bf16.msra.mxu0 0
  %3645 = vmatprep.subr.bf16.mxu0 0
  %3646 = vmatpush1.bf16.msra.mxu0 0
  %3647 = vmatprep.mubr.bf16.mxu0 0
  %3648 = vmatmul.mubr.bf16.gmra.mrb[0].mxu0 %v3613
  %v3649 = vpop.f32.mrb[0].mxu0
  %v3650 = vadd.f32 %v3373, %v3649
  %v3651 = vpop.f32.mrb[0].mxu0
  %v3652 = vpop.f32.mrb[0].mxu0
  %v3653 = vpop.f32.mrb[0].mxu0
  %3654 = vdwg.mxu0
  %3655 = vmatprep.subr.bf16.mxu0 0
  %3656 = vmatpush1.bf16.msra.mxu0 %v79
  %3657 = vmatprep.subr.bf16.mxu0 0
  %3658 = vmatpush1.bf16.msra.mxu0 %v80
  %3659 = vmatprep.subr.bf16.mxu0 0
  %3660 = vmatpush1.bf16.msra.mxu0 0
  %3661 = vmatprep.subr.bf16.mxu0 0
  %3662 = vmatpush1.bf16.msra.mxu0 0
  %3663 = vmatprep.subr.bf16.mxu0 0
  %3664 = vmatpush1.bf16.msra.mxu0 0
  %3665 = vmatprep.subr.bf16.mxu0 0
  %3666 = vmatpush1.bf16.msra.mxu0 0
  %3667 = vmatprep.subr.bf16.mxu0 0
  %3668 = vmatpush1.bf16.msra.mxu0 0
  %3669 = vmatprep.subr.bf16.mxu0 0
  %3670 = vmatpush1.bf16.msra.mxu0 0
  %3671 = vmatprep.subr.bf16.mxu0 0
  %3672 = vmatpush1.bf16.msra.mxu0 0
  %3673 = vmatprep.subr.bf16.mxu0 0
  %3674 = vmatpush1.bf16.msra.mxu0 0
  %3675 = vmatprep.subr.bf16.mxu0 0
  %3676 = vmatpush1.bf16.msra.mxu0 0
  %3677 = vmatprep.subr.bf16.mxu0 0
  %3678 = vmatpush1.bf16.msra.mxu0 0
  %3679 = vmatprep.subr.bf16.mxu0 0
  %3680 = vmatpush1.bf16.msra.mxu0 0
  %3681 = vmatprep.subr.bf16.mxu0 0
  %3682 = vmatpush1.bf16.msra.mxu0 0
  %3683 = vmatprep.subr.bf16.mxu0 0
  %3684 = vmatpush1.bf16.msra.mxu0 0
  %3685 = vmatprep.subr.bf16.mxu0 0
  %3686 = vmatpush1.bf16.msra.mxu0 0
  %3687 = vmatprep.mubr.bf16.mxu0 0
  %3688 = vmatmul.mubr.bf16.gmra.mrb[0].mxu0 %v3517
  %v3689 = vpop.f32.mrb[0].mxu0
  %v3690 = vadd.f32 %v3438, %v3689
  %v3691 = vpop.f32.mrb[0].mxu0
  %v3692 = vpop.f32.mrb[0].mxu0
  %v3693 = vpop.f32.mrb[0].mxu0
  %3694 = vdwg.mxu0
  %v3695 = vadd.f32 %v3650, %v3690
  %v3696 = vxor.u32 %v3695, 2147483648
  %v3697 = vmul.f32 %v3696, 1.442695
  %v3698 = vpow.pop %v3697
  %v3699 = vadd.f32 %v3698, 1.0
  %v3700 = vrcp.pop %v3699
  %v3701 = vmul.f32 1.0, %v3700
  %3703 = vrot.lane.b32.xlu0 %v3690, 64
  %v3704 = vpop.permute.xlu0 %3703
  %v3706 = vmul.f32 %v3701, %v3704
  %3708 = vrot.lane.b32.xlu0 %v3706, 64
  %v3709 = vpop.permute.xlu0 %3708
  %v3711 = vadd.f32 %v3650, %v3709
  %v3712 = vtanh.pop %v3711
  %v3713 = vsub.f32 1.0, %v3701
  %3715 = vrot.lane.b32.xlu0 %v3712, 96
  %v3716 = vpop.permute.xlu0 %3715
  %v3718 = vmul.f32 %v3713, %v3716
  %v3719 = vmul.f32 %v3701, %v3505
  %v3720 = vadd.f32 %v3718, %v3719
  %v3721 = vpack.c.bf16 %v3720, %v3720
  %3723 = vrot.lane.b32.xlu0 %v3721, 96
  %v3724 = vpop.permute.xlu0 %3723
  %v3726 = vsel %vm870, %v3724, 0
  %3728 = vmatprep.subr.bf16.mxu0 0
  %3729 = vmatpush1.bf16.msra.mxu0 %v87
  %3730 = vmatprep.subr.bf16.mxu0 0
  %3731 = vmatpush1.bf16.msra.mxu0 %v88
  %3732 = vmatprep.subr.bf16.mxu0 0
  %3733 = vmatpush1.bf16.msra.mxu0 0
  %3734 = vmatprep.subr.bf16.mxu0 0
  %3735 = vmatpush1.bf16.msra.mxu0 0
  %3736 = vmatprep.subr.bf16.mxu0 0
  %3737 = vmatpush1.bf16.msra.mxu0 0
  %3738 = vmatprep.subr.bf16.mxu0 0
  %3739 = vmatpush1.bf16.msra.mxu0 0
  %3740 = vmatprep.subr.bf16.mxu0 0
  %3741 = vmatpush1.bf16.msra.mxu0 0
  %3742 = vmatprep.subr.bf16.mxu0 0
  %3743 = vmatpush1.bf16.msra.mxu0 0
  %3744 = vmatprep.subr.bf16.mxu0 0
  %3745 = vmatpush1.bf16.msra.mxu0 0
  %3746 = vmatprep.subr.bf16.mxu0 0
  %3747 = vmatpush1.bf16.msra.mxu0 0
  %3748 = vmatprep.subr.bf16.mxu0 0
  %3749 = vmatpush1.bf16.msra.mxu0 0
  %3750 = vmatprep.subr.bf16.mxu0 0
  %3751 = vmatpush1.bf16.msra.mxu0 0
  %3752 = vmatprep.subr.bf16.mxu0 0
  %3753 = vmatpush1.bf16.msra.mxu0 0
  %3754 = vmatprep.subr.bf16.mxu0 0
  %3755 = vmatpush1.bf16.msra.mxu0 0
  %3756 = vmatprep.subr.bf16.mxu0 0
  %3757 = vmatpush1.bf16.msra.mxu0 0
  %3758 = vmatprep.subr.bf16.mxu0 0
  %3759 = vmatpush1.bf16.msra.mxu0 0
  %3760 = vmatprep.mubr.bf16.mxu0 0
  %3761 = vmatmul.mubr.bf16.gmra.mrb[0].mxu0 %v3726
  %v3762 = vpop.f32.mrb[0].mxu0
  %v3763 = vadd.f32 %v3511, %v3762
  %v3764 = vpop.f32.mrb[0].mxu0
  %v3765 = vpop.f32.mrb[0].mxu0
  %v3766 = vpop.f32.mrb[0].mxu0
  %3767 = vdwg.mxu0
  %v3770 = vunpack.c.l.s4 1966171168
  %v3771 = vunpack.c.0.s8 %v3770
  %v3772 = vlaneseq
  %v3773 = vshrl.u32 %v3772, 7
  %v3774 = vsub.s32 %v3771, %v3773
  %v3775 = vrot.slane %v3763, %v3774
  %v3776 = vcombine.high %v3775, %v3775
  %v3778 = vunpack.c.l.s4 1966171168
  %v3779 = vunpack.c.0.s8 %v3778
  %v3780 = vlaneseq
  %v3781 = vshrl.u32 %v3780, 7
  %v3782 = vsub.s32 %v3779, %v3781
  %v3783 = vrot.slane %v3775, %v3782
  %v3785 = vunpack.c.l.s4 1966171168
  %v3786 = vunpack.c.0.s8 %v3785
  %v3787 = vlaneseq
  %v3788 = vshrl.u32 %v3787, 7
  %v3789 = vsub.s32 %v3786, %v3788
  %v3790 = vrot.slane %v3776, %v3789
  %3793 = vst.msk [vmem:[%s16 + $0x1] sm:$0x1] %vm3584, %v3783
  %3794 = vst.msk [vmem:[%s16 + $0x9] sm:$0x1] %vm3584, %v3790
  %v3795 = vsel %vm3587, %v3763, -inf
  %3796 = vmax.xlane.f32.xlu0 %v3795
  %v3797 = vpop.xlane.xlu0 %3796
  %vm3798 = vcmp.eq.f32.partialorder %v3763, %v3797
  %v3799 = vsel %vm3798, %v3379, 12
  %v3800 = vsel %vm3587, %v3799, 2147483647
  %v3801 = vand.u32 %v3800, 65535
  %v3802 = vshra.s32 %v3800, 16
  %v3803 = vcvt.s32.f32 %v3801
  %v3804 = vcvt.s32.f32 %v3802
  %3805 = vmin.xlane.f32.xlu0 %v3804
  %v3806 = vpop.xlane.xlu0 %3805
  %vm3807 = vcmp.eq.f32.partialorder %v3804, %v3806
  %v3808 = vsel %vm3807, %v3803, inf
  %3809 = vmin.xlane.f32.xlu0 %v3808
  %v3810 = vpop.xlane.xlu0 %3809
  %v3811 = vcvt.f32.s32 %v3810
  %v3812 = vcvt.f32.s32 %v3806
  %v3813 = vshll.u32 %v3812, 16
  %v3814 = vadd.s32 %v3813, %v3811
  %vm3815 = vcmp.eq.s32.totalorder %v3814, %v3379
  %v3816 = vsel %vm3815, 1, 0
  %v3817 = vcvt.s32.f32 %v3816
  %v3818 = vpack.c.bf16 %v3817, %v3817
  %v3820 = vsel %vm147, %v3818, 0
  %3822 = vmatprep.subr.bf16.mxu0 0
  %3823 = vmatpush1.bf16.msra.mxu0 %v3392
  %3824 = vmatprep.subr.bf16.mxu0 0
  %3825 = vmatpush1.bf16.msra.mxu0 0
  %3826 = vmatprep.subr.bf16.mxu0 0
  %3827 = vmatpush1.bf16.msra.mxu0 0
  %3828 = vmatprep.subr.bf16.mxu0 0
  %3829 = vmatpush1.bf16.msra.mxu0 0
  %3830 = vmatprep.subr.bf16.mxu0 0
  %3831 = vmatpush1.bf16.msra.mxu0 0
  %3832 = vmatprep.subr.bf16.mxu0 0
  %3833 = vmatpush1.bf16.msra.mxu0 0
  %3834 = vmatprep.subr.bf16.mxu0 0
  %3835 = vmatpush1.bf16.msra.mxu0 0
  %3836 = vmatprep.subr.bf16.mxu0 0
  %3837 = vmatpush1.bf16.msra.mxu0 0
  %3838 = vmatprep.subr.bf16.mxu0 0
  %3839 = vmatpush1.bf16.msra.mxu0 0
  %3840 = vmatprep.subr.bf16.mxu0 0
  %3841 = vmatpush1.bf16.msra.mxu0 0
  %3842 = vmatprep.subr.bf16.mxu0 0
  %3843 = vmatpush1.bf16.msra.mxu0 0
  %3844 = vmatprep.subr.bf16.mxu0 0
  %3845 = vmatpush1.bf16.msra.mxu0 0
  %3846 = vmatprep.subr.bf16.mxu0 0
  %3847 = vmatpush1.bf16.msra.mxu0 0
  %3848 = vmatprep.subr.bf16.mxu0 0
  %3849 = vmatpush1.bf16.msra.mxu0 0
  %3850 = vmatprep.subr.bf16.mxu0 0
  %3851 = vmatpush1.bf16.msra.mxu0 0
  %3852 = vmatprep.subr.bf16.mxu0 0
  %3853 = vmatpush1.bf16.msra.mxu0 0
  %3854 = vmatprep.mubr.bf16.mxu0 0
  %3855 = vmatmul.mubr.bf16.gmra.mrb[0].mxu0 %v3820
  %v3856 = vpop.f32.mrb[0].mxu0
  %v3857 = vadd.f32 %v3373, %v3856
  %v3858 = vpop.f32.mrb[0].mxu0
  %v3859 = vpop.f32.mrb[0].mxu0
  %v3860 = vpop.f32.mrb[0].mxu0
  %3861 = vdwg.mxu0
  %3862 = vmatprep.subr.bf16.mxu0 0
  %3863 = vmatpush1.bf16.msra.mxu0 %v79
  %3864 = vmatprep.subr.bf16.mxu0 0
  %3865 = vmatpush1.bf16.msra.mxu0 %v80
  %3866 = vmatprep.subr.bf16.mxu0 0
  %3867 = vmatpush1.bf16.msra.mxu0 0
  %3868 = vmatprep.subr.bf16.mxu0 0
  %3869 = vmatpush1.bf16.msra.mxu0 0
  %3870 = vmatprep.subr.bf16.mxu0 0
  %3871 = vmatpush1.bf16.msra.mxu0 0
  %3872 = vmatprep.subr.bf16.mxu0 0
  %3873 = vmatpush1.bf16.msra.mxu0 0
  %3874 = vmatprep.subr.bf16.mxu0 0
  %3875 = vmatpush1.bf16.msra.mxu0 0
  %3876 = vmatprep.subr.bf16.mxu0 0
  %3877 = vmatpush1.bf16.msra.mxu0 0
  %3878 = vmatprep.subr.bf16.mxu0 0
  %3879 = vmatpush1.bf16.msra.mxu0 0
  %3880 = vmatprep.subr.bf16.mxu0 0
  %3881 = vmatpush1.bf16.msra.mxu0 0
  %3882 = vmatprep.subr.bf16.mxu0 0
  %3883 = vmatpush1.bf16.msra.mxu0 0
  %3884 = vmatprep.subr.bf16.mxu0 0
  %3885 = vmatpush1.bf16.msra.mxu0 0
  %3886 = vmatprep.subr.bf16.mxu0 0
  %3887 = vmatpush1.bf16.msra.mxu0 0
  %3888 = vmatprep.subr.bf16.mxu0 0
  %3889 = vmatpush1.bf16.msra.mxu0 0
  %3890 = vmatprep.subr.bf16.mxu0 0
  %3891 = vmatpush1.bf16.msra.mxu0 0
  %3892 = vmatprep.subr.bf16.mxu0 0
  %3893 = vmatpush1.bf16.msra.mxu0 0
  %3894 = vmatprep.mubr.bf16.mxu0 0
  %3895 = vmatmul.mubr.bf16.gmra.mrb[0].mxu0 %v3726
  %v3896 = vpop.f32.mrb[0].mxu0
  %v3897 = vadd.f32 %v3438, %v3896
  %v3898 = vpop.f32.mrb[0].mxu0
  %v3899 = vpop.f32.mrb[0].mxu0
  %v3900 = vpop.f32.mrb[0].mxu0
  %3901 = vdwg.mxu0
  %v3902 = vadd.f32 %v3857, %v3897
  %v3903 = vxor.u32 %v3902, 2147483648
  %v3904 = vmul.f32 %v3903, 1.442695
  %v3905 = vpow.pop %v3904
  %v3906 = vadd.f32 %v3905, 1.0
  %v3907 = vrcp.pop %v3906
  %v3908 = vmul.f32 1.0, %v3907
  %3910 = vrot.lane.b32.xlu0 %v3897, 64
  %v3911 = vpop.permute.xlu0 %3910
  %v3913 = vmul.f32 %v3908, %v3911
  %3915 = vrot.lane.b32.xlu0 %v3913, 64
  %v3916 = vpop.permute.xlu0 %3915
  %v3918 = vadd.f32 %v3857, %v3916
  %v3919 = vtanh.pop %v3918
  %v3920 = vsub.f32 1.0, %v3908
  %3922 = vrot.lane.b32.xlu0 %v3919, 96
  %v3923 = vpop.permute.xlu0 %3922
  %v3925 = vmul.f32 %v3920, %v3923
  %v3926 = vmul.f32 %v3908, %v3720
  %v3927 = vadd.f32 %v3925, %v3926
  %v3928 = vpack.c.bf16 %v3927, %v3927
  %3930 = vrot.lane.b32.xlu0 %v3928, 96
  %v3931 = vpop.permute.xlu0 %3930
  %v3933 = vsel %vm870, %v3931, 0
  %3935 = vmatprep.subr.bf16.mxu0 0
  %3936 = vmatpush1.bf16.msra.mxu0 %v87
  %3937 = vmatprep.subr.bf16.mxu0 0
  %3938 = vmatpush1.bf16.msra.mxu0 %v88
  %3939 = vmatprep.subr.bf16.mxu0 0
  %3940 = vmatpush1.bf16.msra.mxu0 0
  %3941 = vmatprep.subr.bf16.mxu0 0
  %3942 = vmatpush1.bf16.msra.mxu0 0
  %3943 = vmatprep.subr.bf16.mxu0 0
  %3944 = vmatpush1.bf16.msra.mxu0 0
  %3945 = vmatprep.subr.bf16.mxu0 0
  %3946 = vmatpush1.bf16.msra.mxu0 0
  %3947 = vmatprep.subr.bf16.mxu0 0
  %3948 = vmatpush1.bf16.msra.mxu0 0
  %3949 = vmatprep.subr.bf16.mxu0 0
  %3950 = vmatpush1.bf16.msra.mxu0 0
  %3951 = vmatprep.subr.bf16.mxu0 0
  %3952 = vmatpush1.bf16.msra.mxu0 0
  %3953 = vmatprep.subr.bf16.mxu0 0
  %3954 = vmatpush1.bf16.msra.mxu0 0
  %3955 = vmatprep.subr.bf16.mxu0 0
  %3956 = vmatpush1.bf16.msra.mxu0 0
  %3957 = vmatprep.subr.bf16.mxu0 0
  %3958 = vmatpush1.bf16.msra.mxu0 0
  %3959 = vmatprep.subr.bf16.mxu0 0
  %3960 = vmatpush1.bf16.msra.mxu0 0
  %3961 = vmatprep.subr.bf16.mxu0 0
  %3962 = vmatpush1.bf16.msra.mxu0 0
  %3963 = vmatprep.subr.bf16.mxu0 0
  %3964 = vmatpush1.bf16.msra.mxu0 0
  %3965 = vmatprep.subr.bf16.mxu0 0
  %3966 = vmatpush1.bf16.msra.mxu0 0
  %3967 = vmatprep.mubr.bf16.mxu0 0
  %3968 = vmatmul.mubr.bf16.gmra.mrb[0].mxu0 %v3933
  %v3969 = vpop.f32.mrb[0].mxu0
  %v3970 = vadd.f32 %v3511, %v3969
  %v3971 = vpop.f32.mrb[0].mxu0
  %v3972 = vpop.f32.mrb[0].mxu0
  %v3973 = vpop.f32.mrb[0].mxu0
  %3974 = vdwg.mxu0
  %v3977 = vunpack.c.l.s4 1966171168
  %v3978 = vunpack.c.0.s8 %v3977
  %v3979 = vlaneseq
  %v3980 = vshrl.u32 %v3979, 7
  %v3981 = vsub.s32 %v3978, %v3980
  %v3982 = vrot.slane %v3970, %v3981
  %v3983 = vcombine.high %v3982, %v3982
  %v3985 = vunpack.c.l.s4 1966171168
  %v3986 = vunpack.c.0.s8 %v3985
  %v3987 = vlaneseq
  %v3988 = vshrl.u32 %v3987, 7
  %v3989 = vsub.s32 %v3986, %v3988
  %v3990 = vrot.slane %v3982, %v3989
  %v3992 = vunpack.c.l.s4 1966171168
  %v3993 = vunpack.c.0.s8 %v3992
  %v3994 = vlaneseq
  %v3995 = vshrl.u32 %v3994, 7
  %v3996 = vsub.s32 %v3993, %v3995
  %v3997 = vrot.slane %v3983, %v3996
  %4000 = vst.msk [vmem:[%s16 + $0x2] sm:$0x1] %vm3584, %v3990
  %4001 = vst.msk [vmem:[%s16 + $0xa] sm:$0x1] %vm3584, %v3997
  %v4002 = vsel %vm3587, %v3970, -inf
  %4003 = vmax.xlane.f32.xlu0 %v4002
  %v4004 = vpop.xlane.xlu0 %4003
  %vm4005 = vcmp.eq.f32.partialorder %v3970, %v4004
  %v4006 = vsel %vm4005, %v3379, 12
  %v4007 = vsel %vm3587, %v4006, 2147483647
  %v4008 = vand.u32 %v4007, 65535
  %v4009 = vshra.s32 %v4007, 16
  %v4010 = vcvt.s32.f32 %v4008
  %v4011 = vcvt.s32.f32 %v4009
  %4012 = vmin.xlane.f32.xlu0 %v4011
  %v4013 = vpop.xlane.xlu0 %4012
  %vm4014 = vcmp.eq.f32.partialorder %v4011, %v4013
  %v4015 = vsel %vm4014, %v4010, inf
  %4016 = vmin.xlane.f32.xlu0 %v4015
  %v4017 = vpop.xlane.xlu0 %4016
  %v4018 = vcvt.f32.s32 %v4017
  %v4019 = vcvt.f32.s32 %v4013
  %v4020 = vshll.u32 %v4019, 16
  %v4021 = vadd.s32 %v4020, %v4018
  %vm4022 = vcmp.eq.s32.totalorder %v4021, %v3379
  %v4023 = vsel %vm4022, 1, 0
  %v4024 = vcvt.s32.f32 %v4023
  %v4025 = vpack.c.bf16 %v4024, %v4024
  %v4027 = vsel %vm147, %v4025, 0
  %4029 = vmatprep.subr.bf16.mxu0 0
  %4030 = vmatpush1.bf16.msra.mxu0 %v3392
  %4031 = vmatprep.subr.bf16.mxu0 0
  %4032 = vmatpush1.bf16.msra.mxu0 0
  %4033 = vmatprep.subr.bf16.mxu0 0
  %4034 = vmatpush1.bf16.msra.mxu0 0
  %4035 = vmatprep.subr.bf16.mxu0 0
  %4036 = vmatpush1.bf16.msra.mxu0 0
  %4037 = vmatprep.subr.bf16.mxu0 0
  %4038 = vmatpush1.bf16.msra.mxu0 0
  %4039 = vmatprep.subr.bf16.mxu0 0
  %4040 = vmatpush1.bf16.msra.mxu0 0
  %4041 = vmatprep.subr.bf16.mxu0 0
  %4042 = vmatpush1.bf16.msra.mxu0 0
  %4043 = vmatprep.subr.bf16.mxu0 0
  %4044 = vmatpush1.bf16.msra.mxu0 0
  %4045 = vmatprep.subr.bf16.mxu0 0
  %4046 = vmatpush1.bf16.msra.mxu0 0
  %4047 = vmatprep.subr.bf16.mxu0 0
  %4048 = vmatpush1.bf16.msra.mxu0 0
  %4049 = vmatprep.subr.bf16.mxu0 0
  %4050 = vmatpush1.bf16.msra.mxu0 0
  %4051 = vmatprep.subr.bf16.mxu0 0
  %4052 = vmatpush1.bf16.msra.mxu0 0
  %4053 = vmatprep.subr.bf16.mxu0 0
  %4054 = vmatpush1.bf16.msra.mxu0 0
  %4055 = vmatprep.subr.bf16.mxu0 0
  %4056 = vmatpush1.bf16.msra.mxu0 0
  %4057 = vmatprep.subr.bf16.mxu0 0
  %4058 = vmatpush1.bf16.msra.mxu0 0
  %4059 = vmatprep.subr.bf16.mxu0 0
  %4060 = vmatpush1.bf16.msra.mxu0 0
  %4061 = vmatprep.mubr.bf16.mxu0 0
  %4062 = vmatmul.mubr.bf16.gmra.mrb[0].mxu0 %v4027
  %v4063 = vpop.f32.mrb[0].mxu0
  %v4064 = vadd.f32 %v3373, %v4063
  %v4065 = vpop.f32.mrb[0].mxu0
  %v4066 = vpop.f32.mrb[0].mxu0
  %v4067 = vpop.f32.mrb[0].mxu0
  %4068 = vdwg.mxu0
  %4069 = vmatprep.subr.bf16.mxu0 0
  %4070 = vmatpush1.bf16.msra.mxu0 %v79
  %4071 = vmatprep.subr.bf16.mxu0 0
  %4072 = vmatpush1.bf16.msra.mxu0 %v80
  %4073 = vmatprep.subr.bf16.mxu0 0
  %4074 = vmatpush1.bf16.msra.mxu0 0
  %4075 = vmatprep.subr.bf16.mxu0 0
  %4076 = vmatpush1.bf16.msra.mxu0 0
  %4077 = vmatprep.subr.bf16.mxu0 0
  %4078 = vmatpush1.bf16.msra.mxu0 0
  %4079 = vmatprep.subr.bf16.mxu0 0
  %4080 = vmatpush1.bf16.msra.mxu0 0
  %4081 = vmatprep.subr.bf16.mxu0 0
  %4082 = vmatpush1.bf16.msra.mxu0 0
  %4083 = vmatprep.subr.bf16.mxu0 0
  %4084 = vmatpush1.bf16.msra.mxu0 0
  %4085 = vmatprep.subr.bf16.mxu0 0
  %4086 = vmatpush1.bf16.msra.mxu0 0
  %4087 = vmatprep.subr.bf16.mxu0 0
  %4088 = vmatpush1.bf16.msra.mxu0 0
  %4089 = vmatprep.subr.bf16.mxu0 0
  %4090 = vmatpush1.bf16.msra.mxu0 0
  %4091 = vmatprep.subr.bf16.mxu0 0
  %4092 = vmatpush1.bf16.msra.mxu0 0
  %4093 = vmatprep.subr.bf16.mxu0 0
  %4094 = vmatpush1.bf16.msra.mxu0 0
  %4095 = vmatprep.subr.bf16.mxu0 0
  %4096 = vmatpush1.bf16.msra.mxu0 0
  %4097 = vmatprep.subr.bf16.mxu0 0
  %4098 = vmatpush1.bf16.msra.mxu0 0
  %4099 = vmatprep.subr.bf16.mxu0 0
  %4100 = vmatpush1.bf16.msra.mxu0 0
  %4101 = vmatprep.mubr.bf16.mxu0 0
  %4102 = vmatmul.mubr.bf16.gmra.mrb[0].mxu0 %v3933
  %v4103 = vpop.f32.mrb[0].mxu0
  %v4104 = vadd.f32 %v3438, %v4103
  %v4105 = vpop.f32.mrb[0].mxu0
  %v4106 = vpop.f32.mrb[0].mxu0
  %v4107 = vpop.f32.mrb[0].mxu0
  %4108 = vdwg.mxu0
  %v4109 = vadd.f32 %v4064, %v4104
  %v4110 = vxor.u32 %v4109, 2147483648
  %v4111 = vmul.f32 %v4110, 1.442695
  %v4112 = vpow.pop %v4111
  %v4113 = vadd.f32 %v4112, 1.0
  %v4114 = vrcp.pop %v4113
  %v4115 = vmul.f32 1.0, %v4114
  %4117 = vrot.lane.b32.xlu0 %v4104, 64
  %v4118 = vpop.permute.xlu0 %4117
  %v4120 = vmul.f32 %v4115, %v4118
  %4122 = vrot.lane.b32.xlu0 %v4120, 64
  %v4123 = vpop.permute.xlu0 %4122
  %v4125 = vadd.f32 %v4064, %v4123
  %v4126 = vtanh.pop %v4125
  %v4127 = vsub.f32 1.0, %v4115
  %4129 = vrot.lane.b32.xlu0 %v4126, 96
  %v4130 = vpop.permute.xlu0 %4129
  %v4132 = vmul.f32 %v4127, %v4130
  %v4133 = vmul.f32 %v4115, %v3927
  %v4134 = vadd.f32 %v4132, %v4133
  %v4135 = vpack.c.bf16 %v4134, %v4134
  %4137 = vrot.lane.b32.xlu0 %v4135, 96
  %v4138 = vpop.permute.xlu0 %4137
  %v4140 = vsel %vm870, %v4138, 0
  %4142 = vmatprep.subr.bf16.mxu0 0
  %4143 = vmatpush1.bf16.msra.mxu0 %v87
  %4144 = vmatprep.subr.bf16.mxu0 0
  %4145 = vmatpush1.bf16.msra.mxu0 %v88
  %4146 = vmatprep.subr.bf16.mxu0 0
  %4147 = vmatpush1.bf16.msra.mxu0 0
  %4148 = vmatprep.subr.bf16.mxu0 0
  %4149 = vmatpush1.bf16.msra.mxu0 0
  %4150 = vmatprep.subr.bf16.mxu0 0
  %4151 = vmatpush1.bf16.msra.mxu0 0
  %4152 = vmatprep.subr.bf16.mxu0 0
  %4153 = vmatpush1.bf16.msra.mxu0 0
  %4154 = vmatprep.subr.bf16.mxu0 0
  %4155 = vmatpush1.bf16.msra.mxu0 0
  %4156 = vmatprep.subr.bf16.mxu0 0
  %4157 = vmatpush1.bf16.msra.mxu0 0
  %4158 = vmatprep.subr.bf16.mxu0 0
  %4159 = vmatpush1.bf16.msra.mxu0 0
  %4160 = vmatprep.subr.bf16.mxu0 0
  %4161 = vmatpush1.bf16.msra.mxu0 0
  %4162 = vmatprep.subr.bf16.mxu0 0
  %4163 = vmatpush1.bf16.msra.mxu0 0
  %4164 = vmatprep.subr.bf16.mxu0 0
  %4165 = vmatpush1.bf16.msra.mxu0 0
  %4166 = vmatprep.subr.bf16.mxu0 0
  %4167 = vmatpush1.bf16.msra.mxu0 0
  %4168 = vmatprep.subr.bf16.mxu0 0
  %4169 = vmatpush1.bf16.msra.mxu0 0
  %4170 = vmatprep.subr.bf16.mxu0 0
  %4171 = vmatpush1.bf16.msra.mxu0 0
  %4172 = vmatprep.subr.bf16.mxu0 0
  %4173 = vmatpush1.bf16.msra.mxu0 0
  %4174 = vmatprep.mubr.bf16.mxu0 0
  %4175 = vmatmul.mubr.bf16.gmra.mrb[0].mxu0 %v4140
  %v4176 = vpop.f32.mrb[0].mxu0
  %v4177 = vadd.f32 %v3511, %v4176
  %v4178 = vpop.f32.mrb[0].mxu0
  %v4179 = vpop.f32.mrb[0].mxu0
  %v4180 = vpop.f32.mrb[0].mxu0
  %4181 = vdwg.mxu0
  %v4184 = vunpack.c.l.s4 1966171168
  %v4185 = vunpack.c.0.s8 %v4184
  %v4186 = vlaneseq
  %v4187 = vshrl.u32 %v4186, 7
  %v4188 = vsub.s32 %v4185, %v4187
  %v4189 = vrot.slane %v4177, %v4188
  %v4190 = vcombine.high %v4189, %v4189
  %v4192 = vunpack.c.l.s4 1966171168
  %v4193 = vunpack.c.0.s8 %v4192
  %v4194 = vlaneseq
  %v4195 = vshrl.u32 %v4194, 7
  %v4196 = vsub.s32 %v4193, %v4195
  %v4197 = vrot.slane %v4189, %v4196
  %v4199 = vunpack.c.l.s4 1966171168
  %v4200 = vunpack.c.0.s8 %v4199
  %v4201 = vlaneseq
  %v4202 = vshrl.u32 %v4201, 7
  %v4203 = vsub.s32 %v4200, %v4202
  %v4204 = vrot.slane %v4190, %v4203
  %4207 = vst.msk [vmem:[%s16 + $0x3] sm:$0x1] %vm3584, %v4197
  %4208 = vst.msk [vmem:[%s16 + $0xb] sm:$0x1] %vm3584, %v4204
  %v4209 = vsel %vm3587, %v4177, -inf
  %4210 = vmax.xlane.f32.xlu0 %v4209
  %v4211 = vpop.xlane.xlu0 %4210
  %vm4212 = vcmp.eq.f32.partialorder %v4177, %v4211
  %v4213 = vsel %vm4212, %v3379, 12
  %v4214 = vsel %vm3587, %v4213, 2147483647
  %v4215 = vand.u32 %v4214, 65535
  %v4216 = vshra.s32 %v4214, 16
  %v4217 = vcvt.s32.f32 %v4215
  %v4218 = vcvt.s32.f32 %v4216
  %4219 = vmin.xlane.f32.xlu0 %v4218
  %v4220 = vpop.xlane.xlu0 %4219
  %vm4221 = vcmp.eq.f32.partialorder %v4218, %v4220
  %v4222 = vsel %vm4221, %v4217, inf
  %4223 = vmin.xlane.f32.xlu0 %v4222
  %v4224 = vpop.xlane.xlu0 %4223
  %v4225 = vcvt.f32.s32 %v4224
  %v4226 = vcvt.f32.s32 %v4220
  %v4227 = vshll.u32 %v4226, 16
  %v4228 = vadd.s32 %v4227, %v4225
  %vm4229 = vcmp.eq.s32.totalorder %v4228, %v3379
  %v4230 = vsel %vm4229, 1, 0
  %v4231 = vcvt.s32.f32 %v4230
  %v4232 = vpack.c.bf16 %v4231, %v4231
  %v4234 = vsel %vm147, %v4232, 0
  %4236 = vmatprep.subr.bf16.mxu0 0
  %4237 = vmatpush1.bf16.msra.mxu0 %v3392
  %4238 = vmatprep.subr.bf16.mxu0 0
  %4239 = vmatpush1.bf16.msra.mxu0 0
  %4240 = vmatprep.subr.bf16.mxu0 0
  %4241 = vmatpush1.bf16.msra.mxu0 0
  %4242 = vmatprep.subr.bf16.mxu0 0
  %4243 = vmatpush1.bf16.msra.mxu0 0
  %4244 = vmatprep.subr.bf16.mxu0 0
  %4245 = vmatpush1.bf16.msra.mxu0 0
  %4246 = vmatprep.subr.bf16.mxu0 0
  %4247 = vmatpush1.bf16.msra.mxu0 0
  %4248 = vmatprep.subr.bf16.mxu0 0
  %4249 = vmatpush1.bf16.msra.mxu0 0
  %4250 = vmatprep.subr.bf16.mxu0 0
  %4251 = vmatpush1.bf16.msra.mxu0 0
  %4252 = vmatprep.subr.bf16.mxu0 0
  %4253 = vmatpush1.bf16.msra.mxu0 0
  %4254 = vmatprep.subr.bf16.mxu0 0
  %4255 = vmatpush1.bf16.msra.mxu0 0
  %4256 = vmatprep.subr.bf16.mxu0 0
  %4257 = vmatpush1.bf16.msra.mxu0 0
  %4258 = vmatprep.subr.bf16.mxu0 0
  %4259 = vmatpush1.bf16.msra.mxu0 0
  %4260 = vmatprep.subr.bf16.mxu0 0
  %4261 = vmatpush1.bf16.msra.mxu0 0
  %4262 = vmatprep.subr.bf16.mxu0 0
  %4263 = vmatpush1.bf16.msra.mxu0 0
  %4264 = vmatprep.subr.bf16.mxu0 0
  %4265 = vmatpush1.bf16.msra.mxu0 0
  %4266 = vmatprep.subr.bf16.mxu0 0
  %4267 = vmatpush1.bf16.msra.mxu0 0
  %4268 = vmatprep.mubr.bf16.mxu0 0
  %4269 = vmatmul.mubr.bf16.gmra.mrb[0].mxu0 %v4234
  %v4270 = vpop.f32.mrb[0].mxu0
  %v4271 = vadd.f32 %v3373, %v4270
  %v4272 = vpop.f32.mrb[0].mxu0
  %v4273 = vpop.f32.mrb[0].mxu0
  %v4274 = vpop.f32.mrb[0].mxu0
  %4275 = vdwg.mxu0
  %4276 = vmatprep.subr.bf16.mxu0 0
  %4277 = vmatpush1.bf16.msra.mxu0 %v79
  %4278 = vmatprep.subr.bf16.mxu0 0
  %4279 = vmatpush1.bf16.msra.mxu0 %v80
  %4280 = vmatprep.subr.bf16.mxu0 0
  %4281 = vmatpush1.bf16.msra.mxu0 0
  %4282 = vmatprep.subr.bf16.mxu0 0
  %4283 = vmatpush1.bf16.msra.mxu0 0
  %4284 = vmatprep.subr.bf16.mxu0 0
  %4285 = vmatpush1.bf16.msra.mxu0 0
  %4286 = vmatprep.subr.bf16.mxu0 0
  %4287 = vmatpush1.bf16.msra.mxu0 0
  %4288 = vmatprep.subr.bf16.mxu0 0
  %4289 = vmatpush1.bf16.msra.mxu0 0
  %4290 = vmatprep.subr.bf16.mxu0 0
  %4291 = vmatpush1.bf16.msra.mxu0 0
  %4292 = vmatprep.subr.bf16.mxu0 0
  %4293 = vmatpush1.bf16.msra.mxu0 0
  %4294 = vmatprep.subr.bf16.mxu0 0
  %4295 = vmatpush1.bf16.msra.mxu0 0
  %4296 = vmatprep.subr.bf16.mxu0 0
  %4297 = vmatpush1.bf16.msra.mxu0 0
  %4298 = vmatprep.subr.bf16.mxu0 0
  %4299 = vmatpush1.bf16.msra.mxu0 0
  %4300 = vmatprep.subr.bf16.mxu0 0
  %4301 = vmatpush1.bf16.msra.mxu0 0
  %4302 = vmatprep.subr.bf16.mxu0 0
  %4303 = vmatpush1.bf16.msra.mxu0 0
  %4304 = vmatprep.subr.bf16.mxu0 0
  %4305 = vmatpush1.bf16.msra.mxu0 0
  %4306 = vmatprep.subr.bf16.mxu0 0
  %4307 = vmatpush1.bf16.msra.mxu0 0
  %4308 = vmatprep.mubr.bf16.mxu0 0
  %4309 = vmatmul.mubr.bf16.gmra.mrb[0].mxu0 %v4140
  %v4310 = vpop.f32.mrb[0].mxu0
  %v4311 = vadd.f32 %v3438, %v4310
  %v4312 = vpop.f32.mrb[0].mxu0
  %v4313 = vpop.f32.mrb[0].mxu0
  %v4314 = vpop.f32.mrb[0].mxu0
  %4315 = vdwg.mxu0
  %v4316 = vadd.f32 %v4271, %v4311
  %v4317 = vxor.u32 %v4316, 2147483648
  %v4318 = vmul.f32 %v4317, 1.442695
  %v4319 = vpow.pop %v4318
  %v4320 = vadd.f32 %v4319, 1.0
  %v4321 = vrcp.pop %v4320
  %v4322 = vmul.f32 1.0, %v4321
  %4324 = vrot.lane.b32.xlu0 %v4311, 64
  %v4325 = vpop.permute.xlu0 %4324
  %v4327 = vmul.f32 %v4322, %v4325
  %4329 = vrot.lane.b32.xlu0 %v4327, 64
  %v4330 = vpop.permute.xlu0 %4329
  %v4332 = vadd.f32 %v4271, %v4330
  %v4333 = vtanh.pop %v4332
  %v4334 = vsub.f32 1.0, %v4322
  %4336 = vrot.lane.b32.xlu0 %v4333, 96
  %v4337 = vpop.permute.xlu0 %4336
  %v4339 = vmul.f32 %v4334, %v4337
  %v4340 = vmul.f32 %v4322, %v4134
  %v4341 = vadd.f32 %v4339, %v4340
  %v4342 = vpack.c.bf16 %v4341, %v4341
  %4344 = vrot.lane.b32.xlu0 %v4342, 96
  %v4345 = vpop.permute.xlu0 %4344
  %v4347 = vsel %vm870, %v4345, 0
  %4349 = vmatprep.subr.bf16.mxu0 0
  %4350 = vmatpush1.bf16.msra.mxu0 %v87
  %4351 = vmatprep.subr.bf16.mxu0 0
  %4352 = vmatpush1.bf16.msra.mxu0 %v88
  %4353 = vmatprep.subr.bf16.mxu0 0
  %4354 = vmatpush1.bf16.msra.mxu0 0
  %4355 = vmatprep.subr.bf16.mxu0 0
  %4356 = vmatpush1.bf16.msra.mxu0 0
  %4357 = vmatprep.subr.bf16.mxu0 0
  %4358 = vmatpush1.bf16.msra.mxu0 0
  %4359 = vmatprep.subr.bf16.mxu0 0
  %4360 = vmatpush1.bf16.msra.mxu0 0
  %4361 = vmatprep.subr.bf16.mxu0 0
  %4362 = vmatpush1.bf16.msra.mxu0 0
  %4363 = vmatprep.subr.bf16.mxu0 0
  %4364 = vmatpush1.bf16.msra.mxu0 0
  %4365 = vmatprep.subr.bf16.mxu0 0
  %4366 = vmatpush1.bf16.msra.mxu0 0
  %4367 = vmatprep.subr.bf16.mxu0 0
  %4368 = vmatpush1.bf16.msra.mxu0 0
  %4369 = vmatprep.subr.bf16.mxu0 0
  %4370 = vmatpush1.bf16.msra.mxu0 0
  %4371 = vmatprep.subr.bf16.mxu0 0
  %4372 = vmatpush1.bf16.msra.mxu0 0
  %4373 = vmatprep.subr.bf16.mxu0 0
  %4374 = vmatpush1.bf16.msra.mxu0 0
  %4375 = vmatprep.subr.bf16.mxu0 0
  %4376 = vmatpush1.bf16.msra.mxu0 0
  %4377 = vmatprep.subr.bf16.mxu0 0
  %4378 = vmatpush1.bf16.msra.mxu0 0
  %4379 = vmatprep.subr.bf16.mxu0 0
  %4380 = vmatpush1.bf16.msra.mxu0 0
  %4381 = vmatprep.mubr.bf16.mxu0 0
  %4382 = vmatmul.mubr.bf16.gmra.mrb[0].mxu0 %v4347
  %v4383 = vpop.f32.mrb[0].mxu0
  %v4384 = vadd.f32 %v3511, %v4383
  %v4385 = vpop.f32.mrb[0].mxu0
  %v4386 = vpop.f32.mrb[0].mxu0
  %v4387 = vpop.f32.mrb[0].mxu0
  %4388 = vdwg.mxu0
  %v4391 = vunpack.c.l.s4 1966171168
  %v4392 = vunpack.c.0.s8 %v4391
  %v4393 = vlaneseq
  %v4394 = vshrl.u32 %v4393, 7
  %v4395 = vsub.s32 %v4392, %v4394
  %v4396 = vrot.slane %v4384, %v4395
  %v4397 = vcombine.high %v4396, %v4396
  %v4399 = vunpack.c.l.s4 1966171168
  %v4400 = vunpack.c.0.s8 %v4399
  %v4401 = vlaneseq
  %v4402 = vshrl.u32 %v4401, 7
  %v4403 = vsub.s32 %v4400, %v4402
  %v4404 = vrot.slane %v4396, %v4403
  %v4406 = vunpack.c.l.s4 1966171168
  %v4407 = vunpack.c.0.s8 %v4406
  %v4408 = vlaneseq
  %v4409 = vshrl.u32 %v4408, 7
  %v4410 = vsub.s32 %v4407, %v4409
  %v4411 = vrot.slane %v4397, %v4410
  %4414 = vst.msk [vmem:[%s16 + $0x4] sm:$0x1] %vm3584, %v4404
  %4415 = vst.msk [vmem:[%s16 + $0xc] sm:$0x1] %vm3584, %v4411
  %v4416 = vsel %vm3587, %v4384, -inf
  %4417 = vmax.xlane.f32.xlu0 %v4416
  %v4418 = vpop.xlane.xlu0 %4417
  %vm4419 = vcmp.eq.f32.partialorder %v4384, %v4418
  %v4420 = vsel %vm4419, %v3379, 12
  %v4421 = vsel %vm3587, %v4420, 2147483647
  %v4422 = vand.u32 %v4421, 65535
  %v4423 = vshra.s32 %v4421, 16
  %v4424 = vcvt.s32.f32 %v4422
  %v4425 = vcvt.s32.f32 %v4423
  %4426 = vmin.xlane.f32.xlu0 %v4425
  %v4427 = vpop.xlane.xlu0 %4426
  %vm4428 = vcmp.eq.f32.partialorder %v4425, %v4427
  %v4429 = vsel %vm4428, %v4424, inf
  %4430 = vmin.xlane.f32.xlu0 %v4429
  %v4431 = vpop.xlane.xlu0 %4430
  %v4432 = vcvt.f32.s32 %v4431
  %v4433 = vcvt.f32.s32 %v4427
  %v4434 = vshll.u32 %v4433, 16
  %v4435 = vadd.s32 %v4434, %v4432
  %vm4436 = vcmp.eq.s32.totalorder %v4435, %v3379
  %v4437 = vsel %vm4436, 1, 0
  %v4438 = vcvt.s32.f32 %v4437
  %v4439 = vpack.c.bf16 %v4438, %v4438
  %v4441 = vsel %vm147, %v4439, 0
  %4443 = vmatprep.subr.bf16.mxu0 0
  %4444 = vmatpush1.bf16.msra.mxu0 %v3392
  %4445 = vmatprep.subr.bf16.mxu0 0
  %4446 = vmatpush1.bf16.msra.mxu0 0
  %4447 = vmatprep.subr.bf16.mxu0 0
  %4448 = vmatpush1.bf16.msra.mxu0 0
  %4449 = vmatprep.subr.bf16.mxu0 0
  %4450 = vmatpush1.bf16.msra.mxu0 0
  %4451 = vmatprep.subr.bf16.mxu0 0
  %4452 = vmatpush1.bf16.msra.mxu0 0
  %4453 = vmatprep.subr.bf16.mxu0 0
  %4454 = vmatpush1.bf16.msra.mxu0 0
  %4455 = vmatprep.subr.bf16.mxu0 0
  %4456 = vmatpush1.bf16.msra.mxu0 0
  %4457 = vmatprep.subr.bf16.mxu0 0
  %4458 = vmatpush1.bf16.msra.mxu0 0
  %4459 = vmatprep.subr.bf16.mxu0 0
  %4460 = vmatpush1.bf16.msra.mxu0 0
  %4461 = vmatprep.subr.bf16.mxu0 0
  %4462 = vmatpush1.bf16.msra.mxu0 0
  %4463 = vmatprep.subr.bf16.mxu0 0
  %4464 = vmatpush1.bf16.msra.mxu0 0
  %4465 = vmatprep.subr.bf16.mxu0 0
  %4466 = vmatpush1.bf16.msra.mxu0 0
  %4467 = vmatprep.subr.bf16.mxu0 0
  %4468 = vmatpush1.bf16.msra.mxu0 0
  %4469 = vmatprep.subr.bf16.mxu0 0
  %4470 = vmatpush1.bf16.msra.mxu0 0
  %4471 = vmatprep.subr.bf16.mxu0 0
  %4472 = vmatpush1.bf16.msra.mxu0 0
  %4473 = vmatprep.subr.bf16.mxu0 0
  %4474 = vmatpush1.bf16.msra.mxu0 0
  %4475 = vmatprep.mubr.bf16.mxu0 0
  %4476 = vmatmul.mubr.bf16.gmra.mrb[0].mxu0 %v4441
  %v4477 = vpop.f32.mrb[0].mxu0
  %v4478 = vadd.f32 %v3373, %v4477
  %v4479 = vpop.f32.mrb[0].mxu0
  %v4480 = vpop.f32.mrb[0].mxu0
  %v4481 = vpop.f32.mrb[0].mxu0
  %4482 = vdwg.mxu0
  %4483 = vmatprep.subr.bf16.mxu0 0
  %4484 = vmatpush1.bf16.msra.mxu0 %v79
  %4485 = vmatprep.subr.bf16.mxu0 0
  %4486 = vmatpush1.bf16.msra.mxu0 %v80
  %4487 = vmatprep.subr.bf16.mxu0 0
  %4488 = vmatpush1.bf16.msra.mxu0 0
  %4489 = vmatprep.subr.bf16.mxu0 0
  %4490 = vmatpush1.bf16.msra.mxu0 0
  %4491 = vmatprep.subr.bf16.mxu0 0
  %4492 = vmatpush1.bf16.msra.mxu0 0
  %4493 = vmatprep.subr.bf16.mxu0 0
  %4494 = vmatpush1.bf16.msra.mxu0 0
  %4495 = vmatprep.subr.bf16.mxu0 0
  %4496 = vmatpush1.bf16.msra.mxu0 0
  %4497 = vmatprep.subr.bf16.mxu0 0
  %4498 = vmatpush1.bf16.msra.mxu0 0
  %4499 = vmatprep.subr.bf16.mxu0 0
  %4500 = vmatpush1.bf16.msra.mxu0 0
  %4501 = vmatprep.subr.bf16.mxu0 0
  %4502 = vmatpush1.bf16.msra.mxu0 0
  %4503 = vmatprep.subr.bf16.mxu0 0
  %4504 = vmatpush1.bf16.msra.mxu0 0
  %4505 = vmatprep.subr.bf16.mxu0 0
  %4506 = vmatpush1.bf16.msra.mxu0 0
  %4507 = vmatprep.subr.bf16.mxu0 0
  %4508 = vmatpush1.bf16.msra.mxu0 0
  %4509 = vmatprep.subr.bf16.mxu0 0
  %4510 = vmatpush1.bf16.msra.mxu0 0
  %4511 = vmatprep.subr.bf16.mxu0 0
  %4512 = vmatpush1.bf16.msra.mxu0 0
  %4513 = vmatprep.subr.bf16.mxu0 0
  %4514 = vmatpush1.bf16.msra.mxu0 0
  %4515 = vmatprep.mubr.bf16.mxu0 0
  %4516 = vmatmul.mubr.bf16.gmra.mrb[0].mxu0 %v4347
  %v4517 = vpop.f32.mrb[0].mxu0
  %v4518 = vadd.f32 %v3438, %v4517
  %v4519 = vpop.f32.mrb[0].mxu0
  %v4520 = vpop.f32.mrb[0].mxu0
  %v4521 = vpop.f32.mrb[0].mxu0
  %4522 = vdwg.mxu0
  %v4523 = vadd.f32 %v4478, %v4518
  %v4524 = vxor.u32 %v4523, 2147483648
  %v4525 = vmul.f32 %v4524, 1.442695
  %v4526 = vpow.pop %v4525
  %v4527 = vadd.f32 %v4526, 1.0
  %v4528 = vrcp.pop %v4527
  %v4529 = vmul.f32 1.0, %v4528
  %4531 = vrot.lane.b32.xlu0 %v4518, 64
  %v4532 = vpop.permute.xlu0 %4531
  %v4534 = vmul.f32 %v4529, %v4532
  %4536 = vrot.lane.b32.xlu0 %v4534, 64
  %v4537 = vpop.permute.xlu0 %4536
  %v4539 = vadd.f32 %v4478, %v4537
  %v4540 = vtanh.pop %v4539
  %v4541 = vsub.f32 1.0, %v4529
  %4543 = vrot.lane.b32.xlu0 %v4540, 96
  %v4544 = vpop.permute.xlu0 %4543
  %v4546 = vmul.f32 %v4541, %v4544
  %v4547 = vmul.f32 %v4529, %v4341
  %v4548 = vadd.f32 %v4546, %v4547
  %v4549 = vpack.c.bf16 %v4548, %v4548
  %4551 = vrot.lane.b32.xlu0 %v4549, 96
  %v4552 = vpop.permute.xlu0 %4551
  %v4554 = vsel %vm870, %v4552, 0
  %4556 = vmatprep.subr.bf16.mxu0 0
  %4557 = vmatpush1.bf16.msra.mxu0 %v87
  %4558 = vmatprep.subr.bf16.mxu0 0
  %4559 = vmatpush1.bf16.msra.mxu0 %v88
  %4560 = vmatprep.subr.bf16.mxu0 0
  %4561 = vmatpush1.bf16.msra.mxu0 0
  %4562 = vmatprep.subr.bf16.mxu0 0
  %4563 = vmatpush1.bf16.msra.mxu0 0
  %4564 = vmatprep.subr.bf16.mxu0 0
  %4565 = vmatpush1.bf16.msra.mxu0 0
  %4566 = vmatprep.subr.bf16.mxu0 0
  %4567 = vmatpush1.bf16.msra.mxu0 0
  %4568 = vmatprep.subr.bf16.mxu0 0
  %4569 = vmatpush1.bf16.msra.mxu0 0
  %4570 = vmatprep.subr.bf16.mxu0 0
  %4571 = vmatpush1.bf16.msra.mxu0 0
  %4572 = vmatprep.subr.bf16.mxu0 0
  %4573 = vmatpush1.bf16.msra.mxu0 0
  %4574 = vmatprep.subr.bf16.mxu0 0
  %4575 = vmatpush1.bf16.msra.mxu0 0
  %4576 = vmatprep.subr.bf16.mxu0 0
  %4577 = vmatpush1.bf16.msra.mxu0 0
  %4578 = vmatprep.subr.bf16.mxu0 0
  %4579 = vmatpush1.bf16.msra.mxu0 0
  %4580 = vmatprep.subr.bf16.mxu0 0
  %4581 = vmatpush1.bf16.msra.mxu0 0
  %4582 = vmatprep.subr.bf16.mxu0 0
  %4583 = vmatpush1.bf16.msra.mxu0 0
  %4584 = vmatprep.subr.bf16.mxu0 0
  %4585 = vmatpush1.bf16.msra.mxu0 0
  %4586 = vmatprep.subr.bf16.mxu0 0
  %4587 = vmatpush1.bf16.msra.mxu0 0
  %4588 = vmatprep.mubr.bf16.mxu0 0
  %4589 = vmatmul.mubr.bf16.gmra.mrb[0].mxu0 %v4554
  %v4590 = vpop.f32.mrb[0].mxu0
  %v4591 = vadd.f32 %v3511, %v4590
  %v4592 = vpop.f32.mrb[0].mxu0
  %v4593 = vpop.f32.mrb[0].mxu0
  %v4594 = vpop.f32.mrb[0].mxu0
  %4595 = vdwg.mxu0
  %v4598 = vunpack.c.l.s4 1966171168
  %v4599 = vunpack.c.0.s8 %v4598
  %v4600 = vlaneseq
  %v4601 = vshrl.u32 %v4600, 7
  %v4602 = vsub.s32 %v4599, %v4601
  %v4603 = vrot.slane %v4591, %v4602
  %v4604 = vcombine.high %v4603, %v4603
  %v4606 = vunpack.c.l.s4 1966171168
  %v4607 = vunpack.c.0.s8 %v4606
  %v4608 = vlaneseq
  %v4609 = vshrl.u32 %v4608, 7
  %v4610 = vsub.s32 %v4607, %v4609
  %v4611 = vrot.slane %v4603, %v4610
  %v4613 = vunpack.c.l.s4 1966171168
  %v4614 = vunpack.c.0.s8 %v4613
  %v4615 = vlaneseq
  %v4616 = vshrl.u32 %v4615, 7
  %v4617 = vsub.s32 %v4614, %v4616
  %v4618 = vrot.slane %v4604, %v4617
  %4621 = vst.msk [vmem:[%s16 + $0x5] sm:$0x1] %vm3584, %v4611
  %4622 = vst.msk [vmem:[%s16 + $0xd] sm:$0x1] %vm3584, %v4618
  // Predicated region
  $region66: #{baseline_forward.1} parent=0 // pred_check
    _
  $region67: #{baseline_forward.1} parent=0 // pred_check_branch
    %4624 = sbr.rel (0) target = $region69
  $region68: #{baseline_forward.1} parent=0 // pred_region
    _
  $region69: #{baseline_forward.1} parent=0 // pred_fallthru
    _
  // Predicated region
  $region70: #{baseline_forward.1} parent=0 // pred_check
    _
  $region71: #{baseline_forward.1} parent=0 // pred_check_branch
    %4626 = sbr.rel (0) target = $region73
  $region72: #{baseline_forward.1} parent=0 // pred_region
    _
  $region73: #{baseline_forward.1} parent=0 // pred_fallthru
    _

</llo_original>
